<compile_context>
chip_gen: v5e
topology: v5e:2x2
jax: 0.10.0
libtpu: 0.0.40
codegen_flags: <defaults>
</compile_context>

<pallas_src>
import functools

import jax
import jax.numpy as jnp
from jax import lax
from jax.experimental import pallas as pl
from jax.experimental.pallas import tpu as pltpu

EPS = 1e-5  # nn.BatchNorm2d default


# -------------------- in-kernel helpers --------------------

def _zero_pad_hw(a, ph, pw):
    """Zero-pad an (Nb,H,W,C) value along H/W in vregs (no scratch, no step-0 init)."""
    Nb, H, W, C = a.shape
    if pw:
        zc = jnp.zeros((Nb, H, pw, C), a.dtype)
        a = jnp.concatenate([zc, a, zc], axis=2)
    if ph:
        zr = jnp.zeros((Nb, ph, a.shape[2], C), a.dtype)
        a = jnp.concatenate([zr, a, zr], axis=1)
    return a


# -------------------- Pallas kernels --------------------

def _stage1_kernel(x_ref, wx_ref, bx_ref, w4_ref, b4_ref,
                   zmid_ref, z14_ref, st_ref, *, H, W, Cin, Cmid, b0, b3):
    """Fused: branch2a/branch3a/branch1 1x1 convs + (maxpool3x3 -> branch4 1x1 conv).

    Emits raw (pre-BN) conv outputs split into the two consumer slabs plus per-block
    BN partial statistics (sum, sumsq over Nb*H*W).
    """
    Nb = x_ref.shape[0]
    x = x_ref[...]
    xm = x.reshape(Nb * H * W, Cin)

    # One fused matmul over x for the three 1x1 convs that read x directly.
    yx = jnp.dot(xm, wx_ref[...], preferred_element_type=jnp.float32) + bx_ref[...]

    # 3x3 stride-1 pad-1 maxpool, separable: max over W shifts, then over H shifts.
    # -inf halo built in vregs (no wrapper pad, no persistent scratch).
    colpad = jnp.full((Nb, H, 1, Cin), -jnp.inf, jnp.float32)
    xw = jnp.concatenate([colpad, x, colpad], axis=2)          # (Nb,H,W+2,Cin)
    rowmax = jnp.maximum(jnp.maximum(xw[:, :, 0:W, :], xw[:, :, 1:W + 1, :]),
                         xw[:, :, 2:W + 2, :])
    rowpad = jnp.full((Nb, 1, W, Cin), -jnp.inf, jnp.float32)
    xh = jnp.concatenate([rowpad, rowmax, rowpad], axis=1)     # (Nb,H+2,W,Cin)
    pooled = jnp.maximum(jnp.maximum(xh[:, 0:H, :, :], xh[:, 1:H + 1, :, :]),
                         xh[:, 2:H + 2, :, :])

    y4 = jnp.dot(pooled.reshape(Nb * H * W, Cin), w4_ref[...],
                 preferred_element_type=jnp.float32) + b4_ref[...]

    zmid = yx[:, :Cmid]            # [branch2a | branch3a] raw outputs
    r1 = yx[:, Cmid:]              # branch1 raw output
    z14 = jnp.concatenate([r1, y4], axis=-1)                   # [branch1 | branch4]

    zmid_ref[...] = zmid.reshape(Nb, H, W, Cmid)
    z14_ref[...] = z14.reshape(Nb, H, W, b0 + b3)

    s = jnp.concatenate([jnp.sum(zmid, axis=0, keepdims=True),
                         jnp.sum(z14, axis=0, keepdims=True)], axis=1)
    ss = jnp.concatenate([jnp.sum(zmid * zmid, axis=0, keepdims=True),
                          jnp.sum(z14 * z14, axis=0, keepdims=True)], axis=1)
    st_ref[...] = jnp.concatenate([s, ss], axis=0).reshape(1, 2, Cmid + b0 + b3)


def _mid_kernel(z_ref, sc_ref, sh_ref, w2_ref, b2_ref, w3_ref, b3_ref,
                y2_ref, y3_ref, st_ref, *, H, W, Cm2, Cm3, C2o, C3o):
    """BN(stage1 mid channels, precomputed affine) -> fused 3x3 AND 5x5 convs (+bias).

    Per-tap accumulation: KH*KW matmuls of (Nb*H*W, Cm) @ (Cm, Cout); zero halo in
    vregs.  Emits raw conv outputs + per-block BN partial stats for both branches.
    """
    Nb = z_ref.shape[0]
    a = z_ref[...] * sc_ref[...] + sh_ref[...]     # normalized previous layer

    def conv(a_br, w_ref, b_ref, KH, KW, Cm, Cout):
        ph, pw = (KH - 1) // 2, (KW - 1) // 2
        ap = _zero_pad_hw(a_br, ph, pw)
        acc = jnp.zeros((Nb * H * W, Cout), jnp.float32)
        for kh in range(KH):
            for kw in range(KW):
                win = ap[:, kh:kh + H, kw:kw + W, :].reshape(Nb * H * W, Cm)
                acc = acc + jnp.dot(win, w_ref[kh * KW + kw],
                                    preferred_element_type=jnp.float32)
        return acc + b_ref[...]

    y2 = conv(a[..., :Cm2], w2_ref, b2_ref, 3, 3, Cm2, C2o)
    y3 = conv(a[..., Cm2:], w3_ref, b3_ref, 5, 5, Cm3, C3o)

    y2_ref[...] = y2.reshape(Nb, H, W, C2o)
    y3_ref[...] = y3.reshape(Nb, H, W, C3o)

    s = jnp.concatenate([jnp.sum(y2, axis=0, keepdims=True),
                         jnp.sum(y3, axis=0, keepdims=True)], axis=1)
    ss = jnp.concatenate([jnp.sum(y2 * y2, axis=0, keepdims=True),
                          jnp.sum(y3 * y3, axis=0, keepdims=True)], axis=1)
    st_ref[...] = jnp.concatenate([s, ss], axis=0).reshape(1, 2, C2o + C3o)


def _assemble_kernel(z14_ref, y2_ref, y3_ref, sc_ref, sh_ref, o_ref,
                     *, b0, b1o, b2o, b3):
    """Apply per-channel BN affine per branch, writing directly into output slices."""
    sc = sc_ref[...]
    sh = sh_ref[...]
    z14 = z14_ref[...]
    c1 = b0
    c2 = b0 + b1o
    c3 = b0 + b1o + b2o
    c4 = c3 + b3
    o_ref[:, :, :, 0:c1] = z14[..., 0:b0] * sc[:, 0:c1] + sh[:, 0:c1]
    o_ref[:, :, :, c1:c2] = y2_ref[...] * sc[:, c1:c2] + sh[:, c1:c2]
    o_ref[:, :, :, c2:c3] = y3_ref[...] * sc[:, c2:c3] + sh[:, c2:c3]
    o_ref[:, :, :, c3:c4] = z14[..., b0:] * sc[:, c3:c4] + sh[:, c3:c4]


# -------------------- pallas_call wrappers --------------------

def _compiler_params():
    # Explicit VMEM limit (v5e default scoped VMEM is only 16 MiB); batch axis parallel
    # so megacore (v7x) can shard grid steps across the two TensorCores.
    return pltpu.CompilerParams(dimension_semantics=("parallel",),
                                vmem_limit_bytes=32 * 1024 * 1024)


def _pick_batch_block(N, per_image_bytes, budget_bytes=8 << 20):
    """Largest per-step image count that fits the VMEM budget, keeping >=2 grid steps."""
    nb = int(max(1, min(N, budget_bytes // max(per_image_bytes, 1))))
    if N >= 2:
        nb = max(1, min(nb, N // 2))   # >=2 steps so v7x can use both TensorCores
    while N % nb:
        nb -= 1
    return nb


def _stage1(x, WX, BX, W4, B4, *, Nb, Cmid, b0, b3):
    N, H, W, Cin = x.shape
    C_A = Cmid + b0 + b3
    grid = (N // Nb,)
    kernel = functools.partial(_stage1_kernel, H=H, W=W, Cin=Cin,
                               Cmid=Cmid, b0=b0, b3=b3)
    return pl.pallas_call(
        kernel,
        grid=grid,
        out_shape=(jax.ShapeDtypeStruct((N, H, W, Cmid), jnp.float32),
                   jax.ShapeDtypeStruct((N, H, W, b0 + b3), jnp.float32),
                   jax.ShapeDtypeStruct((grid[0], 2, C_A), jnp.float32)),
        in_specs=[
            pl.BlockSpec((Nb, H, W, Cin), lambda i: (i, 0, 0, 0)),
            pl.BlockSpec(WX.shape, lambda i: (0, 0)),
            pl.BlockSpec(BX.shape, lambda i: (0, 0)),
            pl.BlockSpec(W4.shape, lambda i: (0, 0)),
            pl.BlockSpec(B4.shape, lambda i: (0, 0)),
        ],
        out_specs=(
            pl.BlockSpec((Nb, H, W, Cmid), lambda i: (i, 0, 0, 0)),
            pl.BlockSpec((Nb, H, W, b0 + b3), lambda i: (i, 0, 0, 0)),
            pl.BlockSpec((1, 2, C_A), lambda i: (i, 0, 0)),
        ),
        compiler_params=_compiler_params(),
    )(x, WX, BX, W4, B4)


def _mid(zmid, scale, shift, W2, B2, W3, B3, *, Nb, Cm2, Cm3):
    N, H, W, Cmid = zmid.shape
    C2o = W2.shape[-1]
    C3o = W3.shape[-1]
    grid = (N // Nb,)
    kernel = functools.partial(_mid_kernel, H=H, W=W, Cm2=Cm2, Cm3=Cm3,
                               C2o=C2o, C3o=C3o)
    return pl.pallas_call(
        kernel,
        grid=grid,
        out_shape=(jax.ShapeDtypeStruct((N, H, W, C2o), jnp.float32),
                   jax.ShapeDtypeStruct((N, H, W, C3o), jnp.float32),
                   jax.ShapeDtypeStruct((grid[0], 2, C2o + C3o), jnp.float32)),
        in_specs=[
            pl.BlockSpec((Nb, H, W, Cmid), lambda i: (i, 0, 0, 0)),
            pl.BlockSpec(scale.shape, lambda i: (0, 0)),
            pl.BlockSpec(shift.shape, lambda i: (0, 0)),
            pl.BlockSpec(W2.shape, lambda i: (0, 0, 0)),
            pl.BlockSpec(B2.shape, lambda i: (0, 0)),
            pl.BlockSpec(W3.shape, lambda i: (0, 0, 0)),
            pl.BlockSpec(B3.shape, lambda i: (0, 0)),
        ],
        out_specs=(
            pl.BlockSpec((Nb, H, W, C2o), lambda i: (i, 0, 0, 0)),
            pl.BlockSpec((Nb, H, W, C3o), lambda i: (i, 0, 0, 0)),
            pl.BlockSpec((1, 2, C2o + C3o), lambda i: (i, 0, 0)),
        ),
        compiler_params=_compiler_params(),
    )(zmid, scale, shift, W2, B2, W3, B3)


def _assemble(z14, y2, y3, scale_out, shift_out, *, Nb, b0, b3):
    N, H, W, _ = z14.shape
    b1o = y2.shape[-1]
    b2o = y3.shape[-1]
    C_OUT = b0 + b1o + b2o + b3
    grid = (N // Nb,)
    kernel = functools.partial(_assemble_kernel, b0=b0, b1o=b1o, b2o=b2o, b3=b3)
    return pl.pallas_call(
        kernel,
        grid=grid,
        out_shape=jax.ShapeDtypeStruct((N, H, W, C_OUT), jnp.float32),
        in_specs=[
            pl.BlockSpec((Nb, H, W, b0 + b3), lambda i: (i, 0, 0, 0)),
            pl.BlockSpec((Nb, H, W, b1o), lambda i: (i, 0, 0, 0)),
            pl.BlockSpec((Nb, H, W, b2o), lambda i: (i, 0, 0, 0)),
            pl.BlockSpec(scale_out.shape, lambda i: (0, 0)),
            pl.BlockSpec(shift_out.shape, lambda i: (0, 0)),
        ],
        out_specs=pl.BlockSpec((Nb, H, W, C_OUT), lambda i: (i, 0, 0, 0)),
        compiler_params=_compiler_params(),
    )(z14, y2, y3, scale_out, shift_out)


# -------------------- forward pass --------------------

def _bn_affine(stats, gamma, beta, count):
    """Combine per-block (sum, sumsq) partials -> per-channel scale/shift (tiny).

    Note: single-pass E[x^2]-E[x]^2 variance in f32 (matches test tolerance; could be
    cancellation-prone for very large activation magnitudes).
    """
    s = jnp.sum(stats[:, 0, :], axis=0)
    ss = jnp.sum(stats[:, 1, :], axis=0)
    mean = s / count
    var = ss / count - mean * mean          # biased variance (BN training mode)
    scale = gamma * lax.rsqrt(var + EPS)
    shift = beta - mean * scale
    return scale, shift


def inception_v1_forward(x_nchw, params):
    # TODO(synk): fold the NCHW<->NHWC relayouts into the first/last kernels.
    x = jnp.transpose(x_nchw, (0, 2, 3, 1)).astype(jnp.float32)   # NCHW -> NHWC
    N, H, W, Cin = x.shape

    (p1,) = params['branch1']
    p2a, p2b = params['branch2']
    p3a, p3b = params['branch3']
    (p4,) = params['branch4']

    b0 = p1['w'].shape[0]
    Cm2, b1o = p2a['w'].shape[0], p2b['w'].shape[0]
    Cm3, b2o = p3a['w'].shape[0], p3b['w'].shape[0]
    b3 = p4['w'].shape[0]
    Cmid = Cm2 + Cm3
    C_A = Cmid + b0 + b3
    C_OUT = b0 + b1o + b2o + b3
    count = N * H * W

    # Batch blocking: size the per-step tiles against a conservative VMEM budget.
    per_img = 4 * H * W * (Cin + C_A + b1o + b2o + C_OUT) * 4
    Nb = _pick_batch_block(N, per_img)

    def w1x1(p):                                    # (Cout,Cin,1,1) -> (Cin,Cout)
        return p['w'].reshape(p['w'].shape[0], -1).T

    def w_taps(p, KH, KW):                          # (Cout,Cin,KH,KW) -> (KH*KW,Cin,Cout)
        cout, cin = p['w'].shape[0], p['w'].shape[1]
        return jnp.transpose(p['w'], (2, 3, 1, 0)).reshape(KH * KW, cin, cout)

    # Fused 1x1 weights for the convs reading x. Channel order: branch2a|branch3a|branch1.
    WX = jnp.concatenate([w1x1(p2a), w1x1(p3a), w1x1(p1)], axis=-1)
    BX = jnp.concatenate([p2a['b'], p3a['b'], p1['b']]).reshape(1, Cmid + b0)
    W4 = w1x1(p4)
    B4 = p4['b'].reshape(1, b3)

    zmid, z14, st1 = _stage1(x, WX, BX, W4, B4, Nb=Nb, Cmid=Cmid, b0=b0, b3=b3)

    # Stage-1 BN affines (stats channel order: branch2a|branch3a|branch1|branch4).
    gammaA = jnp.concatenate([p2a['gamma'], p3a['gamma'], p1['gamma'], p4['gamma']])
    betaA = jnp.concatenate([p2a['beta'], p3a['beta'], p1['beta'], p4['beta']])
    scaleA, shiftA = _bn_affine(st1, gammaA, betaA, count)

    y2, y3, st2 = _mid(zmid,
                       scaleA[:Cmid].reshape(1, Cmid), shiftA[:Cmid].reshape(1, Cmid),
                       w_taps(p2b, 3, 3), p2b['b'].reshape(1, b1o),
                       w_taps(p3b, 5, 5), p3b['b'].reshape(1, b2o),
                       Nb=Nb, Cm2=Cm2, Cm3=Cm3)

    gammaM = jnp.concatenate([p2b['gamma'], p3b['gamma']])
    betaM = jnp.concatenate([p2b['beta'], p3b['beta']])
    scaleM, shiftM = _bn_affine(st2, gammaM, betaM, count)

    # Final output channel order: branch1 | branch2 | branch3 | branch4.
    scale_out = jnp.concatenate(
        [scaleA[Cmid:Cmid + b0], scaleM, scaleA[Cmid + b0:]]).reshape(1, C_OUT)
    shift_out = jnp.concatenate(
        [shiftA[Cmid:Cmid + b0], shiftM, shiftA[Cmid + b0:]]).reshape(1, C_OUT)

    y = _assemble(z14, y2, y3, scale_out, shift_out, Nb=Nb, b0=b0, b3=b3)
    return jnp.transpose(y, (0, 3, 1, 2))                         # NHWC -> NCHW


# -------------------- parameter construction --------------------

def make_cnn_params(key, cin, cout, kh, kw):
    k1, k2, k3, k4 = jax.random.split(key, 4)
    fan_in = cin * kh * kw
    return dict(
        w=jax.random.normal(k1, (cout, cin, kh, kw), jnp.float32) * (2.0 / fan_in) ** 0.5,
        b=0.01 * jax.random.normal(k2, (cout,), jnp.float32),
        gamma=1.0 + 0.1 * jax.random.normal(k3, (cout,), jnp.float32),
        beta=0.1 * jax.random.normal(k4, (cout,), jnp.float32),
    )


def init_inception_v1(key, in_channels, branches):
    b0, (b1m, b1o), (b2m, b2o), b3 = branches
    keys = iter(jax.random.split(key, 8))
    return {
        'branch1': [make_cnn_params(next(keys), in_channels, b0, 1, 1)],
        'branch2': [make_cnn_params(next(keys), in_channels, b1m, 1, 1),
                    make_cnn_params(next(keys), b1m, b1o, 3, 3)],
        'branch3': [make_cnn_params(next(keys), in_channels, b2m, 1, 1),
                    make_cnn_params(next(keys), b2m, b2o, 5, 5)],
        'branch4': [make_cnn_params(next(keys), in_channels, b3, 1, 1)],
    }


# -------------------- pure-JAX reference (correctness check) --------------------

def _conv_bn_ref(x, p, pad=(0, 0)):
    w = jnp.transpose(p['w'], (2, 3, 1, 0))                # HWIO
    y = lax.conv_general_dilated(x, w, (1, 1), ((pad[0], pad[0]), (pad[1], pad[1])),
                                 dimension_numbers=('NHWC', 'HWIO', 'NHWC'))
    y = y + p['b']
    mean = jnp.mean(y, axis=(0, 1, 2), keepdims=True)
    var = jnp.mean((y - mean) ** 2, axis=(0, 1, 2), keepdims=True)
    return (y - mean) * lax.rsqrt(var + EPS) * p['gamma'] + p['beta']


def _inception_ref(x_nchw, params):
    x = jnp.transpose(x_nchw, (0, 2, 3, 1))
    y1 = _conv_bn_ref(x, params['branch1'][0])
    y2 = _conv_bn_ref(_conv_bn_ref(x, params['branch2'][0]), params['branch2'][1], pad=(1, 1))
    y3 = _conv_bn_ref(_conv_bn_ref(x, params['branch3'][0]), params['branch3'][1], pad=(2, 2))
    xp = lax.reduce_window(x, -jnp.inf, lax.max, (1, 3, 3, 1), (1, 1, 1, 1),
                           ((0, 0), (1, 1), (1, 1), (0, 0)))
    y4 = _conv_bn_ref(xp, params['branch4'][0])
    y = jnp.concatenate([y1, y2, y3, y4], axis=-1)
    return jnp.transpose(y, (0, 3, 1, 2))


# -------------------- main --------------------

if __name__ == "__main__":
    key = jax.random.PRNGKey(0)
    k_x, k_p = jax.random.split(key)

    in_channels = 4
    branches = (8, (8, 8), (8, 8), 8)                       # -> 32 output channels
    x = jax.random.normal(k_x, (2, in_channels, 16, 16), jnp.float32)  # NCHW

    params = init_inception_v1(k_p, in_channels, branches)

    fwd = jax.jit(inception_v1_forward)
    out = jax.block_until_ready(fwd(x, params))
    ref = jax.block_until_ready(_inception_ref(x, params))

    assert out.shape == (2, 32, 16, 16), out.shape
    max_err = float(jnp.max(jnp.abs(out - ref)))
    assert jnp.allclose(out, ref, rtol=1e-4, atol=1e-4), max_err
    print("KERNEL_OK")
</pallas_src>

<mosaic_0001>
module attributes {stable_mosaic.version = 11 : i64} {
  func.func @_stage1_kernel(%arg0: i32, %arg1: memref<1x16x16x4xf32, #tpu.memory_space<vmem>>, %arg2: memref<4x24xf32, #tpu.memory_space<vmem>>, %arg3: memref<1x24xf32, #tpu.memory_space<vmem>>, %arg4: memref<4x8xf32, #tpu.memory_space<vmem>>, %arg5: memref<1x8xf32, #tpu.memory_space<vmem>>, %arg6: memref<1x16x16x16xf32, #tpu.memory_space<vmem>>, %arg7: memref<1x16x16x16xf32, #tpu.memory_space<vmem>>, %arg8: memref<1x2x32xf32, #tpu.memory_space<vmem>>) attributes {dimension_semantics = [#tpu.dimension_semantics<parallel>], iteration_bounds = array<i64: 2>, scalar_prefetch = 0 : i64, scratch_operands = 0 : i64, tpu.core_type = #tpu.core_type<tc>, window_params = [{transform_indices = @transform_0, window_bounds = array<i64: 1, 16, 16, 4>}, {pipeline_mode = #tpu.pipeline_mode<synchronous>, transform_indices = @transform_1, window_bounds = array<i64: 4, 24>}, {pipeline_mode = #tpu.pipeline_mode<synchronous>, transform_indices = @transform_2, window_bounds = array<i64: 1, 24>}, {pipeline_mode = #tpu.pipeline_mode<synchronous>, transform_indices = @transform_3, window_bounds = array<i64: 4, 8>}, {pipeline_mode = #tpu.pipeline_mode<synchronous>, transform_indices = @transform_4, window_bounds = array<i64: 1, 8>}, {transform_indices = @transform_5, window_bounds = array<i64: 1, 16, 16, 16>}, {transform_indices = @transform_6, window_bounds = array<i64: 1, 16, 16, 16>}, {transform_indices = @transform_7, window_bounds = array<i64: 1, 2, 32>}]} {
    %c0 = arith.constant 0 : index
    %c0_0 = arith.constant 0 : index
    %c0_1 = arith.constant 0 : index
    %c0_2 = arith.constant 0 : index
    %0 = vector.load %arg1[%c0, %c0_0, %c0_1, %c0_2] : memref<1x16x16x4xf32, #tpu.memory_space<vmem>>, vector<1x16x16x4xf32>
    %1 = vector.shape_cast %0 : vector<1x16x16x4xf32> to vector<256x4xf32>
    %c0_3 = arith.constant 0 : index
    %c0_4 = arith.constant 0 : index
    %2 = vector.load %arg2[%c0_3, %c0_4] : memref<4x24xf32, #tpu.memory_space<vmem>>, vector<4x24xf32>
    %cst = arith.constant dense<0.000000e+00> : vector<256x24xf32>
    %3 = tpu.matmul %1, %2, %cst {dimension_numbers = #tpu.dot_dimension_numbers<[1], [0], [0], [1], [0, 0, 1, 1], [], []>} : vector<256x4xf32>, vector<4x24xf32>, vector<256x24xf32> -> vector<256x24xf32>
    %c0_5 = arith.constant 0 : index
    %c0_6 = arith.constant 0 : index
    %4 = vector.load %arg3[%c0_5, %c0_6] : memref<1x24xf32, #tpu.memory_space<vmem>>, vector<1x24xf32>
    %5 = vector.broadcast %4 : vector<1x24xf32> to vector<256x24xf32>
    %6 = arith.addf %3, %5 : vector<256x24xf32>
    %cst_7 = arith.constant 0xFF800000 : f32
    %7 = vector.broadcast %cst_7 : f32 to vector<1x16x1x4xf32>
    %8 = tpu.concatenate %7, %0, %7 in 2 : vector<1x16x1x4xf32>, vector<1x16x16x4xf32>, vector<1x16x1x4xf32> -> vector<1x16x18x4xf32>
    %9 = vector.extract_strided_slice %8 {offsets = [0, 0, 0, 0], sizes = [1, 16, 16, 4], strides = [1, 1, 1, 1]} : vector<1x16x18x4xf32> to vector<1x16x16x4xf32>
    %10 = vector.extract_strided_slice %8 {offsets = [0, 0, 1, 0], sizes = [1, 16, 16, 4], strides = [1, 1, 1, 1]} : vector<1x16x18x4xf32> to vector<1x16x16x4xf32>
    %11 = arith.maximumf %9, %10 : vector<1x16x16x4xf32>
    %12 = vector.extract_strided_slice %8 {offsets = [0, 0, 2, 0], sizes = [1, 16, 16, 4], strides = [1, 1, 1, 1]} : vector<1x16x18x4xf32> to vector<1x16x16x4xf32>
    %13 = arith.maximumf %11, %12 : vector<1x16x16x4xf32>
    %cst_8 = arith.constant 0xFF800000 : f32
    %14 = vector.broadcast %cst_8 : f32 to vector<1x1x16x4xf32>
    %15 = tpu.concatenate %14, %13, %14 in 1 : vector<1x1x16x4xf32>, vector<1x16x16x4xf32>, vector<1x1x16x4xf32> -> vector<1x18x16x4xf32>
    %16 = vector.extract_strided_slice %15 {offsets = [0, 0, 0, 0], sizes = [1, 16, 16, 4], strides = [1, 1, 1, 1]} : vector<1x18x16x4xf32> to vector<1x16x16x4xf32>
    %17 = vector.extract_strided_slice %15 {offsets = [0, 1, 0, 0], sizes = [1, 16, 16, 4], strides = [1, 1, 1, 1]} : vector<1x18x16x4xf32> to vector<1x16x16x4xf32>
    %18 = arith.maximumf %16, %17 : vector<1x16x16x4xf32>
    %19 = vector.extract_strided_slice %15 {offsets = [0, 2, 0, 0], sizes = [1, 16, 16, 4], strides = [1, 1, 1, 1]} : vector<1x18x16x4xf32> to vector<1x16x16x4xf32>
    %20 = arith.maximumf %18, %19 : vector<1x16x16x4xf32>
    %21 = vector.shape_cast %20 : vector<1x16x16x4xf32> to vector<256x4xf32>
    %c0_9 = arith.constant 0 : index
    %c0_10 = arith.constant 0 : index
    %22 = vector.load %arg4[%c0_9, %c0_10] : memref<4x8xf32, #tpu.memory_space<vmem>>, vector<4x8xf32>
    %cst_11 = arith.constant dense<0.000000e+00> : vector<256x8xf32>
    %23 = tpu.matmul %21, %22, %cst_11 {dimension_numbers = #tpu.dot_dimension_numbers<[1], [0], [0], [1], [0, 0, 1, 1], [], []>} : vector<256x4xf32>, vector<4x8xf32>, vector<256x8xf32> -> vector<256x8xf32>
    %c0_12 = arith.constant 0 : index
    %c0_13 = arith.constant 0 : index
    %24 = vector.load %arg5[%c0_12, %c0_13] : memref<1x8xf32, #tpu.memory_space<vmem>>, vector<1x8xf32>
    %25 = vector.broadcast %24 : vector<1x8xf32> to vector<256x8xf32>
    %26 = arith.addf %23, %25 : vector<256x8xf32>
    %27 = vector.extract_strided_slice %6 {offsets = [0, 0], sizes = [256, 16], strides = [1, 1]} : vector<256x24xf32> to vector<256x16xf32>
    %28 = vector.extract_strided_slice %6 {offsets = [0, 16], sizes = [256, 8], strides = [1, 1]} : vector<256x24xf32> to vector<256x8xf32>
    %29 = tpu.concatenate %28, %26 in 1 : vector<256x8xf32>, vector<256x8xf32> -> vector<256x16xf32>
    %30 = vector.shape_cast %27 : vector<256x16xf32> to vector<1x16x16x16xf32>
    %c0_14 = arith.constant 0 : index
    %c0_15 = arith.constant 0 : index
    %c0_16 = arith.constant 0 : index
    %c0_17 = arith.constant 0 : index
    %31 = vector.load %arg6[%c0_14, %c0_15, %c0_16, %c0_17] : memref<1x16x16x16xf32, #tpu.memory_space<vmem>>, vector<1x16x16x16xf32>
    tpu.vector_store %arg6[%c0_14, %c0_15, %c0_16, %c0_17], %30 {strides = array<i32>} : memref<1x16x16x16xf32, #tpu.memory_space<vmem>>, vector<1x16x16x16xf32>,
    %32 = vector.shape_cast %29 : vector<256x16xf32> to vector<1x16x16x16xf32>
    %c0_18 = arith.constant 0 : index
    %c0_19 = arith.constant 0 : index
    %c0_20 = arith.constant 0 : index
    %c0_21 = arith.constant 0 : index
    %33 = vector.load %arg7[%c0_18, %c0_19, %c0_20, %c0_21] : memref<1x16x16x16xf32, #tpu.memory_space<vmem>>, vector<1x16x16x16xf32>
    tpu.vector_store %arg7[%c0_18, %c0_19, %c0_20, %c0_21], %32 {strides = array<i32>} : memref<1x16x16x16xf32, #tpu.memory_space<vmem>>, vector<1x16x16x16xf32>,
    %cst_22 = arith.constant dense<0.000000e+00> : vector<16xf32>
    %34 = vector.multi_reduction <add>, %27, %cst_22 [0] : vector<256x16xf32> to vector<16xf32>
    %35 = vector.shape_cast %34 : vector<16xf32> to vector<1x16xf32>
    %cst_23 = arith.constant dense<0.000000e+00> : vector<16xf32>
    %36 = vector.multi_reduction <add>, %29, %cst_23 [0] : vector<256x16xf32> to vector<16xf32>
    %37 = vector.shape_cast %36 : vector<16xf32> to vector<1x16xf32>
    %38 = tpu.concatenate %35, %37 in 1 : vector<1x16xf32>, vector<1x16xf32> -> vector<1x32xf32>
    %39 = arith.mulf %27, %27 : vector<256x16xf32>
    %cst_24 = arith.constant dense<0.000000e+00> : vector<16xf32>
    %40 = vector.multi_reduction <add>, %39, %cst_24 [0] : vector<256x16xf32> to vector<16xf32>
    %41 = vector.shape_cast %40 : vector<16xf32> to vector<1x16xf32>
    %42 = arith.mulf %29, %29 : vector<256x16xf32>
    %cst_25 = arith.constant dense<0.000000e+00> : vector<16xf32>
    %43 = vector.multi_reduction <add>, %42, %cst_25 [0] : vector<256x16xf32> to vector<16xf32>
    %44 = vector.shape_cast %43 : vector<16xf32> to vector<1x16xf32>
    %45 = tpu.concatenate %41, %44 in 1 : vector<1x16xf32>, vector<1x16xf32> -> vector<1x32xf32>
    %46 = tpu.concatenate %38, %45 in 0 : vector<1x32xf32>, vector<1x32xf32> -> vector<2x32xf32>
    %47 = vector.shape_cast %46 : vector<2x32xf32> to vector<1x2x32xf32>
    %c0_26 = arith.constant 0 : index
    %c0_27 = arith.constant 0 : index
    %c0_28 = arith.constant 0 : index
    %48 = vector.load %arg8[%c0_26, %c0_27, %c0_28] : memref<1x2x32xf32, #tpu.memory_space<vmem>>, vector<1x2x32xf32>
    tpu.vector_store %arg8[%c0_26, %c0_27, %c0_28], %47 {strides = array<i32>} : memref<1x2x32xf32, #tpu.memory_space<vmem>>, vector<1x2x32xf32>,
    return
  }
  func.func @transform_0(%arg0: i32) -> (i32, i32, i32, i32) {
    %c0_i32 = arith.constant 0 : i32
    %c0_i32_0 = arith.constant 0 : i32
    %c0_i32_1 = arith.constant 0 : i32
    %c0_i32_2 = arith.constant 0 : i32
    return %arg0, %c0_i32, %c0_i32_0, %c0_i32_1 : i32, i32, i32, i32
  }
  func.func @transform_1(%arg0: i32) -> (i32, i32) {
    %c0_i32 = arith.constant 0 : i32
    %c0_i32_0 = arith.constant 0 : i32
    %c0_i32_1 = arith.constant 0 : i32
    return %c0_i32, %c0_i32_0 : i32, i32
  }
  func.func @transform_2(%arg0: i32) -> (i32, i32) {
    %c0_i32 = arith.constant 0 : i32
    %c0_i32_0 = arith.constant 0 : i32
    %c0_i32_1 = arith.constant 0 : i32
    return %c0_i32, %c0_i32_0 : i32, i32
  }
  func.func @transform_3(%arg0: i32) -> (i32, i32) {
    %c0_i32 = arith.constant 0 : i32
    %c0_i32_0 = arith.constant 0 : i32
    %c0_i32_1 = arith.constant 0 : i32
    return %c0_i32, %c0_i32_0 : i32, i32
  }
  func.func @transform_4(%arg0: i32) -> (i32, i32) {
    %c0_i32 = arith.constant 0 : i32
    %c0_i32_0 = arith.constant 0 : i32
    %c0_i32_1 = arith.constant 0 : i32
    return %c0_i32, %c0_i32_0 : i32, i32
  }
  func.func @transform_5(%arg0: i32) -> (i32, i32, i32, i32) {
    %c0_i32 = arith.constant 0 : i32
    %c0_i32_0 = arith.constant 0 : i32
    %c0_i32_1 = arith.constant 0 : i32
    %c0_i32_2 = arith.constant 0 : i32
    return %arg0, %c0_i32, %c0_i32_0, %c0_i32_1 : i32, i32, i32, i32
  }
  func.func @transform_6(%arg0: i32) -> (i32, i32, i32, i32) {
    %c0_i32 = arith.constant 0 : i32
    %c0_i32_0 = arith.constant 0 : i32
    %c0_i32_1 = arith.constant 0 : i32
    %c0_i32_2 = arith.constant 0 : i32
    return %arg0, %c0_i32, %c0_i32_0, %c0_i32_1 : i32, i32, i32, i32
  }
  func.func @transform_7(%arg0: i32) -> (i32, i32, i32) {
    %c0_i32 = arith.constant 0 : i32
    %c0_i32_0 = arith.constant 0 : i32
    %c0_i32_1 = arith.constant 0 : i32
    return %arg0, %c0_i32, %c0_i32_0 : i32, i32, i32
  }
}

module attributes {stable_mosaic.version = 11 : i64} {
  func.func @_mid_kernel(%arg0: i32, %arg1: memref<1x16x16x16xf32, #tpu.memory_space<vmem>>, %arg2: memref<1x16xf32, #tpu.memory_space<vmem>>, %arg3: memref<1x16xf32, #tpu.memory_space<vmem>>, %arg4: memref<9x8x8xf32, #tpu.memory_space<vmem>>, %arg5: memref<1x8xf32, #tpu.memory_space<vmem>>, %arg6: memref<25x8x8xf32, #tpu.memory_space<vmem>>, %arg7: memref<1x8xf32, #tpu.memory_space<vmem>>, %arg8: memref<1x16x16x8xf32, #tpu.memory_space<vmem>>, %arg9: memref<1x16x16x8xf32, #tpu.memory_space<vmem>>, %arg10: memref<1x2x16xf32, #tpu.memory_space<vmem>>) attributes {dimension_semantics = [#tpu.dimension_semantics<parallel>], iteration_bounds = array<i64: 2>, scalar_prefetch = 0 : i64, scratch_operands = 0 : i64, tpu.core_type = #tpu.core_type<tc>, window_params = [{transform_indices = @transform_0, window_bounds = array<i64: 1, 16, 16, 16>}, {pipeline_mode = #tpu.pipeline_mode<synchronous>, transform_indices = @transform_1, window_bounds = array<i64: 1, 16>}, {pipeline_mode = #tpu.pipeline_mode<synchronous>, transform_indices = @transform_2, window_bounds = array<i64: 1, 16>}, {pipeline_mode = #tpu.pipeline_mode<synchronous>, transform_indices = @transform_3, window_bounds = array<i64: 9, 8, 8>}, {pipeline_mode = #tpu.pipeline_mode<synchronous>, transform_indices = @transform_4, window_bounds = array<i64: 1, 8>}, {pipeline_mode = #tpu.pipeline_mode<synchronous>, transform_indices = @transform_5, window_bounds = array<i64: 25, 8, 8>}, {pipeline_mode = #tpu.pipeline_mode<synchronous>, transform_indices = @transform_6, window_bounds = array<i64: 1, 8>}, {transform_indices = @transform_7, window_bounds = array<i64: 1, 16, 16, 8>}, {transform_indices = @transform_8, window_bounds = array<i64: 1, 16, 16, 8>}, {transform_indices = @transform_9, window_bounds = array<i64: 1, 2, 16>}]} {
    %c0 = arith.constant 0 : index
    %c0_0 = arith.constant 0 : index
    %c0_1 = arith.constant 0 : index
    %c0_2 = arith.constant 0 : index
    %0 = vector.load %arg1[%c0, %c0_0, %c0_1, %c0_2] : memref<1x16x16x16xf32, #tpu.memory_space<vmem>>, vector<1x16x16x16xf32>
    %c0_3 = arith.constant 0 : index
    %c0_4 = arith.constant 0 : index
    %1 = vector.load %arg2[%c0_3, %c0_4] : memref<1x16xf32, #tpu.memory_space<vmem>>, vector<1x16xf32>
    %2 = vector.shape_cast %1 : vector<1x16xf32> to vector<1x1x1x16xf32>
    %3 = vector.broadcast %2 : vector<1x1x1x16xf32> to vector<1x16x16x16xf32>
    %4 = arith.mulf %0, %3 : vector<1x16x16x16xf32>
    %c0_5 = arith.constant 0 : index
    %c0_6 = arith.constant 0 : index
    %5 = vector.load %arg3[%c0_5, %c0_6] : memref<1x16xf32, #tpu.memory_space<vmem>>, vector<1x16xf32>
    %6 = vector.shape_cast %5 : vector<1x16xf32> to vector<1x1x1x16xf32>
    %7 = vector.broadcast %6 : vector<1x1x1x16xf32> to vector<1x16x16x16xf32>
    %8 = arith.addf %4, %7 : vector<1x16x16x16xf32>
    %9 = vector.extract_strided_slice %8 {offsets = [0, 0, 0, 0], sizes = [1, 16, 16, 8], strides = [1, 1, 1, 1]} : vector<1x16x16x16xf32> to vector<1x16x16x8xf32>
    %cst = arith.constant 0.000000e+00 : f32
    %10 = vector.broadcast %cst : f32 to vector<1x16x1x8xf32>
    %11 = tpu.concatenate %10, %9, %10 in 2 : vector<1x16x1x8xf32>, vector<1x16x16x8xf32>, vector<1x16x1x8xf32> -> vector<1x16x18x8xf32>
    %cst_7 = arith.constant 0.000000e+00 : f32
    %12 = vector.broadcast %cst_7 : f32 to vector<1x1x18x8xf32>
    %13 = tpu.concatenate %12, %11, %12 in 1 : vector<1x1x18x8xf32>, vector<1x16x18x8xf32>, vector<1x1x18x8xf32> -> vector<1x18x18x8xf32>
    %cst_8 = arith.constant 0.000000e+00 : f32
    %14 = vector.broadcast %cst_8 : f32 to vector<256x8xf32>
    %15 = vector.extract_strided_slice %13 {offsets = [0, 0, 0, 0], sizes = [1, 16, 16, 8], strides = [1, 1, 1, 1]} : vector<1x18x18x8xf32> to vector<1x16x16x8xf32>
    %16 = vector.shape_cast %15 : vector<1x16x16x8xf32> to vector<256x8xf32>
    %c0_9 = arith.constant 0 : index
    %c0_10 = arith.constant 0 : index
    %c0_11 = arith.constant 0 : index
    %17 = vector.load %arg4[%c0_9, %c0_10, %c0_11] : memref<9x8x8xf32, #tpu.memory_space<vmem>>, vector<1x8x8xf32>
    %18 = vector.shape_cast %17 : vector<1x8x8xf32> to vector<8x8xf32>
    %cst_12 = arith.constant dense<0.000000e+00> : vector<256x8xf32>
    %19 = tpu.matmul %16, %18, %cst_12 {dimension_numbers = #tpu.dot_dimension_numbers<[1], [0], [0], [1], [0, 0, 1, 1], [], []>} : vector<256x8xf32>, vector<8x8xf32>, vector<256x8xf32> -> vector<256x8xf32>
    %20 = arith.addf %14, %19 : vector<256x8xf32>
    %21 = vector.extract_strided_slice %13 {offsets = [0, 0, 1, 0], sizes = [1, 16, 16, 8], strides = [1, 1, 1, 1]} : vector<1x18x18x8xf32> to vector<1x16x16x8xf32>
    %22 = vector.shape_cast %21 : vector<1x16x16x8xf32> to vector<256x8xf32>
    %c1 = arith.constant 1 : index
    %c0_13 = arith.constant 0 : index
    %c0_14 = arith.constant 0 : index
    %23 = vector.load %arg4[%c1, %c0_13, %c0_14] : memref<9x8x8xf32, #tpu.memory_space<vmem>>, vector<1x8x8xf32>
    %24 = vector.shape_cast %23 : vector<1x8x8xf32> to vector<8x8xf32>
    %cst_15 = arith.constant dense<0.000000e+00> : vector<256x8xf32>
    %25 = tpu.matmul %22, %24, %cst_15 {dimension_numbers = #tpu.dot_dimension_numbers<[1], [0], [0], [1], [0, 0, 1, 1], [], []>} : vector<256x8xf32>, vector<8x8xf32>, vector<256x8xf32> -> vector<256x8xf32>
    %26 = arith.addf %20, %25 : vector<256x8xf32>
    %27 = vector.extract_strided_slice %13 {offsets = [0, 0, 2, 0], sizes = [1, 16, 16, 8], strides = [1, 1, 1, 1]} : vector<1x18x18x8xf32> to vector<1x16x16x8xf32>
    %28 = vector.shape_cast %27 : vector<1x16x16x8xf32> to vector<256x8xf32>
    %c2 = arith.constant 2 : index
    %c0_16 = arith.constant 0 : index
    %c0_17 = arith.constant 0 : index
    %29 = vector.load %arg4[%c2, %c0_16, %c0_17] : memref<9x8x8xf32, #tpu.memory_space<vmem>>, vector<1x8x8xf32>
    %30 = vector.shape_cast %29 : vector<1x8x8xf32> to vector<8x8xf32>
    %cst_18 = arith.constant dense<0.000000e+00> : vector<256x8xf32>
    %31 = tpu.matmul %28, %30, %cst_18 {dimension_numbers = #tpu.dot_dimension_numbers<[1], [0], [0], [1], [0, 0, 1, 1], [], []>} : vector<256x8xf32>, vector<8x8xf32>, vector<256x8xf32> -> vector<256x8xf32>
    %32 = arith.addf %26, %31 : vector<256x8xf32>
    %33 = vector.extract_strided_slice %13 {offsets = [0, 1, 0, 0], sizes = [1, 16, 16, 8], strides = [1, 1, 1, 1]} : vector<1x18x18x8xf32> to vector<1x16x16x8xf32>
    %34 = vector.shape_cast %33 : vector<1x16x16x8xf32> to vector<256x8xf32>
    %c3 = arith.constant 3 : index
    %c0_19 = arith.constant 0 : index
    %c0_20 = arith.constant 0 : index
    %35 = vector.load %arg4[%c3, %c0_19, %c0_20] : memref<9x8x8xf32, #tpu.memory_space<vmem>>, vector<1x8x8xf32>
    %36 = vector.shape_cast %35 : vector<1x8x8xf32> to vector<8x8xf32>
    %cst_21 = arith.constant dense<0.000000e+00> : vector<256x8xf32>
    %37 = tpu.matmul %34, %36, %cst_21 {dimension_numbers = #tpu.dot_dimension_numbers<[1], [0], [0], [1], [0, 0, 1, 1], [], []>} : vector<256x8xf32>, vector<8x8xf32>, vector<256x8xf32> -> vector<256x8xf32>
    %38 = arith.addf %32, %37 : vector<256x8xf32>
    %39 = vector.extract_strided_slice %13 {offsets = [0, 1, 1, 0], sizes = [1, 16, 16, 8], strides = [1, 1, 1, 1]} : vector<1x18x18x8xf32> to vector<1x16x16x8xf32>
    %40 = vector.shape_cast %39 : vector<1x16x16x8xf32> to vector<256x8xf32>
    %c4 = arith.constant 4 : index
    %c0_22 = arith.constant 0 : index
    %c0_23 = arith.constant 0 : index
    %41 = vector.load %arg4[%c4, %c0_22, %c0_23] : memref<9x8x8xf32, #tpu.memory_space<vmem>>, vector<1x8x8xf32>
    %42 = vector.shape_cast %41 : vector<1x8x8xf32> to vector<8x8xf32>
    %cst_24 = arith.constant dense<0.000000e+00> : vector<256x8xf32>
    %43 = tpu.matmul %40, %42, %cst_24 {dimension_numbers = #tpu.dot_dimension_numbers<[1], [0], [0], [1], [0, 0, 1, 1], [], []>} : vector<256x8xf32>, vector<8x8xf32>, vector<256x8xf32> -> vector<256x8xf32>
    %44 = arith.addf %38, %43 : vector<256x8xf32>
    %45 = vector.extract_strided_slice %13 {offsets = [0, 1, 2, 0], sizes = [1, 16, 16, 8], strides = [1, 1, 1, 1]} : vector<1x18x18x8xf32> to vector<1x16x16x8xf32>
    %46 = vector.shape_cast %45 : vector<1x16x16x8xf32> to vector<256x8xf32>
    %c5 = arith.constant 5 : index
    %c0_25 = arith.constant 0 : index
    %c0_26 = arith.constant 0 : index
    %47 = vector.load %arg4[%c5, %c0_25, %c0_26] : memref<9x8x8xf32, #tpu.memory_space<vmem>>, vector<1x8x8xf32>
    %48 = vector.shape_cast %47 : vector<1x8x8xf32> to vector<8x8xf32>
    %cst_27 = arith.constant dense<0.000000e+00> : vector<256x8xf32>
    %49 = tpu.matmul %46, %48, %cst_27 {dimension_numbers = #tpu.dot_dimension_numbers<[1], [0], [0], [1], [0, 0, 1, 1], [], []>} : vector<256x8xf32>, vector<8x8xf32>, vector<256x8xf32> -> vector<256x8xf32>
    %50 = arith.addf %44, %49 : vector<256x8xf32>
    %51 = vector.extract_strided_slice %13 {offsets = [0, 2, 0, 0], sizes = [1, 16, 16, 8], strides = [1, 1, 1, 1]} : vector<1x18x18x8xf32> to vector<1x16x16x8xf32>
    %52 = vector.shape_cast %51 : vector<1x16x16x8xf32> to vector<256x8xf32>
    %c6 = arith.constant 6 : index
    %c0_28 = arith.constant 0 : index
    %c0_29 = arith.constant 0 : index
    %53 = vector.load %arg4[%c6, %c0_28, %c0_29] : memref<9x8x8xf32, #tpu.memory_space<vmem>>, vector<1x8x8xf32>
    %54 = vector.shape_cast %53 : vector<1x8x8xf32> to vector<8x8xf32>
    %cst_30 = arith.constant dense<0.000000e+00> : vector<256x8xf32>
    %55 = tpu.matmul %52, %54, %cst_30 {dimension_numbers = #tpu.dot_dimension_numbers<[1], [0], [0], [1], [0, 0, 1, 1], [], []>} : vector<256x8xf32>, vector<8x8xf32>, vector<256x8xf32> -> vector<256x8xf32>
    %56 = arith.addf %50, %55 : vector<256x8xf32>
    %57 = vector.extract_strided_slice %13 {offsets = [0, 2, 1, 0], sizes = [1, 16, 16, 8], strides = [1, 1, 1, 1]} : vector<1x18x18x8xf32> to vector<1x16x16x8xf32>
    %58 = vector.shape_cast %57 : vector<1x16x16x8xf32> to vector<256x8xf32>
    %c7 = arith.constant 7 : index
    %c0_31 = arith.constant 0 : index
    %c0_32 = arith.constant 0 : index
    %59 = vector.load %arg4[%c7, %c0_31, %c0_32] : memref<9x8x8xf32, #tpu.memory_space<vmem>>, vector<1x8x8xf32>
    %60 = vector.shape_cast %59 : vector<1x8x8xf32> to vector<8x8xf32>
    %cst_33 = arith.constant dense<0.000000e+00> : vector<256x8xf32>
    %61 = tpu.matmul %58, %60, %cst_33 {dimension_numbers = #tpu.dot_dimension_numbers<[1], [0], [0], [1], [0, 0, 1, 1], [], []>} : vector<256x8xf32>, vector<8x8xf32>, vector<256x8xf32> -> vector<256x8xf32>
    %62 = arith.addf %56, %61 : vector<256x8xf32>
    %63 = vector.extract_strided_slice %13 {offsets = [0, 2, 2, 0], sizes = [1, 16, 16, 8], strides = [1, 1, 1, 1]} : vector<1x18x18x8xf32> to vector<1x16x16x8xf32>
    %64 = vector.shape_cast %63 : vector<1x16x16x8xf32> to vector<256x8xf32>
    %c8 = arith.constant 8 : index
    %c0_34 = arith.constant 0 : index
    %c0_35 = arith.constant 0 : index
    %65 = vector.load %arg4[%c8, %c0_34, %c0_35] : memref<9x8x8xf32, #tpu.memory_space<vmem>>, vector<1x8x8xf32>
    %66 = vector.shape_cast %65 : vector<1x8x8xf32> to vector<8x8xf32>
    %cst_36 = arith.constant dense<0.000000e+00> : vector<256x8xf32>
    %67 = tpu.matmul %64, %66, %cst_36 {dimension_numbers = #tpu.dot_dimension_numbers<[1], [0], [0], [1], [0, 0, 1, 1], [], []>} : vector<256x8xf32>, vector<8x8xf32>, vector<256x8xf32> -> vector<256x8xf32>
    %68 = arith.addf %62, %67 : vector<256x8xf32>
    %c0_37 = arith.constant 0 : index
    %c0_38 = arith.constant 0 : index
    %69 = vector.load %arg5[%c0_37, %c0_38] : memref<1x8xf32, #tpu.memory_space<vmem>>, vector<1x8xf32>
    %70 = vector.broadcast %69 : vector<1x8xf32> to vector<256x8xf32>
    %71 = arith.addf %68, %70 : vector<256x8xf32>
    %72 = vector.extract_strided_slice %8 {offsets = [0, 0, 0, 8], sizes = [1, 16, 16, 8], strides = [1, 1, 1, 1]} : vector<1x16x16x16xf32> to vector<1x16x16x8xf32>
    %cst_39 = arith.constant 0.000000e+00 : f32
    %73 = vector.broadcast %cst_39 : f32 to vector<1x16x2x8xf32>
    %74 = tpu.concatenate %73, %72, %73 in 2 : vector<1x16x2x8xf32>, vector<1x16x16x8xf32>, vector<1x16x2x8xf32> -> vector<1x16x20x8xf32>
    %cst_40 = arith.constant 0.000000e+00 : f32
    %75 = vector.broadcast %cst_40 : f32 to vector<1x2x20x8xf32>
    %76 = tpu.concatenate %75, %74, %75 in 1 : vector<1x2x20x8xf32>, vector<1x16x20x8xf32>, vector<1x2x20x8xf32> -> vector<1x20x20x8xf32>
    %cst_41 = arith.constant 0.000000e+00 : f32
    %77 = vector.broadcast %cst_41 : f32 to vector<256x8xf32>
    %78 = vector.extract_strided_slice %76 {offsets = [0, 0, 0, 0], sizes = [1, 16, 16, 8], strides = [1, 1, 1, 1]} : vector<1x20x20x8xf32> to vector<1x16x16x8xf32>
    %79 = vector.shape_cast %78 : vector<1x16x16x8xf32> to vector<256x8xf32>
    %c0_42 = arith.constant 0 : index
    %c0_43 = arith.constant 0 : index
    %c0_44 = arith.constant 0 : index
    %80 = vector.load %arg6[%c0_42, %c0_43, %c0_44] : memref<25x8x8xf32, #tpu.memory_space<vmem>>, vector<1x8x8xf32>
    %81 = vector.shape_cast %80 : vector<1x8x8xf32> to vector<8x8xf32>
    %cst_45 = arith.constant dense<0.000000e+00> : vector<256x8xf32>
    %82 = tpu.matmul %79, %81, %cst_45 {dimension_numbers = #tpu.dot_dimension_numbers<[1], [0], [0], [1], [0, 0, 1, 1], [], []>} : vector<256x8xf32>, vector<8x8xf32>, vector<256x8xf32> -> vector<256x8xf32>
    %83 = arith.addf %77, %82 : vector<256x8xf32>
    %84 = vector.extract_strided_slice %76 {offsets = [0, 0, 1, 0], sizes = [1, 16, 16, 8], strides = [1, 1, 1, 1]} : vector<1x20x20x8xf32> to vector<1x16x16x8xf32>
    %85 = vector.shape_cast %84 : vector<1x16x16x8xf32> to vector<256x8xf32>
    %c1_46 = arith.constant 1 : index
    %c0_47 = arith.constant 0 : index
    %c0_48 = arith.constant 0 : index
    %86 = vector.load %arg6[%c1_46, %c0_47, %c0_48] : memref<25x8x8xf32, #tpu.memory_space<vmem>>, vector<1x8x8xf32>
    %87 = vector.shape_cast %86 : vector<1x8x8xf32> to vector<8x8xf32>
    %cst_49 = arith.constant dense<0.000000e+00> : vector<256x8xf32>
    %88 = tpu.matmul %85, %87, %cst_49 {dimension_numbers = #tpu.dot_dimension_numbers<[1], [0], [0], [1], [0, 0, 1, 1], [], []>} : vector<256x8xf32>, vector<8x8xf32>, vector<256x8xf32> -> vector<256x8xf32>
    %89 = arith.addf %83, %88 : vector<256x8xf32>
    %90 = vector.extract_strided_slice %76 {offsets = [0, 0, 2, 0], sizes = [1, 16, 16, 8], strides = [1, 1, 1, 1]} : vector<1x20x20x8xf32> to vector<1x16x16x8xf32>
    %91 = vector.shape_cast %90 : vector<1x16x16x8xf32> to vector<256x8xf32>
    %c2_50 = arith.constant 2 : index
    %c0_51 = arith.constant 0 : index
    %c0_52 = arith.constant 0 : index
    %92 = vector.load %arg6[%c2_50, %c0_51, %c0_52] : memref<25x8x8xf32, #tpu.memory_space<vmem>>, vector<1x8x8xf32>
    %93 = vector.shape_cast %92 : vector<1x8x8xf32> to vector<8x8xf32>
    %cst_53 = arith.constant dense<0.000000e+00> : vector<256x8xf32>
    %94 = tpu.matmul %91, %93, %cst_53 {dimension_numbers = #tpu.dot_dimension_numbers<[1], [0], [0], [1], [0, 0, 1, 1], [], []>} : vector<256x8xf32>, vector<8x8xf32>, vector<256x8xf32> -> vector<256x8xf32>
    %95 = arith.addf %89, %94 : vector<256x8xf32>
    %96 = vector.extract_strided_slice %76 {offsets = [0, 0, 3, 0], sizes = [1, 16, 16, 8], strides = [1, 1, 1, 1]} : vector<1x20x20x8xf32> to vector<1x16x16x8xf32>
    %97 = vector.shape_cast %96 : vector<1x16x16x8xf32> to vector<256x8xf32>
    %c3_54 = arith.constant 3 : index
    %c0_55 = arith.constant 0 : index
    %c0_56 = arith.constant 0 : index
    %98 = vector.load %arg6[%c3_54, %c0_55, %c0_56] : memref<25x8x8xf32, #tpu.memory_space<vmem>>, vector<1x8x8xf32>
    %99 = vector.shape_cast %98 : vector<1x8x8xf32> to vector<8x8xf32>
    %cst_57 = arith.constant dense<0.000000e+00> : vector<256x8xf32>
    %100 = tpu.matmul %97, %99, %cst_57 {dimension_numbers = #tpu.dot_dimension_numbers<[1], [0], [0], [1], [0, 0, 1, 1], [], []>} : vector<256x8xf32>, vector<8x8xf32>, vector<256x8xf32> -> vector<256x8xf32>
    %101 = arith.addf %95, %100 : vector<256x8xf32>
    %102 = vector.extract_strided_slice %76 {offsets = [0, 0, 4, 0], sizes = [1, 16, 16, 8], strides = [1, 1, 1, 1]} : vector<1x20x20x8xf32> to vector<1x16x16x8xf32>
    %103 = vector.shape_cast %102 : vector<1x16x16x8xf32> to vector<256x8xf32>
    %c4_58 = arith.constant 4 : index
    %c0_59 = arith.constant 0 : index
    %c0_60 = arith.constant 0 : index
    %104 = vector.load %arg6[%c4_58, %c0_59, %c0_60] : memref<25x8x8xf32, #tpu.memory_space<vmem>>, vector<1x8x8xf32>
    %105 = vector.shape_cast %104 : vector<1x8x8xf32> to vector<8x8xf32>
    %cst_61 = arith.constant dense<0.000000e+00> : vector<256x8xf32>
    %106 = tpu.matmul %103, %105, %cst_61 {dimension_numbers = #tpu.dot_dimension_numbers<[1], [0], [0], [1], [0, 0, 1, 1], [], []>} : vector<256x8xf32>, vector<8x8xf32>, vector<256x8xf32> -> vector<256x8xf32>
    %107 = arith.addf %101, %106 : vector<256x8xf32>
    %108 = vector.extract_strided_slice %76 {offsets = [0, 1, 0, 0], sizes = [1, 16, 16, 8], strides = [1, 1, 1, 1]} : vector<1x20x20x8xf32> to vector<1x16x16x8xf32>
    %109 = vector.shape_cast %108 : vector<1x16x16x8xf32> to vector<256x8xf32>
    %c5_62 = arith.constant 5 : index
    %c0_63 = arith.constant 0 : index
    %c0_64 = arith.constant 0 : index
    %110 = vector.load %arg6[%c5_62, %c0_63, %c0_64] : memref<25x8x8xf32, #tpu.memory_space<vmem>>, vector<1x8x8xf32>
    %111 = vector.shape_cast %110 : vector<1x8x8xf32> to vector<8x8xf32>
    %cst_65 = arith.constant dense<0.000000e+00> : vector<256x8xf32>
    %112 = tpu.matmul %109, %111, %cst_65 {dimension_numbers = #tpu.dot_dimension_numbers<[1], [0], [0], [1], [0, 0, 1, 1], [], []>} : vector<256x8xf32>, vector<8x8xf32>, vector<256x8xf32> -> vector<256x8xf32>
    %113 = arith.addf %107, %112 : vector<256x8xf32>
    %114 = vector.extract_strided_slice %76 {offsets = [0, 1, 1, 0], sizes = [1, 16, 16, 8], strides = [1, 1, 1, 1]} : vector<1x20x20x8xf32> to vector<1x16x16x8xf32>
    %115 = vector.shape_cast %114 : vector<1x16x16x8xf32> to vector<256x8xf32>
    %c6_66 = arith.constant 6 : index
    %c0_67 = arith.constant 0 : index
    %c0_68 = arith.constant 0 : index
    %116 = vector.load %arg6[%c6_66, %c0_67, %c0_68] : memref<25x8x8xf32, #tpu.memory_space<vmem>>, vector<1x8x8xf32>
    %117 = vector.shape_cast %116 : vector<1x8x8xf32> to vector<8x8xf32>
    %cst_69 = arith.constant dense<0.000000e+00> : vector<256x8xf32>
    %118 = tpu.matmul %115, %117, %cst_69 {dimension_numbers = #tpu.dot_dimension_numbers<[1], [0], [0], [1], [0, 0, 1, 1], [], []>} : vector<256x8xf32>, vector<8x8xf32>, vector<256x8xf32> -> vector<256x8xf32>
    %119 = arith.addf %113, %118 : vector<256x8xf32>
    %120 = vector.extract_strided_slice %76 {offsets = [0, 1, 2, 0], sizes = [1, 16, 16, 8], strides = [1, 1, 1, 1]} : vector<1x20x20x8xf32> to vector<1x16x16x8xf32>
    %121 = vector.shape_cast %120 : vector<1x16x16x8xf32> to vector<256x8xf32>
    %c7_70 = arith.constant 7 : index
    %c0_71 = arith.constant 0 : index
    %c0_72 = arith.constant 0 : index
    %122 = vector.load %arg6[%c7_70, %c0_71, %c0_72] : memref<25x8x8xf32, #tpu.memory_space<vmem>>, vector<1x8x8xf32>
    %123 = vector.shape_cast %122 : vector<1x8x8xf32> to vector<8x8xf32>
    %cst_73 = arith.constant dense<0.000000e+00> : vector<256x8xf32>
    %124 = tpu.matmul %121, %123, %cst_73 {dimension_numbers = #tpu.dot_dimension_numbers<[1], [0], [0], [1], [0, 0, 1, 1], [], []>} : vector<256x8xf32>, vector<8x8xf32>, vector<256x8xf32> -> vector<256x8xf32>
    %125 = arith.addf %119, %124 : vector<256x8xf32>
    %126 = vector.extract_strided_slice %76 {offsets = [0, 1, 3, 0], sizes = [1, 16, 16, 8], strides = [1, 1, 1, 1]} : vector<1x20x20x8xf32> to vector<1x16x16x8xf32>
    %127 = vector.shape_cast %126 : vector<1x16x16x8xf32> to vector<256x8xf32>
    %c8_74 = arith.constant 8 : index
    %c0_75 = arith.constant 0 : index
    %c0_76 = arith.constant 0 : index
    %128 = vector.load %arg6[%c8_74, %c0_75, %c0_76] : memref<25x8x8xf32, #tpu.memory_space<vmem>>, vector<1x8x8xf32>
    %129 = vector.shape_cast %128 : vector<1x8x8xf32> to vector<8x8xf32>
    %cst_77 = arith.constant dense<0.000000e+00> : vector<256x8xf32>
    %130 = tpu.matmul %127, %129, %cst_77 {dimension_numbers = #tpu.dot_dimension_numbers<[1], [0], [0], [1], [0, 0, 1, 1], [], []>} : vector<256x8xf32>, vector<8x8xf32>, vector<256x8xf32> -> vector<256x8xf32>
    %131 = arith.addf %125, %130 : vector<256x8xf32>
    %132 = vector.extract_strided_slice %76 {offsets = [0, 1, 4, 0], sizes = [1, 16, 16, 8], strides = [1, 1, 1, 1]} : vector<1x20x20x8xf32> to vector<1x16x16x8xf32>
    %133 = vector.shape_cast %132 : vector<1x16x16x8xf32> to vector<256x8xf32>
    %c9 = arith.constant 9 : index
    %c0_78 = arith.constant 0 : index
    %c0_79 = arith.constant 0 : index
    %134 = vector.load %arg6[%c9, %c0_78, %c0_79] : memref<25x8x8xf32, #tpu.memory_space<vmem>>, vector<1x8x8xf32>
    %135 = vector.shape_cast %134 : vector<1x8x8xf32> to vector<8x8xf32>
    %cst_80 = arith.constant dense<0.000000e+00> : vector<256x8xf32>
    %136 = tpu.matmul %133, %135, %cst_80 {dimension_numbers = #tpu.dot_dimension_numbers<[1], [0], [0], [1], [0, 0, 1, 1], [], []>} : vector<256x8xf32>, vector<8x8xf32>, vector<256x8xf32> -> vector<256x8xf32>
    %137 = arith.addf %131, %136 : vector<256x8xf32>
    %138 = vector.extract_strided_slice %76 {offsets = [0, 2, 0, 0], sizes = [1, 16, 16, 8], strides = [1, 1, 1, 1]} : vector<1x20x20x8xf32> to vector<1x16x16x8xf32>
    %139 = vector.shape_cast %138 : vector<1x16x16x8xf32> to vector<256x8xf32>
    %c10 = arith.constant 10 : index
    %c0_81 = arith.constant 0 : index
    %c0_82 = arith.constant 0 : index
    %140 = vector.load %arg6[%c10, %c0_81, %c0_82] : memref<25x8x8xf32, #tpu.memory_space<vmem>>, vector<1x8x8xf32>
    %141 = vector.shape_cast %140 : vector<1x8x8xf32> to vector<8x8xf32>
    %cst_83 = arith.constant dense<0.000000e+00> : vector<256x8xf32>
    %142 = tpu.matmul %139, %141, %cst_83 {dimension_numbers = #tpu.dot_dimension_numbers<[1], [0], [0], [1], [0, 0, 1, 1], [], []>} : vector<256x8xf32>, vector<8x8xf32>, vector<256x8xf32> -> vector<256x8xf32>
    %143 = arith.addf %137, %142 : vector<256x8xf32>
    %144 = vector.extract_strided_slice %76 {offsets = [0, 2, 1, 0], sizes = [1, 16, 16, 8], strides = [1, 1, 1, 1]} : vector<1x20x20x8xf32> to vector<1x16x16x8xf32>
    %145 = vector.shape_cast %144 : vector<1x16x16x8xf32> to vector<256x8xf32>
    %c11 = arith.constant 11 : index
    %c0_84 = arith.constant 0 : index
    %c0_85 = arith.constant 0 : index
    %146 = vector.load %arg6[%c11, %c0_84, %c0_85] : memref<25x8x8xf32, #tpu.memory_space<vmem>>, vector<1x8x8xf32>
    %147 = vector.shape_cast %146 : vector<1x8x8xf32> to vector<8x8xf32>
    %cst_86 = arith.constant dense<0.000000e+00> : vector<256x8xf32>
    %148 = tpu.matmul %145, %147, %cst_86 {dimension_numbers = #tpu.dot_dimension_numbers<[1], [0], [0], [1], [0, 0, 1, 1], [], []>} : vector<256x8xf32>, vector<8x8xf32>, vector<256x8xf32> -> vector<256x8xf32>
    %149 = arith.addf %143, %148 : vector<256x8xf32>
    %150 = vector.extract_strided_slice %76 {offsets = [0, 2, 2, 0], sizes = [1, 16, 16, 8], strides = [1, 1, 1, 1]} : vector<1x20x20x8xf32> to vector<1x16x16x8xf32>
    %151 = vector.shape_cast %150 : vector<1x16x16x8xf32> to vector<256x8xf32>
    %c12 = arith.constant 12 : index
    %c0_87 = arith.constant 0 : index
    %c0_88 = arith.constant 0 : index
    %152 = vector.load %arg6[%c12, %c0_87, %c0_88] : memref<25x8x8xf32, #tpu.memory_space<vmem>>, vector<1x8x8xf32>
    %153 = vector.shape_cast %152 : vector<1x8x8xf32> to vector<8x8xf32>
    %cst_89 = arith.constant dense<0.000000e+00> : vector<256x8xf32>
    %154 = tpu.matmul %151, %153, %cst_89 {dimension_numbers = #tpu.dot_dimension_numbers<[1], [0], [0], [1], [0, 0, 1, 1], [], []>} : vector<256x8xf32>, vector<8x8xf32>, vector<256x8xf32> -> vector<256x8xf32>
    %155 = arith.addf %149, %154 : vector<256x8xf32>
    %156 = vector.extract_strided_slice %76 {offsets = [0, 2, 3, 0], sizes = [1, 16, 16, 8], strides = [1, 1, 1, 1]} : vector<1x20x20x8xf32> to vector<1x16x16x8xf32>
    %157 = vector.shape_cast %156 : vector<1x16x16x8xf32> to vector<256x8xf32>
    %c13 = arith.constant 13 : index
    %c0_90 = arith.constant 0 : index
    %c0_91 = arith.constant 0 : index
    %158 = vector.load %arg6[%c13, %c0_90, %c0_91] : memref<25x8x8xf32, #tpu.memory_space<vmem>>, vector<1x8x8xf32>
    %159 = vector.shape_cast %158 : vector<1x8x8xf32> to vector<8x8xf32>
    %cst_92 = arith.constant dense<0.000000e+00> : vector<256x8xf32>
    %160 = tpu.matmul %157, %159, %cst_92 {dimension_numbers = #tpu.dot_dimension_numbers<[1], [0], [0], [1], [0, 0, 1, 1], [], []>} : vector<256x8xf32>, vector<8x8xf32>, vector<256x8xf32> -> vector<256x8xf32>
    %161 = arith.addf %155, %160 : vector<256x8xf32>
    %162 = vector.extract_strided_slice %76 {offsets = [0, 2, 4, 0], sizes = [1, 16, 16, 8], strides = [1, 1, 1, 1]} : vector<1x20x20x8xf32> to vector<1x16x16x8xf32>
    %163 = vector.shape_cast %162 : vector<1x16x16x8xf32> to vector<256x8xf32>
    %c14 = arith.constant 14 : index
    %c0_93 = arith.constant 0 : index
    %c0_94 = arith.constant 0 : index
    %164 = vector.load %arg6[%c14, %c0_93, %c0_94] : memref<25x8x8xf32, #tpu.memory_space<vmem>>, vector<1x8x8xf32>
    %165 = vector.shape_cast %164 : vector<1x8x8xf32> to vector<8x8xf32>
    %cst_95 = arith.constant dense<0.000000e+00> : vector<256x8xf32>
    %166 = tpu.matmul %163, %165, %cst_95 {dimension_numbers = #tpu.dot_dimension_numbers<[1], [0], [0], [1], [0, 0, 1, 1], [], []>} : vector<256x8xf32>, vector<8x8xf32>, vector<256x8xf32> -> vector<256x8xf32>
    %167 = arith.addf %161, %166 : vector<256x8xf32>
    %168 = vector.extract_strided_slice %76 {offsets = [0, 3, 0, 0], sizes = [1, 16, 16, 8], strides = [1, 1, 1, 1]} : vector<1x20x20x8xf32> to vector<1x16x16x8xf32>
    %169 = vector.shape_cast %168 : vector<1x16x16x8xf32> to vector<256x8xf32>
    %c15 = arith.constant 15 : index
    %c0_96 = arith.constant 0 : index
    %c0_97 = arith.constant 0 : index
    %170 = vector.load %arg6[%c15, %c0_96, %c0_97] : memref<25x8x8xf32, #tpu.memory_space<vmem>>, vector<1x8x8xf32>
    %171 = vector.shape_cast %170 : vector<1x8x8xf32> to vector<8x8xf32>
    %cst_98 = arith.constant dense<0.000000e+00> : vector<256x8xf32>
    %172 = tpu.matmul %169, %171, %cst_98 {dimension_numbers = #tpu.dot_dimension_numbers<[1], [0], [0], [1], [0, 0, 1, 1], [], []>} : vector<256x8xf32>, vector<8x8xf32>, vector<256x8xf32> -> vector<256x8xf32>
    %173 = arith.addf %167, %172 : vector<256x8xf32>
    %174 = vector.extract_strided_slice %76 {offsets = [0, 3, 1, 0], sizes = [1, 16, 16, 8], strides = [1, 1, 1, 1]} : vector<1x20x20x8xf32> to vector<1x16x16x8xf32>
    %175 = vector.shape_cast %174 : vector<1x16x16x8xf32> to vector<256x8xf32>
    %c16 = arith.constant 16 : index
    %c0_99 = arith.constant 0 : index
    %c0_100 = arith.constant 0 : index
    %176 = vector.load %arg6[%c16, %c0_99, %c0_100] : memref<25x8x8xf32, #tpu.memory_space<vmem>>, vector<1x8x8xf32>
    %177 = vector.shape_cast %176 : vector<1x8x8xf32> to vector<8x8xf32>
    %cst_101 = arith.constant dense<0.000000e+00> : vector<256x8xf32>
    %178 = tpu.matmul %175, %177, %cst_101 {dimension_numbers = #tpu.dot_dimension_numbers<[1], [0], [0], [1], [0, 0, 1, 1], [], []>} : vector<256x8xf32>, vector<8x8xf32>, vector<256x8xf32> -> vector<256x8xf32>
    %179 = arith.addf %173, %178 : vector<256x8xf32>
    %180 = vector.extract_strided_slice %76 {offsets = [0, 3, 2, 0], sizes = [1, 16, 16, 8], strides = [1, 1, 1, 1]} : vector<1x20x20x8xf32> to vector<1x16x16x8xf32>
    %181 = vector.shape_cast %180 : vector<1x16x16x8xf32> to vector<256x8xf32>
    %c17 = arith.constant 17 : index
    %c0_102 = arith.constant 0 : index
    %c0_103 = arith.constant 0 : index
    %182 = vector.load %arg6[%c17, %c0_102, %c0_103] : memref<25x8x8xf32, #tpu.memory_space<vmem>>, vector<1x8x8xf32>
    %183 = vector.shape_cast %182 : vector<1x8x8xf32> to vector<8x8xf32>
    %cst_104 = arith.constant dense<0.000000e+00> : vector<256x8xf32>
    %184 = tpu.matmul %181, %183, %cst_104 {dimension_numbers = #tpu.dot_dimension_numbers<[1], [0], [0], [1], [0, 0, 1, 1], [], []>} : vector<256x8xf32>, vector<8x8xf32>, vector<256x8xf32> -> vector<256x8xf32>
    %185 = arith.addf %179, %184 : vector<256x8xf32>
    %186 = vector.extract_strided_slice %76 {offsets = [0, 3, 3, 0], sizes = [1, 16, 16, 8], strides = [1, 1, 1, 1]} : vector<1x20x20x8xf32> to vector<1x16x16x8xf32>
    %187 = vector.shape_cast %186 : vector<1x16x16x8xf32> to vector<256x8xf32>
    %c18 = arith.constant 18 : index
    %c0_105 = arith.constant 0 : index
    %c0_106 = arith.constant 0 : index
    %188 = vector.load %arg6[%c18, %c0_105, %c0_106] : memref<25x8x8xf32, #tpu.memory_space<vmem>>, vector<1x8x8xf32>
    %189 = vector.shape_cast %188 : vector<1x8x8xf32> to vector<8x8xf32>
    %cst_107 = arith.constant dense<0.000000e+00> : vector<256x8xf32>
    %190 = tpu.matmul %187, %189, %cst_107 {dimension_numbers = #tpu.dot_dimension_numbers<[1], [0], [0], [1], [0, 0, 1, 1], [], []>} : vector<256x8xf32>, vector<8x8xf32>, vector<256x8xf32> -> vector<256x8xf32>
    %191 = arith.addf %185, %190 : vector<256x8xf32>
    %192 = vector.extract_strided_slice %76 {offsets = [0, 3, 4, 0], sizes = [1, 16, 16, 8], strides = [1, 1, 1, 1]} : vector<1x20x20x8xf32> to vector<1x16x16x8xf32>
    %193 = vector.shape_cast %192 : vector<1x16x16x8xf32> to vector<256x8xf32>
    %c19 = arith.constant 19 : index
    %c0_108 = arith.constant 0 : index
    %c0_109 = arith.constant 0 : index
    %194 = vector.load %arg6[%c19, %c0_108, %c0_109] : memref<25x8x8xf32, #tpu.memory_space<vmem>>, vector<1x8x8xf32>
    %195 = vector.shape_cast %194 : vector<1x8x8xf32> to vector<8x8xf32>
    %cst_110 = arith.constant dense<0.000000e+00> : vector<256x8xf32>
    %196 = tpu.matmul %193, %195, %cst_110 {dimension_numbers = #tpu.dot_dimension_numbers<[1], [0], [0], [1], [0, 0, 1, 1], [], []>} : vector<256x8xf32>, vector<8x8xf32>, vector<256x8xf32> -> vector<256x8xf32>
    %197 = arith.addf %191, %196 : vector<256x8xf32>
    %198 = vector.extract_strided_slice %76 {offsets = [0, 4, 0, 0], sizes = [1, 16, 16, 8], strides = [1, 1, 1, 1]} : vector<1x20x20x8xf32> to vector<1x16x16x8xf32>
    %199 = vector.shape_cast %198 : vector<1x16x16x8xf32> to vector<256x8xf32>
    %c20 = arith.constant 20 : index
    %c0_111 = arith.constant 0 : index
    %c0_112 = arith.constant 0 : index
    %200 = vector.load %arg6[%c20, %c0_111, %c0_112] : memref<25x8x8xf32, #tpu.memory_space<vmem>>, vector<1x8x8xf32>
    %201 = vector.shape_cast %200 : vector<1x8x8xf32> to vector<8x8xf32>
    %cst_113 = arith.constant dense<0.000000e+00> : vector<256x8xf32>
    %202 = tpu.matmul %199, %201, %cst_113 {dimension_numbers = #tpu.dot_dimension_numbers<[1], [0], [0], [1], [0, 0, 1, 1], [], []>} : vector<256x8xf32>, vector<8x8xf32>, vector<256x8xf32> -> vector<256x8xf32>
    %203 = arith.addf %197, %202 : vector<256x8xf32>
    %204 = vector.extract_strided_slice %76 {offsets = [0, 4, 1, 0], sizes = [1, 16, 16, 8], strides = [1, 1, 1, 1]} : vector<1x20x20x8xf32> to vector<1x16x16x8xf32>
    %205 = vector.shape_cast %204 : vector<1x16x16x8xf32> to vector<256x8xf32>
    %c21 = arith.constant 21 : index
    %c0_114 = arith.constant 0 : index
    %c0_115 = arith.constant 0 : index
    %206 = vector.load %arg6[%c21, %c0_114, %c0_115] : memref<25x8x8xf32, #tpu.memory_space<vmem>>, vector<1x8x8xf32>
    %207 = vector.shape_cast %206 : vector<1x8x8xf32> to vector<8x8xf32>
    %cst_116 = arith.constant dense<0.000000e+00> : vector<256x8xf32>
    %208 = tpu.matmul %205, %207, %cst_116 {dimension_numbers = #tpu.dot_dimension_numbers<[1], [0], [0], [1], [0, 0, 1, 1], [], []>} : vector<256x8xf32>, vector<8x8xf32>, vector<256x8xf32> -> vector<256x8xf32>
    %209 = arith.addf %203, %208 : vector<256x8xf32>
    %210 = vector.extract_strided_slice %76 {offsets = [0, 4, 2, 0], sizes = [1, 16, 16, 8], strides = [1, 1, 1, 1]} : vector<1x20x20x8xf32> to vector<1x16x16x8xf32>
    %211 = vector.shape_cast %210 : vector<1x16x16x8xf32> to vector<256x8xf32>
    %c22 = arith.constant 22 : index
    %c0_117 = arith.constant 0 : index
    %c0_118 = arith.constant 0 : index
    %212 = vector.load %arg6[%c22, %c0_117, %c0_118] : memref<25x8x8xf32, #tpu.memory_space<vmem>>, vector<1x8x8xf32>
    %213 = vector.shape_cast %212 : vector<1x8x8xf32> to vector<8x8xf32>
    %cst_119 = arith.constant dense<0.000000e+00> : vector<256x8xf32>
    %214 = tpu.matmul %211, %213, %cst_119 {dimension_numbers = #tpu.dot_dimension_numbers<[1], [0], [0], [1], [0, 0, 1, 1], [], []>} : vector<256x8xf32>, vector<8x8xf32>, vector<256x8xf32> -> vector<256x8xf32>
    %215 = arith.addf %209, %214 : vector<256x8xf32>
    %216 = vector.extract_strided_slice %76 {offsets = [0, 4, 3, 0], sizes = [1, 16, 16, 8], strides = [1, 1, 1, 1]} : vector<1x20x20x8xf32> to vector<1x16x16x8xf32>
    %217 = vector.shape_cast %216 : vector<1x16x16x8xf32> to vector<256x8xf32>
    %c23 = arith.constant 23 : index
    %c0_120 = arith.constant 0 : index
    %c0_121 = arith.constant 0 : index
    %218 = vector.load %arg6[%c23, %c0_120, %c0_121] : memref<25x8x8xf32, #tpu.memory_space<vmem>>, vector<1x8x8xf32>
    %219 = vector.shape_cast %218 : vector<1x8x8xf32> to vector<8x8xf32>
    %cst_122 = arith.constant dense<0.000000e+00> : vector<256x8xf32>
    %220 = tpu.matmul %217, %219, %cst_122 {dimension_numbers = #tpu.dot_dimension_numbers<[1], [0], [0], [1], [0, 0, 1, 1], [], []>} : vector<256x8xf32>, vector<8x8xf32>, vector<256x8xf32> -> vector<256x8xf32>
    %221 = arith.addf %215, %220 : vector<256x8xf32>
    %222 = vector.extract_strided_slice %76 {offsets = [0, 4, 4, 0], sizes = [1, 16, 16, 8], strides = [1, 1, 1, 1]} : vector<1x20x20x8xf32> to vector<1x16x16x8xf32>
    %223 = vector.shape_cast %222 : vector<1x16x16x8xf32> to vector<256x8xf32>
    %c24 = arith.constant 24 : index
    %c0_123 = arith.constant 0 : index
    %c0_124 = arith.constant 0 : index
    %224 = vector.load %arg6[%c24, %c0_123, %c0_124] : memref<25x8x8xf32, #tpu.memory_space<vmem>>, vector<1x8x8xf32>
    %225 = vector.shape_cast %224 : vector<1x8x8xf32> to vector<8x8xf32>
    %cst_125 = arith.constant dense<0.000000e+00> : vector<256x8xf32>
    %226 = tpu.matmul %223, %225, %cst_125 {dimension_numbers = #tpu.dot_dimension_numbers<[1], [0], [0], [1], [0, 0, 1, 1], [], []>} : vector<256x8xf32>, vector<8x8xf32>, vector<256x8xf32> -> vector<256x8xf32>
    %227 = arith.addf %221, %226 : vector<256x8xf32>
    %c0_126 = arith.constant 0 : index
    %c0_127 = arith.constant 0 : index
    %228 = vector.load %arg7[%c0_126, %c0_127] : memref<1x8xf32, #tpu.memory_space<vmem>>, vector<1x8xf32>
    %229 = vector.broadcast %228 : vector<1x8xf32> to vector<256x8xf32>
    %230 = arith.addf %227, %229 : vector<256x8xf32>
    %231 = vector.shape_cast %71 : vector<256x8xf32> to vector<1x16x16x8xf32>
    %c0_128 = arith.constant 0 : index
    %c0_129 = arith.constant 0 : index
    %c0_130 = arith.constant 0 : index
    %c0_131 = arith.constant 0 : index
    %232 = vector.load %arg8[%c0_128, %c0_129, %c0_130, %c0_131] : memref<1x16x16x8xf32, #tpu.memory_space<vmem>>, vector<1x16x16x8xf32>
    tpu.vector_store %arg8[%c0_128, %c0_129, %c0_130, %c0_131], %231 {strides = array<i32>} : memref<1x16x16x8xf32, #tpu.memory_space<vmem>>, vector<1x16x16x8xf32>,
    %233 = vector.shape_cast %230 : vector<256x8xf32> to vector<1x16x16x8xf32>
    %c0_132 = arith.constant 0 : index
    %c0_133 = arith.constant 0 : index
    %c0_134 = arith.constant 0 : index
    %c0_135 = arith.constant 0 : index
    %234 = vector.load %arg9[%c0_132, %c0_133, %c0_134, %c0_135] : memref<1x16x16x8xf32, #tpu.memory_space<vmem>>, vector<1x16x16x8xf32>
    tpu.vector_store %arg9[%c0_132, %c0_133, %c0_134, %c0_135], %233 {strides = array<i32>} : memref<1x16x16x8xf32, #tpu.memory_space<vmem>>, vector<1x16x16x8xf32>,
    %cst_136 = arith.constant dense<0.000000e+00> : vector<8xf32>
    %235 = vector.multi_reduction <add>, %71, %cst_136 [0] : vector<256x8xf32> to vector<8xf32>
    %236 = vector.shape_cast %235 : vector<8xf32> to vector<1x8xf32>
    %cst_137 = arith.constant dense<0.000000e+00> : vector<8xf32>
    %237 = vector.multi_reduction <add>, %230, %cst_137 [0] : vector<256x8xf32> to vector<8xf32>
    %238 = vector.shape_cast %237 : vector<8xf32> to vector<1x8xf32>
    %239 = tpu.concatenate %236, %238 in 1 : vector<1x8xf32>, vector<1x8xf32> -> vector<1x16xf32>
    %240 = arith.mulf %71, %71 : vector<256x8xf32>
    %cst_138 = arith.constant dense<0.000000e+00> : vector<8xf32>
    %241 = vector.multi_reduction <add>, %240, %cst_138 [0] : vector<256x8xf32> to vector<8xf32>
    %242 = vector.shape_cast %241 : vector<8xf32> to vector<1x8xf32>
    %243 = arith.mulf %230, %230 : vector<256x8xf32>
    %cst_139 = arith.constant dense<0.000000e+00> : vector<8xf32>
    %244 = vector.multi_reduction <add>, %243, %cst_139 [0] : vector<256x8xf32> to vector<8xf32>
    %245 = vector.shape_cast %244 : vector<8xf32> to vector<1x8xf32>
    %246 = tpu.concatenate %242, %245 in 1 : vector<1x8xf32>, vector<1x8xf32> -> vector<1x16xf32>
    %247 = tpu.concatenate %239, %246 in 0 : vector<1x16xf32>, vector<1x16xf32> -> vector<2x16xf32>
    %248 = vector.shape_cast %247 : vector<2x16xf32> to vector<1x2x16xf32>
    %c0_140 = arith.constant 0 : index
    %c0_141 = arith.constant 0 : index
    %c0_142 = arith.constant 0 : index
    %249 = vector.load %arg10[%c0_140, %c0_141, %c0_142] : memref<1x2x16xf32, #tpu.memory_space<vmem>>, vector<1x2x16xf32>
    tpu.vector_store %arg10[%c0_140, %c0_141, %c0_142], %248 {strides = array<i32>} : memref<1x2x16xf32, #tpu.memory_space<vmem>>, vector<1x2x16xf32>,
    return
  }
  func.func @transform_0(%arg0: i32) -> (i32, i32, i32, i32) {
    %c0_i32 = arith.constant 0 : i32
    %c0_i32_0 = arith.constant 0 : i32
    %c0_i32_1 = arith.constant 0 : i32
    %c0_i32_2 = arith.constant 0 : i32
    return %arg0, %c0_i32, %c0_i32_0, %c0_i32_1 : i32, i32, i32, i32
  }
  func.func @transform_1(%arg0: i32) -> (i32, i32) {
    %c0_i32 = arith.constant 0 : i32
    %c0_i32_0 = arith.constant 0 : i32
    %c0_i32_1 = arith.constant 0 : i32
    return %c0_i32, %c0_i32_0 : i32, i32
  }
  func.func @transform_2(%arg0: i32) -> (i32, i32) {
    %c0_i32 = arith.constant 0 : i32
    %c0_i32_0 = arith.constant 0 : i32
    %c0_i32_1 = arith.constant 0 : i32
    return %c0_i32, %c0_i32_0 : i32, i32
  }
  func.func @transform_3(%arg0: i32) -> (i32, i32, i32) {
    %c0_i32 = arith.constant 0 : i32
    %c0_i32_0 = arith.constant 0 : i32
    %c0_i32_1 = arith.constant 0 : i32
    %c0_i32_2 = arith.constant 0 : i32
    return %c0_i32, %c0_i32_0, %c0_i32_1 : i32, i32, i32
  }
  func.func @transform_4(%arg0: i32) -> (i32, i32) {
    %c0_i32 = arith.constant 0 : i32
    %c0_i32_0 = arith.constant 0 : i32
    %c0_i32_1 = arith.constant 0 : i32
    return %c0_i32, %c0_i32_0 : i32, i32
  }
  func.func @transform_5(%arg0: i32) -> (i32, i32, i32) {
    %c0_i32 = arith.constant 0 : i32
    %c0_i32_0 = arith.constant 0 : i32
    %c0_i32_1 = arith.constant 0 : i32
    %c0_i32_2 = arith.constant 0 : i32
    return %c0_i32, %c0_i32_0, %c0_i32_1 : i32, i32, i32
  }
  func.func @transform_6(%arg0: i32) -> (i32, i32) {
    %c0_i32 = arith.constant 0 : i32
    %c0_i32_0 = arith.constant 0 : i32
    %c0_i32_1 = arith.constant 0 : i32
    return %c0_i32, %c0_i32_0 : i32, i32
  }
  func.func @transform_7(%arg0: i32) -> (i32, i32, i32, i32) {
    %c0_i32 = arith.constant 0 : i32
    %c0_i32_0 = arith.constant 0 : i32
    %c0_i32_1 = arith.constant 0 : i32
    %c0_i32_2 = arith.constant 0 : i32
    return %arg0, %c0_i32, %c0_i32_0, %c0_i32_1 : i32, i32, i32, i32
  }
  func.func @transform_8(%arg0: i32) -> (i32, i32, i32, i32) {
    %c0_i32 = arith.constant 0 : i32
    %c0_i32_0 = arith.constant 0 : i32
    %c0_i32_1 = arith.constant 0 : i32
    %c0_i32_2 = arith.constant 0 : i32
    return %arg0, %c0_i32, %c0_i32_0, %c0_i32_1 : i32, i32, i32, i32
  }
  func.func @transform_9(%arg0: i32) -> (i32, i32, i32) {
    %c0_i32 = arith.constant 0 : i32
    %c0_i32_0 = arith.constant 0 : i32
    %c0_i32_1 = arith.constant 0 : i32
    return %arg0, %c0_i32, %c0_i32_0 : i32, i32, i32
  }
}

module attributes {stable_mosaic.version = 11 : i64} {
  func.func @_assemble_kernel(%arg0: i32, %arg1: memref<1x16x16x16xf32, #tpu.memory_space<vmem>>, %arg2: memref<1x16x16x8xf32, #tpu.memory_space<vmem>>, %arg3: memref<1x16x16x8xf32, #tpu.memory_space<vmem>>, %arg4: memref<1x32xf32, #tpu.memory_space<vmem>>, %arg5: memref<1x32xf32, #tpu.memory_space<vmem>>, %arg6: memref<1x16x16x32xf32, #tpu.memory_space<vmem>>) attributes {dimension_semantics = [#tpu.dimension_semantics<parallel>], iteration_bounds = array<i64: 2>, scalar_prefetch = 0 : i64, scratch_operands = 0 : i64, tpu.core_type = #tpu.core_type<tc>, window_params = [{transform_indices = @transform_0, window_bounds = array<i64: 1, 16, 16, 16>}, {transform_indices = @transform_1, window_bounds = array<i64: 1, 16, 16, 8>}, {transform_indices = @transform_2, window_bounds = array<i64: 1, 16, 16, 8>}, {pipeline_mode = #tpu.pipeline_mode<synchronous>, transform_indices = @transform_3, window_bounds = array<i64: 1, 32>}, {pipeline_mode = #tpu.pipeline_mode<synchronous>, transform_indices = @transform_4, window_bounds = array<i64: 1, 32>}, {transform_indices = @transform_5, window_bounds = array<i64: 1, 16, 16, 32>}]} {
    %c0 = arith.constant 0 : index
    %c0_0 = arith.constant 0 : index
    %0 = vector.load %arg4[%c0, %c0_0] : memref<1x32xf32, #tpu.memory_space<vmem>>, vector<1x32xf32>
    %c0_1 = arith.constant 0 : index
    %c0_2 = arith.constant 0 : index
    %1 = vector.load %arg5[%c0_1, %c0_2] : memref<1x32xf32, #tpu.memory_space<vmem>>, vector<1x32xf32>
    %c0_3 = arith.constant 0 : index
    %c0_4 = arith.constant 0 : index
    %c0_5 = arith.constant 0 : index
    %c0_6 = arith.constant 0 : index
    %2 = vector.load %arg1[%c0_3, %c0_4, %c0_5, %c0_6] : memref<1x16x16x16xf32, #tpu.memory_space<vmem>>, vector<1x16x16x16xf32>
    %3 = vector.extract_strided_slice %2 {offsets = [0, 0, 0, 0], sizes = [1, 16, 16, 8], strides = [1, 1, 1, 1]} : vector<1x16x16x16xf32> to vector<1x16x16x8xf32>
    %4 = vector.extract_strided_slice %0 {offsets = [0, 0], sizes = [1, 8], strides = [1, 1]} : vector<1x32xf32> to vector<1x8xf32>
    %5 = vector.shape_cast %4 : vector<1x8xf32> to vector<1x1x1x8xf32>
    %6 = vector.broadcast %5 : vector<1x1x1x8xf32> to vector<1x16x16x8xf32>
    %7 = arith.mulf %3, %6 : vector<1x16x16x8xf32>
    %8 = vector.extract_strided_slice %1 {offsets = [0, 0], sizes = [1, 8], strides = [1, 1]} : vector<1x32xf32> to vector<1x8xf32>
    %9 = vector.shape_cast %8 : vector<1x8xf32> to vector<1x1x1x8xf32>
    %10 = vector.broadcast %9 : vector<1x1x1x8xf32> to vector<1x16x16x8xf32>
    %11 = arith.addf %7, %10 : vector<1x16x16x8xf32>
    %c0_7 = arith.constant 0 : index
    %c0_8 = arith.constant 0 : index
    %c0_9 = arith.constant 0 : index
    %c0_10 = arith.constant 0 : index
    %12 = vector.load %arg6[%c0_7, %c0_8, %c0_9, %c0_10] : memref<1x16x16x32xf32, #tpu.memory_space<vmem>>, vector<1x16x16x8xf32>
    tpu.vector_store %arg6[%c0_7, %c0_8, %c0_9, %c0_10], %11 {strides = array<i32>} : memref<1x16x16x32xf32, #tpu.memory_space<vmem>>, vector<1x16x16x8xf32>,
    %c0_11 = arith.constant 0 : index
    %c0_12 = arith.constant 0 : index
    %c0_13 = arith.constant 0 : index
    %c0_14 = arith.constant 0 : index
    %13 = vector.load %arg2[%c0_11, %c0_12, %c0_13, %c0_14] : memref<1x16x16x8xf32, #tpu.memory_space<vmem>>, vector<1x16x16x8xf32>
    %14 = vector.extract_strided_slice %0 {offsets = [0, 8], sizes = [1, 8], strides = [1, 1]} : vector<1x32xf32> to vector<1x8xf32>
    %15 = vector.shape_cast %14 : vector<1x8xf32> to vector<1x1x1x8xf32>
    %16 = vector.broadcast %15 : vector<1x1x1x8xf32> to vector<1x16x16x8xf32>
    %17 = arith.mulf %13, %16 : vector<1x16x16x8xf32>
    %18 = vector.extract_strided_slice %1 {offsets = [0, 8], sizes = [1, 8], strides = [1, 1]} : vector<1x32xf32> to vector<1x8xf32>
    %19 = vector.shape_cast %18 : vector<1x8xf32> to vector<1x1x1x8xf32>
    %20 = vector.broadcast %19 : vector<1x1x1x8xf32> to vector<1x16x16x8xf32>
    %21 = arith.addf %17, %20 : vector<1x16x16x8xf32>
    %c0_15 = arith.constant 0 : index
    %c0_16 = arith.constant 0 : index
    %c0_17 = arith.constant 0 : index
    %c8 = arith.constant 8 : index
    %22 = vector.load %arg6[%c0_15, %c0_16, %c0_17, %c8] : memref<1x16x16x32xf32, #tpu.memory_space<vmem>>, vector<1x16x16x8xf32>
    tpu.vector_store %arg6[%c0_15, %c0_16, %c0_17, %c8], %21 {strides = array<i32>} : memref<1x16x16x32xf32, #tpu.memory_space<vmem>>, vector<1x16x16x8xf32>,
    %c0_18 = arith.constant 0 : index
    %c0_19 = arith.constant 0 : index
    %c0_20 = arith.constant 0 : index
    %c0_21 = arith.constant 0 : index
    %23 = vector.load %arg3[%c0_18, %c0_19, %c0_20, %c0_21] : memref<1x16x16x8xf32, #tpu.memory_space<vmem>>, vector<1x16x16x8xf32>
    %24 = vector.extract_strided_slice %0 {offsets = [0, 16], sizes = [1, 8], strides = [1, 1]} : vector<1x32xf32> to vector<1x8xf32>
    %25 = vector.shape_cast %24 : vector<1x8xf32> to vector<1x1x1x8xf32>
    %26 = vector.broadcast %25 : vector<1x1x1x8xf32> to vector<1x16x16x8xf32>
    %27 = arith.mulf %23, %26 : vector<1x16x16x8xf32>
    %28 = vector.extract_strided_slice %1 {offsets = [0, 16], sizes = [1, 8], strides = [1, 1]} : vector<1x32xf32> to vector<1x8xf32>
    %29 = vector.shape_cast %28 : vector<1x8xf32> to vector<1x1x1x8xf32>
    %30 = vector.broadcast %29 : vector<1x1x1x8xf32> to vector<1x16x16x8xf32>
    %31 = arith.addf %27, %30 : vector<1x16x16x8xf32>
    %c0_22 = arith.constant 0 : index
    %c0_23 = arith.constant 0 : index
    %c0_24 = arith.constant 0 : index
    %c16 = arith.constant 16 : index
    %32 = vector.load %arg6[%c0_22, %c0_23, %c0_24, %c16] : memref<1x16x16x32xf32, #tpu.memory_space<vmem>>, vector<1x16x16x8xf32>
    tpu.vector_store %arg6[%c0_22, %c0_23, %c0_24, %c16], %31 {strides = array<i32>} : memref<1x16x16x32xf32, #tpu.memory_space<vmem>>, vector<1x16x16x8xf32>,
    %33 = vector.extract_strided_slice %2 {offsets = [0, 0, 0, 8], sizes = [1, 16, 16, 8], strides = [1, 1, 1, 1]} : vector<1x16x16x16xf32> to vector<1x16x16x8xf32>
    %34 = vector.extract_strided_slice %0 {offsets = [0, 24], sizes = [1, 8], strides = [1, 1]} : vector<1x32xf32> to vector<1x8xf32>
    %35 = vector.shape_cast %34 : vector<1x8xf32> to vector<1x1x1x8xf32>
    %36 = vector.broadcast %35 : vector<1x1x1x8xf32> to vector<1x16x16x8xf32>
    %37 = arith.mulf %33, %36 : vector<1x16x16x8xf32>
    %38 = vector.extract_strided_slice %1 {offsets = [0, 24], sizes = [1, 8], strides = [1, 1]} : vector<1x32xf32> to vector<1x8xf32>
    %39 = vector.shape_cast %38 : vector<1x8xf32> to vector<1x1x1x8xf32>
    %40 = vector.broadcast %39 : vector<1x1x1x8xf32> to vector<1x16x16x8xf32>
    %41 = arith.addf %37, %40 : vector<1x16x16x8xf32>
    %c0_25 = arith.constant 0 : index
    %c0_26 = arith.constant 0 : index
    %c0_27 = arith.constant 0 : index
    %c24 = arith.constant 24 : index
    %42 = vector.load %arg6[%c0_25, %c0_26, %c0_27, %c24] : memref<1x16x16x32xf32, #tpu.memory_space<vmem>>, vector<1x16x16x8xf32>
    tpu.vector_store %arg6[%c0_25, %c0_26, %c0_27, %c24], %41 {strides = array<i32>} : memref<1x16x16x32xf32, #tpu.memory_space<vmem>>, vector<1x16x16x8xf32>,
    return
  }
  func.func @transform_0(%arg0: i32) -> (i32, i32, i32, i32) {
    %c0_i32 = arith.constant 0 : i32
    %c0_i32_0 = arith.constant 0 : i32
    %c0_i32_1 = arith.constant 0 : i32
    %c0_i32_2 = arith.constant 0 : i32
    return %arg0, %c0_i32, %c0_i32_0, %c0_i32_1 : i32, i32, i32, i32
  }
  func.func @transform_1(%arg0: i32) -> (i32, i32, i32, i32) {
    %c0_i32 = arith.constant 0 : i32
    %c0_i32_0 = arith.constant 0 : i32
    %c0_i32_1 = arith.constant 0 : i32
    %c0_i32_2 = arith.constant 0 : i32
    return %arg0, %c0_i32, %c0_i32_0, %c0_i32_1 : i32, i32, i32, i32
  }
  func.func @transform_2(%arg0: i32) -> (i32, i32, i32, i32) {
    %c0_i32 = arith.constant 0 : i32
    %c0_i32_0 = arith.constant 0 : i32
    %c0_i32_1 = arith.constant 0 : i32
    %c0_i32_2 = arith.constant 0 : i32
    return %arg0, %c0_i32, %c0_i32_0, %c0_i32_1 : i32, i32, i32, i32
  }
  func.func @transform_3(%arg0: i32) -> (i32, i32) {
    %c0_i32 = arith.constant 0 : i32
    %c0_i32_0 = arith.constant 0 : i32
    %c0_i32_1 = arith.constant 0 : i32
    return %c0_i32, %c0_i32_0 : i32, i32
  }
  func.func @transform_4(%arg0: i32) -> (i32, i32) {
    %c0_i32 = arith.constant 0 : i32
    %c0_i32_0 = arith.constant 0 : i32
    %c0_i32_1 = arith.constant 0 : i32
    return %c0_i32, %c0_i32_0 : i32, i32
  }
  func.func @transform_5(%arg0: i32) -> (i32, i32, i32, i32) {
    %c0_i32 = arith.constant 0 : i32
    %c0_i32_0 = arith.constant 0 : i32
    %c0_i32_1 = arith.constant 0 : i32
    %c0_i32_2 = arith.constant 0 : i32
    return %arg0, %c0_i32, %c0_i32_0, %c0_i32_1 : i32, i32, i32, i32
  }
}

</mosaic_0001>

<llo_original>
// kernel: inception_v1_forward.3
$region0: #{inception_v1_forward.3}
  #allocation0 [shape = 'u32[]', space=smem, size = 0x4, offset = 0x4, fixed_abs, tag = 'smem constant byte address 0x4 - core index']
  #allocation1 [shape = 'u32[72,128]{1,0:T(1,128)}', space=vmem, size = 0x9000, scoped, tag = 'internal scratch']
  %s0 = inlined_call_operand.vmem [shape: f32[2,16,16,4], index: 0, kind: input, shape index: {}]
  %s1 = inlined_call_operand.vmem [shape: f32[4,24], index: 1, kind: input, shape index: {}]
  %s2 = inlined_call_operand.vmem [shape: f32[1,24], index: 2, kind: input, shape index: {}]
  %s3 = inlined_call_operand.vmem [shape: f32[4,8], index: 3, kind: input, shape index: {}]
  %s4 = inlined_call_operand.vmem [shape: f32[1,8], index: 4, kind: input, shape index: {}]
  %s5 = inlined_call_operand.vmem [shape: f32[2,16,16,16], index: 5, kind: output, shape index: {0}]
  %s6 = inlined_call_operand.vmem [shape: f32[2,16,16,16], index: 6, kind: output, shape index: {1}]
  %s7 = inlined_call_operand.vmem [shape: f32[2,2,32], index: 7, kind: output, shape index: {2}]
  %8 = xla_tuple %s5, %s6, %s7
  %s9 = sld [smem:[#allocation0]]
  $region69: #{inception_v1_forward.3} parent=0
    _
  %s11 = ssub.s32 1, %s9
  %s12 = scalar_select 0, %s11, %s9
  loop: start=0, step=1, limit=4
  $region2: #{inception_v1_forward.3} parent=0 // loop_pre_header
    _
  $region3: #{inception_v1_forward.3} parent=0 // loop_header
    %s14 = sphi 0, %s18
    %p15 = scmp.ge.s32.totalorder %s14, 4
    %s24 = sphi 0, %s26
    %s27 = sphi 0, %s24
    %s28 = sphi 0, %s27
    %s44 = sphi 0, %s28
    %s48 = sphi 0, %s48
    %s50 = sphi 0, %s48
    %s51 = sphi 0, %s50
    %s65 = sphi 0, %s51
    %s69 = sphi 0, %s69
    %s71 = sphi 0, %s69
    %s72 = sphi 0, %s71
    %s86 = sphi 0, %s72
    %s90 = sphi 0, %s90
    %s92 = sphi 0, %s90
    %s93 = sphi 0, %s92
    %s107 = sphi 0, %s93
    %s111 = sphi 0, %s111
    %s113 = sphi 0, %s111
    %s114 = sphi 0, %s113
    %s128 = sphi 0, %s114
    %s134 = sphi 0, %s136
    %s137 = sphi 0, %s134
    %s138 = sphi 0, %s137
    %s154 = sphi 0, %s138
    %s160 = sphi 0, %s162
    %s163 = sphi 0, %s160
    %s164 = sphi 0, %s163
    %s180 = sphi 0, %s164
    %s186 = sphi 0, %s188
    %s189 = sphi 0, %s186
    %s190 = sphi 0, %s189
    %s206 = sphi 0, %s190
  $region4: #{inception_v1_forward.3} parent=0 // loop_header_branch
    %17 = sbr.rel (%p15) target = $region8
  $region5: #{inception_v1_forward.3} parent=0 // loop_body
    %s19 = ssub.s32 %s14, 1
    %s20 = ssub.s32 %s14, 2
    %s21 = sadd.s32 %s14, 1
    %s22 = ssub.s32 %s14, %s21
    %p23 = scmp.eq.s32.totalorder %s22, 0
    %s25 = sadd.s32 %s24, 1
    %s26 = scalar_select %p23, %s24, %s25
    %p29 = pneg %p23
    %p30 = scmp.eq.s32.totalorder %s14, 1
    %p31 = por %p29, %p30
    %p32 = scmp.ne.s32.totalorder %s24, %s27
    %p33 = scmp.eq.s32.totalorder %s14, 0
    %p34 = por %p32, %p33
    %p35 = scmp.ne.s32.totalorder %s24, %s27
    %p36 = scmp.eq.s32.totalorder %s19, 1
    %p37 = por %p35, %p36
    %p38 = scmp.ne.s32.totalorder %s27, %s28
    %p39 = scmp.eq.s32.totalorder %s19, 0
    %p40 = por %p38, %p39
    %p41 = scmp.ne.s32.totalorder %s27, %s28
    %p42 = scmp.eq.s32.totalorder %s20, 1
    %p43 = por %p41, %p42
    %p45 = scmp.ne.s32.totalorder %s28, %s44
    %p46 = scmp.eq.s32.totalorder %s20, 0
    %p47 = por %p45, %p46
    %s49 = sadd.s32 %s48, 1
    %p52 = scmp.eq.s32.totalorder %s14, 1
    %p53 = scmp.ne.s32.totalorder %s48, %s50
    %p54 = scmp.eq.s32.totalorder %s14, 0
    %p55 = por %p53, %p54
    %p56 = scmp.ne.s32.totalorder %s48, %s50
    %p57 = scmp.eq.s32.totalorder %s19, 1
    %p58 = por %p56, %p57
    %p59 = scmp.ne.s32.totalorder %s50, %s51
    %p60 = scmp.eq.s32.totalorder %s19, 0
    %p61 = por %p59, %p60
    %p62 = scmp.ne.s32.totalorder %s50, %s51
    %p63 = scmp.eq.s32.totalorder %s20, 1
    %p64 = por %p62, %p63
    %p66 = scmp.ne.s32.totalorder %s51, %s65
    %p67 = scmp.eq.s32.totalorder %s20, 0
    %p68 = por %p66, %p67
    %s70 = sadd.s32 %s69, 1
    %p73 = scmp.eq.s32.totalorder %s14, 1
    %p74 = scmp.ne.s32.totalorder %s69, %s71
    %p75 = scmp.eq.s32.totalorder %s14, 0
    %p76 = por %p74, %p75
    %p77 = scmp.ne.s32.totalorder %s69, %s71
    %p78 = scmp.eq.s32.totalorder %s19, 1
    %p79 = por %p77, %p78
    %p80 = scmp.ne.s32.totalorder %s71, %s72
    %p81 = scmp.eq.s32.totalorder %s19, 0
    %p82 = por %p80, %p81
    %p83 = scmp.ne.s32.totalorder %s71, %s72
    %p84 = scmp.eq.s32.totalorder %s20, 1
    %p85 = por %p83, %p84
    %p87 = scmp.ne.s32.totalorder %s72, %s86
    %p88 = scmp.eq.s32.totalorder %s20, 0
    %p89 = por %p87, %p88
    %s91 = sadd.s32 %s90, 1
    %p94 = scmp.eq.s32.totalorder %s14, 1
    %p95 = scmp.ne.s32.totalorder %s90, %s92
    %p96 = scmp.eq.s32.totalorder %s14, 0
    %p97 = por %p95, %p96
    %p98 = scmp.ne.s32.totalorder %s90, %s92
    %p99 = scmp.eq.s32.totalorder %s19, 1
    %p100 = por %p98, %p99
    %p101 = scmp.ne.s32.totalorder %s92, %s93
    %p102 = scmp.eq.s32.totalorder %s19, 0
    %p103 = por %p101, %p102
    %p104 = scmp.ne.s32.totalorder %s92, %s93
    %p105 = scmp.eq.s32.totalorder %s20, 1
    %p106 = por %p104, %p105
    %p108 = scmp.ne.s32.totalorder %s93, %s107
    %p109 = scmp.eq.s32.totalorder %s20, 0
    %p110 = por %p108, %p109
    %s112 = sadd.s32 %s111, 1
    %p115 = scmp.eq.s32.totalorder %s14, 1
    %p116 = scmp.ne.s32.totalorder %s111, %s113
    %p117 = scmp.eq.s32.totalorder %s14, 0
    %p118 = por %p116, %p117
    %p119 = scmp.ne.s32.totalorder %s111, %s113
    %p120 = scmp.eq.s32.totalorder %s19, 1
    %p121 = por %p119, %p120
    %p122 = scmp.ne.s32.totalorder %s113, %s114
    %p123 = scmp.eq.s32.totalorder %s19, 0
    %p124 = por %p122, %p123
    %p125 = scmp.ne.s32.totalorder %s113, %s114
    %p126 = scmp.eq.s32.totalorder %s20, 1
    %p127 = por %p125, %p126
    %p129 = scmp.ne.s32.totalorder %s114, %s128
    %p130 = scmp.eq.s32.totalorder %s20, 0
    %p131 = por %p129, %p130
    %s132 = ssub.s32 %s14, %s21
    %p133 = scmp.eq.s32.totalorder %s132, 0
    %s135 = sadd.s32 %s134, 1
    %s136 = scalar_select %p133, %s134, %s135
    %p139 = pneg %p133
    %p140 = scmp.eq.s32.totalorder %s14, 1
    %p141 = por %p139, %p140
    %p142 = scmp.ne.s32.totalorder %s134, %s137
    %p143 = scmp.eq.s32.totalorder %s14, 0
    %p144 = por %p142, %p143
    %p145 = scmp.ne.s32.totalorder %s134, %s137
    %p146 = scmp.eq.s32.totalorder %s19, 1
    %p147 = por %p145, %p146
    %p148 = scmp.ne.s32.totalorder %s137, %s138
    %p149 = scmp.eq.s32.totalorder %s19, 0
    %p150 = por %p148, %p149
    %p151 = scmp.ne.s32.totalorder %s137, %s138
    %p152 = scmp.eq.s32.totalorder %s20, 1
    %p153 = por %p151, %p152
    %p155 = scmp.ne.s32.totalorder %s138, %s154
    %p156 = scmp.eq.s32.totalorder %s20, 0
    %p157 = por %p155, %p156
    %s158 = ssub.s32 %s14, %s21
    %p159 = scmp.eq.s32.totalorder %s158, 0
    %s161 = sadd.s32 %s160, 1
    %s162 = scalar_select %p159, %s160, %s161
    %p165 = pneg %p159
    %p166 = scmp.eq.s32.totalorder %s14, 1
    %p167 = por %p165, %p166
    %p168 = scmp.ne.s32.totalorder %s160, %s163
    %p169 = scmp.eq.s32.totalorder %s14, 0
    %p170 = por %p168, %p169
    %p171 = scmp.ne.s32.totalorder %s160, %s163
    %p172 = scmp.eq.s32.totalorder %s19, 1
    %p173 = por %p171, %p172
    %p174 = scmp.ne.s32.totalorder %s163, %s164
    %p175 = scmp.eq.s32.totalorder %s19, 0
    %p176 = por %p174, %p175
    %p177 = scmp.ne.s32.totalorder %s163, %s164
    %p178 = scmp.eq.s32.totalorder %s20, 1
    %p179 = por %p177, %p178
    %p181 = scmp.ne.s32.totalorder %s164, %s180
    %p182 = scmp.eq.s32.totalorder %s20, 0
    %p183 = por %p181, %p182
    %s184 = ssub.s32 %s14, %s21
    %p185 = scmp.eq.s32.totalorder %s184, 0
    %s187 = sadd.s32 %s186, 1
    %s188 = scalar_select %p185, %s186, %s187
    %p191 = pneg %p185
    %p192 = scmp.eq.s32.totalorder %s14, 1
    %p193 = por %p191, %p192
    %p194 = scmp.ne.s32.totalorder %s186, %s189
    %p195 = scmp.eq.s32.totalorder %s14, 0
    %p196 = por %p194, %p195
    %p197 = scmp.ne.s32.totalorder %s186, %s189
    %p198 = scmp.eq.s32.totalorder %s19, 1
    %p199 = por %p197, %p198
    %p200 = scmp.ne.s32.totalorder %s189, %s190
    %p201 = scmp.eq.s32.totalorder %s19, 0
    %p202 = por %p200, %p201
    %p203 = scmp.ne.s32.totalorder %s189, %s190
    %p204 = scmp.eq.s32.totalorder %s20, 1
    %p205 = por %p203, %p204
    %p207 = scmp.ne.s32.totalorder %s190, %s206
    %p208 = scmp.eq.s32.totalorder %s20, 0
    %p209 = por %p207, %p208
    %p210 = scmp.le.s32.totalorder 1, %s14
    %p211 = scmp.lt.s32.totalorder %s14, 3
    %p212 = pnand %p210, %p211
    %p213 = pneg %p212
    // Predicated region
    $region9: #{inception_v1_forward.3} parent=5 // pred_check
      _
    $region10: #{inception_v1_forward.3} parent=5 // pred_check_branch
      %215 = sbr.rel (%p212) target = $region12
    $region11: #{inception_v1_forward.3} parent=5 // pred_region
      %s216 = ssub.s32 %s14, 1
      // Predicated region
      $region13: #{inception_v1_forward.3} parent=11 // pred_check
        %p217 = pneg %p61
      $region14: #{inception_v1_forward.3} parent=11 // pred_check_branch
        %219 = sbr.rel (%p217) target = $region16
      $region15: #{inception_v1_forward.3} parent=11 // pred_region
        _
      $region16: #{inception_v1_forward.3} parent=11 // pred_fallthru
        _
      // Predicated region
      $region17: #{inception_v1_forward.3} parent=11 // pred_check
        %p220 = pneg %p82
      $region18: #{inception_v1_forward.3} parent=11 // pred_check_branch
        %222 = sbr.rel (%p220) target = $region20
      $region19: #{inception_v1_forward.3} parent=11 // pred_region
        _
      $region20: #{inception_v1_forward.3} parent=11 // pred_fallthru
        _
      // Predicated region
      $region21: #{inception_v1_forward.3} parent=11 // pred_check
        %p223 = pneg %p103
      $region22: #{inception_v1_forward.3} parent=11 // pred_check_branch
        %225 = sbr.rel (%p223) target = $region24
      $region23: #{inception_v1_forward.3} parent=11 // pred_region
        _
      $region24: #{inception_v1_forward.3} parent=11 // pred_fallthru
        _
      // Predicated region
      $region25: #{inception_v1_forward.3} parent=11 // pred_check
        %p226 = pneg %p124
      $region26: #{inception_v1_forward.3} parent=11 // pred_check_branch
        %228 = sbr.rel (%p226) target = $region28
      $region27: #{inception_v1_forward.3} parent=11 // pred_region
        _
      $region28: #{inception_v1_forward.3} parent=11 // pred_fallthru
        _
    $region12: #{inception_v1_forward.3} parent=5 // pred_fallthru
      _
    %p229 = scmp.lt.s32.totalorder %s14, 2
    // Predicated region
    $region29: #{inception_v1_forward.3} parent=5 // pred_check
      %p230 = pneg %p229
    $region30: #{inception_v1_forward.3} parent=5 // pred_check_branch
      %232 = sbr.rel (%p230) target = $region32
    $region31: #{inception_v1_forward.3} parent=5 // pred_region
      // Predicated region
      $region33: #{inception_v1_forward.3} parent=31 // pred_check
        %p233 = pneg %p34
      $region34: #{inception_v1_forward.3} parent=31 // pred_check_branch
        %235 = sbr.rel (%p233) target = $region36
      $region35: #{inception_v1_forward.3} parent=31 // pred_region
        %p236 = scmp.lt.s32.totalorder %s14, 1
        %s237 = scalar_select %p236, %s14, 1
        %s238 = smul.addr %s237, 32
        %s239 = smul.addr %s238, 8
        %s240 = scalar_lea.vmem %s0, %s239
      $region36: #{inception_v1_forward.3} parent=31 // pred_fallthru
        _
    $region32: #{inception_v1_forward.3} parent=5 // pred_fallthru
      _
    %p241 = scmp.le.s32.totalorder 1, %s14
    %p242 = scmp.lt.s32.totalorder %s14, 3
    %p243 = pnand %p241, %p242
    %p244 = pneg %p243
    // Predicated region
    $region37: #{inception_v1_forward.3} parent=5 // pred_check
      _
    $region38: #{inception_v1_forward.3} parent=5 // pred_check_branch
      %246 = sbr.rel (%p243) target = $region40
    $region39: #{inception_v1_forward.3} parent=5 // pred_region
      %s247 = ssub.s32 %s14, 1
      %p248 = scmp.lt.s32.totalorder %s19, 1
      %s249 = scalar_select %p248, %s19, 1
      %s250 = smul.addr %s249, 32
      %s251 = smul.addr %s250, 8
      %s252 = scalar_lea.vmem %s0, %s251
      %p253 = pneg %p40
      %p254 = pneg %p37
      %p255 = pneg %p61
      %p256 = pneg %p58
      %p257 = pneg %p82
      %p258 = pneg %p79
      %p259 = pneg %p103
      %p260 = pneg %p100
      %p261 = pneg %p124
      %p262 = pneg %p121
      %p263 = pneg %p150
      %p264 = pneg %p147
      %p265 = scmp.lt.s32.totalorder %s19, 1
      %s266 = scalar_select %p265, %s19, 1
      %s267 = smul.addr %s266, 32
      %s268 = smul.addr %s267, 8
      %s269 = scalar_lea.vmem %s5, %s268
      %p270 = pneg %p176
      %p271 = pneg %p173
      %p272 = scmp.lt.s32.totalorder %s19, 1
      %s273 = scalar_select %p272, %s19, 1
      %s274 = smul.addr %s273, 32
      %s275 = smul.addr %s274, 8
      %s276 = scalar_lea.vmem %s6, %s275
      %p277 = pneg %p202
      %p278 = pneg %p199
      %p279 = scmp.lt.s32.totalorder %s19, 1
      %s280 = scalar_select %p279, %s19, 1
      %s281 = smul.addr %s280, 2
      %s282 = scalar_lea.vmem %s7, %s281
      %p283 = scmp.lt.s32.totalorder %s19, 1
      %s284 = scalar_select %p283, %s19, 1
      %s285 = smul.addr %s284, 32
      %s286 = smul.addr %s285, 8
      %s287 = scalar_lea.vmem %s0, %s286
      %p288 = scmp.lt.s32.totalorder %s19, 1
      %s289 = scalar_select %p288, %s19, 1
      %s290 = smul.addr %s289, 32
      %s291 = smul.addr %s290, 8
      %s292 = scalar_lea.vmem %s5, %s291
      %p293 = scmp.lt.s32.totalorder %s19, 1
      %s294 = scalar_select %p293, %s19, 1
      %s295 = smul.addr %s294, 32
      %s296 = smul.addr %s295, 8
      %s297 = scalar_lea.vmem %s6, %s296
      %p298 = scmp.lt.s32.totalorder %s19, 1
      %s299 = scalar_select %p298, %s19, 1
      %s300 = smul.addr %s299, 2
      %s301 = scalar_lea.vmem %s7, %s300
      %v302 = vld [vmem:[%s287] sm:$0xff]
      %v303 = vld [vmem:[%s287 + $0x8] sm:$0xff]
      %v304 = vld [vmem:[%s287 + $0x10] sm:$0xff]
      %v305 = vld [vmem:[%s287 + $0x18] sm:$0xff]
      %v306 = vld [vmem:[%s287 + $0x20] sm:$0xff]
      %v307 = vld [vmem:[%s287 + $0x28] sm:$0xff]
      %v308 = vld [vmem:[%s287 + $0x30] sm:$0xff]
      %v309 = vld [vmem:[%s287 + $0x38] sm:$0xff]
      %v310 = vld [vmem:[%s287 + $0x40] sm:$0xff]
      %v311 = vld [vmem:[%s287 + $0x48] sm:$0xff]
      %v312 = vld [vmem:[%s287 + $0x50] sm:$0xff]
      %v313 = vld [vmem:[%s287 + $0x58] sm:$0xff]
      %v314 = vld [vmem:[%s287 + $0x60] sm:$0xff]
      %v315 = vld [vmem:[%s287 + $0x68] sm:$0xff]
      %v316 = vld [vmem:[%s287 + $0x70] sm:$0xff]
      %v317 = vld [vmem:[%s287 + $0x78] sm:$0xff]
      %v318 = vld [vmem:[%s287 + $0x80] sm:$0xff]
      %v319 = vld [vmem:[%s287 + $0x88] sm:$0xff]
      %v320 = vld [vmem:[%s287 + $0x90] sm:$0xff]
      %v321 = vld [vmem:[%s287 + $0x98] sm:$0xff]
      %v322 = vld [vmem:[%s287 + $0xa0] sm:$0xff]
      %v323 = vld [vmem:[%s287 + $0xa8] sm:$0xff]
      %v324 = vld [vmem:[%s287 + $0xb0] sm:$0xff]
      %v325 = vld [vmem:[%s287 + $0xb8] sm:$0xff]
      %v326 = vld [vmem:[%s287 + $0xc0] sm:$0xff]
      %v327 = vld [vmem:[%s287 + $0xc8] sm:$0xff]
      %v328 = vld [vmem:[%s287 + $0xd0] sm:$0xff]
      %v329 = vld [vmem:[%s287 + $0xd8] sm:$0xff]
      %v330 = vld [vmem:[%s287 + $0xe0] sm:$0xff]
      %v331 = vld [vmem:[%s287 + $0xe8] sm:$0xff]
      %v332 = vld [vmem:[%s287 + $0xf0] sm:$0xff]
      %v333 = vld [vmem:[%s287 + $0xf8] sm:$0xff]
      %v334 = vld [vmem:[%s1] sm:$0xf]
      %v335 = vld [vmem:[%s2] sm:$0x1]
      %v337 = vperm.slane %v335, 0
      %vm339 = vcmask 31744
      %v341 = vsel %vm339, %v302, 0
      %v344 = vsel %vm339, %v303, 0
      %v347 = vsel %vm339, %v304, 0
      %v350 = vsel %vm339, %v305, 0
      %v353 = vsel %vm339, %v306, 0
      %v356 = vsel %vm339, %v307, 0
      %v359 = vsel %vm339, %v308, 0
      %v362 = vsel %vm339, %v309, 0
      %v365 = vsel %vm339, %v310, 0
      %v368 = vsel %vm339, %v311, 0
      %v371 = vsel %vm339, %v312, 0
      %v374 = vsel %vm339, %v313, 0
      %v377 = vsel %vm339, %v314, 0
      %v380 = vsel %vm339, %v315, 0
      %v383 = vsel %vm339, %v316, 0
      %v386 = vsel %vm339, %v317, 0
      %v389 = vsel %vm339, %v318, 0
      %v392 = vsel %vm339, %v319, 0
      %v395 = vsel %vm339, %v320, 0
      %v398 = vsel %vm339, %v321, 0
      %v401 = vsel %vm339, %v322, 0
      %v404 = vsel %vm339, %v323, 0
      %v407 = vsel %vm339, %v324, 0
      %v410 = vsel %vm339, %v325, 0
      %v413 = vsel %vm339, %v326, 0
      %v416 = vsel %vm339, %v327, 0
      %v419 = vsel %vm339, %v328, 0
      %v422 = vsel %vm339, %v329, 0
      %v425 = vsel %vm339, %v330, 0
      %v428 = vsel %vm339, %v331, 0
      %v431 = vsel %vm339, %v332, 0
      %v434 = vsel %vm339, %v333, 0
      %vm436 = vcmask 1043456
      %v438 = vsel %vm436, %v334, 0
      %440 = vmatpush.msra.mxu0 0.0
      %441 = vmatpush.msra.mxu0 0.0
      %442 = vmatpush.msra.mxu0 0.0
      %443 = vmatpush.msra.mxu0 0.0
      %444 = vmatpush.msra.mxu0 0.0
      %445 = vmatpush.msra.mxu0 0.0
      %446 = vmatpush.msra.mxu0 0.0
      %447 = vmatpush.msra.mxu0 0.0
      %448 = vmatpush.msra.mxu0 0.0
      %449 = vmatpush.msra.mxu0 0.0
      %450 = vmatpush.msra.mxu0 0.0
      %451 = vmatpush.msra.mxu0 0.0
      %452 = vmatpush.msra.mxu0 0.0
      %453 = vmatpush.msra.mxu0 0.0
      %454 = vmatpush.msra.mxu0 0.0
      %455 = vmatpush.msra.mxu0 %v438
      %456 = vmatmul.f32.gmra.mxu0 %v341
      %v457 = vpop.f32.mrf.mxu0
      %v458 = vadd.f32 %v337, %v457
      %459 = vmatmul.f32.gmra.mxu0 %v344
      %v460 = vpop.f32.mrf.mxu0
      %v461 = vadd.f32 %v337, %v460
      %462 = vmatmul.f32.gmra.mxu0 %v347
      %v463 = vpop.f32.mrf.mxu0
      %v464 = vadd.f32 %v337, %v463
      %465 = vmatmul.f32.gmra.mxu0 %v350
      %v466 = vpop.f32.mrf.mxu0
      %v467 = vadd.f32 %v337, %v466
      %468 = vmatmul.f32.gmra.mxu0 %v353
      %v469 = vpop.f32.mrf.mxu0
      %v470 = vadd.f32 %v337, %v469
      %471 = vmatmul.f32.gmra.mxu0 %v356
      %v472 = vpop.f32.mrf.mxu0
      %v473 = vadd.f32 %v337, %v472
      %474 = vmatmul.f32.gmra.mxu0 %v359
      %v475 = vpop.f32.mrf.mxu0
      %v476 = vadd.f32 %v337, %v475
      %477 = vmatmul.f32.gmra.mxu0 %v362
      %v478 = vpop.f32.mrf.mxu0
      %v479 = vadd.f32 %v337, %v478
      %480 = vmatmul.f32.gmra.mxu0 %v365
      %v481 = vpop.f32.mrf.mxu0
      %v482 = vadd.f32 %v337, %v481
      %483 = vmatmul.f32.gmra.mxu0 %v368
      %v484 = vpop.f32.mrf.mxu0
      %v485 = vadd.f32 %v337, %v484
      %486 = vmatmul.f32.gmra.mxu0 %v371
      %v487 = vpop.f32.mrf.mxu0
      %v488 = vadd.f32 %v337, %v487
      %489 = vmatmul.f32.gmra.mxu0 %v374
      %v490 = vpop.f32.mrf.mxu0
      %v491 = vadd.f32 %v337, %v490
      %492 = vmatmul.f32.gmra.mxu0 %v377
      %v493 = vpop.f32.mrf.mxu0
      %v494 = vadd.f32 %v337, %v493
      %495 = vmatmul.f32.gmra.mxu0 %v380
      %v496 = vpop.f32.mrf.mxu0
      %v497 = vadd.f32 %v337, %v496
      %498 = vmatmul.f32.gmra.mxu0 %v383
      %v499 = vpop.f32.mrf.mxu0
      %v500 = vadd.f32 %v337, %v499
      %501 = vmatmul.f32.gmra.mxu0 %v386
      %v502 = vpop.f32.mrf.mxu0
      %v503 = vadd.f32 %v337, %v502
      %504 = vmatmul.f32.gmra.mxu0 %v389
      %v505 = vpop.f32.mrf.mxu0
      %v506 = vadd.f32 %v337, %v505
      %507 = vmatmul.f32.gmra.mxu0 %v392
      %v508 = vpop.f32.mrf.mxu0
      %v509 = vadd.f32 %v337, %v508
      %510 = vmatmul.f32.gmra.mxu0 %v395
      %v511 = vpop.f32.mrf.mxu0
      %v512 = vadd.f32 %v337, %v511
      %513 = vmatmul.f32.gmra.mxu0 %v398
      %v514 = vpop.f32.mrf.mxu0
      %v515 = vadd.f32 %v337, %v514
      %516 = vmatmul.f32.gmra.mxu0 %v401
      %v517 = vpop.f32.mrf.mxu0
      %v518 = vadd.f32 %v337, %v517
      %519 = vmatmul.f32.gmra.mxu0 %v404
      %v520 = vpop.f32.mrf.mxu0
      %v521 = vadd.f32 %v337, %v520
      %522 = vmatmul.f32.gmra.mxu0 %v407
      %v523 = vpop.f32.mrf.mxu0
      %v524 = vadd.f32 %v337, %v523
      %525 = vmatmul.f32.gmra.mxu0 %v410
      %v526 = vpop.f32.mrf.mxu0
      %v527 = vadd.f32 %v337, %v526
      %528 = vmatmul.f32.gmra.mxu0 %v413
      %v529 = vpop.f32.mrf.mxu0
      %v530 = vadd.f32 %v337, %v529
      %531 = vmatmul.f32.gmra.mxu0 %v416
      %v532 = vpop.f32.mrf.mxu0
      %v533 = vadd.f32 %v337, %v532
      %534 = vmatmul.f32.gmra.mxu0 %v419
      %v535 = vpop.f32.mrf.mxu0
      %v536 = vadd.f32 %v337, %v535
      %537 = vmatmul.f32.gmra.mxu0 %v422
      %v538 = vpop.f32.mrf.mxu0
      %v539 = vadd.f32 %v337, %v538
      %540 = vmatmul.f32.gmra.mxu0 %v425
      %v541 = vpop.f32.mrf.mxu0
      %v542 = vadd.f32 %v337, %v541
      %543 = vmatmul.f32.gmra.mxu0 %v428
      %v544 = vpop.f32.mrf.mxu0
      %v545 = vadd.f32 %v337, %v544
      %546 = vmatmul.f32.gmra.mxu0 %v431
      %v547 = vpop.f32.mrf.mxu0
      %v548 = vadd.f32 %v337, %v547
      %549 = vmatmul.f32.gmra.mxu0 %v434
      %v550 = vpop.f32.mrf.mxu0
      %v551 = vadd.f32 %v337, %v550
      %552 = vdwg.mxu0
      %vm553 = vcmask 1040384
      %v554 = vrot.slane %v302, 7
      %v555 = vrot.slane %v303, 7
      %v556 = vsel %vm553, %v554, %v555
      %v557 = vrot.slane %v304, 7
      %v558 = vrot.slane %v305, 7
      %v559 = vsel %vm553, %v557, %v558
      %v560 = vrot.slane %v306, 7
      %v561 = vrot.slane %v307, 7
      %v562 = vsel %vm553, %v560, %v561
      %v563 = vrot.slane %v308, 7
      %v564 = vrot.slane %v309, 7
      %v565 = vsel %vm553, %v563, %v564
      %v566 = vrot.slane %v310, 7
      %v567 = vrot.slane %v311, 7
      %v568 = vsel %vm553, %v566, %v567
      %v569 = vrot.slane %v312, 7
      %v570 = vrot.slane %v313, 7
      %v571 = vsel %vm553, %v569, %v570
      %v572 = vrot.slane %v314, 7
      %v573 = vrot.slane %v315, 7
      %v574 = vsel %vm553, %v572, %v573
      %v575 = vrot.slane %v316, 7
      %v576 = vrot.slane %v317, 7
      %v577 = vsel %vm553, %v575, %v576
      %v578 = vrot.slane %v318, 7
      %v579 = vrot.slane %v319, 7
      %v580 = vsel %vm553, %v578, %v579
      %v581 = vrot.slane %v320, 7
      %v582 = vrot.slane %v321, 7
      %v583 = vsel %vm553, %v581, %v582
      %v584 = vrot.slane %v322, 7
      %v585 = vrot.slane %v323, 7
      %v586 = vsel %vm553, %v584, %v585
      %v587 = vrot.slane %v324, 7
      %v588 = vrot.slane %v325, 7
      %v589 = vsel %vm553, %v587, %v588
      %v590 = vrot.slane %v326, 7
      %v591 = vrot.slane %v327, 7
      %v592 = vsel %vm553, %v590, %v591
      %v593 = vrot.slane %v328, 7
      %v594 = vrot.slane %v329, 7
      %v595 = vsel %vm553, %v593, %v594
      %v596 = vrot.slane %v330, 7
      %v597 = vrot.slane %v331, 7
      %v598 = vsel %vm553, %v596, %v597
      %v599 = vrot.slane %v332, 7
      %v600 = vrot.slane %v333, 7
      %v601 = vsel %vm553, %v599, %v600
      %v650 = vsel %vm553, -inf, %v554
      %v651 = vsel %vm553, -inf, %v557
      %v652 = vsel %vm553, -inf, %v560
      %v653 = vsel %vm553, -inf, %v563
      %v654 = vsel %vm553, -inf, %v566
      %v655 = vsel %vm553, -inf, %v569
      %v656 = vsel %vm553, -inf, %v572
      %v657 = vsel %vm553, -inf, %v575
      %v658 = vsel %vm553, -inf, %v578
      %v659 = vsel %vm553, -inf, %v581
      %v660 = vsel %vm553, -inf, %v584
      %v661 = vsel %vm553, -inf, %v587
      %v662 = vsel %vm553, -inf, %v590
      %v663 = vsel %vm553, -inf, %v593
      %v664 = vsel %vm553, -inf, %v596
      %v665 = vsel %vm553, -inf, %v599
      %v666 = vsel %vm553, %v555, -inf
      %v667 = vsel %vm553, %v558, -inf
      %v668 = vsel %vm553, %v561, -inf
      %v669 = vsel %vm553, %v564, -inf
      %v670 = vsel %vm553, %v567, -inf
      %v671 = vsel %vm553, %v570, -inf
      %v672 = vsel %vm553, %v573, -inf
      %v673 = vsel %vm553, %v576, -inf
      %v674 = vsel %vm553, %v579, -inf
      %v675 = vsel %vm553, %v582, -inf
      %v676 = vsel %vm553, %v585, -inf
      %v677 = vsel %vm553, %v588, -inf
      %v678 = vsel %vm553, %v591, -inf
      %v679 = vsel %vm553, %v594, -inf
      %v680 = vsel %vm553, %v597, -inf
      %v681 = vsel %vm553, %v600, -inf
      %vm714 = vcmask 1046528
      %v715 = vrot.slane %v650, 1
      %v716 = vrot.slane %v556, 1
      %v717 = vsel %vm714, %v715, %v716
      %v718 = vrot.slane %v666, 1
      %v719 = vsel %vm714, %v716, %v718
      %v720 = vrot.slane %v651, 1
      %v721 = vrot.slane %v559, 1
      %v722 = vsel %vm714, %v720, %v721
      %v723 = vrot.slane %v667, 1
      %v724 = vsel %vm714, %v721, %v723
      %v725 = vrot.slane %v652, 1
      %v726 = vrot.slane %v562, 1
      %v727 = vsel %vm714, %v725, %v726
      %v728 = vrot.slane %v668, 1
      %v729 = vsel %vm714, %v726, %v728
      %v730 = vrot.slane %v653, 1
      %v731 = vrot.slane %v565, 1
      %v732 = vsel %vm714, %v730, %v731
      %v733 = vrot.slane %v669, 1
      %v734 = vsel %vm714, %v731, %v733
      %v735 = vrot.slane %v654, 1
      %v736 = vrot.slane %v568, 1
      %v737 = vsel %vm714, %v735, %v736
      %v738 = vrot.slane %v670, 1
      %v739 = vsel %vm714, %v736, %v738
      %v740 = vrot.slane %v655, 1
      %v741 = vrot.slane %v571, 1
      %v742 = vsel %vm714, %v740, %v741
      %v743 = vrot.slane %v671, 1
      %v744 = vsel %vm714, %v741, %v743
      %v745 = vrot.slane %v656, 1
      %v746 = vrot.slane %v574, 1
      %v747 = vsel %vm714, %v745, %v746
      %v748 = vrot.slane %v672, 1
      %v749 = vsel %vm714, %v746, %v748
      %v750 = vrot.slane %v657, 1
      %v751 = vrot.slane %v577, 1
      %v752 = vsel %vm714, %v750, %v751
      %v753 = vrot.slane %v673, 1
      %v754 = vsel %vm714, %v751, %v753
      %v755 = vrot.slane %v658, 1
      %v756 = vrot.slane %v580, 1
      %v757 = vsel %vm714, %v755, %v756
      %v758 = vrot.slane %v674, 1
      %v759 = vsel %vm714, %v756, %v758
      %v760 = vrot.slane %v659, 1
      %v761 = vrot.slane %v583, 1
      %v762 = vsel %vm714, %v760, %v761
      %v763 = vrot.slane %v675, 1
      %v764 = vsel %vm714, %v761, %v763
      %v765 = vrot.slane %v660, 1
      %v766 = vrot.slane %v586, 1
      %v767 = vsel %vm714, %v765, %v766
      %v768 = vrot.slane %v676, 1
      %v769 = vsel %vm714, %v766, %v768
      %v770 = vrot.slane %v661, 1
      %v771 = vrot.slane %v589, 1
      %v772 = vsel %vm714, %v770, %v771
      %v773 = vrot.slane %v677, 1
      %v774 = vsel %vm714, %v771, %v773
      %v775 = vrot.slane %v662, 1
      %v776 = vrot.slane %v592, 1
      %v777 = vsel %vm714, %v775, %v776
      %v778 = vrot.slane %v678, 1
      %v779 = vsel %vm714, %v776, %v778
      %v780 = vrot.slane %v663, 1
      %v781 = vrot.slane %v595, 1
      %v782 = vsel %vm714, %v780, %v781
      %v783 = vrot.slane %v679, 1
      %v784 = vsel %vm714, %v781, %v783
      %v785 = vrot.slane %v664, 1
      %v786 = vrot.slane %v598, 1
      %v787 = vsel %vm714, %v785, %v786
      %v788 = vrot.slane %v680, 1
      %v789 = vsel %vm714, %v786, %v788
      %v790 = vrot.slane %v665, 1
      %v791 = vrot.slane %v601, 1
      %v792 = vsel %vm714, %v790, %v791
      %v793 = vrot.slane %v681, 1
      %v794 = vsel %vm714, %v791, %v793
      %v827 = vmax.f32 %v650, %v717
      %v828 = vmax.f32 %v556, %v719
      %v829 = vmax.f32 %v651, %v722
      %v830 = vmax.f32 %v559, %v724
      %v831 = vmax.f32 %v652, %v727
      %v832 = vmax.f32 %v562, %v729
      %v833 = vmax.f32 %v653, %v732
      %v834 = vmax.f32 %v565, %v734
      %v835 = vmax.f32 %v654, %v737
      %v836 = vmax.f32 %v568, %v739
      %v837 = vmax.f32 %v655, %v742
      %v838 = vmax.f32 %v571, %v744
      %v839 = vmax.f32 %v656, %v747
      %v840 = vmax.f32 %v574, %v749
      %v841 = vmax.f32 %v657, %v752
      %v842 = vmax.f32 %v577, %v754
      %v843 = vmax.f32 %v658, %v757
      %v844 = vmax.f32 %v580, %v759
      %v845 = vmax.f32 %v659, %v762
      %v846 = vmax.f32 %v583, %v764
      %v847 = vmax.f32 %v660, %v767
      %v848 = vmax.f32 %v586, %v769
      %v849 = vmax.f32 %v661, %v772
      %v850 = vmax.f32 %v589, %v774
      %v851 = vmax.f32 %v662, %v777
      %v852 = vmax.f32 %v592, %v779
      %v853 = vmax.f32 %v663, %v782
      %v854 = vmax.f32 %v595, %v784
      %v855 = vmax.f32 %v664, %v787
      %v856 = vmax.f32 %v598, %v789
      %v857 = vmax.f32 %v665, %v792
      %v858 = vmax.f32 %v601, %v794
      %vm859 = vcmask 1045504
      %v860 = vrot.slane %v650, 2
      %v861 = vrot.slane %v556, 2
      %v862 = vsel %vm859, %v860, %v861
      %v863 = vrot.slane %v666, 2
      %v864 = vsel %vm859, %v861, %v863
      %v865 = vrot.slane %v651, 2
      %v866 = vrot.slane %v559, 2
      %v867 = vsel %vm859, %v865, %v866
      %v868 = vrot.slane %v667, 2
      %v869 = vsel %vm859, %v866, %v868
      %v870 = vrot.slane %v652, 2
      %v871 = vrot.slane %v562, 2
      %v872 = vsel %vm859, %v870, %v871
      %v873 = vrot.slane %v668, 2
      %v874 = vsel %vm859, %v871, %v873
      %v875 = vrot.slane %v653, 2
      %v876 = vrot.slane %v565, 2
      %v877 = vsel %vm859, %v875, %v876
      %v878 = vrot.slane %v669, 2
      %v879 = vsel %vm859, %v876, %v878
      %v880 = vrot.slane %v654, 2
      %v881 = vrot.slane %v568, 2
      %v882 = vsel %vm859, %v880, %v881
      %v883 = vrot.slane %v670, 2
      %v884 = vsel %vm859, %v881, %v883
      %v885 = vrot.slane %v655, 2
      %v886 = vrot.slane %v571, 2
      %v887 = vsel %vm859, %v885, %v886
      %v888 = vrot.slane %v671, 2
      %v889 = vsel %vm859, %v886, %v888
      %v890 = vrot.slane %v656, 2
      %v891 = vrot.slane %v574, 2
      %v892 = vsel %vm859, %v890, %v891
      %v893 = vrot.slane %v672, 2
      %v894 = vsel %vm859, %v891, %v893
      %v895 = vrot.slane %v657, 2
      %v896 = vrot.slane %v577, 2
      %v897 = vsel %vm859, %v895, %v896
      %v898 = vrot.slane %v673, 2
      %v899 = vsel %vm859, %v896, %v898
      %v900 = vrot.slane %v658, 2
      %v901 = vrot.slane %v580, 2
      %v902 = vsel %vm859, %v900, %v901
      %v903 = vrot.slane %v674, 2
      %v904 = vsel %vm859, %v901, %v903
      %v905 = vrot.slane %v659, 2
      %v906 = vrot.slane %v583, 2
      %v907 = vsel %vm859, %v905, %v906
      %v908 = vrot.slane %v675, 2
      %v909 = vsel %vm859, %v906, %v908
      %v910 = vrot.slane %v660, 2
      %v911 = vrot.slane %v586, 2
      %v912 = vsel %vm859, %v910, %v911
      %v913 = vrot.slane %v676, 2
      %v914 = vsel %vm859, %v911, %v913
      %v915 = vrot.slane %v661, 2
      %v916 = vrot.slane %v589, 2
      %v917 = vsel %vm859, %v915, %v916
      %v918 = vrot.slane %v677, 2
      %v919 = vsel %vm859, %v916, %v918
      %v920 = vrot.slane %v662, 2
      %v921 = vrot.slane %v592, 2
      %v922 = vsel %vm859, %v920, %v921
      %v923 = vrot.slane %v678, 2
      %v924 = vsel %vm859, %v921, %v923
      %v925 = vrot.slane %v663, 2
      %v926 = vrot.slane %v595, 2
      %v927 = vsel %vm859, %v925, %v926
      %v928 = vrot.slane %v679, 2
      %v929 = vsel %vm859, %v926, %v928
      %v930 = vrot.slane %v664, 2
      %v931 = vrot.slane %v598, 2
      %v932 = vsel %vm859, %v930, %v931
      %v933 = vrot.slane %v680, 2
      %v934 = vsel %vm859, %v931, %v933
      %v935 = vrot.slane %v665, 2
      %v936 = vrot.slane %v601, 2
      %v937 = vsel %vm859, %v935, %v936
      %v938 = vrot.slane %v681, 2
      %v939 = vsel %vm859, %v936, %v938
      %v972 = vmax.f32 %v827, %v862
      %v973 = vmax.f32 %v828, %v864
      %v974 = vmax.f32 %v829, %v867
      %v975 = vmax.f32 %v830, %v869
      %v976 = vmax.f32 %v831, %v872
      %v977 = vmax.f32 %v832, %v874
      %v978 = vmax.f32 %v833, %v877
      %v979 = vmax.f32 %v834, %v879
      %v980 = vmax.f32 %v835, %v882
      %v981 = vmax.f32 %v836, %v884
      %v982 = vmax.f32 %v837, %v887
      %v983 = vmax.f32 %v838, %v889
      %v984 = vmax.f32 %v839, %v892
      %v985 = vmax.f32 %v840, %v894
      %v986 = vmax.f32 %v841, %v897
      %v987 = vmax.f32 %v842, %v899
      %v988 = vmax.f32 %v843, %v902
      %v989 = vmax.f32 %v844, %v904
      %v990 = vmax.f32 %v845, %v907
      %v991 = vmax.f32 %v846, %v909
      %v992 = vmax.f32 %v847, %v912
      %v993 = vmax.f32 %v848, %v914
      %v994 = vmax.f32 %v849, %v917
      %v995 = vmax.f32 %v850, %v919
      %v996 = vmax.f32 %v851, %v922
      %v997 = vmax.f32 %v852, %v924
      %v998 = vmax.f32 %v853, %v927
      %v999 = vmax.f32 %v854, %v929
      %v1000 = vmax.f32 %v855, %v932
      %v1001 = vmax.f32 %v856, %v934
      %v1002 = vmax.f32 %v857, %v937
      %v1003 = vmax.f32 %v858, %v939
      %v1004 = vmax.f32 %v972, %v974
      %v1005 = vmax.f32 %v973, %v975
      %v1006 = vmax.f32 %v974, %v976
      %v1007 = vmax.f32 %v975, %v977
      %v1008 = vmax.f32 %v976, %v978
      %v1009 = vmax.f32 %v977, %v979
      %v1010 = vmax.f32 %v978, %v980
      %v1011 = vmax.f32 %v979, %v981
      %v1012 = vmax.f32 %v980, %v982
      %v1013 = vmax.f32 %v981, %v983
      %v1014 = vmax.f32 %v982, %v984
      %v1015 = vmax.f32 %v983, %v985
      %v1016 = vmax.f32 %v984, %v986
      %v1017 = vmax.f32 %v985, %v987
      %v1018 = vmax.f32 %v986, %v988
      %v1019 = vmax.f32 %v987, %v989
      %v1020 = vmax.f32 %v988, %v990
      %v1021 = vmax.f32 %v989, %v991
      %v1022 = vmax.f32 %v990, %v992
      %v1023 = vmax.f32 %v991, %v993
      %v1024 = vmax.f32 %v992, %v994
      %v1025 = vmax.f32 %v993, %v995
      %v1026 = vmax.f32 %v994, %v996
      %v1027 = vmax.f32 %v995, %v997
      %v1028 = vmax.f32 %v996, %v998
      %v1029 = vmax.f32 %v997, %v999
      %v1030 = vmax.f32 %v998, %v1000
      %v1031 = vmax.f32 %v999, %v1001
      %v1032 = vmax.f32 %v1000, %v1002
      %v1033 = vmax.f32 %v1001, %v1003
      %v1034 = vmax.f32 %v1004, %v976
      %v1035 = vmax.f32 %v1005, %v977
      %v1036 = vmax.f32 %v1006, %v978
      %v1037 = vmax.f32 %v1007, %v979
      %v1038 = vmax.f32 %v1008, %v980
      %v1039 = vmax.f32 %v1009, %v981
      %v1040 = vmax.f32 %v1010, %v982
      %v1041 = vmax.f32 %v1011, %v983
      %v1042 = vmax.f32 %v1012, %v984
      %v1043 = vmax.f32 %v1013, %v985
      %v1044 = vmax.f32 %v1014, %v986
      %v1045 = vmax.f32 %v1015, %v987
      %v1046 = vmax.f32 %v1016, %v988
      %v1047 = vmax.f32 %v1017, %v989
      %v1048 = vmax.f32 %v1018, %v990
      %v1049 = vmax.f32 %v1019, %v991
      %v1050 = vmax.f32 %v1020, %v992
      %v1051 = vmax.f32 %v1021, %v993
      %v1052 = vmax.f32 %v1022, %v994
      %v1053 = vmax.f32 %v1023, %v995
      %v1054 = vmax.f32 %v1024, %v996
      %v1055 = vmax.f32 %v1025, %v997
      %v1056 = vmax.f32 %v1026, %v998
      %v1057 = vmax.f32 %v1027, %v999
      %v1058 = vmax.f32 %v1028, %v1000
      %v1059 = vmax.f32 %v1029, %v1001
      %v1060 = vmax.f32 %v1030, %v1002
      %v1061 = vmax.f32 %v1031, %v1003
      %v1062 = vld [vmem:[%s3] sm:$0xf]
      %v1063 = vld [vmem:[%s4] sm:$0x1]
      %v1065 = vperm.slane %v1063, 0
      %v1068 = vsel %vm339, %v1004, 0
      %v1071 = vsel %vm339, %v1005, 0
      %v1074 = vsel %vm339, %v1034, 0
      %v1077 = vsel %vm339, %v1035, 0
      %v1080 = vsel %vm339, %v1036, 0
      %v1083 = vsel %vm339, %v1037, 0
      %v1086 = vsel %vm339, %v1038, 0
      %v1089 = vsel %vm339, %v1039, 0
      %v1092 = vsel %vm339, %v1040, 0
      %v1095 = vsel %vm339, %v1041, 0
      %v1098 = vsel %vm339, %v1042, 0
      %v1101 = vsel %vm339, %v1043, 0
      %v1104 = vsel %vm339, %v1044, 0
      %v1107 = vsel %vm339, %v1045, 0
      %v1110 = vsel %vm339, %v1046, 0
      %v1113 = vsel %vm339, %v1047, 0
      %v1116 = vsel %vm339, %v1048, 0
      %v1119 = vsel %vm339, %v1049, 0
      %v1122 = vsel %vm339, %v1050, 0
      %v1125 = vsel %vm339, %v1051, 0
      %v1128 = vsel %vm339, %v1052, 0
      %v1131 = vsel %vm339, %v1053, 0
      %v1134 = vsel %vm339, %v1054, 0
      %v1137 = vsel %vm339, %v1055, 0
      %v1140 = vsel %vm339, %v1056, 0
      %v1143 = vsel %vm339, %v1057, 0
      %v1146 = vsel %vm339, %v1058, 0
      %v1149 = vsel %vm339, %v1059, 0
      %v1152 = vsel %vm339, %v1060, 0
      %v1155 = vsel %vm339, %v1061, 0
      %v1158 = vsel %vm339, %v1032, 0
      %v1161 = vsel %vm339, %v1033, 0
      %v1164 = vsel %vm436, %v1062, 0
      %1166 = vmatpush.msra.mxu0 0.0
      %1167 = vmatpush.msra.mxu0 0.0
      %1168 = vmatpush.msra.mxu0 0.0
      %1169 = vmatpush.msra.mxu0 0.0
      %1170 = vmatpush.msra.mxu0 0.0
      %1171 = vmatpush.msra.mxu0 0.0
      %1172 = vmatpush.msra.mxu0 0.0
      %1173 = vmatpush.msra.mxu0 0.0
      %1174 = vmatpush.msra.mxu0 0.0
      %1175 = vmatpush.msra.mxu0 0.0
      %1176 = vmatpush.msra.mxu0 0.0
      %1177 = vmatpush.msra.mxu0 0.0
      %1178 = vmatpush.msra.mxu0 0.0
      %1179 = vmatpush.msra.mxu0 0.0
      %1180 = vmatpush.msra.mxu0 0.0
      %1181 = vmatpush.msra.mxu0 %v1164
      %1182 = vmatmul.f32.gmra.mxu0 %v1068
      %v1183 = vpop.f32.mrf.mxu0
      %v1184 = vadd.f32 %v1065, %v1183
      %1185 = vmatmul.f32.gmra.mxu0 %v1071
      %v1186 = vpop.f32.mrf.mxu0
      %v1187 = vadd.f32 %v1065, %v1186
      %1188 = vmatmul.f32.gmra.mxu0 %v1074
      %v1189 = vpop.f32.mrf.mxu0
      %v1190 = vadd.f32 %v1065, %v1189
      %1191 = vmatmul.f32.gmra.mxu0 %v1077
      %v1192 = vpop.f32.mrf.mxu0
      %v1193 = vadd.f32 %v1065, %v1192
      %1194 = vmatmul.f32.gmra.mxu0 %v1080
      %v1195 = vpop.f32.mrf.mxu0
      %v1196 = vadd.f32 %v1065, %v1195
      %1197 = vmatmul.f32.gmra.mxu0 %v1083
      %v1198 = vpop.f32.mrf.mxu0
      %v1199 = vadd.f32 %v1065, %v1198
      %1200 = vmatmul.f32.gmra.mxu0 %v1086
      %v1201 = vpop.f32.mrf.mxu0
      %v1202 = vadd.f32 %v1065, %v1201
      %1203 = vmatmul.f32.gmra.mxu0 %v1089
      %v1204 = vpop.f32.mrf.mxu0
      %v1205 = vadd.f32 %v1065, %v1204
      %1206 = vmatmul.f32.gmra.mxu0 %v1092
      %v1207 = vpop.f32.mrf.mxu0
      %v1208 = vadd.f32 %v1065, %v1207
      %1209 = vmatmul.f32.gmra.mxu0 %v1095
      %v1210 = vpop.f32.mrf.mxu0
      %v1211 = vadd.f32 %v1065, %v1210
      %1212 = vmatmul.f32.gmra.mxu0 %v1098
      %v1213 = vpop.f32.mrf.mxu0
      %v1214 = vadd.f32 %v1065, %v1213
      %1215 = vmatmul.f32.gmra.mxu0 %v1101
      %v1216 = vpop.f32.mrf.mxu0
      %v1217 = vadd.f32 %v1065, %v1216
      %1218 = vmatmul.f32.gmra.mxu0 %v1104
      %v1219 = vpop.f32.mrf.mxu0
      %v1220 = vadd.f32 %v1065, %v1219
      %1221 = vmatmul.f32.gmra.mxu0 %v1107
      %v1222 = vpop.f32.mrf.mxu0
      %v1223 = vadd.f32 %v1065, %v1222
      %1224 = vmatmul.f32.gmra.mxu0 %v1110
      %v1225 = vpop.f32.mrf.mxu0
      %v1226 = vadd.f32 %v1065, %v1225
      %1227 = vmatmul.f32.gmra.mxu0 %v1113
      %v1228 = vpop.f32.mrf.mxu0
      %v1229 = vadd.f32 %v1065, %v1228
      %1230 = vmatmul.f32.gmra.mxu0 %v1116
      %v1231 = vpop.f32.mrf.mxu0
      %v1232 = vadd.f32 %v1065, %v1231
      %1233 = vmatmul.f32.gmra.mxu0 %v1119
      %v1234 = vpop.f32.mrf.mxu0
      %v1235 = vadd.f32 %v1065, %v1234
      %1236 = vmatmul.f32.gmra.mxu0 %v1122
      %v1237 = vpop.f32.mrf.mxu0
      %v1238 = vadd.f32 %v1065, %v1237
      %1239 = vmatmul.f32.gmra.mxu0 %v1125
      %v1240 = vpop.f32.mrf.mxu0
      %v1241 = vadd.f32 %v1065, %v1240
      %1242 = vmatmul.f32.gmra.mxu0 %v1128
      %v1243 = vpop.f32.mrf.mxu0
      %v1244 = vadd.f32 %v1065, %v1243
      %1245 = vmatmul.f32.gmra.mxu0 %v1131
      %v1246 = vpop.f32.mrf.mxu0
      %v1247 = vadd.f32 %v1065, %v1246
      %1248 = vmatmul.f32.gmra.mxu0 %v1134
      %v1249 = vpop.f32.mrf.mxu0
      %v1250 = vadd.f32 %v1065, %v1249
      %1251 = vmatmul.f32.gmra.mxu0 %v1137
      %v1252 = vpop.f32.mrf.mxu0
      %v1253 = vadd.f32 %v1065, %v1252
      %1254 = vmatmul.f32.gmra.mxu0 %v1140
      %v1255 = vpop.f32.mrf.mxu0
      %v1256 = vadd.f32 %v1065, %v1255
      %1257 = vmatmul.f32.gmra.mxu0 %v1143
      %v1258 = vpop.f32.mrf.mxu0
      %v1259 = vadd.f32 %v1065, %v1258
      %1260 = vmatmul.f32.gmra.mxu0 %v1146
      %v1261 = vpop.f32.mrf.mxu0
      %v1262 = vadd.f32 %v1065, %v1261
      %1263 = vmatmul.f32.gmra.mxu0 %v1149
      %v1264 = vpop.f32.mrf.mxu0
      %v1265 = vadd.f32 %v1065, %v1264
      %1266 = vmatmul.f32.gmra.mxu0 %v1152
      %v1267 = vpop.f32.mrf.mxu0
      %v1268 = vadd.f32 %v1065, %v1267
      %1269 = vmatmul.f32.gmra.mxu0 %v1155
      %v1270 = vpop.f32.mrf.mxu0
      %v1271 = vadd.f32 %v1065, %v1270
      %1272 = vmatmul.f32.gmra.mxu0 %v1158
      %v1273 = vpop.f32.mrf.mxu0
      %v1274 = vadd.f32 %v1065, %v1273
      %1275 = vmatmul.f32.gmra.mxu0 %v1161
      %v1276 = vpop.f32.mrf.mxu0
      %v1277 = vadd.f32 %v1065, %v1276
      %1278 = vdwg.mxu0
      %1311 = vrot.lane.b32.xlu0 %v458, 112
      %v1312 = vpop.permute.xlu0 %1311
      %1313 = vrot.lane.b32.xlu0 %v461, 112
      %v1314 = vpop.permute.xlu0 %1313
      %1315 = vrot.lane.b32.xlu0 %v464, 112
      %v1316 = vpop.permute.xlu0 %1315
      %1317 = vrot.lane.b32.xlu0 %v467, 112
      %v1318 = vpop.permute.xlu0 %1317
      %1319 = vrot.lane.b32.xlu0 %v470, 112
      %v1320 = vpop.permute.xlu0 %1319
      %1321 = vrot.lane.b32.xlu0 %v473, 112
      %v1322 = vpop.permute.xlu0 %1321
      %1323 = vrot.lane.b32.xlu0 %v476, 112
      %v1324 = vpop.permute.xlu0 %1323
      %1325 = vrot.lane.b32.xlu0 %v479, 112
      %v1326 = vpop.permute.xlu0 %1325
      %1327 = vrot.lane.b32.xlu0 %v482, 112
      %v1328 = vpop.permute.xlu0 %1327
      %1329 = vrot.lane.b32.xlu0 %v485, 112
      %v1330 = vpop.permute.xlu0 %1329
      %1331 = vrot.lane.b32.xlu0 %v488, 112
      %v1332 = vpop.permute.xlu0 %1331
      %1333 = vrot.lane.b32.xlu0 %v491, 112
      %v1334 = vpop.permute.xlu0 %1333
      %1335 = vrot.lane.b32.xlu0 %v494, 112
      %v1336 = vpop.permute.xlu0 %1335
      %1337 = vrot.lane.b32.xlu0 %v497, 112
      %v1338 = vpop.permute.xlu0 %1337
      %1339 = vrot.lane.b32.xlu0 %v500, 112
      %v1340 = vpop.permute.xlu0 %1339
      %1341 = vrot.lane.b32.xlu0 %v503, 112
      %v1342 = vpop.permute.xlu0 %1341
      %1343 = vrot.lane.b32.xlu0 %v506, 112
      %v1344 = vpop.permute.xlu0 %1343
      %1345 = vrot.lane.b32.xlu0 %v509, 112
      %v1346 = vpop.permute.xlu0 %1345
      %1347 = vrot.lane.b32.xlu0 %v512, 112
      %v1348 = vpop.permute.xlu0 %1347
      %1349 = vrot.lane.b32.xlu0 %v515, 112
      %v1350 = vpop.permute.xlu0 %1349
      %1351 = vrot.lane.b32.xlu0 %v518, 112
      %v1352 = vpop.permute.xlu0 %1351
      %1353 = vrot.lane.b32.xlu0 %v521, 112
      %v1354 = vpop.permute.xlu0 %1353
      %1355 = vrot.lane.b32.xlu0 %v524, 112
      %v1356 = vpop.permute.xlu0 %1355
      %1357 = vrot.lane.b32.xlu0 %v527, 112
      %v1358 = vpop.permute.xlu0 %1357
      %1359 = vrot.lane.b32.xlu0 %v530, 112
      %v1360 = vpop.permute.xlu0 %1359
      %1361 = vrot.lane.b32.xlu0 %v533, 112
      %v1362 = vpop.permute.xlu0 %1361
      %1363 = vrot.lane.b32.xlu0 %v536, 112
      %v1364 = vpop.permute.xlu0 %1363
      %1365 = vrot.lane.b32.xlu0 %v539, 112
      %v1366 = vpop.permute.xlu0 %1365
      %1367 = vrot.lane.b32.xlu0 %v542, 112
      %v1368 = vpop.permute.xlu0 %1367
      %1369 = vrot.lane.b32.xlu0 %v545, 112
      %v1370 = vpop.permute.xlu0 %1369
      %1371 = vrot.lane.b32.xlu0 %v548, 112
      %v1372 = vpop.permute.xlu0 %1371
      %1373 = vrot.lane.b32.xlu0 %v551, 112
      %v1374 = vpop.permute.xlu0 %1373
      %1439 = vrot.lane.b32.xlu0 %v1184, 8
      %v1440 = vpop.permute.xlu0 %1439
      %1441 = vrot.lane.b32.xlu0 %v1187, 8
      %v1442 = vpop.permute.xlu0 %1441
      %1443 = vrot.lane.b32.xlu0 %v1190, 8
      %v1444 = vpop.permute.xlu0 %1443
      %1445 = vrot.lane.b32.xlu0 %v1193, 8
      %v1446 = vpop.permute.xlu0 %1445
      %1447 = vrot.lane.b32.xlu0 %v1196, 8
      %v1448 = vpop.permute.xlu0 %1447
      %1449 = vrot.lane.b32.xlu0 %v1199, 8
      %v1450 = vpop.permute.xlu0 %1449
      %1451 = vrot.lane.b32.xlu0 %v1202, 8
      %v1452 = vpop.permute.xlu0 %1451
      %1453 = vrot.lane.b32.xlu0 %v1205, 8
      %v1454 = vpop.permute.xlu0 %1453
      %1455 = vrot.lane.b32.xlu0 %v1208, 8
      %v1456 = vpop.permute.xlu0 %1455
      %1457 = vrot.lane.b32.xlu0 %v1211, 8
      %v1458 = vpop.permute.xlu0 %1457
      %1459 = vrot.lane.b32.xlu0 %v1214, 8
      %v1460 = vpop.permute.xlu0 %1459
      %1461 = vrot.lane.b32.xlu0 %v1217, 8
      %v1462 = vpop.permute.xlu0 %1461
      %1463 = vrot.lane.b32.xlu0 %v1220, 8
      %v1464 = vpop.permute.xlu0 %1463
      %1465 = vrot.lane.b32.xlu0 %v1223, 8
      %v1466 = vpop.permute.xlu0 %1465
      %1467 = vrot.lane.b32.xlu0 %v1226, 8
      %v1468 = vpop.permute.xlu0 %1467
      %1469 = vrot.lane.b32.xlu0 %v1229, 8
      %v1470 = vpop.permute.xlu0 %1469
      %1471 = vrot.lane.b32.xlu0 %v1232, 8
      %v1472 = vpop.permute.xlu0 %1471
      %1473 = vrot.lane.b32.xlu0 %v1235, 8
      %v1474 = vpop.permute.xlu0 %1473
      %1475 = vrot.lane.b32.xlu0 %v1238, 8
      %v1476 = vpop.permute.xlu0 %1475
      %1477 = vrot.lane.b32.xlu0 %v1241, 8
      %v1478 = vpop.permute.xlu0 %1477
      %1479 = vrot.lane.b32.xlu0 %v1244, 8
      %v1480 = vpop.permute.xlu0 %1479
      %1481 = vrot.lane.b32.xlu0 %v1247, 8
      %v1482 = vpop.permute.xlu0 %1481
      %1483 = vrot.lane.b32.xlu0 %v1250, 8
      %v1484 = vpop.permute.xlu0 %1483
      %1485 = vrot.lane.b32.xlu0 %v1253, 8
      %v1486 = vpop.permute.xlu0 %1485
      %1487 = vrot.lane.b32.xlu0 %v1256, 8
      %v1488 = vpop.permute.xlu0 %1487
      %1489 = vrot.lane.b32.xlu0 %v1259, 8
      %v1490 = vpop.permute.xlu0 %1489
      %1491 = vrot.lane.b32.xlu0 %v1262, 8
      %v1492 = vpop.permute.xlu0 %1491
      %1493 = vrot.lane.b32.xlu0 %v1265, 8
      %v1494 = vpop.permute.xlu0 %1493
      %1495 = vrot.lane.b32.xlu0 %v1268, 8
      %v1496 = vpop.permute.xlu0 %1495
      %1497 = vrot.lane.b32.xlu0 %v1271, 8
      %v1498 = vpop.permute.xlu0 %1497
      %1499 = vrot.lane.b32.xlu0 %v1274, 8
      %v1500 = vpop.permute.xlu0 %1499
      %1501 = vrot.lane.b32.xlu0 %v1277, 8
      %v1502 = vpop.permute.xlu0 %1501
      %vm1535 = vcmask 64512
      %v1536 = vsel %vm1535, %v1312, %v1440
      %v1537 = vsel %vm1535, %v1314, %v1442
      %v1538 = vsel %vm1535, %v1316, %v1444
      %v1539 = vsel %vm1535, %v1318, %v1446
      %v1540 = vsel %vm1535, %v1320, %v1448
      %v1541 = vsel %vm1535, %v1322, %v1450
      %v1542 = vsel %vm1535, %v1324, %v1452
      %v1543 = vsel %vm1535, %v1326, %v1454
      %v1544 = vsel %vm1535, %v1328, %v1456
      %v1545 = vsel %vm1535, %v1330, %v1458
      %v1546 = vsel %vm1535, %v1332, %v1460
      %v1547 = vsel %vm1535, %v1334, %v1462
      %v1548 = vsel %vm1535, %v1336, %v1464
      %v1549 = vsel %vm1535, %v1338, %v1466
      %v1550 = vsel %vm1535, %v1340, %v1468
      %v1551 = vsel %vm1535, %v1342, %v1470
      %v1552 = vsel %vm1535, %v1344, %v1472
      %v1553 = vsel %vm1535, %v1346, %v1474
      %v1554 = vsel %vm1535, %v1348, %v1476
      %v1555 = vsel %vm1535, %v1350, %v1478
      %v1556 = vsel %vm1535, %v1352, %v1480
      %v1557 = vsel %vm1535, %v1354, %v1482
      %v1558 = vsel %vm1535, %v1356, %v1484
      %v1559 = vsel %vm1535, %v1358, %v1486
      %v1560 = vsel %vm1535, %v1360, %v1488
      %v1561 = vsel %vm1535, %v1362, %v1490
      %v1562 = vsel %vm1535, %v1364, %v1492
      %v1563 = vsel %vm1535, %v1366, %v1494
      %v1564 = vsel %vm1535, %v1368, %v1496
      %v1565 = vsel %vm1535, %v1370, %v1498
      %v1566 = vsel %vm1535, %v1372, %v1500
      %v1567 = vsel %vm1535, %v1374, %v1502
      %vm1568 = vcmask 130048
      %1569 = vst.msk [vmem:[%s292] sm:$0xff] %vm1568, %v458
      %1570 = vst.msk [vmem:[%s292 + $0x8] sm:$0xff] %vm1568, %v461
      %1571 = vst.msk [vmem:[%s292 + $0x10] sm:$0xff] %vm1568, %v464
      %1572 = vst.msk [vmem:[%s292 + $0x18] sm:$0xff] %vm1568, %v467
      %1573 = vst.msk [vmem:[%s292 + $0x20] sm:$0xff] %vm1568, %v470
      %1574 = vst.msk [vmem:[%s292 + $0x28] sm:$0xff] %vm1568, %v473
      %1575 = vst.msk [vmem:[%s292 + $0x30] sm:$0xff] %vm1568, %v476
      %1576 = vst.msk [vmem:[%s292 + $0x38] sm:$0xff] %vm1568, %v479
      %1577 = vst.msk [vmem:[%s292 + $0x40] sm:$0xff] %vm1568, %v482
      %1578 = vst.msk [vmem:[%s292 + $0x48] sm:$0xff] %vm1568, %v485
      %1579 = vst.msk [vmem:[%s292 + $0x50] sm:$0xff] %vm1568, %v488
      %1580 = vst.msk [vmem:[%s292 + $0x58] sm:$0xff] %vm1568, %v491
      %1581 = vst.msk [vmem:[%s292 + $0x60] sm:$0xff] %vm1568, %v494
      %1582 = vst.msk [vmem:[%s292 + $0x68] sm:$0xff] %vm1568, %v497
      %1583 = vst.msk [vmem:[%s292 + $0x70] sm:$0xff] %vm1568, %v500
      %1584 = vst.msk [vmem:[%s292 + $0x78] sm:$0xff] %vm1568, %v503
      %1585 = vst.msk [vmem:[%s292 + $0x80] sm:$0xff] %vm1568, %v506
      %1586 = vst.msk [vmem:[%s292 + $0x88] sm:$0xff] %vm1568, %v509
      %1587 = vst.msk [vmem:[%s292 + $0x90] sm:$0xff] %vm1568, %v512
      %1588 = vst.msk [vmem:[%s292 + $0x98] sm:$0xff] %vm1568, %v515
      %1589 = vst.msk [vmem:[%s292 + $0xa0] sm:$0xff] %vm1568, %v518
      %1590 = vst.msk [vmem:[%s292 + $0xa8] sm:$0xff] %vm1568, %v521
      %1591 = vst.msk [vmem:[%s292 + $0xb0] sm:$0xff] %vm1568, %v524
      %1592 = vst.msk [vmem:[%s292 + $0xb8] sm:$0xff] %vm1568, %v527
      %1593 = vst.msk [vmem:[%s292 + $0xc0] sm:$0xff] %vm1568, %v530
      %1594 = vst.msk [vmem:[%s292 + $0xc8] sm:$0xff] %vm1568, %v533
      %1595 = vst.msk [vmem:[%s292 + $0xd0] sm:$0xff] %vm1568, %v536
      %1596 = vst.msk [vmem:[%s292 + $0xd8] sm:$0xff] %vm1568, %v539
      %1597 = vst.msk [vmem:[%s292 + $0xe0] sm:$0xff] %vm1568, %v542
      %1598 = vst.msk [vmem:[%s292 + $0xe8] sm:$0xff] %vm1568, %v545
      %1599 = vst.msk [vmem:[%s292 + $0xf0] sm:$0xff] %vm1568, %v548
      %1600 = vst.msk [vmem:[%s292 + $0xf8] sm:$0xff] %vm1568, %v551
      %1601 = vst.msk [vmem:[%s297] sm:$0xff] %vm1568, %v1536
      %1602 = vst.msk [vmem:[%s297 + $0x8] sm:$0xff] %vm1568, %v1537
      %1603 = vst.msk [vmem:[%s297 + $0x10] sm:$0xff] %vm1568, %v1538
      %1604 = vst.msk [vmem:[%s297 + $0x18] sm:$0xff] %vm1568, %v1539
      %1605 = vst.msk [vmem:[%s297 + $0x20] sm:$0xff] %vm1568, %v1540
      %1606 = vst.msk [vmem:[%s297 + $0x28] sm:$0xff] %vm1568, %v1541
      %1607 = vst.msk [vmem:[%s297 + $0x30] sm:$0xff] %vm1568, %v1542
      %1608 = vst.msk [vmem:[%s297 + $0x38] sm:$0xff] %vm1568, %v1543
      %1609 = vst.msk [vmem:[%s297 + $0x40] sm:$0xff] %vm1568, %v1544
      %1610 = vst.msk [vmem:[%s297 + $0x48] sm:$0xff] %vm1568, %v1545
      %1611 = vst.msk [vmem:[%s297 + $0x50] sm:$0xff] %vm1568, %v1546
      %1612 = vst.msk [vmem:[%s297 + $0x58] sm:$0xff] %vm1568, %v1547
      %1613 = vst.msk [vmem:[%s297 + $0x60] sm:$0xff] %vm1568, %v1548
      %1614 = vst.msk [vmem:[%s297 + $0x68] sm:$0xff] %vm1568, %v1549
      %1615 = vst.msk [vmem:[%s297 + $0x70] sm:$0xff] %vm1568, %v1550
      %1616 = vst.msk [vmem:[%s297 + $0x78] sm:$0xff] %vm1568, %v1551
      %1617 = vst.msk [vmem:[%s297 + $0x80] sm:$0xff] %vm1568, %v1552
      %1618 = vst.msk [vmem:[%s297 + $0x88] sm:$0xff] %vm1568, %v1553
      %1619 = vst.msk [vmem:[%s297 + $0x90] sm:$0xff] %vm1568, %v1554
      %1620 = vst.msk [vmem:[%s297 + $0x98] sm:$0xff] %vm1568, %v1555
      %1621 = vst.msk [vmem:[%s297 + $0xa0] sm:$0xff] %vm1568, %v1556
      %1622 = vst.msk [vmem:[%s297 + $0xa8] sm:$0xff] %vm1568, %v1557
      %1623 = vst.msk [vmem:[%s297 + $0xb0] sm:$0xff] %vm1568, %v1558
      %1624 = vst.msk [vmem:[%s297 + $0xb8] sm:$0xff] %vm1568, %v1559
      %1625 = vst.msk [vmem:[%s297 + $0xc0] sm:$0xff] %vm1568, %v1560
      %1626 = vst.msk [vmem:[%s297 + $0xc8] sm:$0xff] %vm1568, %v1561
      %1627 = vst.msk [vmem:[%s297 + $0xd0] sm:$0xff] %vm1568, %v1562
      %1628 = vst.msk [vmem:[%s297 + $0xd8] sm:$0xff] %vm1568, %v1563
      %1629 = vst.msk [vmem:[%s297 + $0xe0] sm:$0xff] %vm1568, %v1564
      %1630 = vst.msk [vmem:[%s297 + $0xe8] sm:$0xff] %vm1568, %v1565
      %1631 = vst.msk [vmem:[%s297 + $0xf0] sm:$0xff] %vm1568, %v1566
      %1632 = vst.msk [vmem:[%s297 + $0xf8] sm:$0xff] %vm1568, %v1567
      %v1633 = vsel %vm1568, %v458, 0.0
      %v1634 = vsel %vm1568, %v461, 0.0
      %v1635 = vadd.f32 %v1633, %v1634
      %v1636 = vsel %vm1568, %v464, 0.0
      %v1637 = vadd.f32 %v1635, %v1636
      %v1638 = vsel %vm1568, %v467, 0.0
      %v1639 = vadd.f32 %v1637, %v1638
      %v1640 = vsel %vm1568, %v470, 0.0
      %v1641 = vadd.f32 %v1639, %v1640
      %v1642 = vsel %vm1568, %v473, 0.0
      %v1643 = vadd.f32 %v1641, %v1642
      %v1644 = vsel %vm1568, %v476, 0.0
      %v1645 = vadd.f32 %v1643, %v1644
      %v1646 = vsel %vm1568, %v479, 0.0
      %v1647 = vadd.f32 %v1645, %v1646
      %v1648 = vsel %vm1568, %v482, 0.0
      %v1649 = vadd.f32 %v1647, %v1648
      %v1650 = vsel %vm1568, %v485, 0.0
      %v1651 = vadd.f32 %v1649, %v1650
      %v1652 = vsel %vm1568, %v488, 0.0
      %v1653 = vadd.f32 %v1651, %v1652
      %v1654 = vsel %vm1568, %v491, 0.0
      %v1655 = vadd.f32 %v1653, %v1654
      %v1656 = vsel %vm1568, %v494, 0.0
      %v1657 = vadd.f32 %v1655, %v1656
      %v1658 = vsel %vm1568, %v497, 0.0
      %v1659 = vadd.f32 %v1657, %v1658
      %v1660 = vsel %vm1568, %v500, 0.0
      %v1661 = vadd.f32 %v1659, %v1660
      %v1662 = vsel %vm1568, %v503, 0.0
      %v1663 = vadd.f32 %v1661, %v1662
      %v1664 = vsel %vm1568, %v506, 0.0
      %v1665 = vadd.f32 %v1663, %v1664
      %v1666 = vsel %vm1568, %v509, 0.0
      %v1667 = vadd.f32 %v1665, %v1666
      %v1668 = vsel %vm1568, %v512, 0.0
      %v1669 = vadd.f32 %v1667, %v1668
      %v1670 = vsel %vm1568, %v515, 0.0
      %v1671 = vadd.f32 %v1669, %v1670
      %v1672 = vsel %vm1568, %v518, 0.0
      %v1673 = vadd.f32 %v1671, %v1672
      %v1674 = vsel %vm1568, %v521, 0.0
      %v1675 = vadd.f32 %v1673, %v1674
      %v1676 = vsel %vm1568, %v524, 0.0
      %v1677 = vadd.f32 %v1675, %v1676
      %v1678 = vsel %vm1568, %v527, 0.0
      %v1679 = vadd.f32 %v1677, %v1678
      %v1680 = vsel %vm1568, %v530, 0.0
      %v1681 = vadd.f32 %v1679, %v1680
      %v1682 = vsel %vm1568, %v533, 0.0
      %v1683 = vadd.f32 %v1681, %v1682
      %v1684 = vsel %vm1568, %v536, 0.0
      %v1685 = vadd.f32 %v1683, %v1684
      %v1686 = vsel %vm1568, %v539, 0.0
      %v1687 = vadd.f32 %v1685, %v1686
      %v1688 = vsel %vm1568, %v542, 0.0
      %v1689 = vadd.f32 %v1687, %v1688
      %v1690 = vsel %vm1568, %v545, 0.0
      %v1691 = vadd.f32 %v1689, %v1690
      %v1692 = vsel %vm1568, %v548, 0.0
      %v1693 = vadd.f32 %v1691, %v1692
      %v1694 = vsel %vm1568, %v551, 0.0
      %v1695 = vadd.f32 %v1693, %v1694
      %v1696 = vrot.slane %v1695, 4
      %v1697 = vadd.f32 %v1695, %v1696
      %v1698 = vrot.slane %v1697, 2
      %v1699 = vadd.f32 %v1697, %v1698
      %v1700 = vrot.slane %v1699, 1
      %v1701 = vadd.f32 %v1699, %v1700
      %v1702 = vsel %vm1568, %v1536, 0.0
      %v1703 = vsel %vm1568, %v1537, 0.0
      %v1704 = vadd.f32 %v1702, %v1703
      %v1705 = vsel %vm1568, %v1538, 0.0
      %v1706 = vadd.f32 %v1704, %v1705
      %v1707 = vsel %vm1568, %v1539, 0.0
      %v1708 = vadd.f32 %v1706, %v1707
      %v1709 = vsel %vm1568, %v1540, 0.0
      %v1710 = vadd.f32 %v1708, %v1709
      %v1711 = vsel %vm1568, %v1541, 0.0
      %v1712 = vadd.f32 %v1710, %v1711
      %v1713 = vsel %vm1568, %v1542, 0.0
      %v1714 = vadd.f32 %v1712, %v1713
      %v1715 = vsel %vm1568, %v1543, 0.0
      %v1716 = vadd.f32 %v1714, %v1715
      %v1717 = vsel %vm1568, %v1544, 0.0
      %v1718 = vadd.f32 %v1716, %v1717
      %v1719 = vsel %vm1568, %v1545, 0.0
      %v1720 = vadd.f32 %v1718, %v1719
      %v1721 = vsel %vm1568, %v1546, 0.0
      %v1722 = vadd.f32 %v1720, %v1721
      %v1723 = vsel %vm1568, %v1547, 0.0
      %v1724 = vadd.f32 %v1722, %v1723
      %v1725 = vsel %vm1568, %v1548, 0.0
      %v1726 = vadd.f32 %v1724, %v1725
      %v1727 = vsel %vm1568, %v1549, 0.0
      %v1728 = vadd.f32 %v1726, %v1727
      %v1729 = vsel %vm1568, %v1550, 0.0
      %v1730 = vadd.f32 %v1728, %v1729
      %v1731 = vsel %vm1568, %v1551, 0.0
      %v1732 = vadd.f32 %v1730, %v1731
      %v1733 = vsel %vm1568, %v1552, 0.0
      %v1734 = vadd.f32 %v1732, %v1733
      %v1735 = vsel %vm1568, %v1553, 0.0
      %v1736 = vadd.f32 %v1734, %v1735
      %v1737 = vsel %vm1568, %v1554, 0.0
      %v1738 = vadd.f32 %v1736, %v1737
      %v1739 = vsel %vm1568, %v1555, 0.0
      %v1740 = vadd.f32 %v1738, %v1739
      %v1741 = vsel %vm1568, %v1556, 0.0
      %v1742 = vadd.f32 %v1740, %v1741
      %v1743 = vsel %vm1568, %v1557, 0.0
      %v1744 = vadd.f32 %v1742, %v1743
      %v1745 = vsel %vm1568, %v1558, 0.0
      %v1746 = vadd.f32 %v1744, %v1745
      %v1747 = vsel %vm1568, %v1559, 0.0
      %v1748 = vadd.f32 %v1746, %v1747
      %v1749 = vsel %vm1568, %v1560, 0.0
      %v1750 = vadd.f32 %v1748, %v1749
      %v1751 = vsel %vm1568, %v1561, 0.0
      %v1752 = vadd.f32 %v1750, %v1751
      %v1753 = vsel %vm1568, %v1562, 0.0
      %v1754 = vadd.f32 %v1752, %v1753
      %v1755 = vsel %vm1568, %v1563, 0.0
      %v1756 = vadd.f32 %v1754, %v1755
      %v1757 = vsel %vm1568, %v1564, 0.0
      %v1758 = vadd.f32 %v1756, %v1757
      %v1759 = vsel %vm1568, %v1565, 0.0
      %v1760 = vadd.f32 %v1758, %v1759
      %v1761 = vsel %vm1568, %v1566, 0.0
      %v1762 = vadd.f32 %v1760, %v1761
      %v1763 = vsel %vm1568, %v1567, 0.0
      %v1764 = vadd.f32 %v1762, %v1763
      %v1765 = vrot.slane %v1764, 4
      %v1766 = vadd.f32 %v1764, %v1765
      %v1767 = vrot.slane %v1766, 2
      %v1768 = vadd.f32 %v1766, %v1767
      %v1769 = vrot.slane %v1768, 1
      %v1770 = vadd.f32 %v1768, %v1769
      %1772 = vrot.lane.b32.xlu0 %v1770, 16
      %v1773 = vpop.permute.xlu0 %1772
      %v1775 = vsel %vm1568, %v1701, %v1773
      %v1776 = vmul.f32 %v458, %v458
      %v1777 = vmul.f32 %v461, %v461
      %v1778 = vmul.f32 %v464, %v464
      %v1779 = vmul.f32 %v467, %v467
      %v1780 = vmul.f32 %v470, %v470
      %v1781 = vmul.f32 %v473, %v473
      %v1782 = vmul.f32 %v476, %v476
      %v1783 = vmul.f32 %v479, %v479
      %v1784 = vmul.f32 %v482, %v482
      %v1785 = vmul.f32 %v485, %v485
      %v1786 = vmul.f32 %v488, %v488
      %v1787 = vmul.f32 %v491, %v491
      %v1788 = vmul.f32 %v494, %v494
      %v1789 = vmul.f32 %v497, %v497
      %v1790 = vmul.f32 %v500, %v500
      %v1791 = vmul.f32 %v503, %v503
      %v1792 = vmul.f32 %v506, %v506
      %v1793 = vmul.f32 %v509, %v509
      %v1794 = vmul.f32 %v512, %v512
      %v1795 = vmul.f32 %v515, %v515
      %v1796 = vmul.f32 %v518, %v518
      %v1797 = vmul.f32 %v521, %v521
      %v1798 = vmul.f32 %v524, %v524
      %v1799 = vmul.f32 %v527, %v527
      %v1800 = vmul.f32 %v530, %v530
      %v1801 = vmul.f32 %v533, %v533
      %v1802 = vmul.f32 %v536, %v536
      %v1803 = vmul.f32 %v539, %v539
      %v1804 = vmul.f32 %v542, %v542
      %v1805 = vmul.f32 %v545, %v545
      %v1806 = vmul.f32 %v548, %v548
      %v1807 = vmul.f32 %v551, %v551
      %v1808 = vsel %vm1568, %v1776, 0.0
      %v1809 = vsel %vm1568, %v1777, 0.0
      %v1810 = vadd.f32 %v1808, %v1809
      %v1811 = vsel %vm1568, %v1778, 0.0
      %v1812 = vadd.f32 %v1810, %v1811
      %v1813 = vsel %vm1568, %v1779, 0.0
      %v1814 = vadd.f32 %v1812, %v1813
      %v1815 = vsel %vm1568, %v1780, 0.0
      %v1816 = vadd.f32 %v1814, %v1815
      %v1817 = vsel %vm1568, %v1781, 0.0
      %v1818 = vadd.f32 %v1816, %v1817
      %v1819 = vsel %vm1568, %v1782, 0.0
      %v1820 = vadd.f32 %v1818, %v1819
      %v1821 = vsel %vm1568, %v1783, 0.0
      %v1822 = vadd.f32 %v1820, %v1821
      %v1823 = vsel %vm1568, %v1784, 0.0
      %v1824 = vadd.f32 %v1822, %v1823
      %v1825 = vsel %vm1568, %v1785, 0.0
      %v1826 = vadd.f32 %v1824, %v1825
      %v1827 = vsel %vm1568, %v1786, 0.0
      %v1828 = vadd.f32 %v1826, %v1827
      %v1829 = vsel %vm1568, %v1787, 0.0
      %v1830 = vadd.f32 %v1828, %v1829
      %v1831 = vsel %vm1568, %v1788, 0.0
      %v1832 = vadd.f32 %v1830, %v1831
      %v1833 = vsel %vm1568, %v1789, 0.0
      %v1834 = vadd.f32 %v1832, %v1833
      %v1835 = vsel %vm1568, %v1790, 0.0
      %v1836 = vadd.f32 %v1834, %v1835
      %v1837 = vsel %vm1568, %v1791, 0.0
      %v1838 = vadd.f32 %v1836, %v1837
      %v1839 = vsel %vm1568, %v1792, 0.0
      %v1840 = vadd.f32 %v1838, %v1839
      %v1841 = vsel %vm1568, %v1793, 0.0
      %v1842 = vadd.f32 %v1840, %v1841
      %v1843 = vsel %vm1568, %v1794, 0.0
      %v1844 = vadd.f32 %v1842, %v1843
      %v1845 = vsel %vm1568, %v1795, 0.0
      %v1846 = vadd.f32 %v1844, %v1845
      %v1847 = vsel %vm1568, %v1796, 0.0
      %v1848 = vadd.f32 %v1846, %v1847
      %v1849 = vsel %vm1568, %v1797, 0.0
      %v1850 = vadd.f32 %v1848, %v1849
      %v1851 = vsel %vm1568, %v1798, 0.0
      %v1852 = vadd.f32 %v1850, %v1851
      %v1853 = vsel %vm1568, %v1799, 0.0
      %v1854 = vadd.f32 %v1852, %v1853
      %v1855 = vsel %vm1568, %v1800, 0.0
      %v1856 = vadd.f32 %v1854, %v1855
      %v1857 = vsel %vm1568, %v1801, 0.0
      %v1858 = vadd.f32 %v1856, %v1857
      %v1859 = vsel %vm1568, %v1802, 0.0
      %v1860 = vadd.f32 %v1858, %v1859
      %v1861 = vsel %vm1568, %v1803, 0.0
      %v1862 = vadd.f32 %v1860, %v1861
      %v1863 = vsel %vm1568, %v1804, 0.0
      %v1864 = vadd.f32 %v1862, %v1863
      %v1865 = vsel %vm1568, %v1805, 0.0
      %v1866 = vadd.f32 %v1864, %v1865
      %v1867 = vsel %vm1568, %v1806, 0.0
      %v1868 = vadd.f32 %v1866, %v1867
      %v1869 = vsel %vm1568, %v1807, 0.0
      %v1870 = vadd.f32 %v1868, %v1869
      %v1871 = vrot.slane %v1870, 4
      %v1872 = vadd.f32 %v1870, %v1871
      %v1873 = vrot.slane %v1872, 2
      %v1874 = vadd.f32 %v1872, %v1873
      %v1875 = vrot.slane %v1874, 1
      %v1876 = vadd.f32 %v1874, %v1875
      %v1877 = vmul.f32 %v1536, %v1536
      %v1878 = vmul.f32 %v1537, %v1537
      %v1879 = vmul.f32 %v1538, %v1538
      %v1880 = vmul.f32 %v1539, %v1539
      %v1881 = vmul.f32 %v1540, %v1540
      %v1882 = vmul.f32 %v1541, %v1541
      %v1883 = vmul.f32 %v1542, %v1542
      %v1884 = vmul.f32 %v1543, %v1543
      %v1885 = vmul.f32 %v1544, %v1544
      %v1886 = vmul.f32 %v1545, %v1545
      %v1887 = vmul.f32 %v1546, %v1546
      %v1888 = vmul.f32 %v1547, %v1547
      %v1889 = vmul.f32 %v1548, %v1548
      %v1890 = vmul.f32 %v1549, %v1549
      %v1891 = vmul.f32 %v1550, %v1550
      %v1892 = vmul.f32 %v1551, %v1551
      %v1893 = vmul.f32 %v1552, %v1552
      %v1894 = vmul.f32 %v1553, %v1553
      %v1895 = vmul.f32 %v1554, %v1554
      %v1896 = vmul.f32 %v1555, %v1555
      %v1897 = vmul.f32 %v1556, %v1556
      %v1898 = vmul.f32 %v1557, %v1557
      %v1899 = vmul.f32 %v1558, %v1558
      %v1900 = vmul.f32 %v1559, %v1559
      %v1901 = vmul.f32 %v1560, %v1560
      %v1902 = vmul.f32 %v1561, %v1561
      %v1903 = vmul.f32 %v1562, %v1562
      %v1904 = vmul.f32 %v1563, %v1563
      %v1905 = vmul.f32 %v1564, %v1564
      %v1906 = vmul.f32 %v1565, %v1565
      %v1907 = vmul.f32 %v1566, %v1566
      %v1908 = vmul.f32 %v1567, %v1567
      %v1909 = vsel %vm1568, %v1877, 0.0
      %v1910 = vsel %vm1568, %v1878, 0.0
      %v1911 = vadd.f32 %v1909, %v1910
      %v1912 = vsel %vm1568, %v1879, 0.0
      %v1913 = vadd.f32 %v1911, %v1912
      %v1914 = vsel %vm1568, %v1880, 0.0
      %v1915 = vadd.f32 %v1913, %v1914
      %v1916 = vsel %vm1568, %v1881, 0.0
      %v1917 = vadd.f32 %v1915, %v1916
      %v1918 = vsel %vm1568, %v1882, 0.0
      %v1919 = vadd.f32 %v1917, %v1918
      %v1920 = vsel %vm1568, %v1883, 0.0
      %v1921 = vadd.f32 %v1919, %v1920
      %v1922 = vsel %vm1568, %v1884, 0.0
      %v1923 = vadd.f32 %v1921, %v1922
      %v1924 = vsel %vm1568, %v1885, 0.0
      %v1925 = vadd.f32 %v1923, %v1924
      %v1926 = vsel %vm1568, %v1886, 0.0
      %v1927 = vadd.f32 %v1925, %v1926
      %v1928 = vsel %vm1568, %v1887, 0.0
      %v1929 = vadd.f32 %v1927, %v1928
      %v1930 = vsel %vm1568, %v1888, 0.0
      %v1931 = vadd.f32 %v1929, %v1930
      %v1932 = vsel %vm1568, %v1889, 0.0
      %v1933 = vadd.f32 %v1931, %v1932
      %v1934 = vsel %vm1568, %v1890, 0.0
      %v1935 = vadd.f32 %v1933, %v1934
      %v1936 = vsel %vm1568, %v1891, 0.0
      %v1937 = vadd.f32 %v1935, %v1936
      %v1938 = vsel %vm1568, %v1892, 0.0
      %v1939 = vadd.f32 %v1937, %v1938
      %v1940 = vsel %vm1568, %v1893, 0.0
      %v1941 = vadd.f32 %v1939, %v1940
      %v1942 = vsel %vm1568, %v1894, 0.0
      %v1943 = vadd.f32 %v1941, %v1942
      %v1944 = vsel %vm1568, %v1895, 0.0
      %v1945 = vadd.f32 %v1943, %v1944
      %v1946 = vsel %vm1568, %v1896, 0.0
      %v1947 = vadd.f32 %v1945, %v1946
      %v1948 = vsel %vm1568, %v1897, 0.0
      %v1949 = vadd.f32 %v1947, %v1948
      %v1950 = vsel %vm1568, %v1898, 0.0
      %v1951 = vadd.f32 %v1949, %v1950
      %v1952 = vsel %vm1568, %v1899, 0.0
      %v1953 = vadd.f32 %v1951, %v1952
      %v1954 = vsel %vm1568, %v1900, 0.0
      %v1955 = vadd.f32 %v1953, %v1954
      %v1956 = vsel %vm1568, %v1901, 0.0
      %v1957 = vadd.f32 %v1955, %v1956
      %v1958 = vsel %vm1568, %v1902, 0.0
      %v1959 = vadd.f32 %v1957, %v1958
      %v1960 = vsel %vm1568, %v1903, 0.0
      %v1961 = vadd.f32 %v1959, %v1960
      %v1962 = vsel %vm1568, %v1904, 0.0
      %v1963 = vadd.f32 %v1961, %v1962
      %v1964 = vsel %vm1568, %v1905, 0.0
      %v1965 = vadd.f32 %v1963, %v1964
      %v1966 = vsel %vm1568, %v1906, 0.0
      %v1967 = vadd.f32 %v1965, %v1966
      %v1968 = vsel %vm1568, %v1907, 0.0
      %v1969 = vadd.f32 %v1967, %v1968
      %v1970 = vsel %vm1568, %v1908, 0.0
      %v1971 = vadd.f32 %v1969, %v1970
      %v1972 = vrot.slane %v1971, 4
      %v1973 = vadd.f32 %v1971, %v1972
      %v1974 = vrot.slane %v1973, 2
      %v1975 = vadd.f32 %v1973, %v1974
      %v1976 = vrot.slane %v1975, 1
      %v1977 = vadd.f32 %v1975, %v1976
      %1979 = vrot.lane.b32.xlu0 %v1977, 16
      %v1980 = vpop.permute.xlu0 %1979
      %v1982 = vsel %vm1568, %v1876, %v1980
      %v1984 = vrot.slane %v1982, 7
      %v1986 = vsel %vm553, %v1775, %v1984
      %vm1987 = vcmask 254976
      %1988 = vst.msk [vmem:[%s301] sm:$0x3] %vm1987, %v1986
      %p1989 = scmp.lt.s32.totalorder %s19, 1
      %s1990 = scalar_select %p1989, %s19, 1
      %s1991 = smul.addr %s1990, 32
      %s1992 = smul.addr %s1991, 8
      %s1993 = scalar_lea.vmem %s5, %s1992
      %p1994 = scmp.lt.s32.totalorder %s19, 1
      %s1995 = scalar_select %p1994, %s19, 1
      %s1996 = smul.addr %s1995, 32
      %s1997 = smul.addr %s1996, 8
      %s1998 = scalar_lea.vmem %s6, %s1997
      %p1999 = scmp.lt.s32.totalorder %s19, 1
      %s2000 = scalar_select %p1999, %s19, 1
      %s2001 = smul.addr %s2000, 2
      %s2002 = scalar_lea.vmem %s7, %s2001
      // Predicated region
      $region41: #{inception_v1_forward.3} parent=39 // pred_check
        %p2003 = pneg %p147
      $region42: #{inception_v1_forward.3} parent=39 // pred_check_branch
        %2005 = sbr.rel (%p2003) target = $region44
      $region43: #{inception_v1_forward.3} parent=39 // pred_region
        _
      $region44: #{inception_v1_forward.3} parent=39 // pred_fallthru
        _
      // Predicated region
      $region45: #{inception_v1_forward.3} parent=39 // pred_check
        %p2006 = pneg %p173
      $region46: #{inception_v1_forward.3} parent=39 // pred_check_branch
        %2008 = sbr.rel (%p2006) target = $region48
      $region47: #{inception_v1_forward.3} parent=39 // pred_region
        _
      $region48: #{inception_v1_forward.3} parent=39 // pred_fallthru
        _
      // Predicated region
      $region49: #{inception_v1_forward.3} parent=39 // pred_check
        %p2009 = pneg %p199
      $region50: #{inception_v1_forward.3} parent=39 // pred_check_branch
        %2011 = sbr.rel (%p2009) target = $region52
      $region51: #{inception_v1_forward.3} parent=39 // pred_region
        _
      $region52: #{inception_v1_forward.3} parent=39 // pred_fallthru
        _
    $region40: #{inception_v1_forward.3} parent=5 // pred_fallthru
      _
    %p2012 = scmp.le.s32.totalorder 2, %s14
    // Predicated region
    $region53: #{inception_v1_forward.3} parent=5 // pred_check
      %p2013 = pneg %p2012
    $region54: #{inception_v1_forward.3} parent=5 // pred_check_branch
      %2015 = sbr.rel (%p2013) target = $region56
    $region55: #{inception_v1_forward.3} parent=5 // pred_region
      %s2016 = ssub.s32 %s14, 2
      // Predicated region
      $region57: #{inception_v1_forward.3} parent=55 // pred_check
        %p2017 = pneg %p153
      $region58: #{inception_v1_forward.3} parent=55 // pred_check_branch
        %2019 = sbr.rel (%p2017) target = $region60
      $region59: #{inception_v1_forward.3} parent=55 // pred_region
        %p2020 = scmp.lt.s32.totalorder %s20, 1
        %s2021 = scalar_select %p2020, %s20, 1
        %s2022 = smul.addr %s2021, 32
        %s2023 = smul.addr %s2022, 8
        %s2024 = scalar_lea.vmem %s5, %s2023
      $region60: #{inception_v1_forward.3} parent=55 // pred_fallthru
        _
      // Predicated region
      $region61: #{inception_v1_forward.3} parent=55 // pred_check
        %p2025 = pneg %p179
      $region62: #{inception_v1_forward.3} parent=55 // pred_check_branch
        %2027 = sbr.rel (%p2025) target = $region64
      $region63: #{inception_v1_forward.3} parent=55 // pred_region
        %p2028 = scmp.lt.s32.totalorder %s20, 1
        %s2029 = scalar_select %p2028, %s20, 1
        %s2030 = smul.addr %s2029, 32
        %s2031 = smul.addr %s2030, 8
        %s2032 = scalar_lea.vmem %s6, %s2031
      $region64: #{inception_v1_forward.3} parent=55 // pred_fallthru
        _
      // Predicated region
      $region65: #{inception_v1_forward.3} parent=55 // pred_check
        %p2033 = pneg %p205
      $region66: #{inception_v1_forward.3} parent=55 // pred_check_branch
        %2035 = sbr.rel (%p2033) target = $region68
      $region67: #{inception_v1_forward.3} parent=55 // pred_region
        %p2036 = scmp.lt.s32.totalorder %s20, 1
        %s2037 = scalar_select %p2036, %s20, 1
        %s2038 = smul.addr %s2037, 2
        %s2039 = scalar_lea.vmem %s7, %s2038
      $region68: #{inception_v1_forward.3} parent=55 // pred_fallthru
        _
    $region56: #{inception_v1_forward.3} parent=5 // pred_fallthru
      _
  $region6: #{inception_v1_forward.3} parent=0 // loop_footer
    %s18 = sadd.s32 1, %s14
  $region7: #{inception_v1_forward.3} parent=0 // loop_footer_branch
    %13 = sbr.rel target = $region3
  $region8: #{inception_v1_forward.3} parent=0 // loop_exit
    _

// kernel: inception_v1_forward.5
$region0: #{inception_v1_forward.5}
  #allocation0 [shape = 'u32[]', space=smem, size = 0x4, offset = 0x4, fixed_abs, tag = 'smem constant byte address 0x4 - core index']
  #allocation1 [shape = 'u32[72,128]{1,0:T(1,128)}', space=vmem, size = 0x9000, scoped, tag = 'internal scratch']
  %s0 = inlined_call_operand.vmem [shape: f32[2,16,16,16], index: 0, kind: input, shape index: {}]
  %s1 = inlined_call_operand.vmem [shape: f32[2,16,16,8], index: 1, kind: input, shape index: {}]
  %s2 = inlined_call_operand.vmem [shape: f32[2,16,16,8], index: 2, kind: input, shape index: {}]
  %s3 = inlined_call_operand.vmem [shape: f32[1,32], index: 3, kind: input, shape index: {}]
  %s4 = inlined_call_operand.vmem [shape: f32[1,32], index: 4, kind: input, shape index: {}]
  %s5 = inlined_call_operand.hbm [shape: f32[2,16,16,32], index: 5, kind: output, shape index: {}]
  %s6 = sld [smem:[#allocation0]]
  $region53: #{inception_v1_forward.5} parent=0
    _
  %s8 = ssub.s32 1, %s6
  %s9 = scalar_select 0, %s8, %s6
  $region1: #{inception_v1_forward.5} parent=0
    #allocation2 [shape = 'u8[262144]{0}', space=vmem, size = 0x40000, scoped, tag = 'output window, operand 0']
    #allocation3 [shape = 's32[2]{0}', space=sflag, size = 0x8, scoped, tag = 'scoped memory for inception_v1_forward.5']
    %10 = vsyncpa [#allocation3], 0
    %s11 = scalar_lea.sflag [#allocation3], 1
    %12 = vsyncpa %s11, 0
    loop: start=0, step=1, limit=4
    $region2: #{inception_v1_forward.5} parent=1 // loop_pre_header
      _
    $region3: #{inception_v1_forward.5} parent=1 // loop_header
      %s14 = sphi 0, %s18
      %p15 = scmp.ge.s32.totalorder %s14, 4
      %s24 = sphi 0, %s26
      %s27 = sphi 0, %s24
      %s28 = sphi 0, %s27
      %s44 = sphi 0, %s28
      %s50 = sphi 0, %s52
      %s53 = sphi 0, %s50
      %s54 = sphi 0, %s53
      %s70 = sphi 0, %s54
      %s76 = sphi 0, %s78
      %s79 = sphi 0, %s76
      %s80 = sphi 0, %s79
      %s96 = sphi 0, %s80
      %s100 = sphi 0, %s100
      %s102 = sphi 0, %s100
      %s103 = sphi 0, %s102
      %s117 = sphi 0, %s103
      %s121 = sphi 0, %s121
      %s123 = sphi 0, %s121
      %s124 = sphi 0, %s123
      %s138 = sphi 0, %s124
      %s144 = sphi 0, %s146
      %s147 = sphi 0, %s144
      %s148 = sphi 0, %s147
      %s164 = sphi 0, %s148
    $region4: #{inception_v1_forward.5} parent=1 // loop_header_branch
      %17 = sbr.rel (%p15) target = $region8
    $region5: #{inception_v1_forward.5} parent=1 // loop_body
      %s19 = ssub.s32 %s14, 1
      %s20 = ssub.s32 %s14, 2
      %s21 = sadd.s32 %s14, 1
      %s22 = ssub.s32 %s14, %s21
      %p23 = scmp.eq.s32.totalorder %s22, 0
      %s25 = sadd.s32 %s24, 1
      %s26 = scalar_select %p23, %s24, %s25
      %p29 = pneg %p23
      %p30 = scmp.eq.s32.totalorder %s14, 1
      %p31 = por %p29, %p30
      %p32 = scmp.ne.s32.totalorder %s24, %s27
      %p33 = scmp.eq.s32.totalorder %s14, 0
      %p34 = por %p32, %p33
      %p35 = scmp.ne.s32.totalorder %s24, %s27
      %p36 = scmp.eq.s32.totalorder %s19, 1
      %p37 = por %p35, %p36
      %p38 = scmp.ne.s32.totalorder %s27, %s28
      %p39 = scmp.eq.s32.totalorder %s19, 0
      %p40 = por %p38, %p39
      %p41 = scmp.ne.s32.totalorder %s27, %s28
      %p42 = scmp.eq.s32.totalorder %s20, 1
      %p43 = por %p41, %p42
      %p45 = scmp.ne.s32.totalorder %s28, %s44
      %p46 = scmp.eq.s32.totalorder %s20, 0
      %p47 = por %p45, %p46
      %s48 = ssub.s32 %s14, %s21
      %p49 = scmp.eq.s32.totalorder %s48, 0
      %s51 = sadd.s32 %s50, 1
      %s52 = scalar_select %p49, %s50, %s51
      %p55 = pneg %p49
      %p56 = scmp.eq.s32.totalorder %s14, 1
      %p57 = por %p55, %p56
      %p58 = scmp.ne.s32.totalorder %s50, %s53
      %p59 = scmp.eq.s32.totalorder %s14, 0
      %p60 = por %p58, %p59
      %p61 = scmp.ne.s32.totalorder %s50, %s53
      %p62 = scmp.eq.s32.totalorder %s19, 1
      %p63 = por %p61, %p62
      %p64 = scmp.ne.s32.totalorder %s53, %s54
      %p65 = scmp.eq.s32.totalorder %s19, 0
      %p66 = por %p64, %p65
      %p67 = scmp.ne.s32.totalorder %s53, %s54
      %p68 = scmp.eq.s32.totalorder %s20, 1
      %p69 = por %p67, %p68
      %p71 = scmp.ne.s32.totalorder %s54, %s70
      %p72 = scmp.eq.s32.totalorder %s20, 0
      %p73 = por %p71, %p72
      %s74 = ssub.s32 %s14, %s21
      %p75 = scmp.eq.s32.totalorder %s74, 0
      %s77 = sadd.s32 %s76, 1
      %s78 = scalar_select %p75, %s76, %s77
      %p81 = pneg %p75
      %p82 = scmp.eq.s32.totalorder %s14, 1
      %p83 = por %p81, %p82
      %p84 = scmp.ne.s32.totalorder %s76, %s79
      %p85 = scmp.eq.s32.totalorder %s14, 0
      %p86 = por %p84, %p85
      %p87 = scmp.ne.s32.totalorder %s76, %s79
      %p88 = scmp.eq.s32.totalorder %s19, 1
      %p89 = por %p87, %p88
      %p90 = scmp.ne.s32.totalorder %s79, %s80
      %p91 = scmp.eq.s32.totalorder %s19, 0
      %p92 = por %p90, %p91
      %p93 = scmp.ne.s32.totalorder %s79, %s80
      %p94 = scmp.eq.s32.totalorder %s20, 1
      %p95 = por %p93, %p94
      %p97 = scmp.ne.s32.totalorder %s80, %s96
      %p98 = scmp.eq.s32.totalorder %s20, 0
      %p99 = por %p97, %p98
      %s101 = sadd.s32 %s100, 1
      %p104 = scmp.eq.s32.totalorder %s14, 1
      %p105 = scmp.ne.s32.totalorder %s100, %s102
      %p106 = scmp.eq.s32.totalorder %s14, 0
      %p107 = por %p105, %p106
      %p108 = scmp.ne.s32.totalorder %s100, %s102
      %p109 = scmp.eq.s32.totalorder %s19, 1
      %p110 = por %p108, %p109
      %p111 = scmp.ne.s32.totalorder %s102, %s103
      %p112 = scmp.eq.s32.totalorder %s19, 0
      %p113 = por %p111, %p112
      %p114 = scmp.ne.s32.totalorder %s102, %s103
      %p115 = scmp.eq.s32.totalorder %s20, 1
      %p116 = por %p114, %p115
      %p118 = scmp.ne.s32.totalorder %s103, %s117
      %p119 = scmp.eq.s32.totalorder %s20, 0
      %p120 = por %p118, %p119
      %s122 = sadd.s32 %s121, 1
      %p125 = scmp.eq.s32.totalorder %s14, 1
      %p126 = scmp.ne.s32.totalorder %s121, %s123
      %p127 = scmp.eq.s32.totalorder %s14, 0
      %p128 = por %p126, %p127
      %p129 = scmp.ne.s32.totalorder %s121, %s123
      %p130 = scmp.eq.s32.totalorder %s19, 1
      %p131 = por %p129, %p130
      %p132 = scmp.ne.s32.totalorder %s123, %s124
      %p133 = scmp.eq.s32.totalorder %s19, 0
      %p134 = por %p132, %p133
      %p135 = scmp.ne.s32.totalorder %s123, %s124
      %p136 = scmp.eq.s32.totalorder %s20, 1
      %p137 = por %p135, %p136
      %p139 = scmp.ne.s32.totalorder %s124, %s138
      %p140 = scmp.eq.s32.totalorder %s20, 0
      %p141 = por %p139, %p140
      %s142 = ssub.s32 %s14, %s21
      %p143 = scmp.eq.s32.totalorder %s142, 0
      %s145 = sadd.s32 %s144, 1
      %s146 = scalar_select %p143, %s144, %s145
      %p149 = pneg %p143
      %p150 = scmp.eq.s32.totalorder %s14, 1
      %p151 = por %p149, %p150
      %p152 = scmp.ne.s32.totalorder %s144, %s147
      %p153 = scmp.eq.s32.totalorder %s14, 0
      %p154 = por %p152, %p153
      %p155 = scmp.ne.s32.totalorder %s144, %s147
      %p156 = scmp.eq.s32.totalorder %s19, 1
      %p157 = por %p155, %p156
      %p158 = scmp.ne.s32.totalorder %s147, %s148
      %p159 = scmp.eq.s32.totalorder %s19, 0
      %p160 = por %p158, %p159
      %p161 = scmp.ne.s32.totalorder %s147, %s148
      %p162 = scmp.eq.s32.totalorder %s20, 1
      %p163 = por %p161, %p162
      %p165 = scmp.ne.s32.totalorder %s148, %s164
      %p166 = scmp.eq.s32.totalorder %s20, 0
      %p167 = por %p165, %p166
      %p168 = scmp.le.s32.totalorder 1, %s14
      %p169 = scmp.lt.s32.totalorder %s14, 3
      %p170 = pnand %p168, %p169
      %p171 = pneg %p170
      // Predicated region
      $region9: #{inception_v1_forward.5} parent=5 // pred_check
        _
      $region10: #{inception_v1_forward.5} parent=5 // pred_check_branch
        %173 = sbr.rel (%p170) target = $region12
      $region11: #{inception_v1_forward.5} parent=5 // pred_region
        %s174 = ssub.s32 %s14, 1
        // Predicated region
        $region13: #{inception_v1_forward.5} parent=11 // pred_check
          %p175 = pneg %p113
        $region14: #{inception_v1_forward.5} parent=11 // pred_check_branch
          %177 = sbr.rel (%p175) target = $region16
        $region15: #{inception_v1_forward.5} parent=11 // pred_region
          _
        $region16: #{inception_v1_forward.5} parent=11 // pred_fallthru
          _
        // Predicated region
        $region17: #{inception_v1_forward.5} parent=11 // pred_check
          %p178 = pneg %p134
        $region18: #{inception_v1_forward.5} parent=11 // pred_check_branch
          %180 = sbr.rel (%p178) target = $region20
        $region19: #{inception_v1_forward.5} parent=11 // pred_region
          _
        $region20: #{inception_v1_forward.5} parent=11 // pred_fallthru
          _
      $region12: #{inception_v1_forward.5} parent=5 // pred_fallthru
        _
      %p181 = scmp.lt.s32.totalorder %s14, 2
      // Predicated region
      $region21: #{inception_v1_forward.5} parent=5 // pred_check
        %p182 = pneg %p181
      $region22: #{inception_v1_forward.5} parent=5 // pred_check_branch
        %184 = sbr.rel (%p182) target = $region24
      $region23: #{inception_v1_forward.5} parent=5 // pred_region
        // Predicated region
        $region25: #{inception_v1_forward.5} parent=23 // pred_check
          %p185 = pneg %p34
        $region26: #{inception_v1_forward.5} parent=23 // pred_check_branch
          %187 = sbr.rel (%p185) target = $region28
        $region27: #{inception_v1_forward.5} parent=23 // pred_region
          %p188 = scmp.lt.s32.totalorder %s14, 1
          %s189 = scalar_select %p188, %s14, 1
          %s190 = smul.addr %s189, 32
          %s191 = smul.addr %s190, 8
          %s192 = scalar_lea.vmem %s0, %s191
        $region28: #{inception_v1_forward.5} parent=23 // pred_fallthru
          _
        // Predicated region
        $region29: #{inception_v1_forward.5} parent=23 // pred_check
          %p193 = pneg %p60
        $region30: #{inception_v1_forward.5} parent=23 // pred_check_branch
          %195 = sbr.rel (%p193) target = $region32
        $region31: #{inception_v1_forward.5} parent=23 // pred_region
          %p196 = scmp.lt.s32.totalorder %s14, 1
          %s197 = scalar_select %p196, %s14, 1
          %s198 = smul.addr %s197, 32
          %s199 = smul.addr %s198, 8
          %s200 = scalar_lea.vmem %s1, %s199
        $region32: #{inception_v1_forward.5} parent=23 // pred_fallthru
          _
        // Predicated region
        $region33: #{inception_v1_forward.5} parent=23 // pred_check
          %p201 = pneg %p86
        $region34: #{inception_v1_forward.5} parent=23 // pred_check_branch
          %203 = sbr.rel (%p201) target = $region36
        $region35: #{inception_v1_forward.5} parent=23 // pred_region
          %p204 = scmp.lt.s32.totalorder %s14, 1
          %s205 = scalar_select %p204, %s14, 1
          %s206 = smul.addr %s205, 32
          %s207 = smul.addr %s206, 8
          %s208 = scalar_lea.vmem %s2, %s207
        $region36: #{inception_v1_forward.5} parent=23 // pred_fallthru
          _
      $region24: #{inception_v1_forward.5} parent=5 // pred_fallthru
        _
      %p209 = scmp.le.s32.totalorder 1, %s14
      %p210 = scmp.lt.s32.totalorder %s14, 3
      %p211 = pnand %p209, %p210
      %p212 = pneg %p211
      // Predicated region
      $region37: #{inception_v1_forward.5} parent=5 // pred_check
        _
      $region38: #{inception_v1_forward.5} parent=5 // pred_check_branch
        %214 = sbr.rel (%p211) target = $region40
      $region39: #{inception_v1_forward.5} parent=5 // pred_region
        %s215 = ssub.s32 %s14, 1
        %p216 = scmp.lt.s32.totalorder %s19, 1
        %s217 = scalar_select %p216, %s19, 1
        %s218 = smul.addr %s217, 32
        %s219 = smul.addr %s218, 8
        %s220 = scalar_lea.vmem %s0, %s219
        %p221 = pneg %p40
        %p222 = pneg %p37
        %p223 = scmp.lt.s32.totalorder %s19, 1
        %s224 = scalar_select %p223, %s19, 1
        %s225 = smul.addr %s224, 32
        %s226 = smul.addr %s225, 8
        %s227 = scalar_lea.vmem %s1, %s226
        %p228 = pneg %p66
        %p229 = pneg %p63
        %p230 = scmp.lt.s32.totalorder %s19, 1
        %s231 = scalar_select %p230, %s19, 1
        %s232 = smul.addr %s231, 32
        %s233 = smul.addr %s232, 8
        %s234 = scalar_lea.vmem %s2, %s233
        %p235 = pneg %p92
        %p236 = pneg %p89
        %p237 = pneg %p113
        %p238 = pneg %p110
        %p239 = pneg %p134
        %p240 = pneg %p131
        %p241 = pneg %p160
        %p242 = pneg %p157
        %s243 = sand.u32 %s147, 1
        %s244 = scalar_lea.sflag [#allocation3], %s243
        %s245 = sand.u32 %s147, 1
        %s246 = smul.addr %s245, 256
        %s247 = scalar_lea.vmem [#allocation2], %s246
        %p248 = scmp.lt.s32.totalorder %s19, 1
        %s249 = scalar_select %p248, %s19, 1
        %s250 = smul.addr %s249, 32
        %s251 = smul.addr %s250, 8
        %s252 = scalar_lea.vmem %s0, %s251
        %p253 = scmp.lt.s32.totalorder %s19, 1
        %s254 = scalar_select %p253, %s19, 1
        %s255 = smul.addr %s254, 32
        %s256 = smul.addr %s255, 8
        %s257 = scalar_lea.vmem %s1, %s256
        %p258 = scmp.lt.s32.totalorder %s19, 1
        %s259 = scalar_select %p258, %s19, 1
        %s260 = smul.addr %s259, 32
        %s261 = smul.addr %s260, 8
        %s262 = scalar_lea.vmem %s2, %s261
        %v263 = vld [vmem:[%s3] sm:$0x1]
        %v264 = vld [vmem:[%s4] sm:$0x1]
        %v265 = vld [vmem:[%s252] sm:$0xff]
        %v266 = vld [vmem:[%s252 + $0x8] sm:$0xff]
        %v267 = vld [vmem:[%s252 + $0x10] sm:$0xff]
        %v268 = vld [vmem:[%s252 + $0x18] sm:$0xff]
        %v269 = vld [vmem:[%s252 + $0x20] sm:$0xff]
        %v270 = vld [vmem:[%s252 + $0x28] sm:$0xff]
        %v271 = vld [vmem:[%s252 + $0x30] sm:$0xff]
        %v272 = vld [vmem:[%s252 + $0x38] sm:$0xff]
        %v273 = vld [vmem:[%s252 + $0x40] sm:$0xff]
        %v274 = vld [vmem:[%s252 + $0x48] sm:$0xff]
        %v275 = vld [vmem:[%s252 + $0x50] sm:$0xff]
        %v276 = vld [vmem:[%s252 + $0x58] sm:$0xff]
        %v277 = vld [vmem:[%s252 + $0x60] sm:$0xff]
        %v278 = vld [vmem:[%s252 + $0x68] sm:$0xff]
        %v279 = vld [vmem:[%s252 + $0x70] sm:$0xff]
        %v280 = vld [vmem:[%s252 + $0x78] sm:$0xff]
        %v281 = vld [vmem:[%s252 + $0x80] sm:$0xff]
        %v282 = vld [vmem:[%s252 + $0x88] sm:$0xff]
        %v283 = vld [vmem:[%s252 + $0x90] sm:$0xff]
        %v284 = vld [vmem:[%s252 + $0x98] sm:$0xff]
        %v285 = vld [vmem:[%s252 + $0xa0] sm:$0xff]
        %v286 = vld [vmem:[%s252 + $0xa8] sm:$0xff]
        %v287 = vld [vmem:[%s252 + $0xb0] sm:$0xff]
        %v288 = vld [vmem:[%s252 + $0xb8] sm:$0xff]
        %v289 = vld [vmem:[%s252 + $0xc0] sm:$0xff]
        %v290 = vld [vmem:[%s252 + $0xc8] sm:$0xff]
        %v291 = vld [vmem:[%s252 + $0xd0] sm:$0xff]
        %v292 = vld [vmem:[%s252 + $0xd8] sm:$0xff]
        %v293 = vld [vmem:[%s252 + $0xe0] sm:$0xff]
        %v294 = vld [vmem:[%s252 + $0xe8] sm:$0xff]
        %v295 = vld [vmem:[%s252 + $0xf0] sm:$0xff]
        %v296 = vld [vmem:[%s252 + $0xf8] sm:$0xff]
        %v298 = vperm.slane %v263, 0
        %v300 = vmul.f32 %v265, %v298
        %v301 = vmul.f32 %v266, %v298
        %v302 = vmul.f32 %v267, %v298
        %v303 = vmul.f32 %v268, %v298
        %v304 = vmul.f32 %v269, %v298
        %v305 = vmul.f32 %v270, %v298
        %v306 = vmul.f32 %v271, %v298
        %v307 = vmul.f32 %v272, %v298
        %v308 = vmul.f32 %v273, %v298
        %v309 = vmul.f32 %v274, %v298
        %v310 = vmul.f32 %v275, %v298
        %v311 = vmul.f32 %v276, %v298
        %v312 = vmul.f32 %v277, %v298
        %v313 = vmul.f32 %v278, %v298
        %v314 = vmul.f32 %v279, %v298
        %v315 = vmul.f32 %v280, %v298
        %v316 = vmul.f32 %v281, %v298
        %v317 = vmul.f32 %v282, %v298
        %v318 = vmul.f32 %v283, %v298
        %v319 = vmul.f32 %v284, %v298
        %v320 = vmul.f32 %v285, %v298
        %v321 = vmul.f32 %v286, %v298
        %v322 = vmul.f32 %v287, %v298
        %v323 = vmul.f32 %v288, %v298
        %v324 = vmul.f32 %v289, %v298
        %v325 = vmul.f32 %v290, %v298
        %v326 = vmul.f32 %v291, %v298
        %v327 = vmul.f32 %v292, %v298
        %v328 = vmul.f32 %v293, %v298
        %v329 = vmul.f32 %v294, %v298
        %v330 = vmul.f32 %v295, %v298
        %v331 = vmul.f32 %v296, %v298
        %v333 = vperm.slane %v264, 0
        %v335 = vadd.f32 %v300, %v333
        %v336 = vadd.f32 %v301, %v333
        %v337 = vadd.f32 %v302, %v333
        %v338 = vadd.f32 %v303, %v333
        %v339 = vadd.f32 %v304, %v333
        %v340 = vadd.f32 %v305, %v333
        %v341 = vadd.f32 %v306, %v333
        %v342 = vadd.f32 %v307, %v333
        %v343 = vadd.f32 %v308, %v333
        %v344 = vadd.f32 %v309, %v333
        %v345 = vadd.f32 %v310, %v333
        %v346 = vadd.f32 %v311, %v333
        %v347 = vadd.f32 %v312, %v333
        %v348 = vadd.f32 %v313, %v333
        %v349 = vadd.f32 %v314, %v333
        %v350 = vadd.f32 %v315, %v333
        %v351 = vadd.f32 %v316, %v333
        %v352 = vadd.f32 %v317, %v333
        %v353 = vadd.f32 %v318, %v333
        %v354 = vadd.f32 %v319, %v333
        %v355 = vadd.f32 %v320, %v333
        %v356 = vadd.f32 %v321, %v333
        %v357 = vadd.f32 %v322, %v333
        %v358 = vadd.f32 %v323, %v333
        %v359 = vadd.f32 %v324, %v333
        %v360 = vadd.f32 %v325, %v333
        %v361 = vadd.f32 %v326, %v333
        %v362 = vadd.f32 %v327, %v333
        %v363 = vadd.f32 %v328, %v333
        %v364 = vadd.f32 %v329, %v333
        %v365 = vadd.f32 %v330, %v333
        %v366 = vadd.f32 %v331, %v333
        %vm367 = vcmask 64512
        %368 = vst.msk [vmem:[%s247] sm:$0xff] %vm367, %v335
        %369 = vst.msk [vmem:[%s247 + $0x8] sm:$0xff] %vm367, %v336
        %370 = vst.msk [vmem:[%s247 + $0x10] sm:$0xff] %vm367, %v337
        %371 = vst.msk [vmem:[%s247 + $0x18] sm:$0xff] %vm367, %v338
        %372 = vst.msk [vmem:[%s247 + $0x20] sm:$0xff] %vm367, %v339
        %373 = vst.msk [vmem:[%s247 + $0x28] sm:$0xff] %vm367, %v340
        %374 = vst.msk [vmem:[%s247 + $0x30] sm:$0xff] %vm367, %v341
        %375 = vst.msk [vmem:[%s247 + $0x38] sm:$0xff] %vm367, %v342
        %376 = vst.msk [vmem:[%s247 + $0x40] sm:$0xff] %vm367, %v343
        %377 = vst.msk [vmem:[%s247 + $0x48] sm:$0xff] %vm367, %v344
        %378 = vst.msk [vmem:[%s247 + $0x50] sm:$0xff] %vm367, %v345
        %379 = vst.msk [vmem:[%s247 + $0x58] sm:$0xff] %vm367, %v346
        %380 = vst.msk [vmem:[%s247 + $0x60] sm:$0xff] %vm367, %v347
        %381 = vst.msk [vmem:[%s247 + $0x68] sm:$0xff] %vm367, %v348
        %382 = vst.msk [vmem:[%s247 + $0x70] sm:$0xff] %vm367, %v349
        %383 = vst.msk [vmem:[%s247 + $0x78] sm:$0xff] %vm367, %v350
        %384 = vst.msk [vmem:[%s247 + $0x80] sm:$0xff] %vm367, %v351
        %385 = vst.msk [vmem:[%s247 + $0x88] sm:$0xff] %vm367, %v352
        %386 = vst.msk [vmem:[%s247 + $0x90] sm:$0xff] %vm367, %v353
        %387 = vst.msk [vmem:[%s247 + $0x98] sm:$0xff] %vm367, %v354
        %388 = vst.msk [vmem:[%s247 + $0xa0] sm:$0xff] %vm367, %v355
        %389 = vst.msk [vmem:[%s247 + $0xa8] sm:$0xff] %vm367, %v356
        %390 = vst.msk [vmem:[%s247 + $0xb0] sm:$0xff] %vm367, %v357
        %391 = vst.msk [vmem:[%s247 + $0xb8] sm:$0xff] %vm367, %v358
        %392 = vst.msk [vmem:[%s247 + $0xc0] sm:$0xff] %vm367, %v359
        %393 = vst.msk [vmem:[%s247 + $0xc8] sm:$0xff] %vm367, %v360
        %394 = vst.msk [vmem:[%s247 + $0xd0] sm:$0xff] %vm367, %v361
        %395 = vst.msk [vmem:[%s247 + $0xd8] sm:$0xff] %vm367, %v362
        %396 = vst.msk [vmem:[%s247 + $0xe0] sm:$0xff] %vm367, %v363
        %397 = vst.msk [vmem:[%s247 + $0xe8] sm:$0xff] %vm367, %v364
        %398 = vst.msk [vmem:[%s247 + $0xf0] sm:$0xff] %vm367, %v365
        %399 = vst.msk [vmem:[%s247 + $0xf8] sm:$0xff] %vm367, %v366
        %v400 = vld [vmem:[%s257] sm:$0xff]
        %v401 = vld [vmem:[%s257 + $0x8] sm:$0xff]
        %v402 = vld [vmem:[%s257 + $0x10] sm:$0xff]
        %v403 = vld [vmem:[%s257 + $0x18] sm:$0xff]
        %v404 = vld [vmem:[%s257 + $0x20] sm:$0xff]
        %v405 = vld [vmem:[%s257 + $0x28] sm:$0xff]
        %v406 = vld [vmem:[%s257 + $0x30] sm:$0xff]
        %v407 = vld [vmem:[%s257 + $0x38] sm:$0xff]
        %v408 = vld [vmem:[%s257 + $0x40] sm:$0xff]
        %v409 = vld [vmem:[%s257 + $0x48] sm:$0xff]
        %v410 = vld [vmem:[%s257 + $0x50] sm:$0xff]
        %v411 = vld [vmem:[%s257 + $0x58] sm:$0xff]
        %v412 = vld [vmem:[%s257 + $0x60] sm:$0xff]
        %v413 = vld [vmem:[%s257 + $0x68] sm:$0xff]
        %v414 = vld [vmem:[%s257 + $0x70] sm:$0xff]
        %v415 = vld [vmem:[%s257 + $0x78] sm:$0xff]
        %v416 = vld [vmem:[%s257 + $0x80] sm:$0xff]
        %v417 = vld [vmem:[%s257 + $0x88] sm:$0xff]
        %v418 = vld [vmem:[%s257 + $0x90] sm:$0xff]
        %v419 = vld [vmem:[%s257 + $0x98] sm:$0xff]
        %v420 = vld [vmem:[%s257 + $0xa0] sm:$0xff]
        %v421 = vld [vmem:[%s257 + $0xa8] sm:$0xff]
        %v422 = vld [vmem:[%s257 + $0xb0] sm:$0xff]
        %v423 = vld [vmem:[%s257 + $0xb8] sm:$0xff]
        %v424 = vld [vmem:[%s257 + $0xc0] sm:$0xff]
        %v425 = vld [vmem:[%s257 + $0xc8] sm:$0xff]
        %v426 = vld [vmem:[%s257 + $0xd0] sm:$0xff]
        %v427 = vld [vmem:[%s257 + $0xd8] sm:$0xff]
        %v428 = vld [vmem:[%s257 + $0xe0] sm:$0xff]
        %v429 = vld [vmem:[%s257 + $0xe8] sm:$0xff]
        %v430 = vld [vmem:[%s257 + $0xf0] sm:$0xff]
        %v431 = vld [vmem:[%s257 + $0xf8] sm:$0xff]
        %432 = vrot.lane.b32.xlu0 %v298, 120
        %v433 = vpop.permute.xlu0 %432
        %v435 = vmul.f32 %v400, %v433
        %v436 = vmul.f32 %v401, %v433
        %v437 = vmul.f32 %v402, %v433
        %v438 = vmul.f32 %v403, %v433
        %v439 = vmul.f32 %v404, %v433
        %v440 = vmul.f32 %v405, %v433
        %v441 = vmul.f32 %v406, %v433
        %v442 = vmul.f32 %v407, %v433
        %v443 = vmul.f32 %v408, %v433
        %v444 = vmul.f32 %v409, %v433
        %v445 = vmul.f32 %v410, %v433
        %v446 = vmul.f32 %v411, %v433
        %v447 = vmul.f32 %v412, %v433
        %v448 = vmul.f32 %v413, %v433
        %v449 = vmul.f32 %v414, %v433
        %v450 = vmul.f32 %v415, %v433
        %v451 = vmul.f32 %v416, %v433
        %v452 = vmul.f32 %v417, %v433
        %v453 = vmul.f32 %v418, %v433
        %v454 = vmul.f32 %v419, %v433
        %v455 = vmul.f32 %v420, %v433
        %v456 = vmul.f32 %v421, %v433
        %v457 = vmul.f32 %v422, %v433
        %v458 = vmul.f32 %v423, %v433
        %v459 = vmul.f32 %v424, %v433
        %v460 = vmul.f32 %v425, %v433
        %v461 = vmul.f32 %v426, %v433
        %v462 = vmul.f32 %v427, %v433
        %v463 = vmul.f32 %v428, %v433
        %v464 = vmul.f32 %v429, %v433
        %v465 = vmul.f32 %v430, %v433
        %v466 = vmul.f32 %v431, %v433
        %467 = vrot.lane.b32.xlu0 %v333, 120
        %v468 = vpop.permute.xlu0 %467
        %v470 = vadd.f32 %v435, %v468
        %v471 = vadd.f32 %v436, %v468
        %v472 = vadd.f32 %v437, %v468
        %v473 = vadd.f32 %v438, %v468
        %v474 = vadd.f32 %v439, %v468
        %v475 = vadd.f32 %v440, %v468
        %v476 = vadd.f32 %v441, %v468
        %v477 = vadd.f32 %v442, %v468
        %v478 = vadd.f32 %v443, %v468
        %v479 = vadd.f32 %v444, %v468
        %v480 = vadd.f32 %v445, %v468
        %v481 = vadd.f32 %v446, %v468
        %v482 = vadd.f32 %v447, %v468
        %v483 = vadd.f32 %v448, %v468
        %v484 = vadd.f32 %v449, %v468
        %v485 = vadd.f32 %v450, %v468
        %v486 = vadd.f32 %v451, %v468
        %v487 = vadd.f32 %v452, %v468
        %v488 = vadd.f32 %v453, %v468
        %v489 = vadd.f32 %v454, %v468
        %v490 = vadd.f32 %v455, %v468
        %v491 = vadd.f32 %v456, %v468
        %v492 = vadd.f32 %v457, %v468
        %v493 = vadd.f32 %v458, %v468
        %v494 = vadd.f32 %v459, %v468
        %v495 = vadd.f32 %v460, %v468
        %v496 = vadd.f32 %v461, %v468
        %v497 = vadd.f32 %v462, %v468
        %v498 = vadd.f32 %v463, %v468
        %v499 = vadd.f32 %v464, %v468
        %v500 = vadd.f32 %v465, %v468
        %v501 = vadd.f32 %v466, %v468
        %534 = vrot.lane.b32.xlu0 %v470, 8
        %v535 = vpop.permute.xlu0 %534
        %536 = vrot.lane.b32.xlu0 %v471, 8
        %v537 = vpop.permute.xlu0 %536
        %538 = vrot.lane.b32.xlu0 %v472, 8
        %v539 = vpop.permute.xlu0 %538
        %540 = vrot.lane.b32.xlu0 %v473, 8
        %v541 = vpop.permute.xlu0 %540
        %542 = vrot.lane.b32.xlu0 %v474, 8
        %v543 = vpop.permute.xlu0 %542
        %544 = vrot.lane.b32.xlu0 %v475, 8
        %v545 = vpop.permute.xlu0 %544
        %546 = vrot.lane.b32.xlu0 %v476, 8
        %v547 = vpop.permute.xlu0 %546
        %548 = vrot.lane.b32.xlu0 %v477, 8
        %v549 = vpop.permute.xlu0 %548
        %550 = vrot.lane.b32.xlu0 %v478, 8
        %v551 = vpop.permute.xlu0 %550
        %552 = vrot.lane.b32.xlu0 %v479, 8
        %v553 = vpop.permute.xlu0 %552
        %554 = vrot.lane.b32.xlu0 %v480, 8
        %v555 = vpop.permute.xlu0 %554
        %556 = vrot.lane.b32.xlu0 %v481, 8
        %v557 = vpop.permute.xlu0 %556
        %558 = vrot.lane.b32.xlu0 %v482, 8
        %v559 = vpop.permute.xlu0 %558
        %560 = vrot.lane.b32.xlu0 %v483, 8
        %v561 = vpop.permute.xlu0 %560
        %562 = vrot.lane.b32.xlu0 %v484, 8
        %v563 = vpop.permute.xlu0 %562
        %564 = vrot.lane.b32.xlu0 %v485, 8
        %v565 = vpop.permute.xlu0 %564
        %566 = vrot.lane.b32.xlu0 %v486, 8
        %v567 = vpop.permute.xlu0 %566
        %568 = vrot.lane.b32.xlu0 %v487, 8
        %v569 = vpop.permute.xlu0 %568
        %570 = vrot.lane.b32.xlu0 %v488, 8
        %v571 = vpop.permute.xlu0 %570
        %572 = vrot.lane.b32.xlu0 %v489, 8
        %v573 = vpop.permute.xlu0 %572
        %574 = vrot.lane.b32.xlu0 %v490, 8
        %v575 = vpop.permute.xlu0 %574
        %576 = vrot.lane.b32.xlu0 %v491, 8
        %v577 = vpop.permute.xlu0 %576
        %578 = vrot.lane.b32.xlu0 %v492, 8
        %v579 = vpop.permute.xlu0 %578
        %580 = vrot.lane.b32.xlu0 %v493, 8
        %v581 = vpop.permute.xlu0 %580
        %582 = vrot.lane.b32.xlu0 %v494, 8
        %v583 = vpop.permute.xlu0 %582
        %584 = vrot.lane.b32.xlu0 %v495, 8
        %v585 = vpop.permute.xlu0 %584
        %586 = vrot.lane.b32.xlu0 %v496, 8
        %v587 = vpop.permute.xlu0 %586
        %588 = vrot.lane.b32.xlu0 %v497, 8
        %v589 = vpop.permute.xlu0 %588
        %590 = vrot.lane.b32.xlu0 %v498, 8
        %v591 = vpop.permute.xlu0 %590
        %592 = vrot.lane.b32.xlu0 %v499, 8
        %v593 = vpop.permute.xlu0 %592
        %594 = vrot.lane.b32.xlu0 %v500, 8
        %v595 = vpop.permute.xlu0 %594
        %596 = vrot.lane.b32.xlu0 %v501, 8
        %v597 = vpop.permute.xlu0 %596
        %vm630 = vcmask 130112
        %631 = vst.msk [vmem:[%s247] sm:$0xff] %vm630, %v535
        %632 = vst.msk [vmem:[%s247 + $0x8] sm:$0xff] %vm630, %v537
        %633 = vst.msk [vmem:[%s247 + $0x10] sm:$0xff] %vm630, %v539
        %634 = vst.msk [vmem:[%s247 + $0x18] sm:$0xff] %vm630, %v541
        %635 = vst.msk [vmem:[%s247 + $0x20] sm:$0xff] %vm630, %v543
        %636 = vst.msk [vmem:[%s247 + $0x28] sm:$0xff] %vm630, %v545
        %637 = vst.msk [vmem:[%s247 + $0x30] sm:$0xff] %vm630, %v547
        %638 = vst.msk [vmem:[%s247 + $0x38] sm:$0xff] %vm630, %v549
        %639 = vst.msk [vmem:[%s247 + $0x40] sm:$0xff] %vm630, %v551
        %640 = vst.msk [vmem:[%s247 + $0x48] sm:$0xff] %vm630, %v553
        %641 = vst.msk [vmem:[%s247 + $0x50] sm:$0xff] %vm630, %v555
        %642 = vst.msk [vmem:[%s247 + $0x58] sm:$0xff] %vm630, %v557
        %643 = vst.msk [vmem:[%s247 + $0x60] sm:$0xff] %vm630, %v559
        %644 = vst.msk [vmem:[%s247 + $0x68] sm:$0xff] %vm630, %v561
        %645 = vst.msk [vmem:[%s247 + $0x70] sm:$0xff] %vm630, %v563
        %646 = vst.msk [vmem:[%s247 + $0x78] sm:$0xff] %vm630, %v565
        %647 = vst.msk [vmem:[%s247 + $0x80] sm:$0xff] %vm630, %v567
        %648 = vst.msk [vmem:[%s247 + $0x88] sm:$0xff] %vm630, %v569
        %649 = vst.msk [vmem:[%s247 + $0x90] sm:$0xff] %vm630, %v571
        %650 = vst.msk [vmem:[%s247 + $0x98] sm:$0xff] %vm630, %v573
        %651 = vst.msk [vmem:[%s247 + $0xa0] sm:$0xff] %vm630, %v575
        %652 = vst.msk [vmem:[%s247 + $0xa8] sm:$0xff] %vm630, %v577
        %653 = vst.msk [vmem:[%s247 + $0xb0] sm:$0xff] %vm630, %v579
        %654 = vst.msk [vmem:[%s247 + $0xb8] sm:$0xff] %vm630, %v581
        %655 = vst.msk [vmem:[%s247 + $0xc0] sm:$0xff] %vm630, %v583
        %656 = vst.msk [vmem:[%s247 + $0xc8] sm:$0xff] %vm630, %v585
        %657 = vst.msk [vmem:[%s247 + $0xd0] sm:$0xff] %vm630, %v587
        %658 = vst.msk [vmem:[%s247 + $0xd8] sm:$0xff] %vm630, %v589
        %659 = vst.msk [vmem:[%s247 + $0xe0] sm:$0xff] %vm630, %v591
        %660 = vst.msk [vmem:[%s247 + $0xe8] sm:$0xff] %vm630, %v593
        %661 = vst.msk [vmem:[%s247 + $0xf0] sm:$0xff] %vm630, %v595
        %662 = vst.msk [vmem:[%s247 + $0xf8] sm:$0xff] %vm630, %v597
        %v663 = vld [vmem:[%s262] sm:$0xff]
        %v664 = vld [vmem:[%s262 + $0x8] sm:$0xff]
        %v665 = vld [vmem:[%s262 + $0x10] sm:$0xff]
        %v666 = vld [vmem:[%s262 + $0x18] sm:$0xff]
        %v667 = vld [vmem:[%s262 + $0x20] sm:$0xff]
        %v668 = vld [vmem:[%s262 + $0x28] sm:$0xff]
        %v669 = vld [vmem:[%s262 + $0x30] sm:$0xff]
        %v670 = vld [vmem:[%s262 + $0x38] sm:$0xff]
        %v671 = vld [vmem:[%s262 + $0x40] sm:$0xff]
        %v672 = vld [vmem:[%s262 + $0x48] sm:$0xff]
        %v673 = vld [vmem:[%s262 + $0x50] sm:$0xff]
        %v674 = vld [vmem:[%s262 + $0x58] sm:$0xff]
        %v675 = vld [vmem:[%s262 + $0x60] sm:$0xff]
        %v676 = vld [vmem:[%s262 + $0x68] sm:$0xff]
        %v677 = vld [vmem:[%s262 + $0x70] sm:$0xff]
        %v678 = vld [vmem:[%s262 + $0x78] sm:$0xff]
        %v679 = vld [vmem:[%s262 + $0x80] sm:$0xff]
        %v680 = vld [vmem:[%s262 + $0x88] sm:$0xff]
        %v681 = vld [vmem:[%s262 + $0x90] sm:$0xff]
        %v682 = vld [vmem:[%s262 + $0x98] sm:$0xff]
        %v683 = vld [vmem:[%s262 + $0xa0] sm:$0xff]
        %v684 = vld [vmem:[%s262 + $0xa8] sm:$0xff]
        %v685 = vld [vmem:[%s262 + $0xb0] sm:$0xff]
        %v686 = vld [vmem:[%s262 + $0xb8] sm:$0xff]
        %v687 = vld [vmem:[%s262 + $0xc0] sm:$0xff]
        %v688 = vld [vmem:[%s262 + $0xc8] sm:$0xff]
        %v689 = vld [vmem:[%s262 + $0xd0] sm:$0xff]
        %v690 = vld [vmem:[%s262 + $0xd8] sm:$0xff]
        %v691 = vld [vmem:[%s262 + $0xe0] sm:$0xff]
        %v692 = vld [vmem:[%s262 + $0xe8] sm:$0xff]
        %v693 = vld [vmem:[%s262 + $0xf0] sm:$0xff]
        %v694 = vld [vmem:[%s262 + $0xf8] sm:$0xff]
        %695 = vrot.lane.b32.xlu0 %v298, 112
        %v696 = vpop.permute.xlu0 %695
        %v698 = vmul.f32 %v663, %v696
        %v699 = vmul.f32 %v664, %v696
        %v700 = vmul.f32 %v665, %v696
        %v701 = vmul.f32 %v666, %v696
        %v702 = vmul.f32 %v667, %v696
        %v703 = vmul.f32 %v668, %v696
        %v704 = vmul.f32 %v669, %v696
        %v705 = vmul.f32 %v670, %v696
        %v706 = vmul.f32 %v671, %v696
        %v707 = vmul.f32 %v672, %v696
        %v708 = vmul.f32 %v673, %v696
        %v709 = vmul.f32 %v674, %v696
        %v710 = vmul.f32 %v675, %v696
        %v711 = vmul.f32 %v676, %v696
        %v712 = vmul.f32 %v677, %v696
        %v713 = vmul.f32 %v678, %v696
        %v714 = vmul.f32 %v679, %v696
        %v715 = vmul.f32 %v680, %v696
        %v716 = vmul.f32 %v681, %v696
        %v717 = vmul.f32 %v682, %v696
        %v718 = vmul.f32 %v683, %v696
        %v719 = vmul.f32 %v684, %v696
        %v720 = vmul.f32 %v685, %v696
        %v721 = vmul.f32 %v686, %v696
        %v722 = vmul.f32 %v687, %v696
        %v723 = vmul.f32 %v688, %v696
        %v724 = vmul.f32 %v689, %v696
        %v725 = vmul.f32 %v690, %v696
        %v726 = vmul.f32 %v691, %v696
        %v727 = vmul.f32 %v692, %v696
        %v728 = vmul.f32 %v693, %v696
        %v729 = vmul.f32 %v694, %v696
        %730 = vrot.lane.b32.xlu0 %v333, 112
        %v731 = vpop.permute.xlu0 %730
        %v733 = vadd.f32 %v698, %v731
        %v734 = vadd.f32 %v699, %v731
        %v735 = vadd.f32 %v700, %v731
        %v736 = vadd.f32 %v701, %v731
        %v737 = vadd.f32 %v702, %v731
        %v738 = vadd.f32 %v703, %v731
        %v739 = vadd.f32 %v704, %v731
        %v740 = vadd.f32 %v705, %v731
        %v741 = vadd.f32 %v706, %v731
        %v742 = vadd.f32 %v707, %v731
        %v743 = vadd.f32 %v708, %v731
        %v744 = vadd.f32 %v709, %v731
        %v745 = vadd.f32 %v710, %v731
        %v746 = vadd.f32 %v711, %v731
        %v747 = vadd.f32 %v712, %v731
        %v748 = vadd.f32 %v713, %v731
        %v749 = vadd.f32 %v714, %v731
        %v750 = vadd.f32 %v715, %v731
        %v751 = vadd.f32 %v716, %v731
        %v752 = vadd.f32 %v717, %v731
        %v753 = vadd.f32 %v718, %v731
        %v754 = vadd.f32 %v719, %v731
        %v755 = vadd.f32 %v720, %v731
        %v756 = vadd.f32 %v721, %v731
        %v757 = vadd.f32 %v722, %v731
        %v758 = vadd.f32 %v723, %v731
        %v759 = vadd.f32 %v724, %v731
        %v760 = vadd.f32 %v725, %v731
        %v761 = vadd.f32 %v726, %v731
        %v762 = vadd.f32 %v727, %v731
        %v763 = vadd.f32 %v728, %v731
        %v764 = vadd.f32 %v729, %v731
        %797 = vrot.lane.b32.xlu0 %v733, 16
        %v798 = vpop.permute.xlu0 %797
        %799 = vrot.lane.b32.xlu0 %v734, 16
        %v800 = vpop.permute.xlu0 %799
        %801 = vrot.lane.b32.xlu0 %v735, 16
        %v802 = vpop.permute.xlu0 %801
        %803 = vrot.lane.b32.xlu0 %v736, 16
        %v804 = vpop.permute.xlu0 %803
        %805 = vrot.lane.b32.xlu0 %v737, 16
        %v806 = vpop.permute.xlu0 %805
        %807 = vrot.lane.b32.xlu0 %v738, 16
        %v808 = vpop.permute.xlu0 %807
        %809 = vrot.lane.b32.xlu0 %v739, 16
        %v810 = vpop.permute.xlu0 %809
        %811 = vrot.lane.b32.xlu0 %v740, 16
        %v812 = vpop.permute.xlu0 %811
        %813 = vrot.lane.b32.xlu0 %v741, 16
        %v814 = vpop.permute.xlu0 %813
        %815 = vrot.lane.b32.xlu0 %v742, 16
        %v816 = vpop.permute.xlu0 %815
        %817 = vrot.lane.b32.xlu0 %v743, 16
        %v818 = vpop.permute.xlu0 %817
        %819 = vrot.lane.b32.xlu0 %v744, 16
        %v820 = vpop.permute.xlu0 %819
        %821 = vrot.lane.b32.xlu0 %v745, 16
        %v822 = vpop.permute.xlu0 %821
        %823 = vrot.lane.b32.xlu0 %v746, 16
        %v824 = vpop.permute.xlu0 %823
        %825 = vrot.lane.b32.xlu0 %v747, 16
        %v826 = vpop.permute.xlu0 %825
        %827 = vrot.lane.b32.xlu0 %v748, 16
        %v828 = vpop.permute.xlu0 %827
        %829 = vrot.lane.b32.xlu0 %v749, 16
        %v830 = vpop.permute.xlu0 %829
        %831 = vrot.lane.b32.xlu0 %v750, 16
        %v832 = vpop.permute.xlu0 %831
        %833 = vrot.lane.b32.xlu0 %v751, 16
        %v834 = vpop.permute.xlu0 %833
        %835 = vrot.lane.b32.xlu0 %v752, 16
        %v836 = vpop.permute.xlu0 %835
        %837 = vrot.lane.b32.xlu0 %v753, 16
        %v838 = vpop.permute.xlu0 %837
        %839 = vrot.lane.b32.xlu0 %v754, 16
        %v840 = vpop.permute.xlu0 %839
        %841 = vrot.lane.b32.xlu0 %v755, 16
        %v842 = vpop.permute.xlu0 %841
        %843 = vrot.lane.b32.xlu0 %v756, 16
        %v844 = vpop.permute.xlu0 %843
        %845 = vrot.lane.b32.xlu0 %v757, 16
        %v846 = vpop.permute.xlu0 %845
        %847 = vrot.lane.b32.xlu0 %v758, 16
        %v848 = vpop.permute.xlu0 %847
        %849 = vrot.lane.b32.xlu0 %v759, 16
        %v850 = vpop.permute.xlu0 %849
        %851 = vrot.lane.b32.xlu0 %v760, 16
        %v852 = vpop.permute.xlu0 %851
        %853 = vrot.lane.b32.xlu0 %v761, 16
        %v854 = vpop.permute.xlu0 %853
        %855 = vrot.lane.b32.xlu0 %v762, 16
        %v856 = vpop.permute.xlu0 %855
        %857 = vrot.lane.b32.xlu0 %v763, 16
        %v858 = vpop.permute.xlu0 %857
        %859 = vrot.lane.b32.xlu0 %v764, 16
        %v860 = vpop.permute.xlu0 %859
        %vm893 = vcmask 195712
        %894 = vst.msk [vmem:[%s247] sm:$0xff] %vm893, %v798
        %895 = vst.msk [vmem:[%s247 + $0x8] sm:$0xff] %vm893, %v800
        %896 = vst.msk [vmem:[%s247 + $0x10] sm:$0xff] %vm893, %v802
        %897 = vst.msk [vmem:[%s247 + $0x18] sm:$0xff] %vm893, %v804
        %898 = vst.msk [vmem:[%s247 + $0x20] sm:$0xff] %vm893, %v806
        %899 = vst.msk [vmem:[%s247 + $0x28] sm:$0xff] %vm893, %v808
        %900 = vst.msk [vmem:[%s247 + $0x30] sm:$0xff] %vm893, %v810
        %901 = vst.msk [vmem:[%s247 + $0x38] sm:$0xff] %vm893, %v812
        %902 = vst.msk [vmem:[%s247 + $0x40] sm:$0xff] %vm893, %v814
        %903 = vst.msk [vmem:[%s247 + $0x48] sm:$0xff] %vm893, %v816
        %904 = vst.msk [vmem:[%s247 + $0x50] sm:$0xff] %vm893, %v818
        %905 = vst.msk [vmem:[%s247 + $0x58] sm:$0xff] %vm893, %v820
        %906 = vst.msk [vmem:[%s247 + $0x60] sm:$0xff] %vm893, %v822
        %907 = vst.msk [vmem:[%s247 + $0x68] sm:$0xff] %vm893, %v824
        %908 = vst.msk [vmem:[%s247 + $0x70] sm:$0xff] %vm893, %v826
        %909 = vst.msk [vmem:[%s247 + $0x78] sm:$0xff] %vm893, %v828
        %910 = vst.msk [vmem:[%s247 + $0x80] sm:$0xff] %vm893, %v830
        %911 = vst.msk [vmem:[%s247 + $0x88] sm:$0xff] %vm893, %v832
        %912 = vst.msk [vmem:[%s247 + $0x90] sm:$0xff] %vm893, %v834
        %913 = vst.msk [vmem:[%s247 + $0x98] sm:$0xff] %vm893, %v836
        %914 = vst.msk [vmem:[%s247 + $0xa0] sm:$0xff] %vm893, %v838
        %915 = vst.msk [vmem:[%s247 + $0xa8] sm:$0xff] %vm893, %v840
        %916 = vst.msk [vmem:[%s247 + $0xb0] sm:$0xff] %vm893, %v842
        %917 = vst.msk [vmem:[%s247 + $0xb8] sm:$0xff] %vm893, %v844
        %918 = vst.msk [vmem:[%s247 + $0xc0] sm:$0xff] %vm893, %v846
        %919 = vst.msk [vmem:[%s247 + $0xc8] sm:$0xff] %vm893, %v848
        %920 = vst.msk [vmem:[%s247 + $0xd0] sm:$0xff] %vm893, %v850
        %921 = vst.msk [vmem:[%s247 + $0xd8] sm:$0xff] %vm893, %v852
        %922 = vst.msk [vmem:[%s247 + $0xe0] sm:$0xff] %vm893, %v854
        %923 = vst.msk [vmem:[%s247 + $0xe8] sm:$0xff] %vm893, %v856
        %924 = vst.msk [vmem:[%s247 + $0xf0] sm:$0xff] %vm893, %v858
        %925 = vst.msk [vmem:[%s247 + $0xf8] sm:$0xff] %vm893, %v860
        %v926 = vmul.f32 %v265, %v696
        %v927 = vmul.f32 %v266, %v696
        %v928 = vmul.f32 %v267, %v696
        %v929 = vmul.f32 %v268, %v696
        %v930 = vmul.f32 %v269, %v696
        %v931 = vmul.f32 %v270, %v696
        %v932 = vmul.f32 %v271, %v696
        %v933 = vmul.f32 %v272, %v696
        %v934 = vmul.f32 %v273, %v696
        %v935 = vmul.f32 %v274, %v696
        %v936 = vmul.f32 %v275, %v696
        %v937 = vmul.f32 %v276, %v696
        %v938 = vmul.f32 %v277, %v696
        %v939 = vmul.f32 %v278, %v696
        %v940 = vmul.f32 %v279, %v696
        %v941 = vmul.f32 %v280, %v696
        %v942 = vmul.f32 %v281, %v696
        %v943 = vmul.f32 %v282, %v696
        %v944 = vmul.f32 %v283, %v696
        %v945 = vmul.f32 %v284, %v696
        %v946 = vmul.f32 %v285, %v696
        %v947 = vmul.f32 %v286, %v696
        %v948 = vmul.f32 %v287, %v696
        %v949 = vmul.f32 %v288, %v696
        %v950 = vmul.f32 %v289, %v696
        %v951 = vmul.f32 %v290, %v696
        %v952 = vmul.f32 %v291, %v696
        %v953 = vmul.f32 %v292, %v696
        %v954 = vmul.f32 %v293, %v696
        %v955 = vmul.f32 %v294, %v696
        %v956 = vmul.f32 %v295, %v696
        %v957 = vmul.f32 %v296, %v696
        %v958 = vadd.f32 %v926, %v731
        %v959 = vadd.f32 %v927, %v731
        %v960 = vadd.f32 %v928, %v731
        %v961 = vadd.f32 %v929, %v731
        %v962 = vadd.f32 %v930, %v731
        %v963 = vadd.f32 %v931, %v731
        %v964 = vadd.f32 %v932, %v731
        %v965 = vadd.f32 %v933, %v731
        %v966 = vadd.f32 %v934, %v731
        %v967 = vadd.f32 %v935, %v731
        %v968 = vadd.f32 %v936, %v731
        %v969 = vadd.f32 %v937, %v731
        %v970 = vadd.f32 %v938, %v731
        %v971 = vadd.f32 %v939, %v731
        %v972 = vadd.f32 %v940, %v731
        %v973 = vadd.f32 %v941, %v731
        %v974 = vadd.f32 %v942, %v731
        %v975 = vadd.f32 %v943, %v731
        %v976 = vadd.f32 %v944, %v731
        %v977 = vadd.f32 %v945, %v731
        %v978 = vadd.f32 %v946, %v731
        %v979 = vadd.f32 %v947, %v731
        %v980 = vadd.f32 %v948, %v731
        %v981 = vadd.f32 %v949, %v731
        %v982 = vadd.f32 %v950, %v731
        %v983 = vadd.f32 %v951, %v731
        %v984 = vadd.f32 %v952, %v731
        %v985 = vadd.f32 %v953, %v731
        %v986 = vadd.f32 %v954, %v731
        %v987 = vadd.f32 %v955, %v731
        %v988 = vadd.f32 %v956, %v731
        %v989 = vadd.f32 %v957, %v731
        %1022 = vrot.lane.b32.xlu0 %v958, 16
        %v1023 = vpop.permute.xlu0 %1022
        %1024 = vrot.lane.b32.xlu0 %v959, 16
        %v1025 = vpop.permute.xlu0 %1024
        %1026 = vrot.lane.b32.xlu0 %v960, 16
        %v1027 = vpop.permute.xlu0 %1026
        %1028 = vrot.lane.b32.xlu0 %v961, 16
        %v1029 = vpop.permute.xlu0 %1028
        %1030 = vrot.lane.b32.xlu0 %v962, 16
        %v1031 = vpop.permute.xlu0 %1030
        %1032 = vrot.lane.b32.xlu0 %v963, 16
        %v1033 = vpop.permute.xlu0 %1032
        %1034 = vrot.lane.b32.xlu0 %v964, 16
        %v1035 = vpop.permute.xlu0 %1034
        %1036 = vrot.lane.b32.xlu0 %v965, 16
        %v1037 = vpop.permute.xlu0 %1036
        %1038 = vrot.lane.b32.xlu0 %v966, 16
        %v1039 = vpop.permute.xlu0 %1038
        %1040 = vrot.lane.b32.xlu0 %v967, 16
        %v1041 = vpop.permute.xlu0 %1040
        %1042 = vrot.lane.b32.xlu0 %v968, 16
        %v1043 = vpop.permute.xlu0 %1042
        %1044 = vrot.lane.b32.xlu0 %v969, 16
        %v1045 = vpop.permute.xlu0 %1044
        %1046 = vrot.lane.b32.xlu0 %v970, 16
        %v1047 = vpop.permute.xlu0 %1046
        %1048 = vrot.lane.b32.xlu0 %v971, 16
        %v1049 = vpop.permute.xlu0 %1048
        %1050 = vrot.lane.b32.xlu0 %v972, 16
        %v1051 = vpop.permute.xlu0 %1050
        %1052 = vrot.lane.b32.xlu0 %v973, 16
        %v1053 = vpop.permute.xlu0 %1052
        %1054 = vrot.lane.b32.xlu0 %v974, 16
        %v1055 = vpop.permute.xlu0 %1054
        %1056 = vrot.lane.b32.xlu0 %v975, 16
        %v1057 = vpop.permute.xlu0 %1056
        %1058 = vrot.lane.b32.xlu0 %v976, 16
        %v1059 = vpop.permute.xlu0 %1058
        %1060 = vrot.lane.b32.xlu0 %v977, 16
        %v1061 = vpop.permute.xlu0 %1060
        %1062 = vrot.lane.b32.xlu0 %v978, 16
        %v1063 = vpop.permute.xlu0 %1062
        %1064 = vrot.lane.b32.xlu0 %v979, 16
        %v1065 = vpop.permute.xlu0 %1064
        %1066 = vrot.lane.b32.xlu0 %v980, 16
        %v1067 = vpop.permute.xlu0 %1066
        %1068 = vrot.lane.b32.xlu0 %v981, 16
        %v1069 = vpop.permute.xlu0 %1068
        %1070 = vrot.lane.b32.xlu0 %v982, 16
        %v1071 = vpop.permute.xlu0 %1070
        %1072 = vrot.lane.b32.xlu0 %v983, 16
        %v1073 = vpop.permute.xlu0 %1072
        %1074 = vrot.lane.b32.xlu0 %v984, 16
        %v1075 = vpop.permute.xlu0 %1074
        %1076 = vrot.lane.b32.xlu0 %v985, 16
        %v1077 = vpop.permute.xlu0 %1076
        %1078 = vrot.lane.b32.xlu0 %v986, 16
        %v1079 = vpop.permute.xlu0 %1078
        %1080 = vrot.lane.b32.xlu0 %v987, 16
        %v1081 = vpop.permute.xlu0 %1080
        %1082 = vrot.lane.b32.xlu0 %v988, 16
        %v1083 = vpop.permute.xlu0 %1082
        %1084 = vrot.lane.b32.xlu0 %v989, 16
        %v1085 = vpop.permute.xlu0 %1084
        %vm1118 = vcmask 261312
        %1119 = vst.msk [vmem:[%s247] sm:$0xff] %vm1118, %v1023
        %1120 = vst.msk [vmem:[%s247 + $0x8] sm:$0xff] %vm1118, %v1025
        %1121 = vst.msk [vmem:[%s247 + $0x10] sm:$0xff] %vm1118, %v1027
        %1122 = vst.msk [vmem:[%s247 + $0x18] sm:$0xff] %vm1118, %v1029
        %1123 = vst.msk [vmem:[%s247 + $0x20] sm:$0xff] %vm1118, %v1031
        %1124 = vst.msk [vmem:[%s247 + $0x28] sm:$0xff] %vm1118, %v1033
        %1125 = vst.msk [vmem:[%s247 + $0x30] sm:$0xff] %vm1118, %v1035
        %1126 = vst.msk [vmem:[%s247 + $0x38] sm:$0xff] %vm1118, %v1037
        %1127 = vst.msk [vmem:[%s247 + $0x40] sm:$0xff] %vm1118, %v1039
        %1128 = vst.msk [vmem:[%s247 + $0x48] sm:$0xff] %vm1118, %v1041
        %1129 = vst.msk [vmem:[%s247 + $0x50] sm:$0xff] %vm1118, %v1043
        %1130 = vst.msk [vmem:[%s247 + $0x58] sm:$0xff] %vm1118, %v1045
        %1131 = vst.msk [vmem:[%s247 + $0x60] sm:$0xff] %vm1118, %v1047
        %1132 = vst.msk [vmem:[%s247 + $0x68] sm:$0xff] %vm1118, %v1049
        %1133 = vst.msk [vmem:[%s247 + $0x70] sm:$0xff] %vm1118, %v1051
        %1134 = vst.msk [vmem:[%s247 + $0x78] sm:$0xff] %vm1118, %v1053
        %1135 = vst.msk [vmem:[%s247 + $0x80] sm:$0xff] %vm1118, %v1055
        %1136 = vst.msk [vmem:[%s247 + $0x88] sm:$0xff] %vm1118, %v1057
        %1137 = vst.msk [vmem:[%s247 + $0x90] sm:$0xff] %vm1118, %v1059
        %1138 = vst.msk [vmem:[%s247 + $0x98] sm:$0xff] %vm1118, %v1061
        %1139 = vst.msk [vmem:[%s247 + $0xa0] sm:$0xff] %vm1118, %v1063
        %1140 = vst.msk [vmem:[%s247 + $0xa8] sm:$0xff] %vm1118, %v1065
        %1141 = vst.msk [vmem:[%s247 + $0xb0] sm:$0xff] %vm1118, %v1067
        %1142 = vst.msk [vmem:[%s247 + $0xb8] sm:$0xff] %vm1118, %v1069
        %1143 = vst.msk [vmem:[%s247 + $0xc0] sm:$0xff] %vm1118, %v1071
        %1144 = vst.msk [vmem:[%s247 + $0xc8] sm:$0xff] %vm1118, %v1073
        %1145 = vst.msk [vmem:[%s247 + $0xd0] sm:$0xff] %vm1118, %v1075
        %1146 = vst.msk [vmem:[%s247 + $0xd8] sm:$0xff] %vm1118, %v1077
        %1147 = vst.msk [vmem:[%s247 + $0xe0] sm:$0xff] %vm1118, %v1079
        %1148 = vst.msk [vmem:[%s247 + $0xe8] sm:$0xff] %vm1118, %v1081
        %1149 = vst.msk [vmem:[%s247 + $0xf0] sm:$0xff] %vm1118, %v1083
        %1150 = vst.msk [vmem:[%s247 + $0xf8] sm:$0xff] %vm1118, %v1085
        %s1151 = sand.u32 %s147, 1
        %s1152 = scalar_lea.sflag [#allocation3], %s1151
        %s1153 = sand.u32 %s147, 1
        %s1154 = smul.addr %s1153, 256
        %s1155 = scalar_lea.vmem [#allocation2], %s1154
        // Predicated region
        $region41: #{inception_v1_forward.5} parent=39 // pred_check
          %p1156 = pneg %p157
        $region42: #{inception_v1_forward.5} parent=39 // pred_check_branch
          %1158 = sbr.rel (%p1156) target = $region44
        $region43: #{inception_v1_forward.5} parent=39 // pred_region
          %1160 = vsyncadd %s1152, 0
          %s1161 = smul.addr %s19, 32
          %s1162 = smul.addr %s1161, 8
          %s1163 = scalar_lea.hbm %s5, %s1162
          %s1164 = sshll.u32 %s1155, 4
          %s1165 = int_to_ptr.vmem [resolvable:$true] %s1164
          %s1166 = sshll.u32 %s1163, 4
          %s1167 = int_to_ptr.hbm [resolvable:$true] %s1166
          %1172 = dma.vmem_to_hbm [thread:$0]  %s1165, 4096, %s1167, %s1152, 128, 128, 8
        $region44: #{inception_v1_forward.5} parent=39 // pred_fallthru
          _
      $region40: #{inception_v1_forward.5} parent=5 // pred_fallthru
        _
      %p1173 = scmp.le.s32.totalorder 2, %s14
      // Predicated region
      $region45: #{inception_v1_forward.5} parent=5 // pred_check
        %p1174 = pneg %p1173
      $region46: #{inception_v1_forward.5} parent=5 // pred_check_branch
        %1176 = sbr.rel (%p1174) target = $region48
      $region47: #{inception_v1_forward.5} parent=5 // pred_region
        %s1177 = ssub.s32 %s14, 2
        // Predicated region
        $region49: #{inception_v1_forward.5} parent=47 // pred_check
          %p1178 = pneg %p163
        $region50: #{inception_v1_forward.5} parent=47 // pred_check_branch
          %1180 = sbr.rel (%p1178) target = $region52
        $region51: #{inception_v1_forward.5} parent=47 // pred_region
          %s1181 = sand.u32 %s148, 1
          %s1182 = scalar_lea.sflag [#allocation3], %s1181
          %s1183 = sand.u32 %s148, 1
          %s1184 = smul.addr %s1183, 256
          %s1185 = scalar_lea.vmem [#allocation2], %s1184
          %1187 = dma.done %s1182, 4096
        $region52: #{inception_v1_forward.5} parent=47 // pred_fallthru
          _
      $region48: #{inception_v1_forward.5} parent=5 // pred_fallthru
        _
    $region6: #{inception_v1_forward.5} parent=1 // loop_footer
      %s18 = sadd.s32 1, %s14
    $region7: #{inception_v1_forward.5} parent=1 // loop_footer_branch
      %13 = sbr.rel target = $region3
    $region8: #{inception_v1_forward.5} parent=1 // loop_exit
      _
    %1188 = vsyncpa [#allocation3], 1
    %s1189 = scalar_lea.sflag [#allocation3], 1
    %1190 = vsyncpa %s1189, 1

// kernel: inception_v1_forward.4
$region0: #{inception_v1_forward.4}
  #allocation0 [shape = 'u32[]', space=smem, size = 0x4, offset = 0x4, fixed_abs, tag = 'smem constant byte address 0x4 - core index']
  #allocation1 [shape = 'u32[72,128]{1,0:T(1,128)}', space=vmem, size = 0x9000, scoped, tag = 'internal scratch']
  %s0 = inlined_call_operand.vmem [shape: f32[2,16,16,16], index: 0, kind: input, shape index: {}]
  %s1 = inlined_call_operand.vmem [shape: f32[1,16], index: 1, kind: input, shape index: {}]
  %s2 = inlined_call_operand.vmem [shape: f32[1,16], index: 2, kind: input, shape index: {}]
  %s3 = inlined_call_operand.vmem [shape: f32[9,8,8], index: 3, kind: input, shape index: {}]
  %s4 = inlined_call_operand.vmem [shape: f32[1,8], index: 4, kind: input, shape index: {}]
  %s5 = inlined_call_operand.vmem [shape: f32[25,8,8], index: 5, kind: input, shape index: {}]
  %s6 = inlined_call_operand.vmem [shape: f32[1,8], index: 6, kind: input, shape index: {}]
  %s7 = inlined_call_operand.vmem [shape: f32[2,16,16,8], index: 7, kind: output, shape index: {0}]
  %s8 = inlined_call_operand.vmem [shape: f32[2,16,16,8], index: 8, kind: output, shape index: {1}]
  %s9 = inlined_call_operand.vmem [shape: f32[2,2,16], index: 9, kind: output, shape index: {2}]
  %10 = xla_tuple %s7, %s8, %s9
  %s11 = sld [smem:[#allocation0]]
  $region77: #{inception_v1_forward.4} parent=0
    _
  %s13 = ssub.s32 1, %s11
  %s14 = scalar_select 0, %s13, %s11
  loop: start=0, step=1, limit=4
  $region2: #{inception_v1_forward.4} parent=0 // loop_pre_header
    _
  $region3: #{inception_v1_forward.4} parent=0 // loop_header
    %s16 = sphi 0, %s20
    %p17 = scmp.ge.s32.totalorder %s16, 4
    %s26 = sphi 0, %s28
    %s29 = sphi 0, %s26
    %s30 = sphi 0, %s29
    %s46 = sphi 0, %s30
    %s50 = sphi 0, %s50
    %s52 = sphi 0, %s50
    %s53 = sphi 0, %s52
    %s67 = sphi 0, %s53
    %s71 = sphi 0, %s71
    %s73 = sphi 0, %s71
    %s74 = sphi 0, %s73
    %s88 = sphi 0, %s74
    %s92 = sphi 0, %s92
    %s94 = sphi 0, %s92
    %s95 = sphi 0, %s94
    %s109 = sphi 0, %s95
    %s113 = sphi 0, %s113
    %s115 = sphi 0, %s113
    %s116 = sphi 0, %s115
    %s130 = sphi 0, %s116
    %s134 = sphi 0, %s134
    %s136 = sphi 0, %s134
    %s137 = sphi 0, %s136
    %s151 = sphi 0, %s137
    %s155 = sphi 0, %s155
    %s157 = sphi 0, %s155
    %s158 = sphi 0, %s157
    %s172 = sphi 0, %s158
    %s178 = sphi 0, %s180
    %s181 = sphi 0, %s178
    %s182 = sphi 0, %s181
    %s198 = sphi 0, %s182
    %s204 = sphi 0, %s206
    %s207 = sphi 0, %s204
    %s208 = sphi 0, %s207
    %s224 = sphi 0, %s208
    %s230 = sphi 0, %s232
    %s233 = sphi 0, %s230
    %s234 = sphi 0, %s233
    %s250 = sphi 0, %s234
  $region4: #{inception_v1_forward.4} parent=0 // loop_header_branch
    %19 = sbr.rel (%p17) target = $region8
  $region5: #{inception_v1_forward.4} parent=0 // loop_body
    %s21 = ssub.s32 %s16, 1
    %s22 = ssub.s32 %s16, 2
    %s23 = sadd.s32 %s16, 1
    %s24 = ssub.s32 %s16, %s23
    %p25 = scmp.eq.s32.totalorder %s24, 0
    %s27 = sadd.s32 %s26, 1
    %s28 = scalar_select %p25, %s26, %s27
    %p31 = pneg %p25
    %p32 = scmp.eq.s32.totalorder %s16, 1
    %p33 = por %p31, %p32
    %p34 = scmp.ne.s32.totalorder %s26, %s29
    %p35 = scmp.eq.s32.totalorder %s16, 0
    %p36 = por %p34, %p35
    %p37 = scmp.ne.s32.totalorder %s26, %s29
    %p38 = scmp.eq.s32.totalorder %s21, 1
    %p39 = por %p37, %p38
    %p40 = scmp.ne.s32.totalorder %s29, %s30
    %p41 = scmp.eq.s32.totalorder %s21, 0
    %p42 = por %p40, %p41
    %p43 = scmp.ne.s32.totalorder %s29, %s30
    %p44 = scmp.eq.s32.totalorder %s22, 1
    %p45 = por %p43, %p44
    %p47 = scmp.ne.s32.totalorder %s30, %s46
    %p48 = scmp.eq.s32.totalorder %s22, 0
    %p49 = por %p47, %p48
    %s51 = sadd.s32 %s50, 1
    %p54 = scmp.eq.s32.totalorder %s16, 1
    %p55 = scmp.ne.s32.totalorder %s50, %s52
    %p56 = scmp.eq.s32.totalorder %s16, 0
    %p57 = por %p55, %p56
    %p58 = scmp.ne.s32.totalorder %s50, %s52
    %p59 = scmp.eq.s32.totalorder %s21, 1
    %p60 = por %p58, %p59
    %p61 = scmp.ne.s32.totalorder %s52, %s53
    %p62 = scmp.eq.s32.totalorder %s21, 0
    %p63 = por %p61, %p62
    %p64 = scmp.ne.s32.totalorder %s52, %s53
    %p65 = scmp.eq.s32.totalorder %s22, 1
    %p66 = por %p64, %p65
    %p68 = scmp.ne.s32.totalorder %s53, %s67
    %p69 = scmp.eq.s32.totalorder %s22, 0
    %p70 = por %p68, %p69
    %s72 = sadd.s32 %s71, 1
    %p75 = scmp.eq.s32.totalorder %s16, 1
    %p76 = scmp.ne.s32.totalorder %s71, %s73
    %p77 = scmp.eq.s32.totalorder %s16, 0
    %p78 = por %p76, %p77
    %p79 = scmp.ne.s32.totalorder %s71, %s73
    %p80 = scmp.eq.s32.totalorder %s21, 1
    %p81 = por %p79, %p80
    %p82 = scmp.ne.s32.totalorder %s73, %s74
    %p83 = scmp.eq.s32.totalorder %s21, 0
    %p84 = por %p82, %p83
    %p85 = scmp.ne.s32.totalorder %s73, %s74
    %p86 = scmp.eq.s32.totalorder %s22, 1
    %p87 = por %p85, %p86
    %p89 = scmp.ne.s32.totalorder %s74, %s88
    %p90 = scmp.eq.s32.totalorder %s22, 0
    %p91 = por %p89, %p90
    %s93 = sadd.s32 %s92, 1
    %p96 = scmp.eq.s32.totalorder %s16, 1
    %p97 = scmp.ne.s32.totalorder %s92, %s94
    %p98 = scmp.eq.s32.totalorder %s16, 0
    %p99 = por %p97, %p98
    %p100 = scmp.ne.s32.totalorder %s92, %s94
    %p101 = scmp.eq.s32.totalorder %s21, 1
    %p102 = por %p100, %p101
    %p103 = scmp.ne.s32.totalorder %s94, %s95
    %p104 = scmp.eq.s32.totalorder %s21, 0
    %p105 = por %p103, %p104
    %p106 = scmp.ne.s32.totalorder %s94, %s95
    %p107 = scmp.eq.s32.totalorder %s22, 1
    %p108 = por %p106, %p107
    %p110 = scmp.ne.s32.totalorder %s95, %s109
    %p111 = scmp.eq.s32.totalorder %s22, 0
    %p112 = por %p110, %p111
    %s114 = sadd.s32 %s113, 1
    %p117 = scmp.eq.s32.totalorder %s16, 1
    %p118 = scmp.ne.s32.totalorder %s113, %s115
    %p119 = scmp.eq.s32.totalorder %s16, 0
    %p120 = por %p118, %p119
    %p121 = scmp.ne.s32.totalorder %s113, %s115
    %p122 = scmp.eq.s32.totalorder %s21, 1
    %p123 = por %p121, %p122
    %p124 = scmp.ne.s32.totalorder %s115, %s116
    %p125 = scmp.eq.s32.totalorder %s21, 0
    %p126 = por %p124, %p125
    %p127 = scmp.ne.s32.totalorder %s115, %s116
    %p128 = scmp.eq.s32.totalorder %s22, 1
    %p129 = por %p127, %p128
    %p131 = scmp.ne.s32.totalorder %s116, %s130
    %p132 = scmp.eq.s32.totalorder %s22, 0
    %p133 = por %p131, %p132
    %s135 = sadd.s32 %s134, 1
    %p138 = scmp.eq.s32.totalorder %s16, 1
    %p139 = scmp.ne.s32.totalorder %s134, %s136
    %p140 = scmp.eq.s32.totalorder %s16, 0
    %p141 = por %p139, %p140
    %p142 = scmp.ne.s32.totalorder %s134, %s136
    %p143 = scmp.eq.s32.totalorder %s21, 1
    %p144 = por %p142, %p143
    %p145 = scmp.ne.s32.totalorder %s136, %s137
    %p146 = scmp.eq.s32.totalorder %s21, 0
    %p147 = por %p145, %p146
    %p148 = scmp.ne.s32.totalorder %s136, %s137
    %p149 = scmp.eq.s32.totalorder %s22, 1
    %p150 = por %p148, %p149
    %p152 = scmp.ne.s32.totalorder %s137, %s151
    %p153 = scmp.eq.s32.totalorder %s22, 0
    %p154 = por %p152, %p153
    %s156 = sadd.s32 %s155, 1
    %p159 = scmp.eq.s32.totalorder %s16, 1
    %p160 = scmp.ne.s32.totalorder %s155, %s157
    %p161 = scmp.eq.s32.totalorder %s16, 0
    %p162 = por %p160, %p161
    %p163 = scmp.ne.s32.totalorder %s155, %s157
    %p164 = scmp.eq.s32.totalorder %s21, 1
    %p165 = por %p163, %p164
    %p166 = scmp.ne.s32.totalorder %s157, %s158
    %p167 = scmp.eq.s32.totalorder %s21, 0
    %p168 = por %p166, %p167
    %p169 = scmp.ne.s32.totalorder %s157, %s158
    %p170 = scmp.eq.s32.totalorder %s22, 1
    %p171 = por %p169, %p170
    %p173 = scmp.ne.s32.totalorder %s158, %s172
    %p174 = scmp.eq.s32.totalorder %s22, 0
    %p175 = por %p173, %p174
    %s176 = ssub.s32 %s16, %s23
    %p177 = scmp.eq.s32.totalorder %s176, 0
    %s179 = sadd.s32 %s178, 1
    %s180 = scalar_select %p177, %s178, %s179
    %p183 = pneg %p177
    %p184 = scmp.eq.s32.totalorder %s16, 1
    %p185 = por %p183, %p184
    %p186 = scmp.ne.s32.totalorder %s178, %s181
    %p187 = scmp.eq.s32.totalorder %s16, 0
    %p188 = por %p186, %p187
    %p189 = scmp.ne.s32.totalorder %s178, %s181
    %p190 = scmp.eq.s32.totalorder %s21, 1
    %p191 = por %p189, %p190
    %p192 = scmp.ne.s32.totalorder %s181, %s182
    %p193 = scmp.eq.s32.totalorder %s21, 0
    %p194 = por %p192, %p193
    %p195 = scmp.ne.s32.totalorder %s181, %s182
    %p196 = scmp.eq.s32.totalorder %s22, 1
    %p197 = por %p195, %p196
    %p199 = scmp.ne.s32.totalorder %s182, %s198
    %p200 = scmp.eq.s32.totalorder %s22, 0
    %p201 = por %p199, %p200
    %s202 = ssub.s32 %s16, %s23
    %p203 = scmp.eq.s32.totalorder %s202, 0
    %s205 = sadd.s32 %s204, 1
    %s206 = scalar_select %p203, %s204, %s205
    %p209 = pneg %p203
    %p210 = scmp.eq.s32.totalorder %s16, 1
    %p211 = por %p209, %p210
    %p212 = scmp.ne.s32.totalorder %s204, %s207
    %p213 = scmp.eq.s32.totalorder %s16, 0
    %p214 = por %p212, %p213
    %p215 = scmp.ne.s32.totalorder %s204, %s207
    %p216 = scmp.eq.s32.totalorder %s21, 1
    %p217 = por %p215, %p216
    %p218 = scmp.ne.s32.totalorder %s207, %s208
    %p219 = scmp.eq.s32.totalorder %s21, 0
    %p220 = por %p218, %p219
    %p221 = scmp.ne.s32.totalorder %s207, %s208
    %p222 = scmp.eq.s32.totalorder %s22, 1
    %p223 = por %p221, %p222
    %p225 = scmp.ne.s32.totalorder %s208, %s224
    %p226 = scmp.eq.s32.totalorder %s22, 0
    %p227 = por %p225, %p226
    %s228 = ssub.s32 %s16, %s23
    %p229 = scmp.eq.s32.totalorder %s228, 0
    %s231 = sadd.s32 %s230, 1
    %s232 = scalar_select %p229, %s230, %s231
    %p235 = pneg %p229
    %p236 = scmp.eq.s32.totalorder %s16, 1
    %p237 = por %p235, %p236
    %p238 = scmp.ne.s32.totalorder %s230, %s233
    %p239 = scmp.eq.s32.totalorder %s16, 0
    %p240 = por %p238, %p239
    %p241 = scmp.ne.s32.totalorder %s230, %s233
    %p242 = scmp.eq.s32.totalorder %s21, 1
    %p243 = por %p241, %p242
    %p244 = scmp.ne.s32.totalorder %s233, %s234
    %p245 = scmp.eq.s32.totalorder %s21, 0
    %p246 = por %p244, %p245
    %p247 = scmp.ne.s32.totalorder %s233, %s234
    %p248 = scmp.eq.s32.totalorder %s22, 1
    %p249 = por %p247, %p248
    %p251 = scmp.ne.s32.totalorder %s234, %s250
    %p252 = scmp.eq.s32.totalorder %s22, 0
    %p253 = por %p251, %p252
    %p254 = scmp.le.s32.totalorder 1, %s16
    %p255 = scmp.lt.s32.totalorder %s16, 3
    %p256 = pnand %p254, %p255
    %p257 = pneg %p256
    // Predicated region
    $region9: #{inception_v1_forward.4} parent=5 // pred_check
      _
    $region10: #{inception_v1_forward.4} parent=5 // pred_check_branch
      %259 = sbr.rel (%p256) target = $region12
    $region11: #{inception_v1_forward.4} parent=5 // pred_region
      %s260 = ssub.s32 %s16, 1
      // Predicated region
      $region13: #{inception_v1_forward.4} parent=11 // pred_check
        %p261 = pneg %p63
      $region14: #{inception_v1_forward.4} parent=11 // pred_check_branch
        %263 = sbr.rel (%p261) target = $region16
      $region15: #{inception_v1_forward.4} parent=11 // pred_region
        _
      $region16: #{inception_v1_forward.4} parent=11 // pred_fallthru
        _
      // Predicated region
      $region17: #{inception_v1_forward.4} parent=11 // pred_check
        %p264 = pneg %p84
      $region18: #{inception_v1_forward.4} parent=11 // pred_check_branch
        %266 = sbr.rel (%p264) target = $region20
      $region19: #{inception_v1_forward.4} parent=11 // pred_region
        _
      $region20: #{inception_v1_forward.4} parent=11 // pred_fallthru
        _
      // Predicated region
      $region21: #{inception_v1_forward.4} parent=11 // pred_check
        %p267 = pneg %p105
      $region22: #{inception_v1_forward.4} parent=11 // pred_check_branch
        %269 = sbr.rel (%p267) target = $region24
      $region23: #{inception_v1_forward.4} parent=11 // pred_region
        _
      $region24: #{inception_v1_forward.4} parent=11 // pred_fallthru
        _
      // Predicated region
      $region25: #{inception_v1_forward.4} parent=11 // pred_check
        %p270 = pneg %p126
      $region26: #{inception_v1_forward.4} parent=11 // pred_check_branch
        %272 = sbr.rel (%p270) target = $region28
      $region27: #{inception_v1_forward.4} parent=11 // pred_region
        _
      $region28: #{inception_v1_forward.4} parent=11 // pred_fallthru
        _
      // Predicated region
      $region29: #{inception_v1_forward.4} parent=11 // pred_check
        %p273 = pneg %p147
      $region30: #{inception_v1_forward.4} parent=11 // pred_check_branch
        %275 = sbr.rel (%p273) target = $region32
      $region31: #{inception_v1_forward.4} parent=11 // pred_region
        _
      $region32: #{inception_v1_forward.4} parent=11 // pred_fallthru
        _
      // Predicated region
      $region33: #{inception_v1_forward.4} parent=11 // pred_check
        %p276 = pneg %p168
      $region34: #{inception_v1_forward.4} parent=11 // pred_check_branch
        %278 = sbr.rel (%p276) target = $region36
      $region35: #{inception_v1_forward.4} parent=11 // pred_region
        _
      $region36: #{inception_v1_forward.4} parent=11 // pred_fallthru
        _
    $region12: #{inception_v1_forward.4} parent=5 // pred_fallthru
      _
    %p279 = scmp.lt.s32.totalorder %s16, 2
    // Predicated region
    $region37: #{inception_v1_forward.4} parent=5 // pred_check
      %p280 = pneg %p279
    $region38: #{inception_v1_forward.4} parent=5 // pred_check_branch
      %282 = sbr.rel (%p280) target = $region40
    $region39: #{inception_v1_forward.4} parent=5 // pred_region
      // Predicated region
      $region41: #{inception_v1_forward.4} parent=39 // pred_check
        %p283 = pneg %p36
      $region42: #{inception_v1_forward.4} parent=39 // pred_check_branch
        %285 = sbr.rel (%p283) target = $region44
      $region43: #{inception_v1_forward.4} parent=39 // pred_region
        %p286 = scmp.lt.s32.totalorder %s16, 1
        %s287 = scalar_select %p286, %s16, 1
        %s288 = smul.addr %s287, 32
        %s289 = smul.addr %s288, 8
        %s290 = scalar_lea.vmem %s0, %s289
      $region44: #{inception_v1_forward.4} parent=39 // pred_fallthru
        _
    $region40: #{inception_v1_forward.4} parent=5 // pred_fallthru
      _
    %p291 = scmp.le.s32.totalorder 1, %s16
    %p292 = scmp.lt.s32.totalorder %s16, 3
    %p293 = pnand %p291, %p292
    %p294 = pneg %p293
    // Predicated region
    $region45: #{inception_v1_forward.4} parent=5 // pred_check
      _
    $region46: #{inception_v1_forward.4} parent=5 // pred_check_branch
      %296 = sbr.rel (%p293) target = $region48
    $region47: #{inception_v1_forward.4} parent=5 // pred_region
      %s297 = ssub.s32 %s16, 1
      %p298 = scmp.lt.s32.totalorder %s21, 1
      %s299 = scalar_select %p298, %s21, 1
      %s300 = smul.addr %s299, 32
      %s301 = smul.addr %s300, 8
      %s302 = scalar_lea.vmem %s0, %s301
      %p303 = pneg %p42
      %p304 = pneg %p39
      %p305 = pneg %p63
      %p306 = pneg %p60
      %p307 = pneg %p84
      %p308 = pneg %p81
      %p309 = pneg %p105
      %p310 = pneg %p102
      %p311 = pneg %p126
      %p312 = pneg %p123
      %p313 = pneg %p147
      %p314 = pneg %p144
      %p315 = pneg %p168
      %p316 = pneg %p165
      %p317 = pneg %p194
      %p318 = pneg %p191
      %p319 = scmp.lt.s32.totalorder %s21, 1
      %s320 = scalar_select %p319, %s21, 1
      %s321 = smul.addr %s320, 32
      %s322 = smul.addr %s321, 8
      %s323 = scalar_lea.vmem %s7, %s322
      %p324 = pneg %p220
      %p325 = pneg %p217
      %p326 = scmp.lt.s32.totalorder %s21, 1
      %s327 = scalar_select %p326, %s21, 1
      %s328 = smul.addr %s327, 32
      %s329 = smul.addr %s328, 8
      %s330 = scalar_lea.vmem %s8, %s329
      %p331 = pneg %p246
      %p332 = pneg %p243
      %p333 = scmp.lt.s32.totalorder %s21, 1
      %s334 = scalar_select %p333, %s21, 1
      %s335 = smul.addr %s334, 2
      %s336 = scalar_lea.vmem %s9, %s335
      %p337 = scmp.lt.s32.totalorder %s21, 1
      %s338 = scalar_select %p337, %s21, 1
      %s339 = smul.addr %s338, 32
      %s340 = smul.addr %s339, 8
      %s341 = scalar_lea.vmem %s0, %s340
      %p342 = scmp.lt.s32.totalorder %s21, 1
      %s343 = scalar_select %p342, %s21, 1
      %s344 = smul.addr %s343, 32
      %s345 = smul.addr %s344, 8
      %s346 = scalar_lea.vmem %s7, %s345
      %p347 = scmp.lt.s32.totalorder %s21, 1
      %s348 = scalar_select %p347, %s21, 1
      %s349 = smul.addr %s348, 32
      %s350 = smul.addr %s349, 8
      %s351 = scalar_lea.vmem %s8, %s350
      %p352 = scmp.lt.s32.totalorder %s21, 1
      %s353 = scalar_select %p352, %s21, 1
      %s354 = smul.addr %s353, 2
      %s355 = scalar_lea.vmem %s9, %s354
      %v356 = vld [vmem:[%s341] sm:$0xff]
      %v357 = vld [vmem:[%s341 + $0x8] sm:$0xff]
      %v358 = vld [vmem:[%s341 + $0x10] sm:$0xff]
      %v359 = vld [vmem:[%s341 + $0x18] sm:$0xff]
      %v360 = vld [vmem:[%s341 + $0x20] sm:$0xff]
      %v361 = vld [vmem:[%s341 + $0x28] sm:$0xff]
      %v362 = vld [vmem:[%s341 + $0x30] sm:$0xff]
      %v363 = vld [vmem:[%s341 + $0x38] sm:$0xff]
      %v364 = vld [vmem:[%s341 + $0x40] sm:$0xff]
      %v365 = vld [vmem:[%s341 + $0x48] sm:$0xff]
      %v366 = vld [vmem:[%s341 + $0x50] sm:$0xff]
      %v367 = vld [vmem:[%s341 + $0x58] sm:$0xff]
      %v368 = vld [vmem:[%s341 + $0x60] sm:$0xff]
      %v369 = vld [vmem:[%s341 + $0x68] sm:$0xff]
      %v370 = vld [vmem:[%s341 + $0x70] sm:$0xff]
      %v371 = vld [vmem:[%s341 + $0x78] sm:$0xff]
      %v372 = vld [vmem:[%s341 + $0x80] sm:$0xff]
      %v373 = vld [vmem:[%s341 + $0x88] sm:$0xff]
      %v374 = vld [vmem:[%s341 + $0x90] sm:$0xff]
      %v375 = vld [vmem:[%s341 + $0x98] sm:$0xff]
      %v376 = vld [vmem:[%s341 + $0xa0] sm:$0xff]
      %v377 = vld [vmem:[%s341 + $0xa8] sm:$0xff]
      %v378 = vld [vmem:[%s341 + $0xb0] sm:$0xff]
      %v379 = vld [vmem:[%s341 + $0xb8] sm:$0xff]
      %v380 = vld [vmem:[%s341 + $0xc0] sm:$0xff]
      %v381 = vld [vmem:[%s341 + $0xc8] sm:$0xff]
      %v382 = vld [vmem:[%s341 + $0xd0] sm:$0xff]
      %v383 = vld [vmem:[%s341 + $0xd8] sm:$0xff]
      %v384 = vld [vmem:[%s341 + $0xe0] sm:$0xff]
      %v385 = vld [vmem:[%s341 + $0xe8] sm:$0xff]
      %v386 = vld [vmem:[%s341 + $0xf0] sm:$0xff]
      %v387 = vld [vmem:[%s341 + $0xf8] sm:$0xff]
      %v388 = vld [vmem:[%s1] sm:$0x1]
      %v390 = vperm.slane %v388, 0
      %v392 = vmul.f32 %v356, %v390
      %v393 = vmul.f32 %v357, %v390
      %v394 = vmul.f32 %v358, %v390
      %v395 = vmul.f32 %v359, %v390
      %v396 = vmul.f32 %v360, %v390
      %v397 = vmul.f32 %v361, %v390
      %v398 = vmul.f32 %v362, %v390
      %v399 = vmul.f32 %v363, %v390
      %v400 = vmul.f32 %v364, %v390
      %v401 = vmul.f32 %v365, %v390
      %v402 = vmul.f32 %v366, %v390
      %v403 = vmul.f32 %v367, %v390
      %v404 = vmul.f32 %v368, %v390
      %v405 = vmul.f32 %v369, %v390
      %v406 = vmul.f32 %v370, %v390
      %v407 = vmul.f32 %v371, %v390
      %v408 = vmul.f32 %v372, %v390
      %v409 = vmul.f32 %v373, %v390
      %v410 = vmul.f32 %v374, %v390
      %v411 = vmul.f32 %v375, %v390
      %v412 = vmul.f32 %v376, %v390
      %v413 = vmul.f32 %v377, %v390
      %v414 = vmul.f32 %v378, %v390
      %v415 = vmul.f32 %v379, %v390
      %v416 = vmul.f32 %v380, %v390
      %v417 = vmul.f32 %v381, %v390
      %v418 = vmul.f32 %v382, %v390
      %v419 = vmul.f32 %v383, %v390
      %v420 = vmul.f32 %v384, %v390
      %v421 = vmul.f32 %v385, %v390
      %v422 = vmul.f32 %v386, %v390
      %v423 = vmul.f32 %v387, %v390
      %v424 = vld [vmem:[%s2] sm:$0x1]
      %v426 = vperm.slane %v424, 0
      %v428 = vadd.f32 %v392, %v426
      %v429 = vadd.f32 %v393, %v426
      %v430 = vadd.f32 %v394, %v426
      %v431 = vadd.f32 %v395, %v426
      %v432 = vadd.f32 %v396, %v426
      %v433 = vadd.f32 %v397, %v426
      %v434 = vadd.f32 %v398, %v426
      %v435 = vadd.f32 %v399, %v426
      %v436 = vadd.f32 %v400, %v426
      %v437 = vadd.f32 %v401, %v426
      %v438 = vadd.f32 %v402, %v426
      %v439 = vadd.f32 %v403, %v426
      %v440 = vadd.f32 %v404, %v426
      %v441 = vadd.f32 %v405, %v426
      %v442 = vadd.f32 %v406, %v426
      %v443 = vadd.f32 %v407, %v426
      %v444 = vadd.f32 %v408, %v426
      %v445 = vadd.f32 %v409, %v426
      %v446 = vadd.f32 %v410, %v426
      %v447 = vadd.f32 %v411, %v426
      %v448 = vadd.f32 %v412, %v426
      %v449 = vadd.f32 %v413, %v426
      %v450 = vadd.f32 %v414, %v426
      %v451 = vadd.f32 %v415, %v426
      %v452 = vadd.f32 %v416, %v426
      %v453 = vadd.f32 %v417, %v426
      %v454 = vadd.f32 %v418, %v426
      %v455 = vadd.f32 %v419, %v426
      %v456 = vadd.f32 %v420, %v426
      %v457 = vadd.f32 %v421, %v426
      %v458 = vadd.f32 %v422, %v426
      %v459 = vadd.f32 %v423, %v426
      %vm492 = vcmask 1040384
      %v493 = vrot.slane %v428, 7
      %v494 = vrot.slane %v429, 7
      %v495 = vsel %vm492, %v493, %v494
      %v496 = vrot.slane %v430, 7
      %v497 = vrot.slane %v431, 7
      %v498 = vsel %vm492, %v496, %v497
      %v499 = vrot.slane %v432, 7
      %v500 = vrot.slane %v433, 7
      %v501 = vsel %vm492, %v499, %v500
      %v502 = vrot.slane %v434, 7
      %v503 = vrot.slane %v435, 7
      %v504 = vsel %vm492, %v502, %v503
      %v505 = vrot.slane %v436, 7
      %v506 = vrot.slane %v437, 7
      %v507 = vsel %vm492, %v505, %v506
      %v508 = vrot.slane %v438, 7
      %v509 = vrot.slane %v439, 7
      %v510 = vsel %vm492, %v508, %v509
      %v511 = vrot.slane %v440, 7
      %v512 = vrot.slane %v441, 7
      %v513 = vsel %vm492, %v511, %v512
      %v514 = vrot.slane %v442, 7
      %v515 = vrot.slane %v443, 7
      %v516 = vsel %vm492, %v514, %v515
      %v517 = vrot.slane %v444, 7
      %v518 = vrot.slane %v445, 7
      %v519 = vsel %vm492, %v517, %v518
      %v520 = vrot.slane %v446, 7
      %v521 = vrot.slane %v447, 7
      %v522 = vsel %vm492, %v520, %v521
      %v523 = vrot.slane %v448, 7
      %v524 = vrot.slane %v449, 7
      %v525 = vsel %vm492, %v523, %v524
      %v526 = vrot.slane %v450, 7
      %v527 = vrot.slane %v451, 7
      %v528 = vsel %vm492, %v526, %v527
      %v529 = vrot.slane %v452, 7
      %v530 = vrot.slane %v453, 7
      %v531 = vsel %vm492, %v529, %v530
      %v532 = vrot.slane %v454, 7
      %v533 = vrot.slane %v455, 7
      %v534 = vsel %vm492, %v532, %v533
      %v535 = vrot.slane %v456, 7
      %v536 = vrot.slane %v457, 7
      %v537 = vsel %vm492, %v535, %v536
      %v538 = vrot.slane %v458, 7
      %v539 = vrot.slane %v459, 7
      %v540 = vsel %vm492, %v538, %v539
      %v573 = vsel %vm492, 0.0, %v493
      %v574 = vsel %vm492, 0.0, %v496
      %v575 = vsel %vm492, 0.0, %v499
      %v576 = vsel %vm492, 0.0, %v502
      %v577 = vsel %vm492, 0.0, %v505
      %v578 = vsel %vm492, 0.0, %v508
      %v579 = vsel %vm492, 0.0, %v511
      %v580 = vsel %vm492, 0.0, %v514
      %v581 = vsel %vm492, 0.0, %v517
      %v582 = vsel %vm492, 0.0, %v520
      %v583 = vsel %vm492, 0.0, %v523
      %v584 = vsel %vm492, 0.0, %v526
      %v585 = vsel %vm492, 0.0, %v529
      %v586 = vsel %vm492, 0.0, %v532
      %v587 = vsel %vm492, 0.0, %v535
      %v588 = vsel %vm492, 0.0, %v538
      %v589 = vsel %vm492, %v494, 0.0
      %v590 = vsel %vm492, %v497, 0.0
      %v591 = vsel %vm492, %v500, 0.0
      %v592 = vsel %vm492, %v503, 0.0
      %v593 = vsel %vm492, %v506, 0.0
      %v594 = vsel %vm492, %v509, 0.0
      %v595 = vsel %vm492, %v512, 0.0
      %v596 = vsel %vm492, %v515, 0.0
      %v597 = vsel %vm492, %v518, 0.0
      %v598 = vsel %vm492, %v521, 0.0
      %v599 = vsel %vm492, %v524, 0.0
      %v600 = vsel %vm492, %v527, 0.0
      %v601 = vsel %vm492, %v530, 0.0
      %v602 = vsel %vm492, %v533, 0.0
      %v603 = vsel %vm492, %v536, 0.0
      %v604 = vsel %vm492, %v539, 0.0
      %v605 = vld [vmem:[%s3] sm:$0xff]
      %vm637 = vcmask 1046528
      %v638 = vrot.slane 0.0, 1
      %v639 = vsel %vm637, %v638, %v638
      %v640 = vrot.slane %v573, 1
      %v641 = vrot.slane %v495, 1
      %v642 = vsel %vm637, %v640, %v641
      %v643 = vrot.slane %v589, 1
      %v644 = vsel %vm637, %v641, %v643
      %v645 = vrot.slane %v574, 1
      %v646 = vrot.slane %v498, 1
      %v647 = vsel %vm637, %v645, %v646
      %v648 = vrot.slane %v590, 1
      %v649 = vsel %vm637, %v646, %v648
      %v650 = vrot.slane %v575, 1
      %v651 = vrot.slane %v501, 1
      %v652 = vsel %vm637, %v650, %v651
      %v653 = vrot.slane %v591, 1
      %v654 = vsel %vm637, %v651, %v653
      %v655 = vrot.slane %v576, 1
      %v656 = vrot.slane %v504, 1
      %v657 = vsel %vm637, %v655, %v656
      %v658 = vrot.slane %v592, 1
      %v659 = vsel %vm637, %v656, %v658
      %v660 = vrot.slane %v577, 1
      %v661 = vrot.slane %v507, 1
      %v662 = vsel %vm637, %v660, %v661
      %v663 = vrot.slane %v593, 1
      %v664 = vsel %vm637, %v661, %v663
      %v665 = vrot.slane %v578, 1
      %v666 = vrot.slane %v510, 1
      %v667 = vsel %vm637, %v665, %v666
      %v668 = vrot.slane %v594, 1
      %v669 = vsel %vm637, %v666, %v668
      %v670 = vrot.slane %v579, 1
      %v671 = vrot.slane %v513, 1
      %v672 = vsel %vm637, %v670, %v671
      %v673 = vrot.slane %v595, 1
      %v674 = vsel %vm637, %v671, %v673
      %v675 = vrot.slane %v580, 1
      %v676 = vrot.slane %v516, 1
      %v677 = vsel %vm637, %v675, %v676
      %v678 = vrot.slane %v596, 1
      %v679 = vsel %vm637, %v676, %v678
      %v680 = vrot.slane %v581, 1
      %v681 = vrot.slane %v519, 1
      %v682 = vsel %vm637, %v680, %v681
      %v683 = vrot.slane %v597, 1
      %v684 = vsel %vm637, %v681, %v683
      %v685 = vrot.slane %v582, 1
      %v686 = vrot.slane %v522, 1
      %v687 = vsel %vm637, %v685, %v686
      %v688 = vrot.slane %v598, 1
      %v689 = vsel %vm637, %v686, %v688
      %v690 = vrot.slane %v583, 1
      %v691 = vrot.slane %v525, 1
      %v692 = vsel %vm637, %v690, %v691
      %v693 = vrot.slane %v599, 1
      %v694 = vsel %vm637, %v691, %v693
      %v695 = vrot.slane %v584, 1
      %v696 = vrot.slane %v528, 1
      %v697 = vsel %vm637, %v695, %v696
      %v698 = vrot.slane %v600, 1
      %v699 = vsel %vm637, %v696, %v698
      %v700 = vrot.slane %v585, 1
      %v701 = vrot.slane %v531, 1
      %v702 = vsel %vm637, %v700, %v701
      %v703 = vrot.slane %v601, 1
      %v704 = vsel %vm637, %v701, %v703
      %v705 = vrot.slane %v586, 1
      %v706 = vrot.slane %v534, 1
      %v707 = vsel %vm637, %v705, %v706
      %v708 = vrot.slane %v602, 1
      %v709 = vsel %vm637, %v706, %v708
      %v710 = vrot.slane %v587, 1
      %v711 = vrot.slane %v537, 1
      %v712 = vsel %vm637, %v710, %v711
      %v713 = vrot.slane %v603, 1
      %v714 = vsel %vm637, %v711, %v713
      %s715 = scalar_lea.vmem %s3, 8
      %v716 = vld [vmem:[%s715] sm:$0xff]
      %vm717 = vcmask 64512
      %v718 = vsel %vm717, %v639, 0
      %v720 = vsel %vm717, %v642, 0
      %v722 = vsel %vm717, %v644, 0
      %v724 = vsel %vm717, %v647, 0
      %v726 = vsel %vm717, %v649, 0
      %v728 = vsel %vm717, %v652, 0
      %v730 = vsel %vm717, %v654, 0
      %v732 = vsel %vm717, %v657, 0
      %v734 = vsel %vm717, %v659, 0
      %v736 = vsel %vm717, %v662, 0
      %v738 = vsel %vm717, %v664, 0
      %v740 = vsel %vm717, %v667, 0
      %v742 = vsel %vm717, %v669, 0
      %v744 = vsel %vm717, %v672, 0
      %v746 = vsel %vm717, %v674, 0
      %v748 = vsel %vm717, %v677, 0
      %v750 = vsel %vm717, %v679, 0
      %v752 = vsel %vm717, %v682, 0
      %v754 = vsel %vm717, %v684, 0
      %v756 = vsel %vm717, %v687, 0
      %v758 = vsel %vm717, %v689, 0
      %v760 = vsel %vm717, %v692, 0
      %v762 = vsel %vm717, %v694, 0
      %v764 = vsel %vm717, %v697, 0
      %v766 = vsel %vm717, %v699, 0
      %v768 = vsel %vm717, %v702, 0
      %v770 = vsel %vm717, %v704, 0
      %v772 = vsel %vm717, %v707, 0
      %v774 = vsel %vm717, %v709, 0
      %v776 = vsel %vm717, %v712, 0
      %v778 = vsel %vm717, %v714, 0
      %780 = vmatpush.msra.mxu0 0.0
      %781 = vmatpush.msra.mxu0 0.0
      %782 = vmatpush.msra.mxu0 0.0
      %783 = vmatpush.msra.mxu0 0.0
      %784 = vmatpush.msra.mxu0 0.0
      %785 = vmatpush.msra.mxu0 0.0
      %786 = vmatpush.msra.mxu0 0.0
      %787 = vmatpush.msra.mxu0 0.0
      %788 = vmatpush.msra.mxu0 0.0
      %789 = vmatpush.msra.mxu0 0.0
      %790 = vmatpush.msra.mxu0 0.0
      %791 = vmatpush.msra.mxu0 0.0
      %792 = vmatpush.msra.mxu0 0.0
      %793 = vmatpush.msra.mxu0 0.0
      %794 = vmatpush.msra.mxu0 0.0
      %795 = vmatpush.msra.mxu0 %v716
      %796 = vmatmul.f32.gmra.mxu0 %v718
      %v797 = vpop.f32.mrf.mxu0
      %v798 = vadd.f32 0.0, %v797
      %799 = vmatmul.f32.gmra.mxu0 %v718
      %v800 = vpop.f32.mrf.mxu0
      %v801 = vadd.f32 0.0, %v800
      %802 = vmatmul.f32.gmra.mxu0 %v720
      %v803 = vpop.f32.mrf.mxu0
      %v804 = vadd.f32 0.0, %v803
      %805 = vmatmul.f32.gmra.mxu0 %v722
      %v806 = vpop.f32.mrf.mxu0
      %v807 = vadd.f32 0.0, %v806
      %808 = vmatmul.f32.gmra.mxu0 %v724
      %v809 = vpop.f32.mrf.mxu0
      %v810 = vadd.f32 0.0, %v809
      %811 = vmatmul.f32.gmra.mxu0 %v726
      %v812 = vpop.f32.mrf.mxu0
      %v813 = vadd.f32 0.0, %v812
      %814 = vmatmul.f32.gmra.mxu0 %v728
      %v815 = vpop.f32.mrf.mxu0
      %v816 = vadd.f32 0.0, %v815
      %817 = vmatmul.f32.gmra.mxu0 %v730
      %v818 = vpop.f32.mrf.mxu0
      %v819 = vadd.f32 0.0, %v818
      %820 = vmatmul.f32.gmra.mxu0 %v732
      %v821 = vpop.f32.mrf.mxu0
      %v822 = vadd.f32 0.0, %v821
      %823 = vmatmul.f32.gmra.mxu0 %v734
      %v824 = vpop.f32.mrf.mxu0
      %v825 = vadd.f32 0.0, %v824
      %826 = vmatmul.f32.gmra.mxu0 %v736
      %v827 = vpop.f32.mrf.mxu0
      %v828 = vadd.f32 0.0, %v827
      %829 = vmatmul.f32.gmra.mxu0 %v738
      %v830 = vpop.f32.mrf.mxu0
      %v831 = vadd.f32 0.0, %v830
      %832 = vmatmul.f32.gmra.mxu0 %v740
      %v833 = vpop.f32.mrf.mxu0
      %v834 = vadd.f32 0.0, %v833
      %835 = vmatmul.f32.gmra.mxu0 %v742
      %v836 = vpop.f32.mrf.mxu0
      %v837 = vadd.f32 0.0, %v836
      %838 = vmatmul.f32.gmra.mxu0 %v744
      %v839 = vpop.f32.mrf.mxu0
      %v840 = vadd.f32 0.0, %v839
      %841 = vmatmul.f32.gmra.mxu0 %v746
      %v842 = vpop.f32.mrf.mxu0
      %v843 = vadd.f32 0.0, %v842
      %844 = vmatmul.f32.gmra.mxu0 %v748
      %v845 = vpop.f32.mrf.mxu0
      %v846 = vadd.f32 0.0, %v845
      %847 = vmatmul.f32.gmra.mxu0 %v750
      %v848 = vpop.f32.mrf.mxu0
      %v849 = vadd.f32 0.0, %v848
      %850 = vmatmul.f32.gmra.mxu0 %v752
      %v851 = vpop.f32.mrf.mxu0
      %v852 = vadd.f32 0.0, %v851
      %853 = vmatmul.f32.gmra.mxu0 %v754
      %v854 = vpop.f32.mrf.mxu0
      %v855 = vadd.f32 0.0, %v854
      %856 = vmatmul.f32.gmra.mxu0 %v756
      %v857 = vpop.f32.mrf.mxu0
      %v858 = vadd.f32 0.0, %v857
      %859 = vmatmul.f32.gmra.mxu0 %v758
      %v860 = vpop.f32.mrf.mxu0
      %v861 = vadd.f32 0.0, %v860
      %862 = vmatmul.f32.gmra.mxu0 %v760
      %v863 = vpop.f32.mrf.mxu0
      %v864 = vadd.f32 0.0, %v863
      %865 = vmatmul.f32.gmra.mxu0 %v762
      %v866 = vpop.f32.mrf.mxu0
      %v867 = vadd.f32 0.0, %v866
      %868 = vmatmul.f32.gmra.mxu0 %v764
      %v869 = vpop.f32.mrf.mxu0
      %v870 = vadd.f32 0.0, %v869
      %871 = vmatmul.f32.gmra.mxu0 %v766
      %v872 = vpop.f32.mrf.mxu0
      %v873 = vadd.f32 0.0, %v872
      %874 = vmatmul.f32.gmra.mxu0 %v768
      %v875 = vpop.f32.mrf.mxu0
      %v876 = vadd.f32 0.0, %v875
      %877 = vmatmul.f32.gmra.mxu0 %v770
      %v878 = vpop.f32.mrf.mxu0
      %v879 = vadd.f32 0.0, %v878
      %880 = vmatmul.f32.gmra.mxu0 %v772
      %v881 = vpop.f32.mrf.mxu0
      %v882 = vadd.f32 0.0, %v881
      %883 = vmatmul.f32.gmra.mxu0 %v774
      %v884 = vpop.f32.mrf.mxu0
      %v885 = vadd.f32 0.0, %v884
      %886 = vmatmul.f32.gmra.mxu0 %v776
      %v887 = vpop.f32.mrf.mxu0
      %v888 = vadd.f32 0.0, %v887
      %889 = vmatmul.f32.gmra.mxu0 %v778
      %v890 = vpop.f32.mrf.mxu0
      %v891 = vadd.f32 0.0, %v890
      %892 = vdwg.mxu0
      %v893 = vsel %vm717, 0.0, 0
      %v895 = vsel %vm717, %v573, 0
      %v897 = vsel %vm717, %v495, 0
      %v899 = vsel %vm717, %v574, 0
      %v901 = vsel %vm717, %v498, 0
      %v903 = vsel %vm717, %v575, 0
      %v905 = vsel %vm717, %v501, 0
      %v907 = vsel %vm717, %v576, 0
      %v909 = vsel %vm717, %v504, 0
      %v911 = vsel %vm717, %v577, 0
      %v913 = vsel %vm717, %v507, 0
      %v915 = vsel %vm717, %v578, 0
      %v917 = vsel %vm717, %v510, 0
      %v919 = vsel %vm717, %v579, 0
      %v921 = vsel %vm717, %v513, 0
      %v923 = vsel %vm717, %v580, 0
      %v925 = vsel %vm717, %v516, 0
      %v927 = vsel %vm717, %v581, 0
      %v929 = vsel %vm717, %v519, 0
      %v931 = vsel %vm717, %v582, 0
      %v933 = vsel %vm717, %v522, 0
      %v935 = vsel %vm717, %v583, 0
      %v937 = vsel %vm717, %v525, 0
      %v939 = vsel %vm717, %v584, 0
      %v941 = vsel %vm717, %v528, 0
      %v943 = vsel %vm717, %v585, 0
      %v945 = vsel %vm717, %v531, 0
      %v947 = vsel %vm717, %v586, 0
      %v949 = vsel %vm717, %v534, 0
      %v951 = vsel %vm717, %v587, 0
      %v953 = vsel %vm717, %v537, 0
      %955 = vmatpush.msra.mxu0 0.0
      %956 = vmatpush.msra.mxu0 0.0
      %957 = vmatpush.msra.mxu0 0.0
      %958 = vmatpush.msra.mxu0 0.0
      %959 = vmatpush.msra.mxu0 0.0
      %960 = vmatpush.msra.mxu0 0.0
      %961 = vmatpush.msra.mxu0 0.0
      %962 = vmatpush.msra.mxu0 0.0
      %963 = vmatpush.msra.mxu0 0.0
      %964 = vmatpush.msra.mxu0 0.0
      %965 = vmatpush.msra.mxu0 0.0
      %966 = vmatpush.msra.mxu0 0.0
      %967 = vmatpush.msra.mxu0 0.0
      %968 = vmatpush.msra.mxu0 0.0
      %969 = vmatpush.msra.mxu0 0.0
      %970 = vmatpush.msra.mxu0 %v605
      %971 = vmatmul.f32.gmra.mxu0 %v893
      %v972 = vpop.f32.mrf.mxu0
      %v973 = vadd.f32 %v798, %v972
      %974 = vmatmul.f32.gmra.mxu0 %v893
      %v975 = vpop.f32.mrf.mxu0
      %v976 = vadd.f32 %v801, %v975
      %977 = vmatmul.f32.gmra.mxu0 %v895
      %v978 = vpop.f32.mrf.mxu0
      %v979 = vadd.f32 %v804, %v978
      %980 = vmatmul.f32.gmra.mxu0 %v897
      %v981 = vpop.f32.mrf.mxu0
      %v982 = vadd.f32 %v807, %v981
      %983 = vmatmul.f32.gmra.mxu0 %v899
      %v984 = vpop.f32.mrf.mxu0
      %v985 = vadd.f32 %v810, %v984
      %986 = vmatmul.f32.gmra.mxu0 %v901
      %v987 = vpop.f32.mrf.mxu0
      %v988 = vadd.f32 %v813, %v987
      %989 = vmatmul.f32.gmra.mxu0 %v903
      %v990 = vpop.f32.mrf.mxu0
      %v991 = vadd.f32 %v816, %v990
      %992 = vmatmul.f32.gmra.mxu0 %v905
      %v993 = vpop.f32.mrf.mxu0
      %v994 = vadd.f32 %v819, %v993
      %995 = vmatmul.f32.gmra.mxu0 %v907
      %v996 = vpop.f32.mrf.mxu0
      %v997 = vadd.f32 %v822, %v996
      %998 = vmatmul.f32.gmra.mxu0 %v909
      %v999 = vpop.f32.mrf.mxu0
      %v1000 = vadd.f32 %v825, %v999
      %1001 = vmatmul.f32.gmra.mxu0 %v911
      %v1002 = vpop.f32.mrf.mxu0
      %v1003 = vadd.f32 %v828, %v1002
      %1004 = vmatmul.f32.gmra.mxu0 %v913
      %v1005 = vpop.f32.mrf.mxu0
      %v1006 = vadd.f32 %v831, %v1005
      %1007 = vmatmul.f32.gmra.mxu0 %v915
      %v1008 = vpop.f32.mrf.mxu0
      %v1009 = vadd.f32 %v834, %v1008
      %1010 = vmatmul.f32.gmra.mxu0 %v917
      %v1011 = vpop.f32.mrf.mxu0
      %v1012 = vadd.f32 %v837, %v1011
      %1013 = vmatmul.f32.gmra.mxu0 %v919
      %v1014 = vpop.f32.mrf.mxu0
      %v1015 = vadd.f32 %v840, %v1014
      %1016 = vmatmul.f32.gmra.mxu0 %v921
      %v1017 = vpop.f32.mrf.mxu0
      %v1018 = vadd.f32 %v843, %v1017
      %1019 = vmatmul.f32.gmra.mxu0 %v923
      %v1020 = vpop.f32.mrf.mxu0
      %v1021 = vadd.f32 %v846, %v1020
      %1022 = vmatmul.f32.gmra.mxu0 %v925
      %v1023 = vpop.f32.mrf.mxu0
      %v1024 = vadd.f32 %v849, %v1023
      %1025 = vmatmul.f32.gmra.mxu0 %v927
      %v1026 = vpop.f32.mrf.mxu0
      %v1027 = vadd.f32 %v852, %v1026
      %1028 = vmatmul.f32.gmra.mxu0 %v929
      %v1029 = vpop.f32.mrf.mxu0
      %v1030 = vadd.f32 %v855, %v1029
      %1031 = vmatmul.f32.gmra.mxu0 %v931
      %v1032 = vpop.f32.mrf.mxu0
      %v1033 = vadd.f32 %v858, %v1032
      %1034 = vmatmul.f32.gmra.mxu0 %v933
      %v1035 = vpop.f32.mrf.mxu0
      %v1036 = vadd.f32 %v861, %v1035
      %1037 = vmatmul.f32.gmra.mxu0 %v935
      %v1038 = vpop.f32.mrf.mxu0
      %v1039 = vadd.f32 %v864, %v1038
      %1040 = vmatmul.f32.gmra.mxu0 %v937
      %v1041 = vpop.f32.mrf.mxu0
      %v1042 = vadd.f32 %v867, %v1041
      %1043 = vmatmul.f32.gmra.mxu0 %v939
      %v1044 = vpop.f32.mrf.mxu0
      %v1045 = vadd.f32 %v870, %v1044
      %1046 = vmatmul.f32.gmra.mxu0 %v941
      %v1047 = vpop.f32.mrf.mxu0
      %v1048 = vadd.f32 %v873, %v1047
      %1049 = vmatmul.f32.gmra.mxu0 %v943
      %v1050 = vpop.f32.mrf.mxu0
      %v1051 = vadd.f32 %v876, %v1050
      %1052 = vmatmul.f32.gmra.mxu0 %v945
      %v1053 = vpop.f32.mrf.mxu0
      %v1054 = vadd.f32 %v879, %v1053
      %1055 = vmatmul.f32.gmra.mxu0 %v947
      %v1056 = vpop.f32.mrf.mxu0
      %v1057 = vadd.f32 %v882, %v1056
      %1058 = vmatmul.f32.gmra.mxu0 %v949
      %v1059 = vpop.f32.mrf.mxu0
      %v1060 = vadd.f32 %v885, %v1059
      %1061 = vmatmul.f32.gmra.mxu0 %v951
      %v1062 = vpop.f32.mrf.mxu0
      %v1063 = vadd.f32 %v888, %v1062
      %1064 = vmatmul.f32.gmra.mxu0 %v953
      %v1065 = vpop.f32.mrf.mxu0
      %v1066 = vadd.f32 %v891, %v1065
      %1067 = vdwg.mxu0
      %vm1068 = vcmask 1045504
      %v1069 = vrot.slane 0.0, 2
      %v1070 = vsel %vm1068, %v1069, %v1069
      %v1071 = vrot.slane %v573, 2
      %v1072 = vrot.slane %v495, 2
      %v1073 = vsel %vm1068, %v1071, %v1072
      %v1074 = vrot.slane %v589, 2
      %v1075 = vsel %vm1068, %v1072, %v1074
      %v1076 = vrot.slane %v574, 2
      %v1077 = vrot.slane %v498, 2
      %v1078 = vsel %vm1068, %v1076, %v1077
      %v1079 = vrot.slane %v590, 2
      %v1080 = vsel %vm1068, %v1077, %v1079
      %v1081 = vrot.slane %v575, 2
      %v1082 = vrot.slane %v501, 2
      %v1083 = vsel %vm1068, %v1081, %v1082
      %v1084 = vrot.slane %v591, 2
      %v1085 = vsel %vm1068, %v1082, %v1084
      %v1086 = vrot.slane %v576, 2
      %v1087 = vrot.slane %v504, 2
      %v1088 = vsel %vm1068, %v1086, %v1087
      %v1089 = vrot.slane %v592, 2
      %v1090 = vsel %vm1068, %v1087, %v1089
      %v1091 = vrot.slane %v577, 2
      %v1092 = vrot.slane %v507, 2
      %v1093 = vsel %vm1068, %v1091, %v1092
      %v1094 = vrot.slane %v593, 2
      %v1095 = vsel %vm1068, %v1092, %v1094
      %v1096 = vrot.slane %v578, 2
      %v1097 = vrot.slane %v510, 2
      %v1098 = vsel %vm1068, %v1096, %v1097
      %v1099 = vrot.slane %v594, 2
      %v1100 = vsel %vm1068, %v1097, %v1099
      %v1101 = vrot.slane %v579, 2
      %v1102 = vrot.slane %v513, 2
      %v1103 = vsel %vm1068, %v1101, %v1102
      %v1104 = vrot.slane %v595, 2
      %v1105 = vsel %vm1068, %v1102, %v1104
      %v1106 = vrot.slane %v580, 2
      %v1107 = vrot.slane %v516, 2
      %v1108 = vsel %vm1068, %v1106, %v1107
      %v1109 = vrot.slane %v596, 2
      %v1110 = vsel %vm1068, %v1107, %v1109
      %v1111 = vrot.slane %v581, 2
      %v1112 = vrot.slane %v519, 2
      %v1113 = vsel %vm1068, %v1111, %v1112
      %v1114 = vrot.slane %v597, 2
      %v1115 = vsel %vm1068, %v1112, %v1114
      %v1116 = vrot.slane %v582, 2
      %v1117 = vrot.slane %v522, 2
      %v1118 = vsel %vm1068, %v1116, %v1117
      %v1119 = vrot.slane %v598, 2
      %v1120 = vsel %vm1068, %v1117, %v1119
      %v1121 = vrot.slane %v583, 2
      %v1122 = vrot.slane %v525, 2
      %v1123 = vsel %vm1068, %v1121, %v1122
      %v1124 = vrot.slane %v599, 2
      %v1125 = vsel %vm1068, %v1122, %v1124
      %v1126 = vrot.slane %v584, 2
      %v1127 = vrot.slane %v528, 2
      %v1128 = vsel %vm1068, %v1126, %v1127
      %v1129 = vrot.slane %v600, 2
      %v1130 = vsel %vm1068, %v1127, %v1129
      %v1131 = vrot.slane %v585, 2
      %v1132 = vrot.slane %v531, 2
      %v1133 = vsel %vm1068, %v1131, %v1132
      %v1134 = vrot.slane %v601, 2
      %v1135 = vsel %vm1068, %v1132, %v1134
      %v1136 = vrot.slane %v586, 2
      %v1137 = vrot.slane %v534, 2
      %v1138 = vsel %vm1068, %v1136, %v1137
      %v1139 = vrot.slane %v602, 2
      %v1140 = vsel %vm1068, %v1137, %v1139
      %v1141 = vrot.slane %v587, 2
      %v1142 = vrot.slane %v537, 2
      %v1143 = vsel %vm1068, %v1141, %v1142
      %v1144 = vrot.slane %v603, 2
      %v1145 = vsel %vm1068, %v1142, %v1144
      %s1146 = scalar_lea.vmem %s3, 16
      %v1147 = vld [vmem:[%s1146] sm:$0xff]
      %v1148 = vsel %vm717, %v1070, 0
      %v1150 = vsel %vm717, %v1073, 0
      %v1152 = vsel %vm717, %v1075, 0
      %v1154 = vsel %vm717, %v1078, 0
      %v1156 = vsel %vm717, %v1080, 0
      %v1158 = vsel %vm717, %v1083, 0
      %v1160 = vsel %vm717, %v1085, 0
      %v1162 = vsel %vm717, %v1088, 0
      %v1164 = vsel %vm717, %v1090, 0
      %v1166 = vsel %vm717, %v1093, 0
      %v1168 = vsel %vm717, %v1095, 0
      %v1170 = vsel %vm717, %v1098, 0
      %v1172 = vsel %vm717, %v1100, 0
      %v1174 = vsel %vm717, %v1103, 0
      %v1176 = vsel %vm717, %v1105, 0
      %v1178 = vsel %vm717, %v1108, 0
      %v1180 = vsel %vm717, %v1110, 0
      %v1182 = vsel %vm717, %v1113, 0
      %v1184 = vsel %vm717, %v1115, 0
      %v1186 = vsel %vm717, %v1118, 0
      %v1188 = vsel %vm717, %v1120, 0
      %v1190 = vsel %vm717, %v1123, 0
      %v1192 = vsel %vm717, %v1125, 0
      %v1194 = vsel %vm717, %v1128, 0
      %v1196 = vsel %vm717, %v1130, 0
      %v1198 = vsel %vm717, %v1133, 0
      %v1200 = vsel %vm717, %v1135, 0
      %v1202 = vsel %vm717, %v1138, 0
      %v1204 = vsel %vm717, %v1140, 0
      %v1206 = vsel %vm717, %v1143, 0
      %v1208 = vsel %vm717, %v1145, 0
      %1210 = vmatpush.msra.mxu0 0.0
      %1211 = vmatpush.msra.mxu0 0.0
      %1212 = vmatpush.msra.mxu0 0.0
      %1213 = vmatpush.msra.mxu0 0.0
      %1214 = vmatpush.msra.mxu0 0.0
      %1215 = vmatpush.msra.mxu0 0.0
      %1216 = vmatpush.msra.mxu0 0.0
      %1217 = vmatpush.msra.mxu0 0.0
      %1218 = vmatpush.msra.mxu0 0.0
      %1219 = vmatpush.msra.mxu0 0.0
      %1220 = vmatpush.msra.mxu0 0.0
      %1221 = vmatpush.msra.mxu0 0.0
      %1222 = vmatpush.msra.mxu0 0.0
      %1223 = vmatpush.msra.mxu0 0.0
      %1224 = vmatpush.msra.mxu0 0.0
      %1225 = vmatpush.msra.mxu0 %v1147
      %1226 = vmatmul.f32.gmra.mxu0 %v1148
      %v1227 = vpop.f32.mrf.mxu0
      %v1228 = vadd.f32 0.0, %v1227
      %1229 = vmatmul.f32.gmra.mxu0 %v1148
      %v1230 = vpop.f32.mrf.mxu0
      %v1231 = vadd.f32 0.0, %v1230
      %1232 = vmatmul.f32.gmra.mxu0 %v1150
      %v1233 = vpop.f32.mrf.mxu0
      %v1234 = vadd.f32 0.0, %v1233
      %1235 = vmatmul.f32.gmra.mxu0 %v1152
      %v1236 = vpop.f32.mrf.mxu0
      %v1237 = vadd.f32 0.0, %v1236
      %1238 = vmatmul.f32.gmra.mxu0 %v1154
      %v1239 = vpop.f32.mrf.mxu0
      %v1240 = vadd.f32 0.0, %v1239
      %1241 = vmatmul.f32.gmra.mxu0 %v1156
      %v1242 = vpop.f32.mrf.mxu0
      %v1243 = vadd.f32 0.0, %v1242
      %1244 = vmatmul.f32.gmra.mxu0 %v1158
      %v1245 = vpop.f32.mrf.mxu0
      %v1246 = vadd.f32 0.0, %v1245
      %1247 = vmatmul.f32.gmra.mxu0 %v1160
      %v1248 = vpop.f32.mrf.mxu0
      %v1249 = vadd.f32 0.0, %v1248
      %1250 = vmatmul.f32.gmra.mxu0 %v1162
      %v1251 = vpop.f32.mrf.mxu0
      %v1252 = vadd.f32 0.0, %v1251
      %1253 = vmatmul.f32.gmra.mxu0 %v1164
      %v1254 = vpop.f32.mrf.mxu0
      %v1255 = vadd.f32 0.0, %v1254
      %1256 = vmatmul.f32.gmra.mxu0 %v1166
      %v1257 = vpop.f32.mrf.mxu0
      %v1258 = vadd.f32 0.0, %v1257
      %1259 = vmatmul.f32.gmra.mxu0 %v1168
      %v1260 = vpop.f32.mrf.mxu0
      %v1261 = vadd.f32 0.0, %v1260
      %1262 = vmatmul.f32.gmra.mxu0 %v1170
      %v1263 = vpop.f32.mrf.mxu0
      %v1264 = vadd.f32 0.0, %v1263
      %1265 = vmatmul.f32.gmra.mxu0 %v1172
      %v1266 = vpop.f32.mrf.mxu0
      %v1267 = vadd.f32 0.0, %v1266
      %1268 = vmatmul.f32.gmra.mxu0 %v1174
      %v1269 = vpop.f32.mrf.mxu0
      %v1270 = vadd.f32 0.0, %v1269
      %1271 = vmatmul.f32.gmra.mxu0 %v1176
      %v1272 = vpop.f32.mrf.mxu0
      %v1273 = vadd.f32 0.0, %v1272
      %1274 = vmatmul.f32.gmra.mxu0 %v1178
      %v1275 = vpop.f32.mrf.mxu0
      %v1276 = vadd.f32 0.0, %v1275
      %1277 = vmatmul.f32.gmra.mxu0 %v1180
      %v1278 = vpop.f32.mrf.mxu0
      %v1279 = vadd.f32 0.0, %v1278
      %1280 = vmatmul.f32.gmra.mxu0 %v1182
      %v1281 = vpop.f32.mrf.mxu0
      %v1282 = vadd.f32 0.0, %v1281
      %1283 = vmatmul.f32.gmra.mxu0 %v1184
      %v1284 = vpop.f32.mrf.mxu0
      %v1285 = vadd.f32 0.0, %v1284
      %1286 = vmatmul.f32.gmra.mxu0 %v1186
      %v1287 = vpop.f32.mrf.mxu0
      %v1288 = vadd.f32 0.0, %v1287
      %1289 = vmatmul.f32.gmra.mxu0 %v1188
      %v1290 = vpop.f32.mrf.mxu0
      %v1291 = vadd.f32 0.0, %v1290
      %1292 = vmatmul.f32.gmra.mxu0 %v1190
      %v1293 = vpop.f32.mrf.mxu0
      %v1294 = vadd.f32 0.0, %v1293
      %1295 = vmatmul.f32.gmra.mxu0 %v1192
      %v1296 = vpop.f32.mrf.mxu0
      %v1297 = vadd.f32 0.0, %v1296
      %1298 = vmatmul.f32.gmra.mxu0 %v1194
      %v1299 = vpop.f32.mrf.mxu0
      %v1300 = vadd.f32 0.0, %v1299
      %1301 = vmatmul.f32.gmra.mxu0 %v1196
      %v1302 = vpop.f32.mrf.mxu0
      %v1303 = vadd.f32 0.0, %v1302
      %1304 = vmatmul.f32.gmra.mxu0 %v1198
      %v1305 = vpop.f32.mrf.mxu0
      %v1306 = vadd.f32 0.0, %v1305
      %1307 = vmatmul.f32.gmra.mxu0 %v1200
      %v1308 = vpop.f32.mrf.mxu0
      %v1309 = vadd.f32 0.0, %v1308
      %1310 = vmatmul.f32.gmra.mxu0 %v1202
      %v1311 = vpop.f32.mrf.mxu0
      %v1312 = vadd.f32 0.0, %v1311
      %1313 = vmatmul.f32.gmra.mxu0 %v1204
      %v1314 = vpop.f32.mrf.mxu0
      %v1315 = vadd.f32 0.0, %v1314
      %1316 = vmatmul.f32.gmra.mxu0 %v1206
      %v1317 = vpop.f32.mrf.mxu0
      %v1318 = vadd.f32 0.0, %v1317
      %1319 = vmatmul.f32.gmra.mxu0 %v1208
      %v1320 = vpop.f32.mrf.mxu0
      %v1321 = vadd.f32 0.0, %v1320
      %1322 = vdwg.mxu0
      %v1323 = vadd.f32 %v973, %v1228
      %v1324 = vadd.f32 %v976, %v1231
      %v1325 = vadd.f32 %v979, %v1234
      %v1326 = vadd.f32 %v982, %v1237
      %v1327 = vadd.f32 %v985, %v1240
      %v1328 = vadd.f32 %v988, %v1243
      %v1329 = vadd.f32 %v991, %v1246
      %v1330 = vadd.f32 %v994, %v1249
      %v1331 = vadd.f32 %v997, %v1252
      %v1332 = vadd.f32 %v1000, %v1255
      %v1333 = vadd.f32 %v1003, %v1258
      %v1334 = vadd.f32 %v1006, %v1261
      %v1335 = vadd.f32 %v1009, %v1264
      %v1336 = vadd.f32 %v1012, %v1267
      %v1337 = vadd.f32 %v1015, %v1270
      %v1338 = vadd.f32 %v1018, %v1273
      %v1339 = vadd.f32 %v1021, %v1276
      %v1340 = vadd.f32 %v1024, %v1279
      %v1341 = vadd.f32 %v1027, %v1282
      %v1342 = vadd.f32 %v1030, %v1285
      %v1343 = vadd.f32 %v1033, %v1288
      %v1344 = vadd.f32 %v1036, %v1291
      %v1345 = vadd.f32 %v1039, %v1294
      %v1346 = vadd.f32 %v1042, %v1297
      %v1347 = vadd.f32 %v1045, %v1300
      %v1348 = vadd.f32 %v1048, %v1303
      %v1349 = vadd.f32 %v1051, %v1306
      %v1350 = vadd.f32 %v1054, %v1309
      %v1351 = vadd.f32 %v1057, %v1312
      %v1352 = vadd.f32 %v1060, %v1315
      %v1353 = vadd.f32 %v1063, %v1318
      %v1354 = vadd.f32 %v1066, %v1321
      %s1355 = scalar_lea.vmem %s3, 24
      %v1356 = vld [vmem:[%s1355] sm:$0xff]
      %v1358 = vsel %vm717, %v588, 0
      %v1360 = vsel %vm717, %v540, 0
      %1362 = vmatpush.msra.mxu0 0.0
      %1363 = vmatpush.msra.mxu0 0.0
      %1364 = vmatpush.msra.mxu0 0.0
      %1365 = vmatpush.msra.mxu0 0.0
      %1366 = vmatpush.msra.mxu0 0.0
      %1367 = vmatpush.msra.mxu0 0.0
      %1368 = vmatpush.msra.mxu0 0.0
      %1369 = vmatpush.msra.mxu0 0.0
      %1370 = vmatpush.msra.mxu0 0.0
      %1371 = vmatpush.msra.mxu0 0.0
      %1372 = vmatpush.msra.mxu0 0.0
      %1373 = vmatpush.msra.mxu0 0.0
      %1374 = vmatpush.msra.mxu0 0.0
      %1375 = vmatpush.msra.mxu0 0.0
      %1376 = vmatpush.msra.mxu0 0.0
      %1377 = vmatpush.msra.mxu0 %v1356
      %1378 = vmatmul.f32.gmra.mxu0 %v895
      %v1379 = vpop.f32.mrf.mxu0
      %v1380 = vadd.f32 0.0, %v1379
      %1381 = vmatmul.f32.gmra.mxu0 %v897
      %v1382 = vpop.f32.mrf.mxu0
      %v1383 = vadd.f32 0.0, %v1382
      %1384 = vmatmul.f32.gmra.mxu0 %v899
      %v1385 = vpop.f32.mrf.mxu0
      %v1386 = vadd.f32 0.0, %v1385
      %1387 = vmatmul.f32.gmra.mxu0 %v901
      %v1388 = vpop.f32.mrf.mxu0
      %v1389 = vadd.f32 0.0, %v1388
      %1390 = vmatmul.f32.gmra.mxu0 %v903
      %v1391 = vpop.f32.mrf.mxu0
      %v1392 = vadd.f32 0.0, %v1391
      %1393 = vmatmul.f32.gmra.mxu0 %v905
      %v1394 = vpop.f32.mrf.mxu0
      %v1395 = vadd.f32 0.0, %v1394
      %1396 = vmatmul.f32.gmra.mxu0 %v907
      %v1397 = vpop.f32.mrf.mxu0
      %v1398 = vadd.f32 0.0, %v1397
      %1399 = vmatmul.f32.gmra.mxu0 %v909
      %v1400 = vpop.f32.mrf.mxu0
      %v1401 = vadd.f32 0.0, %v1400
      %1402 = vmatmul.f32.gmra.mxu0 %v911
      %v1403 = vpop.f32.mrf.mxu0
      %v1404 = vadd.f32 0.0, %v1403
      %1405 = vmatmul.f32.gmra.mxu0 %v913
      %v1406 = vpop.f32.mrf.mxu0
      %v1407 = vadd.f32 0.0, %v1406
      %1408 = vmatmul.f32.gmra.mxu0 %v915
      %v1409 = vpop.f32.mrf.mxu0
      %v1410 = vadd.f32 0.0, %v1409
      %1411 = vmatmul.f32.gmra.mxu0 %v917
      %v1412 = vpop.f32.mrf.mxu0
      %v1413 = vadd.f32 0.0, %v1412
      %1414 = vmatmul.f32.gmra.mxu0 %v919
      %v1415 = vpop.f32.mrf.mxu0
      %v1416 = vadd.f32 0.0, %v1415
      %1417 = vmatmul.f32.gmra.mxu0 %v921
      %v1418 = vpop.f32.mrf.mxu0
      %v1419 = vadd.f32 0.0, %v1418
      %1420 = vmatmul.f32.gmra.mxu0 %v923
      %v1421 = vpop.f32.mrf.mxu0
      %v1422 = vadd.f32 0.0, %v1421
      %1423 = vmatmul.f32.gmra.mxu0 %v925
      %v1424 = vpop.f32.mrf.mxu0
      %v1425 = vadd.f32 0.0, %v1424
      %1426 = vmatmul.f32.gmra.mxu0 %v927
      %v1427 = vpop.f32.mrf.mxu0
      %v1428 = vadd.f32 0.0, %v1427
      %1429 = vmatmul.f32.gmra.mxu0 %v929
      %v1430 = vpop.f32.mrf.mxu0
      %v1431 = vadd.f32 0.0, %v1430
      %1432 = vmatmul.f32.gmra.mxu0 %v931
      %v1433 = vpop.f32.mrf.mxu0
      %v1434 = vadd.f32 0.0, %v1433
      %1435 = vmatmul.f32.gmra.mxu0 %v933
      %v1436 = vpop.f32.mrf.mxu0
      %v1437 = vadd.f32 0.0, %v1436
      %1438 = vmatmul.f32.gmra.mxu0 %v935
      %v1439 = vpop.f32.mrf.mxu0
      %v1440 = vadd.f32 0.0, %v1439
      %1441 = vmatmul.f32.gmra.mxu0 %v937
      %v1442 = vpop.f32.mrf.mxu0
      %v1443 = vadd.f32 0.0, %v1442
      %1444 = vmatmul.f32.gmra.mxu0 %v939
      %v1445 = vpop.f32.mrf.mxu0
      %v1446 = vadd.f32 0.0, %v1445
      %1447 = vmatmul.f32.gmra.mxu0 %v941
      %v1448 = vpop.f32.mrf.mxu0
      %v1449 = vadd.f32 0.0, %v1448
      %1450 = vmatmul.f32.gmra.mxu0 %v943
      %v1451 = vpop.f32.mrf.mxu0
      %v1452 = vadd.f32 0.0, %v1451
      %1453 = vmatmul.f32.gmra.mxu0 %v945
      %v1454 = vpop.f32.mrf.mxu0
      %v1455 = vadd.f32 0.0, %v1454
      %1456 = vmatmul.f32.gmra.mxu0 %v947
      %v1457 = vpop.f32.mrf.mxu0
      %v1458 = vadd.f32 0.0, %v1457
      %1459 = vmatmul.f32.gmra.mxu0 %v949
      %v1460 = vpop.f32.mrf.mxu0
      %v1461 = vadd.f32 0.0, %v1460
      %1462 = vmatmul.f32.gmra.mxu0 %v951
      %v1463 = vpop.f32.mrf.mxu0
      %v1464 = vadd.f32 0.0, %v1463
      %1465 = vmatmul.f32.gmra.mxu0 %v953
      %v1466 = vpop.f32.mrf.mxu0
      %v1467 = vadd.f32 0.0, %v1466
      %1468 = vmatmul.f32.gmra.mxu0 %v1358
      %v1469 = vpop.f32.mrf.mxu0
      %v1470 = vadd.f32 0.0, %v1469
      %1471 = vmatmul.f32.gmra.mxu0 %v1360
      %v1472 = vpop.f32.mrf.mxu0
      %v1473 = vadd.f32 0.0, %v1472
      %1474 = vdwg.mxu0
      %v1475 = vadd.f32 %v1323, %v1380
      %v1476 = vadd.f32 %v1324, %v1383
      %v1477 = vadd.f32 %v1325, %v1386
      %v1478 = vadd.f32 %v1326, %v1389
      %v1479 = vadd.f32 %v1327, %v1392
      %v1480 = vadd.f32 %v1328, %v1395
      %v1481 = vadd.f32 %v1329, %v1398
      %v1482 = vadd.f32 %v1330, %v1401
      %v1483 = vadd.f32 %v1331, %v1404
      %v1484 = vadd.f32 %v1332, %v1407
      %v1485 = vadd.f32 %v1333, %v1410
      %v1486 = vadd.f32 %v1334, %v1413
      %v1487 = vadd.f32 %v1335, %v1416
      %v1488 = vadd.f32 %v1336, %v1419
      %v1489 = vadd.f32 %v1337, %v1422
      %v1490 = vadd.f32 %v1338, %v1425
      %v1491 = vadd.f32 %v1339, %v1428
      %v1492 = vadd.f32 %v1340, %v1431
      %v1493 = vadd.f32 %v1341, %v1434
      %v1494 = vadd.f32 %v1342, %v1437
      %v1495 = vadd.f32 %v1343, %v1440
      %v1496 = vadd.f32 %v1344, %v1443
      %v1497 = vadd.f32 %v1345, %v1446
      %v1498 = vadd.f32 %v1346, %v1449
      %v1499 = vadd.f32 %v1347, %v1452
      %v1500 = vadd.f32 %v1348, %v1455
      %v1501 = vadd.f32 %v1349, %v1458
      %v1502 = vadd.f32 %v1350, %v1461
      %v1503 = vadd.f32 %v1351, %v1464
      %v1504 = vadd.f32 %v1352, %v1467
      %v1505 = vadd.f32 %v1353, %v1470
      %v1506 = vadd.f32 %v1354, %v1473
      %v1508 = vrot.slane %v588, 1
      %v1509 = vrot.slane %v540, 1
      %v1510 = vsel %vm637, %v1508, %v1509
      %v1511 = vrot.slane %v604, 1
      %v1512 = vsel %vm637, %v1509, %v1511
      %s1513 = scalar_lea.vmem %s3, 32
      %v1514 = vld [vmem:[%s1513] sm:$0xff]
      %v1515 = vsel %vm717, %v1510, 0
      %v1517 = vsel %vm717, %v1512, 0
      %1519 = vmatpush.msra.mxu0 0.0
      %1520 = vmatpush.msra.mxu0 0.0
      %1521 = vmatpush.msra.mxu0 0.0
      %1522 = vmatpush.msra.mxu0 0.0
      %1523 = vmatpush.msra.mxu0 0.0
      %1524 = vmatpush.msra.mxu0 0.0
      %1525 = vmatpush.msra.mxu0 0.0
      %1526 = vmatpush.msra.mxu0 0.0
      %1527 = vmatpush.msra.mxu0 0.0
      %1528 = vmatpush.msra.mxu0 0.0
      %1529 = vmatpush.msra.mxu0 0.0
      %1530 = vmatpush.msra.mxu0 0.0
      %1531 = vmatpush.msra.mxu0 0.0
      %1532 = vmatpush.msra.mxu0 0.0
      %1533 = vmatpush.msra.mxu0 0.0
      %1534 = vmatpush.msra.mxu0 %v1514
      %1535 = vmatmul.f32.gmra.mxu0 %v720
      %v1536 = vpop.f32.mrf.mxu0
      %v1537 = vadd.f32 0.0, %v1536
      %1538 = vmatmul.f32.gmra.mxu0 %v722
      %v1539 = vpop.f32.mrf.mxu0
      %v1540 = vadd.f32 0.0, %v1539
      %1541 = vmatmul.f32.gmra.mxu0 %v724
      %v1542 = vpop.f32.mrf.mxu0
      %v1543 = vadd.f32 0.0, %v1542
      %1544 = vmatmul.f32.gmra.mxu0 %v726
      %v1545 = vpop.f32.mrf.mxu0
      %v1546 = vadd.f32 0.0, %v1545
      %1547 = vmatmul.f32.gmra.mxu0 %v728
      %v1548 = vpop.f32.mrf.mxu0
      %v1549 = vadd.f32 0.0, %v1548
      %1550 = vmatmul.f32.gmra.mxu0 %v730
      %v1551 = vpop.f32.mrf.mxu0
      %v1552 = vadd.f32 0.0, %v1551
      %1553 = vmatmul.f32.gmra.mxu0 %v732
      %v1554 = vpop.f32.mrf.mxu0
      %v1555 = vadd.f32 0.0, %v1554
      %1556 = vmatmul.f32.gmra.mxu0 %v734
      %v1557 = vpop.f32.mrf.mxu0
      %v1558 = vadd.f32 0.0, %v1557
      %1559 = vmatmul.f32.gmra.mxu0 %v736
      %v1560 = vpop.f32.mrf.mxu0
      %v1561 = vadd.f32 0.0, %v1560
      %1562 = vmatmul.f32.gmra.mxu0 %v738
      %v1563 = vpop.f32.mrf.mxu0
      %v1564 = vadd.f32 0.0, %v1563
      %1565 = vmatmul.f32.gmra.mxu0 %v740
      %v1566 = vpop.f32.mrf.mxu0
      %v1567 = vadd.f32 0.0, %v1566
      %1568 = vmatmul.f32.gmra.mxu0 %v742
      %v1569 = vpop.f32.mrf.mxu0
      %v1570 = vadd.f32 0.0, %v1569
      %1571 = vmatmul.f32.gmra.mxu0 %v744
      %v1572 = vpop.f32.mrf.mxu0
      %v1573 = vadd.f32 0.0, %v1572
      %1574 = vmatmul.f32.gmra.mxu0 %v746
      %v1575 = vpop.f32.mrf.mxu0
      %v1576 = vadd.f32 0.0, %v1575
      %1577 = vmatmul.f32.gmra.mxu0 %v748
      %v1578 = vpop.f32.mrf.mxu0
      %v1579 = vadd.f32 0.0, %v1578
      %1580 = vmatmul.f32.gmra.mxu0 %v750
      %v1581 = vpop.f32.mrf.mxu0
      %v1582 = vadd.f32 0.0, %v1581
      %1583 = vmatmul.f32.gmra.mxu0 %v752
      %v1584 = vpop.f32.mrf.mxu0
      %v1585 = vadd.f32 0.0, %v1584
      %1586 = vmatmul.f32.gmra.mxu0 %v754
      %v1587 = vpop.f32.mrf.mxu0
      %v1588 = vadd.f32 0.0, %v1587
      %1589 = vmatmul.f32.gmra.mxu0 %v756
      %v1590 = vpop.f32.mrf.mxu0
      %v1591 = vadd.f32 0.0, %v1590
      %1592 = vmatmul.f32.gmra.mxu0 %v758
      %v1593 = vpop.f32.mrf.mxu0
      %v1594 = vadd.f32 0.0, %v1593
      %1595 = vmatmul.f32.gmra.mxu0 %v760
      %v1596 = vpop.f32.mrf.mxu0
      %v1597 = vadd.f32 0.0, %v1596
      %1598 = vmatmul.f32.gmra.mxu0 %v762
      %v1599 = vpop.f32.mrf.mxu0
      %v1600 = vadd.f32 0.0, %v1599
      %1601 = vmatmul.f32.gmra.mxu0 %v764
      %v1602 = vpop.f32.mrf.mxu0
      %v1603 = vadd.f32 0.0, %v1602
      %1604 = vmatmul.f32.gmra.mxu0 %v766
      %v1605 = vpop.f32.mrf.mxu0
      %v1606 = vadd.f32 0.0, %v1605
      %1607 = vmatmul.f32.gmra.mxu0 %v768
      %v1608 = vpop.f32.mrf.mxu0
      %v1609 = vadd.f32 0.0, %v1608
      %1610 = vmatmul.f32.gmra.mxu0 %v770
      %v1611 = vpop.f32.mrf.mxu0
      %v1612 = vadd.f32 0.0, %v1611
      %1613 = vmatmul.f32.gmra.mxu0 %v772
      %v1614 = vpop.f32.mrf.mxu0
      %v1615 = vadd.f32 0.0, %v1614
      %1616 = vmatmul.f32.gmra.mxu0 %v774
      %v1617 = vpop.f32.mrf.mxu0
      %v1618 = vadd.f32 0.0, %v1617
      %1619 = vmatmul.f32.gmra.mxu0 %v776
      %v1620 = vpop.f32.mrf.mxu0
      %v1621 = vadd.f32 0.0, %v1620
      %1622 = vmatmul.f32.gmra.mxu0 %v778
      %v1623 = vpop.f32.mrf.mxu0
      %v1624 = vadd.f32 0.0, %v1623
      %1625 = vmatmul.f32.gmra.mxu0 %v1515
      %v1626 = vpop.f32.mrf.mxu0
      %v1627 = vadd.f32 0.0, %v1626
      %1628 = vmatmul.f32.gmra.mxu0 %v1517
      %v1629 = vpop.f32.mrf.mxu0
      %v1630 = vadd.f32 0.0, %v1629
      %1631 = vdwg.mxu0
      %v1632 = vadd.f32 %v1475, %v1537
      %v1633 = vadd.f32 %v1476, %v1540
      %v1634 = vadd.f32 %v1477, %v1543
      %v1635 = vadd.f32 %v1478, %v1546
      %v1636 = vadd.f32 %v1479, %v1549
      %v1637 = vadd.f32 %v1480, %v1552
      %v1638 = vadd.f32 %v1481, %v1555
      %v1639 = vadd.f32 %v1482, %v1558
      %v1640 = vadd.f32 %v1483, %v1561
      %v1641 = vadd.f32 %v1484, %v1564
      %v1642 = vadd.f32 %v1485, %v1567
      %v1643 = vadd.f32 %v1486, %v1570
      %v1644 = vadd.f32 %v1487, %v1573
      %v1645 = vadd.f32 %v1488, %v1576
      %v1646 = vadd.f32 %v1489, %v1579
      %v1647 = vadd.f32 %v1490, %v1582
      %v1648 = vadd.f32 %v1491, %v1585
      %v1649 = vadd.f32 %v1492, %v1588
      %v1650 = vadd.f32 %v1493, %v1591
      %v1651 = vadd.f32 %v1494, %v1594
      %v1652 = vadd.f32 %v1495, %v1597
      %v1653 = vadd.f32 %v1496, %v1600
      %v1654 = vadd.f32 %v1497, %v1603
      %v1655 = vadd.f32 %v1498, %v1606
      %v1656 = vadd.f32 %v1499, %v1609
      %v1657 = vadd.f32 %v1500, %v1612
      %v1658 = vadd.f32 %v1501, %v1615
      %v1659 = vadd.f32 %v1502, %v1618
      %v1660 = vadd.f32 %v1503, %v1621
      %v1661 = vadd.f32 %v1504, %v1624
      %v1662 = vadd.f32 %v1505, %v1627
      %v1663 = vadd.f32 %v1506, %v1630
      %v1664 = vrot.slane %v588, 2
      %v1665 = vrot.slane %v540, 2
      %v1666 = vsel %vm1068, %v1664, %v1665
      %v1667 = vrot.slane %v604, 2
      %v1668 = vsel %vm1068, %v1665, %v1667
      %s1669 = scalar_lea.vmem %s3, 40
      %v1670 = vld [vmem:[%s1669] sm:$0xff]
      %v1671 = vsel %vm717, %v1666, 0
      %v1673 = vsel %vm717, %v1668, 0
      %1675 = vmatpush.msra.mxu0 0.0
      %1676 = vmatpush.msra.mxu0 0.0
      %1677 = vmatpush.msra.mxu0 0.0
      %1678 = vmatpush.msra.mxu0 0.0
      %1679 = vmatpush.msra.mxu0 0.0
      %1680 = vmatpush.msra.mxu0 0.0
      %1681 = vmatpush.msra.mxu0 0.0
      %1682 = vmatpush.msra.mxu0 0.0
      %1683 = vmatpush.msra.mxu0 0.0
      %1684 = vmatpush.msra.mxu0 0.0
      %1685 = vmatpush.msra.mxu0 0.0
      %1686 = vmatpush.msra.mxu0 0.0
      %1687 = vmatpush.msra.mxu0 0.0
      %1688 = vmatpush.msra.mxu0 0.0
      %1689 = vmatpush.msra.mxu0 0.0
      %1690 = vmatpush.msra.mxu0 %v1670
      %1691 = vmatmul.f32.gmra.mxu0 %v1150
      %v1692 = vpop.f32.mrf.mxu0
      %v1693 = vadd.f32 0.0, %v1692
      %1694 = vmatmul.f32.gmra.mxu0 %v1152
      %v1695 = vpop.f32.mrf.mxu0
      %v1696 = vadd.f32 0.0, %v1695
      %1697 = vmatmul.f32.gmra.mxu0 %v1154
      %v1698 = vpop.f32.mrf.mxu0
      %v1699 = vadd.f32 0.0, %v1698
      %1700 = vmatmul.f32.gmra.mxu0 %v1156
      %v1701 = vpop.f32.mrf.mxu0
      %v1702 = vadd.f32 0.0, %v1701
      %1703 = vmatmul.f32.gmra.mxu0 %v1158
      %v1704 = vpop.f32.mrf.mxu0
      %v1705 = vadd.f32 0.0, %v1704
      %1706 = vmatmul.f32.gmra.mxu0 %v1160
      %v1707 = vpop.f32.mrf.mxu0
      %v1708 = vadd.f32 0.0, %v1707
      %1709 = vmatmul.f32.gmra.mxu0 %v1162
      %v1710 = vpop.f32.mrf.mxu0
      %v1711 = vadd.f32 0.0, %v1710
      %1712 = vmatmul.f32.gmra.mxu0 %v1164
      %v1713 = vpop.f32.mrf.mxu0
      %v1714 = vadd.f32 0.0, %v1713
      %1715 = vmatmul.f32.gmra.mxu0 %v1166
      %v1716 = vpop.f32.mrf.mxu0
      %v1717 = vadd.f32 0.0, %v1716
      %1718 = vmatmul.f32.gmra.mxu0 %v1168
      %v1719 = vpop.f32.mrf.mxu0
      %v1720 = vadd.f32 0.0, %v1719
      %1721 = vmatmul.f32.gmra.mxu0 %v1170
      %v1722 = vpop.f32.mrf.mxu0
      %v1723 = vadd.f32 0.0, %v1722
      %1724 = vmatmul.f32.gmra.mxu0 %v1172
      %v1725 = vpop.f32.mrf.mxu0
      %v1726 = vadd.f32 0.0, %v1725
      %1727 = vmatmul.f32.gmra.mxu0 %v1174
      %v1728 = vpop.f32.mrf.mxu0
      %v1729 = vadd.f32 0.0, %v1728
      %1730 = vmatmul.f32.gmra.mxu0 %v1176
      %v1731 = vpop.f32.mrf.mxu0
      %v1732 = vadd.f32 0.0, %v1731
      %1733 = vmatmul.f32.gmra.mxu0 %v1178
      %v1734 = vpop.f32.mrf.mxu0
      %v1735 = vadd.f32 0.0, %v1734
      %1736 = vmatmul.f32.gmra.mxu0 %v1180
      %v1737 = vpop.f32.mrf.mxu0
      %v1738 = vadd.f32 0.0, %v1737
      %1739 = vmatmul.f32.gmra.mxu0 %v1182
      %v1740 = vpop.f32.mrf.mxu0
      %v1741 = vadd.f32 0.0, %v1740
      %1742 = vmatmul.f32.gmra.mxu0 %v1184
      %v1743 = vpop.f32.mrf.mxu0
      %v1744 = vadd.f32 0.0, %v1743
      %1745 = vmatmul.f32.gmra.mxu0 %v1186
      %v1746 = vpop.f32.mrf.mxu0
      %v1747 = vadd.f32 0.0, %v1746
      %1748 = vmatmul.f32.gmra.mxu0 %v1188
      %v1749 = vpop.f32.mrf.mxu0
      %v1750 = vadd.f32 0.0, %v1749
      %1751 = vmatmul.f32.gmra.mxu0 %v1190
      %v1752 = vpop.f32.mrf.mxu0
      %v1753 = vadd.f32 0.0, %v1752
      %1754 = vmatmul.f32.gmra.mxu0 %v1192
      %v1755 = vpop.f32.mrf.mxu0
      %v1756 = vadd.f32 0.0, %v1755
      %1757 = vmatmul.f32.gmra.mxu0 %v1194
      %v1758 = vpop.f32.mrf.mxu0
      %v1759 = vadd.f32 0.0, %v1758
      %1760 = vmatmul.f32.gmra.mxu0 %v1196
      %v1761 = vpop.f32.mrf.mxu0
      %v1762 = vadd.f32 0.0, %v1761
      %1763 = vmatmul.f32.gmra.mxu0 %v1198
      %v1764 = vpop.f32.mrf.mxu0
      %v1765 = vadd.f32 0.0, %v1764
      %1766 = vmatmul.f32.gmra.mxu0 %v1200
      %v1767 = vpop.f32.mrf.mxu0
      %v1768 = vadd.f32 0.0, %v1767
      %1769 = vmatmul.f32.gmra.mxu0 %v1202
      %v1770 = vpop.f32.mrf.mxu0
      %v1771 = vadd.f32 0.0, %v1770
      %1772 = vmatmul.f32.gmra.mxu0 %v1204
      %v1773 = vpop.f32.mrf.mxu0
      %v1774 = vadd.f32 0.0, %v1773
      %1775 = vmatmul.f32.gmra.mxu0 %v1206
      %v1776 = vpop.f32.mrf.mxu0
      %v1777 = vadd.f32 0.0, %v1776
      %1778 = vmatmul.f32.gmra.mxu0 %v1208
      %v1779 = vpop.f32.mrf.mxu0
      %v1780 = vadd.f32 0.0, %v1779
      %1781 = vmatmul.f32.gmra.mxu0 %v1671
      %v1782 = vpop.f32.mrf.mxu0
      %v1783 = vadd.f32 0.0, %v1782
      %1784 = vmatmul.f32.gmra.mxu0 %v1673
      %v1785 = vpop.f32.mrf.mxu0
      %v1786 = vadd.f32 0.0, %v1785
      %1787 = vdwg.mxu0
      %v1788 = vadd.f32 %v1632, %v1693
      %v1789 = vadd.f32 %v1633, %v1696
      %v1790 = vadd.f32 %v1634, %v1699
      %v1791 = vadd.f32 %v1635, %v1702
      %v1792 = vadd.f32 %v1636, %v1705
      %v1793 = vadd.f32 %v1637, %v1708
      %v1794 = vadd.f32 %v1638, %v1711
      %v1795 = vadd.f32 %v1639, %v1714
      %v1796 = vadd.f32 %v1640, %v1717
      %v1797 = vadd.f32 %v1641, %v1720
      %v1798 = vadd.f32 %v1642, %v1723
      %v1799 = vadd.f32 %v1643, %v1726
      %v1800 = vadd.f32 %v1644, %v1729
      %v1801 = vadd.f32 %v1645, %v1732
      %v1802 = vadd.f32 %v1646, %v1735
      %v1803 = vadd.f32 %v1647, %v1738
      %v1804 = vadd.f32 %v1648, %v1741
      %v1805 = vadd.f32 %v1649, %v1744
      %v1806 = vadd.f32 %v1650, %v1747
      %v1807 = vadd.f32 %v1651, %v1750
      %v1808 = vadd.f32 %v1652, %v1753
      %v1809 = vadd.f32 %v1653, %v1756
      %v1810 = vadd.f32 %v1654, %v1759
      %v1811 = vadd.f32 %v1655, %v1762
      %v1812 = vadd.f32 %v1656, %v1765
      %v1813 = vadd.f32 %v1657, %v1768
      %v1814 = vadd.f32 %v1658, %v1771
      %v1815 = vadd.f32 %v1659, %v1774
      %v1816 = vadd.f32 %v1660, %v1777
      %v1817 = vadd.f32 %v1661, %v1780
      %v1818 = vadd.f32 %v1662, %v1783
      %v1819 = vadd.f32 %v1663, %v1786
      %s1820 = scalar_lea.vmem %s3, 48
      %v1821 = vld [vmem:[%s1820] sm:$0xff]
      %1822 = vmatpush.msra.mxu0 0.0
      %1823 = vmatpush.msra.mxu0 0.0
      %1824 = vmatpush.msra.mxu0 0.0
      %1825 = vmatpush.msra.mxu0 0.0
      %1826 = vmatpush.msra.mxu0 0.0
      %1827 = vmatpush.msra.mxu0 0.0
      %1828 = vmatpush.msra.mxu0 0.0
      %1829 = vmatpush.msra.mxu0 0.0
      %1830 = vmatpush.msra.mxu0 0.0
      %1831 = vmatpush.msra.mxu0 0.0
      %1832 = vmatpush.msra.mxu0 0.0
      %1833 = vmatpush.msra.mxu0 0.0
      %1834 = vmatpush.msra.mxu0 0.0
      %1835 = vmatpush.msra.mxu0 0.0
      %1836 = vmatpush.msra.mxu0 0.0
      %1837 = vmatpush.msra.mxu0 %v1821
      %1838 = vmatmul.f32.gmra.mxu0 %v899
      %v1839 = vpop.f32.mrf.mxu0
      %v1840 = vadd.f32 0.0, %v1839
      %1841 = vmatmul.f32.gmra.mxu0 %v901
      %v1842 = vpop.f32.mrf.mxu0
      %v1843 = vadd.f32 0.0, %v1842
      %1844 = vmatmul.f32.gmra.mxu0 %v903
      %v1845 = vpop.f32.mrf.mxu0
      %v1846 = vadd.f32 0.0, %v1845
      %1847 = vmatmul.f32.gmra.mxu0 %v905
      %v1848 = vpop.f32.mrf.mxu0
      %v1849 = vadd.f32 0.0, %v1848
      %1850 = vmatmul.f32.gmra.mxu0 %v907
      %v1851 = vpop.f32.mrf.mxu0
      %v1852 = vadd.f32 0.0, %v1851
      %1853 = vmatmul.f32.gmra.mxu0 %v909
      %v1854 = vpop.f32.mrf.mxu0
      %v1855 = vadd.f32 0.0, %v1854
      %1856 = vmatmul.f32.gmra.mxu0 %v911
      %v1857 = vpop.f32.mrf.mxu0
      %v1858 = vadd.f32 0.0, %v1857
      %1859 = vmatmul.f32.gmra.mxu0 %v913
      %v1860 = vpop.f32.mrf.mxu0
      %v1861 = vadd.f32 0.0, %v1860
      %1862 = vmatmul.f32.gmra.mxu0 %v915
      %v1863 = vpop.f32.mrf.mxu0
      %v1864 = vadd.f32 0.0, %v1863
      %1865 = vmatmul.f32.gmra.mxu0 %v917
      %v1866 = vpop.f32.mrf.mxu0
      %v1867 = vadd.f32 0.0, %v1866
      %1868 = vmatmul.f32.gmra.mxu0 %v919
      %v1869 = vpop.f32.mrf.mxu0
      %v1870 = vadd.f32 0.0, %v1869
      %1871 = vmatmul.f32.gmra.mxu0 %v921
      %v1872 = vpop.f32.mrf.mxu0
      %v1873 = vadd.f32 0.0, %v1872
      %1874 = vmatmul.f32.gmra.mxu0 %v923
      %v1875 = vpop.f32.mrf.mxu0
      %v1876 = vadd.f32 0.0, %v1875
      %1877 = vmatmul.f32.gmra.mxu0 %v925
      %v1878 = vpop.f32.mrf.mxu0
      %v1879 = vadd.f32 0.0, %v1878
      %1880 = vmatmul.f32.gmra.mxu0 %v927
      %v1881 = vpop.f32.mrf.mxu0
      %v1882 = vadd.f32 0.0, %v1881
      %1883 = vmatmul.f32.gmra.mxu0 %v929
      %v1884 = vpop.f32.mrf.mxu0
      %v1885 = vadd.f32 0.0, %v1884
      %1886 = vmatmul.f32.gmra.mxu0 %v931
      %v1887 = vpop.f32.mrf.mxu0
      %v1888 = vadd.f32 0.0, %v1887
      %1889 = vmatmul.f32.gmra.mxu0 %v933
      %v1890 = vpop.f32.mrf.mxu0
      %v1891 = vadd.f32 0.0, %v1890
      %1892 = vmatmul.f32.gmra.mxu0 %v935
      %v1893 = vpop.f32.mrf.mxu0
      %v1894 = vadd.f32 0.0, %v1893
      %1895 = vmatmul.f32.gmra.mxu0 %v937
      %v1896 = vpop.f32.mrf.mxu0
      %v1897 = vadd.f32 0.0, %v1896
      %1898 = vmatmul.f32.gmra.mxu0 %v939
      %v1899 = vpop.f32.mrf.mxu0
      %v1900 = vadd.f32 0.0, %v1899
      %1901 = vmatmul.f32.gmra.mxu0 %v941
      %v1902 = vpop.f32.mrf.mxu0
      %v1903 = vadd.f32 0.0, %v1902
      %1904 = vmatmul.f32.gmra.mxu0 %v943
      %v1905 = vpop.f32.mrf.mxu0
      %v1906 = vadd.f32 0.0, %v1905
      %1907 = vmatmul.f32.gmra.mxu0 %v945
      %v1908 = vpop.f32.mrf.mxu0
      %v1909 = vadd.f32 0.0, %v1908
      %1910 = vmatmul.f32.gmra.mxu0 %v947
      %v1911 = vpop.f32.mrf.mxu0
      %v1912 = vadd.f32 0.0, %v1911
      %1913 = vmatmul.f32.gmra.mxu0 %v949
      %v1914 = vpop.f32.mrf.mxu0
      %v1915 = vadd.f32 0.0, %v1914
      %1916 = vmatmul.f32.gmra.mxu0 %v951
      %v1917 = vpop.f32.mrf.mxu0
      %v1918 = vadd.f32 0.0, %v1917
      %1919 = vmatmul.f32.gmra.mxu0 %v953
      %v1920 = vpop.f32.mrf.mxu0
      %v1921 = vadd.f32 0.0, %v1920
      %1922 = vmatmul.f32.gmra.mxu0 %v1358
      %v1923 = vpop.f32.mrf.mxu0
      %v1924 = vadd.f32 0.0, %v1923
      %1925 = vmatmul.f32.gmra.mxu0 %v1360
      %v1926 = vpop.f32.mrf.mxu0
      %v1927 = vadd.f32 0.0, %v1926
      %1928 = vmatmul.f32.gmra.mxu0 %v893
      %v1929 = vpop.f32.mrf.mxu0
      %v1930 = vadd.f32 0.0, %v1929
      %1931 = vmatmul.f32.gmra.mxu0 %v893
      %v1932 = vpop.f32.mrf.mxu0
      %v1933 = vadd.f32 0.0, %v1932
      %1934 = vdwg.mxu0
      %v1935 = vadd.f32 %v1788, %v1840
      %v1936 = vadd.f32 %v1789, %v1843
      %v1937 = vadd.f32 %v1790, %v1846
      %v1938 = vadd.f32 %v1791, %v1849
      %v1939 = vadd.f32 %v1792, %v1852
      %v1940 = vadd.f32 %v1793, %v1855
      %v1941 = vadd.f32 %v1794, %v1858
      %v1942 = vadd.f32 %v1795, %v1861
      %v1943 = vadd.f32 %v1796, %v1864
      %v1944 = vadd.f32 %v1797, %v1867
      %v1945 = vadd.f32 %v1798, %v1870
      %v1946 = vadd.f32 %v1799, %v1873
      %v1947 = vadd.f32 %v1800, %v1876
      %v1948 = vadd.f32 %v1801, %v1879
      %v1949 = vadd.f32 %v1802, %v1882
      %v1950 = vadd.f32 %v1803, %v1885
      %v1951 = vadd.f32 %v1804, %v1888
      %v1952 = vadd.f32 %v1805, %v1891
      %v1953 = vadd.f32 %v1806, %v1894
      %v1954 = vadd.f32 %v1807, %v1897
      %v1955 = vadd.f32 %v1808, %v1900
      %v1956 = vadd.f32 %v1809, %v1903
      %v1957 = vadd.f32 %v1810, %v1906
      %v1958 = vadd.f32 %v1811, %v1909
      %v1959 = vadd.f32 %v1812, %v1912
      %v1960 = vadd.f32 %v1813, %v1915
      %v1961 = vadd.f32 %v1814, %v1918
      %v1962 = vadd.f32 %v1815, %v1921
      %v1963 = vadd.f32 %v1816, %v1924
      %v1964 = vadd.f32 %v1817, %v1927
      %v1965 = vadd.f32 %v1818, %v1930
      %v1966 = vadd.f32 %v1819, %v1933
      %s1967 = scalar_lea.vmem %s3, 56
      %v1968 = vld [vmem:[%s1967] sm:$0xff]
      %1969 = vmatpush.msra.mxu0 0.0
      %1970 = vmatpush.msra.mxu0 0.0
      %1971 = vmatpush.msra.mxu0 0.0
      %1972 = vmatpush.msra.mxu0 0.0
      %1973 = vmatpush.msra.mxu0 0.0
      %1974 = vmatpush.msra.mxu0 0.0
      %1975 = vmatpush.msra.mxu0 0.0
      %1976 = vmatpush.msra.mxu0 0.0
      %1977 = vmatpush.msra.mxu0 0.0
      %1978 = vmatpush.msra.mxu0 0.0
      %1979 = vmatpush.msra.mxu0 0.0
      %1980 = vmatpush.msra.mxu0 0.0
      %1981 = vmatpush.msra.mxu0 0.0
      %1982 = vmatpush.msra.mxu0 0.0
      %1983 = vmatpush.msra.mxu0 0.0
      %1984 = vmatpush.msra.mxu0 %v1968
      %1985 = vmatmul.f32.gmra.mxu0 %v724
      %v1986 = vpop.f32.mrf.mxu0
      %v1987 = vadd.f32 0.0, %v1986
      %1988 = vmatmul.f32.gmra.mxu0 %v726
      %v1989 = vpop.f32.mrf.mxu0
      %v1990 = vadd.f32 0.0, %v1989
      %1991 = vmatmul.f32.gmra.mxu0 %v728
      %v1992 = vpop.f32.mrf.mxu0
      %v1993 = vadd.f32 0.0, %v1992
      %1994 = vmatmul.f32.gmra.mxu0 %v730
      %v1995 = vpop.f32.mrf.mxu0
      %v1996 = vadd.f32 0.0, %v1995
      %1997 = vmatmul.f32.gmra.mxu0 %v732
      %v1998 = vpop.f32.mrf.mxu0
      %v1999 = vadd.f32 0.0, %v1998
      %2000 = vmatmul.f32.gmra.mxu0 %v734
      %v2001 = vpop.f32.mrf.mxu0
      %v2002 = vadd.f32 0.0, %v2001
      %2003 = vmatmul.f32.gmra.mxu0 %v736
      %v2004 = vpop.f32.mrf.mxu0
      %v2005 = vadd.f32 0.0, %v2004
      %2006 = vmatmul.f32.gmra.mxu0 %v738
      %v2007 = vpop.f32.mrf.mxu0
      %v2008 = vadd.f32 0.0, %v2007
      %2009 = vmatmul.f32.gmra.mxu0 %v740
      %v2010 = vpop.f32.mrf.mxu0
      %v2011 = vadd.f32 0.0, %v2010
      %2012 = vmatmul.f32.gmra.mxu0 %v742
      %v2013 = vpop.f32.mrf.mxu0
      %v2014 = vadd.f32 0.0, %v2013
      %2015 = vmatmul.f32.gmra.mxu0 %v744
      %v2016 = vpop.f32.mrf.mxu0
      %v2017 = vadd.f32 0.0, %v2016
      %2018 = vmatmul.f32.gmra.mxu0 %v746
      %v2019 = vpop.f32.mrf.mxu0
      %v2020 = vadd.f32 0.0, %v2019
      %2021 = vmatmul.f32.gmra.mxu0 %v748
      %v2022 = vpop.f32.mrf.mxu0
      %v2023 = vadd.f32 0.0, %v2022
      %2024 = vmatmul.f32.gmra.mxu0 %v750
      %v2025 = vpop.f32.mrf.mxu0
      %v2026 = vadd.f32 0.0, %v2025
      %2027 = vmatmul.f32.gmra.mxu0 %v752
      %v2028 = vpop.f32.mrf.mxu0
      %v2029 = vadd.f32 0.0, %v2028
      %2030 = vmatmul.f32.gmra.mxu0 %v754
      %v2031 = vpop.f32.mrf.mxu0
      %v2032 = vadd.f32 0.0, %v2031
      %2033 = vmatmul.f32.gmra.mxu0 %v756
      %v2034 = vpop.f32.mrf.mxu0
      %v2035 = vadd.f32 0.0, %v2034
      %2036 = vmatmul.f32.gmra.mxu0 %v758
      %v2037 = vpop.f32.mrf.mxu0
      %v2038 = vadd.f32 0.0, %v2037
      %2039 = vmatmul.f32.gmra.mxu0 %v760
      %v2040 = vpop.f32.mrf.mxu0
      %v2041 = vadd.f32 0.0, %v2040
      %2042 = vmatmul.f32.gmra.mxu0 %v762
      %v2043 = vpop.f32.mrf.mxu0
      %v2044 = vadd.f32 0.0, %v2043
      %2045 = vmatmul.f32.gmra.mxu0 %v764
      %v2046 = vpop.f32.mrf.mxu0
      %v2047 = vadd.f32 0.0, %v2046
      %2048 = vmatmul.f32.gmra.mxu0 %v766
      %v2049 = vpop.f32.mrf.mxu0
      %v2050 = vadd.f32 0.0, %v2049
      %2051 = vmatmul.f32.gmra.mxu0 %v768
      %v2052 = vpop.f32.mrf.mxu0
      %v2053 = vadd.f32 0.0, %v2052
      %2054 = vmatmul.f32.gmra.mxu0 %v770
      %v2055 = vpop.f32.mrf.mxu0
      %v2056 = vadd.f32 0.0, %v2055
      %2057 = vmatmul.f32.gmra.mxu0 %v772
      %v2058 = vpop.f32.mrf.mxu0
      %v2059 = vadd.f32 0.0, %v2058
      %2060 = vmatmul.f32.gmra.mxu0 %v774
      %v2061 = vpop.f32.mrf.mxu0
      %v2062 = vadd.f32 0.0, %v2061
      %2063 = vmatmul.f32.gmra.mxu0 %v776
      %v2064 = vpop.f32.mrf.mxu0
      %v2065 = vadd.f32 0.0, %v2064
      %2066 = vmatmul.f32.gmra.mxu0 %v778
      %v2067 = vpop.f32.mrf.mxu0
      %v2068 = vadd.f32 0.0, %v2067
      %2069 = vmatmul.f32.gmra.mxu0 %v1515
      %v2070 = vpop.f32.mrf.mxu0
      %v2071 = vadd.f32 0.0, %v2070
      %2072 = vmatmul.f32.gmra.mxu0 %v1517
      %v2073 = vpop.f32.mrf.mxu0
      %v2074 = vadd.f32 0.0, %v2073
      %2075 = vmatmul.f32.gmra.mxu0 %v718
      %v2076 = vpop.f32.mrf.mxu0
      %v2077 = vadd.f32 0.0, %v2076
      %2078 = vmatmul.f32.gmra.mxu0 %v718
      %v2079 = vpop.f32.mrf.mxu0
      %v2080 = vadd.f32 0.0, %v2079
      %2081 = vdwg.mxu0
      %v2082 = vadd.f32 %v1935, %v1987
      %v2083 = vadd.f32 %v1936, %v1990
      %v2084 = vadd.f32 %v1937, %v1993
      %v2085 = vadd.f32 %v1938, %v1996
      %v2086 = vadd.f32 %v1939, %v1999
      %v2087 = vadd.f32 %v1940, %v2002
      %v2088 = vadd.f32 %v1941, %v2005
      %v2089 = vadd.f32 %v1942, %v2008
      %v2090 = vadd.f32 %v1943, %v2011
      %v2091 = vadd.f32 %v1944, %v2014
      %v2092 = vadd.f32 %v1945, %v2017
      %v2093 = vadd.f32 %v1946, %v2020
      %v2094 = vadd.f32 %v1947, %v2023
      %v2095 = vadd.f32 %v1948, %v2026
      %v2096 = vadd.f32 %v1949, %v2029
      %v2097 = vadd.f32 %v1950, %v2032
      %v2098 = vadd.f32 %v1951, %v2035
      %v2099 = vadd.f32 %v1952, %v2038
      %v2100 = vadd.f32 %v1953, %v2041
      %v2101 = vadd.f32 %v1954, %v2044
      %v2102 = vadd.f32 %v1955, %v2047
      %v2103 = vadd.f32 %v1956, %v2050
      %v2104 = vadd.f32 %v1957, %v2053
      %v2105 = vadd.f32 %v1958, %v2056
      %v2106 = vadd.f32 %v1959, %v2059
      %v2107 = vadd.f32 %v1960, %v2062
      %v2108 = vadd.f32 %v1961, %v2065
      %v2109 = vadd.f32 %v1962, %v2068
      %v2110 = vadd.f32 %v1963, %v2071
      %v2111 = vadd.f32 %v1964, %v2074
      %v2112 = vadd.f32 %v1965, %v2077
      %v2113 = vadd.f32 %v1966, %v2080
      %s2114 = scalar_lea.vmem %s3, 64
      %v2115 = vld [vmem:[%s2114] sm:$0xff]
      %2116 = vmatpush.msra.mxu0 0.0
      %2117 = vmatpush.msra.mxu0 0.0
      %2118 = vmatpush.msra.mxu0 0.0
      %2119 = vmatpush.msra.mxu0 0.0
      %2120 = vmatpush.msra.mxu0 0.0
      %2121 = vmatpush.msra.mxu0 0.0
      %2122 = vmatpush.msra.mxu0 0.0
      %2123 = vmatpush.msra.mxu0 0.0
      %2124 = vmatpush.msra.mxu0 0.0
      %2125 = vmatpush.msra.mxu0 0.0
      %2126 = vmatpush.msra.mxu0 0.0
      %2127 = vmatpush.msra.mxu0 0.0
      %2128 = vmatpush.msra.mxu0 0.0
      %2129 = vmatpush.msra.mxu0 0.0
      %2130 = vmatpush.msra.mxu0 0.0
      %2131 = vmatpush.msra.mxu0 %v2115
      %2132 = vmatmul.f32.gmra.mxu0 %v1154
      %v2133 = vpop.f32.mrf.mxu0
      %v2134 = vadd.f32 0.0, %v2133
      %2135 = vmatmul.f32.gmra.mxu0 %v1156
      %v2136 = vpop.f32.mrf.mxu0
      %v2137 = vadd.f32 0.0, %v2136
      %2138 = vmatmul.f32.gmra.mxu0 %v1158
      %v2139 = vpop.f32.mrf.mxu0
      %v2140 = vadd.f32 0.0, %v2139
      %2141 = vmatmul.f32.gmra.mxu0 %v1160
      %v2142 = vpop.f32.mrf.mxu0
      %v2143 = vadd.f32 0.0, %v2142
      %2144 = vmatmul.f32.gmra.mxu0 %v1162
      %v2145 = vpop.f32.mrf.mxu0
      %v2146 = vadd.f32 0.0, %v2145
      %2147 = vmatmul.f32.gmra.mxu0 %v1164
      %v2148 = vpop.f32.mrf.mxu0
      %v2149 = vadd.f32 0.0, %v2148
      %2150 = vmatmul.f32.gmra.mxu0 %v1166
      %v2151 = vpop.f32.mrf.mxu0
      %v2152 = vadd.f32 0.0, %v2151
      %2153 = vmatmul.f32.gmra.mxu0 %v1168
      %v2154 = vpop.f32.mrf.mxu0
      %v2155 = vadd.f32 0.0, %v2154
      %2156 = vmatmul.f32.gmra.mxu0 %v1170
      %v2157 = vpop.f32.mrf.mxu0
      %v2158 = vadd.f32 0.0, %v2157
      %2159 = vmatmul.f32.gmra.mxu0 %v1172
      %v2160 = vpop.f32.mrf.mxu0
      %v2161 = vadd.f32 0.0, %v2160
      %2162 = vmatmul.f32.gmra.mxu0 %v1174
      %v2163 = vpop.f32.mrf.mxu0
      %v2164 = vadd.f32 0.0, %v2163
      %2165 = vmatmul.f32.gmra.mxu0 %v1176
      %v2166 = vpop.f32.mrf.mxu0
      %v2167 = vadd.f32 0.0, %v2166
      %2168 = vmatmul.f32.gmra.mxu0 %v1178
      %v2169 = vpop.f32.mrf.mxu0
      %v2170 = vadd.f32 0.0, %v2169
      %2171 = vmatmul.f32.gmra.mxu0 %v1180
      %v2172 = vpop.f32.mrf.mxu0
      %v2173 = vadd.f32 0.0, %v2172
      %2174 = vmatmul.f32.gmra.mxu0 %v1182
      %v2175 = vpop.f32.mrf.mxu0
      %v2176 = vadd.f32 0.0, %v2175
      %2177 = vmatmul.f32.gmra.mxu0 %v1184
      %v2178 = vpop.f32.mrf.mxu0
      %v2179 = vadd.f32 0.0, %v2178
      %2180 = vmatmul.f32.gmra.mxu0 %v1186
      %v2181 = vpop.f32.mrf.mxu0
      %v2182 = vadd.f32 0.0, %v2181
      %2183 = vmatmul.f32.gmra.mxu0 %v1188
      %v2184 = vpop.f32.mrf.mxu0
      %v2185 = vadd.f32 0.0, %v2184
      %2186 = vmatmul.f32.gmra.mxu0 %v1190
      %v2187 = vpop.f32.mrf.mxu0
      %v2188 = vadd.f32 0.0, %v2187
      %2189 = vmatmul.f32.gmra.mxu0 %v1192
      %v2190 = vpop.f32.mrf.mxu0
      %v2191 = vadd.f32 0.0, %v2190
      %2192 = vmatmul.f32.gmra.mxu0 %v1194
      %v2193 = vpop.f32.mrf.mxu0
      %v2194 = vadd.f32 0.0, %v2193
      %2195 = vmatmul.f32.gmra.mxu0 %v1196
      %v2196 = vpop.f32.mrf.mxu0
      %v2197 = vadd.f32 0.0, %v2196
      %2198 = vmatmul.f32.gmra.mxu0 %v1198
      %v2199 = vpop.f32.mrf.mxu0
      %v2200 = vadd.f32 0.0, %v2199
      %2201 = vmatmul.f32.gmra.mxu0 %v1200
      %v2202 = vpop.f32.mrf.mxu0
      %v2203 = vadd.f32 0.0, %v2202
      %2204 = vmatmul.f32.gmra.mxu0 %v1202
      %v2205 = vpop.f32.mrf.mxu0
      %v2206 = vadd.f32 0.0, %v2205
      %2207 = vmatmul.f32.gmra.mxu0 %v1204
      %v2208 = vpop.f32.mrf.mxu0
      %v2209 = vadd.f32 0.0, %v2208
      %2210 = vmatmul.f32.gmra.mxu0 %v1206
      %v2211 = vpop.f32.mrf.mxu0
      %v2212 = vadd.f32 0.0, %v2211
      %2213 = vmatmul.f32.gmra.mxu0 %v1208
      %v2214 = vpop.f32.mrf.mxu0
      %v2215 = vadd.f32 0.0, %v2214
      %2216 = vmatmul.f32.gmra.mxu0 %v1671
      %v2217 = vpop.f32.mrf.mxu0
      %v2218 = vadd.f32 0.0, %v2217
      %2219 = vmatmul.f32.gmra.mxu0 %v1673
      %v2220 = vpop.f32.mrf.mxu0
      %v2221 = vadd.f32 0.0, %v2220
      %2222 = vmatmul.f32.gmra.mxu0 %v1148
      %v2223 = vpop.f32.mrf.mxu0
      %v2224 = vadd.f32 0.0, %v2223
      %2225 = vmatmul.f32.gmra.mxu0 %v1148
      %v2226 = vpop.f32.mrf.mxu0
      %v2227 = vadd.f32 0.0, %v2226
      %2228 = vdwg.mxu0
      %v2229 = vadd.f32 %v2082, %v2134
      %v2230 = vadd.f32 %v2083, %v2137
      %v2231 = vadd.f32 %v2084, %v2140
      %v2232 = vadd.f32 %v2085, %v2143
      %v2233 = vadd.f32 %v2086, %v2146
      %v2234 = vadd.f32 %v2087, %v2149
      %v2235 = vadd.f32 %v2088, %v2152
      %v2236 = vadd.f32 %v2089, %v2155
      %v2237 = vadd.f32 %v2090, %v2158
      %v2238 = vadd.f32 %v2091, %v2161
      %v2239 = vadd.f32 %v2092, %v2164
      %v2240 = vadd.f32 %v2093, %v2167
      %v2241 = vadd.f32 %v2094, %v2170
      %v2242 = vadd.f32 %v2095, %v2173
      %v2243 = vadd.f32 %v2096, %v2176
      %v2244 = vadd.f32 %v2097, %v2179
      %v2245 = vadd.f32 %v2098, %v2182
      %v2246 = vadd.f32 %v2099, %v2185
      %v2247 = vadd.f32 %v2100, %v2188
      %v2248 = vadd.f32 %v2101, %v2191
      %v2249 = vadd.f32 %v2102, %v2194
      %v2250 = vadd.f32 %v2103, %v2197
      %v2251 = vadd.f32 %v2104, %v2200
      %v2252 = vadd.f32 %v2105, %v2203
      %v2253 = vadd.f32 %v2106, %v2206
      %v2254 = vadd.f32 %v2107, %v2209
      %v2255 = vadd.f32 %v2108, %v2212
      %v2256 = vadd.f32 %v2109, %v2215
      %v2257 = vadd.f32 %v2110, %v2218
      %v2258 = vadd.f32 %v2111, %v2221
      %v2259 = vadd.f32 %v2112, %v2224
      %v2260 = vadd.f32 %v2113, %v2227
      %v2261 = vld [vmem:[%s4] sm:$0x1]
      %v2263 = vperm.slane %v2261, 0
      %v2265 = vadd.f32 %v2229, %v2263
      %v2266 = vadd.f32 %v2230, %v2263
      %v2267 = vadd.f32 %v2231, %v2263
      %v2268 = vadd.f32 %v2232, %v2263
      %v2269 = vadd.f32 %v2233, %v2263
      %v2270 = vadd.f32 %v2234, %v2263
      %v2271 = vadd.f32 %v2235, %v2263
      %v2272 = vadd.f32 %v2236, %v2263
      %v2273 = vadd.f32 %v2237, %v2263
      %v2274 = vadd.f32 %v2238, %v2263
      %v2275 = vadd.f32 %v2239, %v2263
      %v2276 = vadd.f32 %v2240, %v2263
      %v2277 = vadd.f32 %v2241, %v2263
      %v2278 = vadd.f32 %v2242, %v2263
      %v2279 = vadd.f32 %v2243, %v2263
      %v2280 = vadd.f32 %v2244, %v2263
      %v2281 = vadd.f32 %v2245, %v2263
      %v2282 = vadd.f32 %v2246, %v2263
      %v2283 = vadd.f32 %v2247, %v2263
      %v2284 = vadd.f32 %v2248, %v2263
      %v2285 = vadd.f32 %v2249, %v2263
      %v2286 = vadd.f32 %v2250, %v2263
      %v2287 = vadd.f32 %v2251, %v2263
      %v2288 = vadd.f32 %v2252, %v2263
      %v2289 = vadd.f32 %v2253, %v2263
      %v2290 = vadd.f32 %v2254, %v2263
      %v2291 = vadd.f32 %v2255, %v2263
      %v2292 = vadd.f32 %v2256, %v2263
      %v2293 = vadd.f32 %v2257, %v2263
      %v2294 = vadd.f32 %v2258, %v2263
      %v2295 = vadd.f32 %v2259, %v2263
      %v2296 = vadd.f32 %v2260, %v2263
      %vm2297 = vcmask 1041408
      %v2298 = vrot.slane %v428, 6
      %v2299 = vrot.slane %v429, 6
      %v2300 = vsel %vm2297, %v2298, %v2299
      %v2301 = vrot.slane %v430, 6
      %v2302 = vrot.slane %v431, 6
      %v2303 = vsel %vm2297, %v2301, %v2302
      %v2304 = vrot.slane %v432, 6
      %v2305 = vrot.slane %v433, 6
      %v2306 = vsel %vm2297, %v2304, %v2305
      %v2307 = vrot.slane %v434, 6
      %v2308 = vrot.slane %v435, 6
      %v2309 = vsel %vm2297, %v2307, %v2308
      %v2310 = vrot.slane %v436, 6
      %v2311 = vrot.slane %v437, 6
      %v2312 = vsel %vm2297, %v2310, %v2311
      %v2313 = vrot.slane %v438, 6
      %v2314 = vrot.slane %v439, 6
      %v2315 = vsel %vm2297, %v2313, %v2314
      %v2316 = vrot.slane %v440, 6
      %v2317 = vrot.slane %v441, 6
      %v2318 = vsel %vm2297, %v2316, %v2317
      %v2319 = vrot.slane %v442, 6
      %v2320 = vrot.slane %v443, 6
      %v2321 = vsel %vm2297, %v2319, %v2320
      %v2322 = vrot.slane %v444, 6
      %v2323 = vrot.slane %v445, 6
      %v2324 = vsel %vm2297, %v2322, %v2323
      %v2325 = vrot.slane %v446, 6
      %v2326 = vrot.slane %v447, 6
      %v2327 = vsel %vm2297, %v2325, %v2326
      %v2328 = vrot.slane %v448, 6
      %v2329 = vrot.slane %v449, 6
      %v2330 = vsel %vm2297, %v2328, %v2329
      %v2331 = vrot.slane %v450, 6
      %v2332 = vrot.slane %v451, 6
      %v2333 = vsel %vm2297, %v2331, %v2332
      %v2334 = vrot.slane %v452, 6
      %v2335 = vrot.slane %v453, 6
      %v2336 = vsel %vm2297, %v2334, %v2335
      %v2337 = vrot.slane %v454, 6
      %v2338 = vrot.slane %v455, 6
      %v2339 = vsel %vm2297, %v2337, %v2338
      %v2340 = vrot.slane %v456, 6
      %v2341 = vrot.slane %v457, 6
      %v2342 = vsel %vm2297, %v2340, %v2341
      %v2343 = vrot.slane %v458, 6
      %v2344 = vrot.slane %v459, 6
      %v2345 = vsel %vm2297, %v2343, %v2344
      %2346 = vrot.lane.b32.xlu0 %v2298, 120
      %v2347 = vpop.permute.xlu0 %2346
      %2348 = vrot.lane.b32.xlu0 %v2300, 120
      %v2349 = vpop.permute.xlu0 %2348
      %2350 = vrot.lane.b32.xlu0 %v2299, 120
      %v2351 = vpop.permute.xlu0 %2350
      %2352 = vrot.lane.b32.xlu0 %v2301, 120
      %v2353 = vpop.permute.xlu0 %2352
      %2354 = vrot.lane.b32.xlu0 %v2303, 120
      %v2355 = vpop.permute.xlu0 %2354
      %2356 = vrot.lane.b32.xlu0 %v2302, 120
      %v2357 = vpop.permute.xlu0 %2356
      %2358 = vrot.lane.b32.xlu0 %v2304, 120
      %v2359 = vpop.permute.xlu0 %2358
      %2360 = vrot.lane.b32.xlu0 %v2306, 120
      %v2361 = vpop.permute.xlu0 %2360
      %2362 = vrot.lane.b32.xlu0 %v2305, 120
      %v2363 = vpop.permute.xlu0 %2362
      %2364 = vrot.lane.b32.xlu0 %v2307, 120
      %v2365 = vpop.permute.xlu0 %2364
      %2366 = vrot.lane.b32.xlu0 %v2309, 120
      %v2367 = vpop.permute.xlu0 %2366
      %2368 = vrot.lane.b32.xlu0 %v2308, 120
      %v2369 = vpop.permute.xlu0 %2368
      %2370 = vrot.lane.b32.xlu0 %v2310, 120
      %v2371 = vpop.permute.xlu0 %2370
      %2372 = vrot.lane.b32.xlu0 %v2312, 120
      %v2373 = vpop.permute.xlu0 %2372
      %2374 = vrot.lane.b32.xlu0 %v2311, 120
      %v2375 = vpop.permute.xlu0 %2374
      %2376 = vrot.lane.b32.xlu0 %v2313, 120
      %v2377 = vpop.permute.xlu0 %2376
      %2378 = vrot.lane.b32.xlu0 %v2315, 120
      %v2379 = vpop.permute.xlu0 %2378
      %2380 = vrot.lane.b32.xlu0 %v2314, 120
      %v2381 = vpop.permute.xlu0 %2380
      %2382 = vrot.lane.b32.xlu0 %v2316, 120
      %v2383 = vpop.permute.xlu0 %2382
      %2384 = vrot.lane.b32.xlu0 %v2318, 120
      %v2385 = vpop.permute.xlu0 %2384
      %2386 = vrot.lane.b32.xlu0 %v2317, 120
      %v2387 = vpop.permute.xlu0 %2386
      %2388 = vrot.lane.b32.xlu0 %v2319, 120
      %v2389 = vpop.permute.xlu0 %2388
      %2390 = vrot.lane.b32.xlu0 %v2321, 120
      %v2391 = vpop.permute.xlu0 %2390
      %2392 = vrot.lane.b32.xlu0 %v2320, 120
      %v2393 = vpop.permute.xlu0 %2392
      %2394 = vrot.lane.b32.xlu0 %v2322, 120
      %v2395 = vpop.permute.xlu0 %2394
      %2396 = vrot.lane.b32.xlu0 %v2324, 120
      %v2397 = vpop.permute.xlu0 %2396
      %2398 = vrot.lane.b32.xlu0 %v2323, 120
      %v2399 = vpop.permute.xlu0 %2398
      %2400 = vrot.lane.b32.xlu0 %v2325, 120
      %v2401 = vpop.permute.xlu0 %2400
      %2402 = vrot.lane.b32.xlu0 %v2327, 120
      %v2403 = vpop.permute.xlu0 %2402
      %2404 = vrot.lane.b32.xlu0 %v2326, 120
      %v2405 = vpop.permute.xlu0 %2404
      %2406 = vrot.lane.b32.xlu0 %v2328, 120
      %v2407 = vpop.permute.xlu0 %2406
      %2408 = vrot.lane.b32.xlu0 %v2330, 120
      %v2409 = vpop.permute.xlu0 %2408
      %2410 = vrot.lane.b32.xlu0 %v2329, 120
      %v2411 = vpop.permute.xlu0 %2410
      %2412 = vrot.lane.b32.xlu0 %v2331, 120
      %v2413 = vpop.permute.xlu0 %2412
      %2414 = vrot.lane.b32.xlu0 %v2333, 120
      %v2415 = vpop.permute.xlu0 %2414
      %2416 = vrot.lane.b32.xlu0 %v2332, 120
      %v2417 = vpop.permute.xlu0 %2416
      %2418 = vrot.lane.b32.xlu0 %v2334, 120
      %v2419 = vpop.permute.xlu0 %2418
      %2420 = vrot.lane.b32.xlu0 %v2336, 120
      %v2421 = vpop.permute.xlu0 %2420
      %2422 = vrot.lane.b32.xlu0 %v2335, 120
      %v2423 = vpop.permute.xlu0 %2422
      %2424 = vrot.lane.b32.xlu0 %v2337, 120
      %v2425 = vpop.permute.xlu0 %2424
      %2426 = vrot.lane.b32.xlu0 %v2339, 120
      %v2427 = vpop.permute.xlu0 %2426
      %2428 = vrot.lane.b32.xlu0 %v2338, 120
      %v2429 = vpop.permute.xlu0 %2428
      %2430 = vrot.lane.b32.xlu0 %v2340, 120
      %v2431 = vpop.permute.xlu0 %2430
      %2432 = vrot.lane.b32.xlu0 %v2342, 120
      %v2433 = vpop.permute.xlu0 %2432
      %2434 = vrot.lane.b32.xlu0 %v2341, 120
      %v2435 = vpop.permute.xlu0 %2434
      %2436 = vrot.lane.b32.xlu0 %v2343, 120
      %v2437 = vpop.permute.xlu0 %2436
      %2438 = vrot.lane.b32.xlu0 %v2345, 120
      %v2439 = vpop.permute.xlu0 %2438
      %2440 = vrot.lane.b32.xlu0 %v2344, 120
      %v2441 = vpop.permute.xlu0 %2440
      %v2474 = vsel %vm2297, 0.0, %v2347
      %v2475 = vsel %vm2297, 0.0, %v2353
      %v2476 = vsel %vm2297, 0.0, %v2359
      %v2477 = vsel %vm2297, 0.0, %v2365
      %v2478 = vsel %vm2297, 0.0, %v2371
      %v2479 = vsel %vm2297, 0.0, %v2377
      %v2480 = vsel %vm2297, 0.0, %v2383
      %v2481 = vsel %vm2297, 0.0, %v2389
      %v2482 = vsel %vm2297, 0.0, %v2395
      %v2483 = vsel %vm2297, 0.0, %v2401
      %v2484 = vsel %vm2297, 0.0, %v2407
      %v2485 = vsel %vm2297, 0.0, %v2413
      %v2486 = vsel %vm2297, 0.0, %v2419
      %v2487 = vsel %vm2297, 0.0, %v2425
      %v2488 = vsel %vm2297, 0.0, %v2431
      %v2489 = vsel %vm2297, 0.0, %v2437
      %v2490 = vsel %vm2297, %v2351, 0.0
      %v2491 = vsel %vm2297, %v2357, 0.0
      %v2492 = vsel %vm2297, %v2363, 0.0
      %v2493 = vsel %vm2297, %v2369, 0.0
      %v2494 = vsel %vm2297, %v2375, 0.0
      %v2495 = vsel %vm2297, %v2381, 0.0
      %v2496 = vsel %vm2297, %v2387, 0.0
      %v2497 = vsel %vm2297, %v2393, 0.0
      %v2498 = vsel %vm2297, %v2399, 0.0
      %v2499 = vsel %vm2297, %v2405, 0.0
      %v2500 = vsel %vm2297, %v2411, 0.0
      %v2501 = vsel %vm2297, %v2417, 0.0
      %v2502 = vsel %vm2297, %v2423, 0.0
      %v2503 = vsel %vm2297, %v2429, 0.0
      %v2504 = vsel %vm2297, %v2435, 0.0
      %v2505 = vsel %vm2297, %v2441, 0.0
      %v2506 = vld [vmem:[%s5] sm:$0xff]
      %v2535 = vrot.slane %v2474, 1
      %v2536 = vrot.slane %v2349, 1
      %v2537 = vsel %vm637, %v2535, %v2536
      %v2538 = vrot.slane %v2490, 1
      %v2539 = vsel %vm637, %v2536, %v2538
      %v2540 = vrot.slane %v2475, 1
      %v2541 = vrot.slane %v2355, 1
      %v2542 = vsel %vm637, %v2540, %v2541
      %v2543 = vrot.slane %v2491, 1
      %v2544 = vsel %vm637, %v2541, %v2543
      %v2545 = vrot.slane %v2476, 1
      %v2546 = vrot.slane %v2361, 1
      %v2547 = vsel %vm637, %v2545, %v2546
      %v2548 = vrot.slane %v2492, 1
      %v2549 = vsel %vm637, %v2546, %v2548
      %v2550 = vrot.slane %v2477, 1
      %v2551 = vrot.slane %v2367, 1
      %v2552 = vsel %vm637, %v2550, %v2551
      %v2553 = vrot.slane %v2493, 1
      %v2554 = vsel %vm637, %v2551, %v2553
      %v2555 = vrot.slane %v2478, 1
      %v2556 = vrot.slane %v2373, 1
      %v2557 = vsel %vm637, %v2555, %v2556
      %v2558 = vrot.slane %v2494, 1
      %v2559 = vsel %vm637, %v2556, %v2558
      %v2560 = vrot.slane %v2479, 1
      %v2561 = vrot.slane %v2379, 1
      %v2562 = vsel %vm637, %v2560, %v2561
      %v2563 = vrot.slane %v2495, 1
      %v2564 = vsel %vm637, %v2561, %v2563
      %v2565 = vrot.slane %v2480, 1
      %v2566 = vrot.slane %v2385, 1
      %v2567 = vsel %vm637, %v2565, %v2566
      %v2568 = vrot.slane %v2496, 1
      %v2569 = vsel %vm637, %v2566, %v2568
      %v2570 = vrot.slane %v2481, 1
      %v2571 = vrot.slane %v2391, 1
      %v2572 = vsel %vm637, %v2570, %v2571
      %v2573 = vrot.slane %v2497, 1
      %v2574 = vsel %vm637, %v2571, %v2573
      %v2575 = vrot.slane %v2482, 1
      %v2576 = vrot.slane %v2397, 1
      %v2577 = vsel %vm637, %v2575, %v2576
      %v2578 = vrot.slane %v2498, 1
      %v2579 = vsel %vm637, %v2576, %v2578
      %v2580 = vrot.slane %v2483, 1
      %v2581 = vrot.slane %v2403, 1
      %v2582 = vsel %vm637, %v2580, %v2581
      %v2583 = vrot.slane %v2499, 1
      %v2584 = vsel %vm637, %v2581, %v2583
      %v2585 = vrot.slane %v2484, 1
      %v2586 = vrot.slane %v2409, 1
      %v2587 = vsel %vm637, %v2585, %v2586
      %v2588 = vrot.slane %v2500, 1
      %v2589 = vsel %vm637, %v2586, %v2588
      %v2590 = vrot.slane %v2485, 1
      %v2591 = vrot.slane %v2415, 1
      %v2592 = vsel %vm637, %v2590, %v2591
      %v2593 = vrot.slane %v2501, 1
      %v2594 = vsel %vm637, %v2591, %v2593
      %v2595 = vrot.slane %v2486, 1
      %v2596 = vrot.slane %v2421, 1
      %v2597 = vsel %vm637, %v2595, %v2596
      %v2598 = vrot.slane %v2502, 1
      %v2599 = vsel %vm637, %v2596, %v2598
      %v2600 = vrot.slane %v2487, 1
      %v2601 = vrot.slane %v2427, 1
      %v2602 = vsel %vm637, %v2600, %v2601
      %v2603 = vrot.slane %v2503, 1
      %v2604 = vsel %vm637, %v2601, %v2603
      %s2605 = scalar_lea.vmem %s5, 8
      %v2606 = vld [vmem:[%s2605] sm:$0xff]
      %v2607 = vsel %vm717, %v2537, 0
      %v2609 = vsel %vm717, %v2539, 0
      %v2611 = vsel %vm717, %v2542, 0
      %v2613 = vsel %vm717, %v2544, 0
      %v2615 = vsel %vm717, %v2547, 0
      %v2617 = vsel %vm717, %v2549, 0
      %v2619 = vsel %vm717, %v2552, 0
      %v2621 = vsel %vm717, %v2554, 0
      %v2623 = vsel %vm717, %v2557, 0
      %v2625 = vsel %vm717, %v2559, 0
      %v2627 = vsel %vm717, %v2562, 0
      %v2629 = vsel %vm717, %v2564, 0
      %v2631 = vsel %vm717, %v2567, 0
      %v2633 = vsel %vm717, %v2569, 0
      %v2635 = vsel %vm717, %v2572, 0
      %v2637 = vsel %vm717, %v2574, 0
      %v2639 = vsel %vm717, %v2577, 0
      %v2641 = vsel %vm717, %v2579, 0
      %v2643 = vsel %vm717, %v2582, 0
      %v2645 = vsel %vm717, %v2584, 0
      %v2647 = vsel %vm717, %v2587, 0
      %v2649 = vsel %vm717, %v2589, 0
      %v2651 = vsel %vm717, %v2592, 0
      %v2653 = vsel %vm717, %v2594, 0
      %v2655 = vsel %vm717, %v2597, 0
      %v2657 = vsel %vm717, %v2599, 0
      %v2659 = vsel %vm717, %v2602, 0
      %v2661 = vsel %vm717, %v2604, 0
      %2663 = vmatpush.msra.mxu0 0.0
      %2664 = vmatpush.msra.mxu0 0.0
      %2665 = vmatpush.msra.mxu0 0.0
      %2666 = vmatpush.msra.mxu0 0.0
      %2667 = vmatpush.msra.mxu0 0.0
      %2668 = vmatpush.msra.mxu0 0.0
      %2669 = vmatpush.msra.mxu0 0.0
      %2670 = vmatpush.msra.mxu0 0.0
      %2671 = vmatpush.msra.mxu0 0.0
      %2672 = vmatpush.msra.mxu0 0.0
      %2673 = vmatpush.msra.mxu0 0.0
      %2674 = vmatpush.msra.mxu0 0.0
      %2675 = vmatpush.msra.mxu0 0.0
      %2676 = vmatpush.msra.mxu0 0.0
      %2677 = vmatpush.msra.mxu0 0.0
      %2678 = vmatpush.msra.mxu0 %v2606
      %2679 = vmatmul.f32.gmra.mxu0 %v718
      %v2680 = vpop.f32.mrf.mxu0
      %v2681 = vadd.f32 0.0, %v2680
      %2682 = vmatmul.f32.gmra.mxu0 %v718
      %v2683 = vpop.f32.mrf.mxu0
      %v2684 = vadd.f32 0.0, %v2683
      %2685 = vmatmul.f32.gmra.mxu0 %v718
      %v2686 = vpop.f32.mrf.mxu0
      %v2687 = vadd.f32 0.0, %v2686
      %2688 = vmatmul.f32.gmra.mxu0 %v718
      %v2689 = vpop.f32.mrf.mxu0
      %v2690 = vadd.f32 0.0, %v2689
      %2691 = vmatmul.f32.gmra.mxu0 %v2607
      %v2692 = vpop.f32.mrf.mxu0
      %v2693 = vadd.f32 0.0, %v2692
      %2694 = vmatmul.f32.gmra.mxu0 %v2609
      %v2695 = vpop.f32.mrf.mxu0
      %v2696 = vadd.f32 0.0, %v2695
      %2697 = vmatmul.f32.gmra.mxu0 %v2611
      %v2698 = vpop.f32.mrf.mxu0
      %v2699 = vadd.f32 0.0, %v2698
      %2700 = vmatmul.f32.gmra.mxu0 %v2613
      %v2701 = vpop.f32.mrf.mxu0
      %v2702 = vadd.f32 0.0, %v2701
      %2703 = vmatmul.f32.gmra.mxu0 %v2615
      %v2704 = vpop.f32.mrf.mxu0
      %v2705 = vadd.f32 0.0, %v2704
      %2706 = vmatmul.f32.gmra.mxu0 %v2617
      %v2707 = vpop.f32.mrf.mxu0
      %v2708 = vadd.f32 0.0, %v2707
      %2709 = vmatmul.f32.gmra.mxu0 %v2619
      %v2710 = vpop.f32.mrf.mxu0
      %v2711 = vadd.f32 0.0, %v2710
      %2712 = vmatmul.f32.gmra.mxu0 %v2621
      %v2713 = vpop.f32.mrf.mxu0
      %v2714 = vadd.f32 0.0, %v2713
      %2715 = vmatmul.f32.gmra.mxu0 %v2623
      %v2716 = vpop.f32.mrf.mxu0
      %v2717 = vadd.f32 0.0, %v2716
      %2718 = vmatmul.f32.gmra.mxu0 %v2625
      %v2719 = vpop.f32.mrf.mxu0
      %v2720 = vadd.f32 0.0, %v2719
      %2721 = vmatmul.f32.gmra.mxu0 %v2627
      %v2722 = vpop.f32.mrf.mxu0
      %v2723 = vadd.f32 0.0, %v2722
      %2724 = vmatmul.f32.gmra.mxu0 %v2629
      %v2725 = vpop.f32.mrf.mxu0
      %v2726 = vadd.f32 0.0, %v2725
      %2727 = vmatmul.f32.gmra.mxu0 %v2631
      %v2728 = vpop.f32.mrf.mxu0
      %v2729 = vadd.f32 0.0, %v2728
      %2730 = vmatmul.f32.gmra.mxu0 %v2633
      %v2731 = vpop.f32.mrf.mxu0
      %v2732 = vadd.f32 0.0, %v2731
      %2733 = vmatmul.f32.gmra.mxu0 %v2635
      %v2734 = vpop.f32.mrf.mxu0
      %v2735 = vadd.f32 0.0, %v2734
      %2736 = vmatmul.f32.gmra.mxu0 %v2637
      %v2737 = vpop.f32.mrf.mxu0
      %v2738 = vadd.f32 0.0, %v2737
      %2739 = vmatmul.f32.gmra.mxu0 %v2639
      %v2740 = vpop.f32.mrf.mxu0
      %v2741 = vadd.f32 0.0, %v2740
      %2742 = vmatmul.f32.gmra.mxu0 %v2641
      %v2743 = vpop.f32.mrf.mxu0
      %v2744 = vadd.f32 0.0, %v2743
      %2745 = vmatmul.f32.gmra.mxu0 %v2643
      %v2746 = vpop.f32.mrf.mxu0
      %v2747 = vadd.f32 0.0, %v2746
      %2748 = vmatmul.f32.gmra.mxu0 %v2645
      %v2749 = vpop.f32.mrf.mxu0
      %v2750 = vadd.f32 0.0, %v2749
      %2751 = vmatmul.f32.gmra.mxu0 %v2647
      %v2752 = vpop.f32.mrf.mxu0
      %v2753 = vadd.f32 0.0, %v2752
      %2754 = vmatmul.f32.gmra.mxu0 %v2649
      %v2755 = vpop.f32.mrf.mxu0
      %v2756 = vadd.f32 0.0, %v2755
      %2757 = vmatmul.f32.gmra.mxu0 %v2651
      %v2758 = vpop.f32.mrf.mxu0
      %v2759 = vadd.f32 0.0, %v2758
      %2760 = vmatmul.f32.gmra.mxu0 %v2653
      %v2761 = vpop.f32.mrf.mxu0
      %v2762 = vadd.f32 0.0, %v2761
      %2763 = vmatmul.f32.gmra.mxu0 %v2655
      %v2764 = vpop.f32.mrf.mxu0
      %v2765 = vadd.f32 0.0, %v2764
      %2766 = vmatmul.f32.gmra.mxu0 %v2657
      %v2767 = vpop.f32.mrf.mxu0
      %v2768 = vadd.f32 0.0, %v2767
      %2769 = vmatmul.f32.gmra.mxu0 %v2659
      %v2770 = vpop.f32.mrf.mxu0
      %v2771 = vadd.f32 0.0, %v2770
      %2772 = vmatmul.f32.gmra.mxu0 %v2661
      %v2773 = vpop.f32.mrf.mxu0
      %v2774 = vadd.f32 0.0, %v2773
      %2775 = vdwg.mxu0
      %v2776 = vsel %vm717, %v2474, 0
      %v2778 = vsel %vm717, %v2349, 0
      %v2780 = vsel %vm717, %v2475, 0
      %v2782 = vsel %vm717, %v2355, 0
      %v2784 = vsel %vm717, %v2476, 0
      %v2786 = vsel %vm717, %v2361, 0
      %v2788 = vsel %vm717, %v2477, 0
      %v2790 = vsel %vm717, %v2367, 0
      %v2792 = vsel %vm717, %v2478, 0
      %v2794 = vsel %vm717, %v2373, 0
      %v2796 = vsel %vm717, %v2479, 0
      %v2798 = vsel %vm717, %v2379, 0
      %v2800 = vsel %vm717, %v2480, 0
      %v2802 = vsel %vm717, %v2385, 0
      %v2804 = vsel %vm717, %v2481, 0
      %v2806 = vsel %vm717, %v2391, 0
      %v2808 = vsel %vm717, %v2482, 0
      %v2810 = vsel %vm717, %v2397, 0
      %v2812 = vsel %vm717, %v2483, 0
      %v2814 = vsel %vm717, %v2403, 0
      %v2816 = vsel %vm717, %v2484, 0
      %v2818 = vsel %vm717, %v2409, 0
      %v2820 = vsel %vm717, %v2485, 0
      %v2822 = vsel %vm717, %v2415, 0
      %v2824 = vsel %vm717, %v2486, 0
      %v2826 = vsel %vm717, %v2421, 0
      %v2828 = vsel %vm717, %v2487, 0
      %v2830 = vsel %vm717, %v2427, 0
      %2832 = vmatpush.msra.mxu0 0.0
      %2833 = vmatpush.msra.mxu0 0.0
      %2834 = vmatpush.msra.mxu0 0.0
      %2835 = vmatpush.msra.mxu0 0.0
      %2836 = vmatpush.msra.mxu0 0.0
      %2837 = vmatpush.msra.mxu0 0.0
      %2838 = vmatpush.msra.mxu0 0.0
      %2839 = vmatpush.msra.mxu0 0.0
      %2840 = vmatpush.msra.mxu0 0.0
      %2841 = vmatpush.msra.mxu0 0.0
      %2842 = vmatpush.msra.mxu0 0.0
      %2843 = vmatpush.msra.mxu0 0.0
      %2844 = vmatpush.msra.mxu0 0.0
      %2845 = vmatpush.msra.mxu0 0.0
      %2846 = vmatpush.msra.mxu0 0.0
      %2847 = vmatpush.msra.mxu0 %v2506
      %2848 = vmatmul.f32.gmra.mxu0 %v893
      %v2849 = vpop.f32.mrf.mxu0
      %v2850 = vadd.f32 %v2681, %v2849
      %2851 = vmatmul.f32.gmra.mxu0 %v893
      %v2852 = vpop.f32.mrf.mxu0
      %v2853 = vadd.f32 %v2684, %v2852
      %2854 = vmatmul.f32.gmra.mxu0 %v893
      %v2855 = vpop.f32.mrf.mxu0
      %v2856 = vadd.f32 %v2687, %v2855
      %2857 = vmatmul.f32.gmra.mxu0 %v893
      %v2858 = vpop.f32.mrf.mxu0
      %v2859 = vadd.f32 %v2690, %v2858
      %2860 = vmatmul.f32.gmra.mxu0 %v2776
      %v2861 = vpop.f32.mrf.mxu0
      %v2862 = vadd.f32 %v2693, %v2861
      %2863 = vmatmul.f32.gmra.mxu0 %v2778
      %v2864 = vpop.f32.mrf.mxu0
      %v2865 = vadd.f32 %v2696, %v2864
      %2866 = vmatmul.f32.gmra.mxu0 %v2780
      %v2867 = vpop.f32.mrf.mxu0
      %v2868 = vadd.f32 %v2699, %v2867
      %2869 = vmatmul.f32.gmra.mxu0 %v2782
      %v2870 = vpop.f32.mrf.mxu0
      %v2871 = vadd.f32 %v2702, %v2870
      %2872 = vmatmul.f32.gmra.mxu0 %v2784
      %v2873 = vpop.f32.mrf.mxu0
      %v2874 = vadd.f32 %v2705, %v2873
      %2875 = vmatmul.f32.gmra.mxu0 %v2786
      %v2876 = vpop.f32.mrf.mxu0
      %v2877 = vadd.f32 %v2708, %v2876
      %2878 = vmatmul.f32.gmra.mxu0 %v2788
      %v2879 = vpop.f32.mrf.mxu0
      %v2880 = vadd.f32 %v2711, %v2879
      %2881 = vmatmul.f32.gmra.mxu0 %v2790
      %v2882 = vpop.f32.mrf.mxu0
      %v2883 = vadd.f32 %v2714, %v2882
      %2884 = vmatmul.f32.gmra.mxu0 %v2792
      %v2885 = vpop.f32.mrf.mxu0
      %v2886 = vadd.f32 %v2717, %v2885
      %2887 = vmatmul.f32.gmra.mxu0 %v2794
      %v2888 = vpop.f32.mrf.mxu0
      %v2889 = vadd.f32 %v2720, %v2888
      %2890 = vmatmul.f32.gmra.mxu0 %v2796
      %v2891 = vpop.f32.mrf.mxu0
      %v2892 = vadd.f32 %v2723, %v2891
      %2893 = vmatmul.f32.gmra.mxu0 %v2798
      %v2894 = vpop.f32.mrf.mxu0
      %v2895 = vadd.f32 %v2726, %v2894
      %2896 = vmatmul.f32.gmra.mxu0 %v2800
      %v2897 = vpop.f32.mrf.mxu0
      %v2898 = vadd.f32 %v2729, %v2897
      %2899 = vmatmul.f32.gmra.mxu0 %v2802
      %v2900 = vpop.f32.mrf.mxu0
      %v2901 = vadd.f32 %v2732, %v2900
      %2902 = vmatmul.f32.gmra.mxu0 %v2804
      %v2903 = vpop.f32.mrf.mxu0
      %v2904 = vadd.f32 %v2735, %v2903
      %2905 = vmatmul.f32.gmra.mxu0 %v2806
      %v2906 = vpop.f32.mrf.mxu0
      %v2907 = vadd.f32 %v2738, %v2906
      %2908 = vmatmul.f32.gmra.mxu0 %v2808
      %v2909 = vpop.f32.mrf.mxu0
      %v2910 = vadd.f32 %v2741, %v2909
      %2911 = vmatmul.f32.gmra.mxu0 %v2810
      %v2912 = vpop.f32.mrf.mxu0
      %v2913 = vadd.f32 %v2744, %v2912
      %2914 = vmatmul.f32.gmra.mxu0 %v2812
      %v2915 = vpop.f32.mrf.mxu0
      %v2916 = vadd.f32 %v2747, %v2915
      %2917 = vmatmul.f32.gmra.mxu0 %v2814
      %v2918 = vpop.f32.mrf.mxu0
      %v2919 = vadd.f32 %v2750, %v2918
      %2920 = vmatmul.f32.gmra.mxu0 %v2816
      %v2921 = vpop.f32.mrf.mxu0
      %v2922 = vadd.f32 %v2753, %v2921
      %2923 = vmatmul.f32.gmra.mxu0 %v2818
      %v2924 = vpop.f32.mrf.mxu0
      %v2925 = vadd.f32 %v2756, %v2924
      %2926 = vmatmul.f32.gmra.mxu0 %v2820
      %v2927 = vpop.f32.mrf.mxu0
      %v2928 = vadd.f32 %v2759, %v2927
      %2929 = vmatmul.f32.gmra.mxu0 %v2822
      %v2930 = vpop.f32.mrf.mxu0
      %v2931 = vadd.f32 %v2762, %v2930
      %2932 = vmatmul.f32.gmra.mxu0 %v2824
      %v2933 = vpop.f32.mrf.mxu0
      %v2934 = vadd.f32 %v2765, %v2933
      %2935 = vmatmul.f32.gmra.mxu0 %v2826
      %v2936 = vpop.f32.mrf.mxu0
      %v2937 = vadd.f32 %v2768, %v2936
      %2938 = vmatmul.f32.gmra.mxu0 %v2828
      %v2939 = vpop.f32.mrf.mxu0
      %v2940 = vadd.f32 %v2771, %v2939
      %2941 = vmatmul.f32.gmra.mxu0 %v2830
      %v2942 = vpop.f32.mrf.mxu0
      %v2943 = vadd.f32 %v2774, %v2942
      %2944 = vdwg.mxu0
      %v2945 = vrot.slane %v2474, 2
      %v2946 = vrot.slane %v2349, 2
      %v2947 = vsel %vm1068, %v2945, %v2946
      %v2948 = vrot.slane %v2490, 2
      %v2949 = vsel %vm1068, %v2946, %v2948
      %v2950 = vrot.slane %v2475, 2
      %v2951 = vrot.slane %v2355, 2
      %v2952 = vsel %vm1068, %v2950, %v2951
      %v2953 = vrot.slane %v2491, 2
      %v2954 = vsel %vm1068, %v2951, %v2953
      %v2955 = vrot.slane %v2476, 2
      %v2956 = vrot.slane %v2361, 2
      %v2957 = vsel %vm1068, %v2955, %v2956
      %v2958 = vrot.slane %v2492, 2
      %v2959 = vsel %vm1068, %v2956, %v2958
      %v2960 = vrot.slane %v2477, 2
      %v2961 = vrot.slane %v2367, 2
      %v2962 = vsel %vm1068, %v2960, %v2961
      %v2963 = vrot.slane %v2493, 2
      %v2964 = vsel %vm1068, %v2961, %v2963
      %v2965 = vrot.slane %v2478, 2
      %v2966 = vrot.slane %v2373, 2
      %v2967 = vsel %vm1068, %v2965, %v2966
      %v2968 = vrot.slane %v2494, 2
      %v2969 = vsel %vm1068, %v2966, %v2968
      %v2970 = vrot.slane %v2479, 2
      %v2971 = vrot.slane %v2379, 2
      %v2972 = vsel %vm1068, %v2970, %v2971
      %v2973 = vrot.slane %v2495, 2
      %v2974 = vsel %vm1068, %v2971, %v2973
      %v2975 = vrot.slane %v2480, 2
      %v2976 = vrot.slane %v2385, 2
      %v2977 = vsel %vm1068, %v2975, %v2976
      %v2978 = vrot.slane %v2496, 2
      %v2979 = vsel %vm1068, %v2976, %v2978
      %v2980 = vrot.slane %v2481, 2
      %v2981 = vrot.slane %v2391, 2
      %v2982 = vsel %vm1068, %v2980, %v2981
      %v2983 = vrot.slane %v2497, 2
      %v2984 = vsel %vm1068, %v2981, %v2983
      %v2985 = vrot.slane %v2482, 2
      %v2986 = vrot.slane %v2397, 2
      %v2987 = vsel %vm1068, %v2985, %v2986
      %v2988 = vrot.slane %v2498, 2
      %v2989 = vsel %vm1068, %v2986, %v2988
      %v2990 = vrot.slane %v2483, 2
      %v2991 = vrot.slane %v2403, 2
      %v2992 = vsel %vm1068, %v2990, %v2991
      %v2993 = vrot.slane %v2499, 2
      %v2994 = vsel %vm1068, %v2991, %v2993
      %v2995 = vrot.slane %v2484, 2
      %v2996 = vrot.slane %v2409, 2
      %v2997 = vsel %vm1068, %v2995, %v2996
      %v2998 = vrot.slane %v2500, 2
      %v2999 = vsel %vm1068, %v2996, %v2998
      %v3000 = vrot.slane %v2485, 2
      %v3001 = vrot.slane %v2415, 2
      %v3002 = vsel %vm1068, %v3000, %v3001
      %v3003 = vrot.slane %v2501, 2
      %v3004 = vsel %vm1068, %v3001, %v3003
      %v3005 = vrot.slane %v2486, 2
      %v3006 = vrot.slane %v2421, 2
      %v3007 = vsel %vm1068, %v3005, %v3006
      %v3008 = vrot.slane %v2502, 2
      %v3009 = vsel %vm1068, %v3006, %v3008
      %v3010 = vrot.slane %v2487, 2
      %v3011 = vrot.slane %v2427, 2
      %v3012 = vsel %vm1068, %v3010, %v3011
      %v3013 = vrot.slane %v2503, 2
      %v3014 = vsel %vm1068, %v3011, %v3013
      %s3015 = scalar_lea.vmem %s5, 16
      %v3016 = vld [vmem:[%s3015] sm:$0xff]
      %v3017 = vsel %vm717, %v2947, 0
      %v3019 = vsel %vm717, %v2949, 0
      %v3021 = vsel %vm717, %v2952, 0
      %v3023 = vsel %vm717, %v2954, 0
      %v3025 = vsel %vm717, %v2957, 0
      %v3027 = vsel %vm717, %v2959, 0
      %v3029 = vsel %vm717, %v2962, 0
      %v3031 = vsel %vm717, %v2964, 0
      %v3033 = vsel %vm717, %v2967, 0
      %v3035 = vsel %vm717, %v2969, 0
      %v3037 = vsel %vm717, %v2972, 0
      %v3039 = vsel %vm717, %v2974, 0
      %v3041 = vsel %vm717, %v2977, 0
      %v3043 = vsel %vm717, %v2979, 0
      %v3045 = vsel %vm717, %v2982, 0
      %v3047 = vsel %vm717, %v2984, 0
      %v3049 = vsel %vm717, %v2987, 0
      %v3051 = vsel %vm717, %v2989, 0
      %v3053 = vsel %vm717, %v2992, 0
      %v3055 = vsel %vm717, %v2994, 0
      %v3057 = vsel %vm717, %v2997, 0
      %v3059 = vsel %vm717, %v2999, 0
      %v3061 = vsel %vm717, %v3002, 0
      %v3063 = vsel %vm717, %v3004, 0
      %v3065 = vsel %vm717, %v3007, 0
      %v3067 = vsel %vm717, %v3009, 0
      %v3069 = vsel %vm717, %v3012, 0
      %v3071 = vsel %vm717, %v3014, 0
      %3073 = vmatpush.msra.mxu0 0.0
      %3074 = vmatpush.msra.mxu0 0.0
      %3075 = vmatpush.msra.mxu0 0.0
      %3076 = vmatpush.msra.mxu0 0.0
      %3077 = vmatpush.msra.mxu0 0.0
      %3078 = vmatpush.msra.mxu0 0.0
      %3079 = vmatpush.msra.mxu0 0.0
      %3080 = vmatpush.msra.mxu0 0.0
      %3081 = vmatpush.msra.mxu0 0.0
      %3082 = vmatpush.msra.mxu0 0.0
      %3083 = vmatpush.msra.mxu0 0.0
      %3084 = vmatpush.msra.mxu0 0.0
      %3085 = vmatpush.msra.mxu0 0.0
      %3086 = vmatpush.msra.mxu0 0.0
      %3087 = vmatpush.msra.mxu0 0.0
      %3088 = vmatpush.msra.mxu0 %v3016
      %3089 = vmatmul.f32.gmra.mxu0 %v1148
      %v3090 = vpop.f32.mrf.mxu0
      %v3091 = vadd.f32 0.0, %v3090
      %3092 = vmatmul.f32.gmra.mxu0 %v1148
      %v3093 = vpop.f32.mrf.mxu0
      %v3094 = vadd.f32 0.0, %v3093
      %3095 = vmatmul.f32.gmra.mxu0 %v1148
      %v3096 = vpop.f32.mrf.mxu0
      %v3097 = vadd.f32 0.0, %v3096
      %3098 = vmatmul.f32.gmra.mxu0 %v1148
      %v3099 = vpop.f32.mrf.mxu0
      %v3100 = vadd.f32 0.0, %v3099
      %3101 = vmatmul.f32.gmra.mxu0 %v3017
      %v3102 = vpop.f32.mrf.mxu0
      %v3103 = vadd.f32 0.0, %v3102
      %3104 = vmatmul.f32.gmra.mxu0 %v3019
      %v3105 = vpop.f32.mrf.mxu0
      %v3106 = vadd.f32 0.0, %v3105
      %3107 = vmatmul.f32.gmra.mxu0 %v3021
      %v3108 = vpop.f32.mrf.mxu0
      %v3109 = vadd.f32 0.0, %v3108
      %3110 = vmatmul.f32.gmra.mxu0 %v3023
      %v3111 = vpop.f32.mrf.mxu0
      %v3112 = vadd.f32 0.0, %v3111
      %3113 = vmatmul.f32.gmra.mxu0 %v3025
      %v3114 = vpop.f32.mrf.mxu0
      %v3115 = vadd.f32 0.0, %v3114
      %3116 = vmatmul.f32.gmra.mxu0 %v3027
      %v3117 = vpop.f32.mrf.mxu0
      %v3118 = vadd.f32 0.0, %v3117
      %3119 = vmatmul.f32.gmra.mxu0 %v3029
      %v3120 = vpop.f32.mrf.mxu0
      %v3121 = vadd.f32 0.0, %v3120
      %3122 = vmatmul.f32.gmra.mxu0 %v3031
      %v3123 = vpop.f32.mrf.mxu0
      %v3124 = vadd.f32 0.0, %v3123
      %3125 = vmatmul.f32.gmra.mxu0 %v3033
      %v3126 = vpop.f32.mrf.mxu0
      %v3127 = vadd.f32 0.0, %v3126
      %3128 = vmatmul.f32.gmra.mxu0 %v3035
      %v3129 = vpop.f32.mrf.mxu0
      %v3130 = vadd.f32 0.0, %v3129
      %3131 = vmatmul.f32.gmra.mxu0 %v3037
      %v3132 = vpop.f32.mrf.mxu0
      %v3133 = vadd.f32 0.0, %v3132
      %3134 = vmatmul.f32.gmra.mxu0 %v3039
      %v3135 = vpop.f32.mrf.mxu0
      %v3136 = vadd.f32 0.0, %v3135
      %3137 = vmatmul.f32.gmra.mxu0 %v3041
      %v3138 = vpop.f32.mrf.mxu0
      %v3139 = vadd.f32 0.0, %v3138
      %3140 = vmatmul.f32.gmra.mxu0 %v3043
      %v3141 = vpop.f32.mrf.mxu0
      %v3142 = vadd.f32 0.0, %v3141
      %3143 = vmatmul.f32.gmra.mxu0 %v3045
      %v3144 = vpop.f32.mrf.mxu0
      %v3145 = vadd.f32 0.0, %v3144
      %3146 = vmatmul.f32.gmra.mxu0 %v3047
      %v3147 = vpop.f32.mrf.mxu0
      %v3148 = vadd.f32 0.0, %v3147
      %3149 = vmatmul.f32.gmra.mxu0 %v3049
      %v3150 = vpop.f32.mrf.mxu0
      %v3151 = vadd.f32 0.0, %v3150
      %3152 = vmatmul.f32.gmra.mxu0 %v3051
      %v3153 = vpop.f32.mrf.mxu0
      %v3154 = vadd.f32 0.0, %v3153
      %3155 = vmatmul.f32.gmra.mxu0 %v3053
      %v3156 = vpop.f32.mrf.mxu0
      %v3157 = vadd.f32 0.0, %v3156
      %3158 = vmatmul.f32.gmra.mxu0 %v3055
      %v3159 = vpop.f32.mrf.mxu0
      %v3160 = vadd.f32 0.0, %v3159
      %3161 = vmatmul.f32.gmra.mxu0 %v3057
      %v3162 = vpop.f32.mrf.mxu0
      %v3163 = vadd.f32 0.0, %v3162
      %3164 = vmatmul.f32.gmra.mxu0 %v3059
      %v3165 = vpop.f32.mrf.mxu0
      %v3166 = vadd.f32 0.0, %v3165
      %3167 = vmatmul.f32.gmra.mxu0 %v3061
      %v3168 = vpop.f32.mrf.mxu0
      %v3169 = vadd.f32 0.0, %v3168
      %3170 = vmatmul.f32.gmra.mxu0 %v3063
      %v3171 = vpop.f32.mrf.mxu0
      %v3172 = vadd.f32 0.0, %v3171
      %3173 = vmatmul.f32.gmra.mxu0 %v3065
      %v3174 = vpop.f32.mrf.mxu0
      %v3175 = vadd.f32 0.0, %v3174
      %3176 = vmatmul.f32.gmra.mxu0 %v3067
      %v3177 = vpop.f32.mrf.mxu0
      %v3178 = vadd.f32 0.0, %v3177
      %3179 = vmatmul.f32.gmra.mxu0 %v3069
      %v3180 = vpop.f32.mrf.mxu0
      %v3181 = vadd.f32 0.0, %v3180
      %3182 = vmatmul.f32.gmra.mxu0 %v3071
      %v3183 = vpop.f32.mrf.mxu0
      %v3184 = vadd.f32 0.0, %v3183
      %3185 = vdwg.mxu0
      %v3186 = vadd.f32 %v2850, %v3091
      %v3187 = vadd.f32 %v2853, %v3094
      %v3188 = vadd.f32 %v2856, %v3097
      %v3189 = vadd.f32 %v2859, %v3100
      %v3190 = vadd.f32 %v2862, %v3103
      %v3191 = vadd.f32 %v2865, %v3106
      %v3192 = vadd.f32 %v2868, %v3109
      %v3193 = vadd.f32 %v2871, %v3112
      %v3194 = vadd.f32 %v2874, %v3115
      %v3195 = vadd.f32 %v2877, %v3118
      %v3196 = vadd.f32 %v2880, %v3121
      %v3197 = vadd.f32 %v2883, %v3124
      %v3198 = vadd.f32 %v2886, %v3127
      %v3199 = vadd.f32 %v2889, %v3130
      %v3200 = vadd.f32 %v2892, %v3133
      %v3201 = vadd.f32 %v2895, %v3136
      %v3202 = vadd.f32 %v2898, %v3139
      %v3203 = vadd.f32 %v2901, %v3142
      %v3204 = vadd.f32 %v2904, %v3145
      %v3205 = vadd.f32 %v2907, %v3148
      %v3206 = vadd.f32 %v2910, %v3151
      %v3207 = vadd.f32 %v2913, %v3154
      %v3208 = vadd.f32 %v2916, %v3157
      %v3209 = vadd.f32 %v2919, %v3160
      %v3210 = vadd.f32 %v2922, %v3163
      %v3211 = vadd.f32 %v2925, %v3166
      %v3212 = vadd.f32 %v2928, %v3169
      %v3213 = vadd.f32 %v2931, %v3172
      %v3214 = vadd.f32 %v2934, %v3175
      %v3215 = vadd.f32 %v2937, %v3178
      %v3216 = vadd.f32 %v2940, %v3181
      %v3217 = vadd.f32 %v2943, %v3184
      %vm3218 = vcmask 1044480
      %v3219 = vrot.slane 0.0, 3
      %v3220 = vsel %vm3218, %v3219, %v3219
      %v3221 = vrot.slane %v2474, 3
      %v3222 = vrot.slane %v2349, 3
      %v3223 = vsel %vm3218, %v3221, %v3222
      %v3224 = vrot.slane %v2490, 3
      %v3225 = vsel %vm3218, %v3222, %v3224
      %v3226 = vrot.slane %v2475, 3
      %v3227 = vrot.slane %v2355, 3
      %v3228 = vsel %vm3218, %v3226, %v3227
      %v3229 = vrot.slane %v2491, 3
      %v3230 = vsel %vm3218, %v3227, %v3229
      %v3231 = vrot.slane %v2476, 3
      %v3232 = vrot.slane %v2361, 3
      %v3233 = vsel %vm3218, %v3231, %v3232
      %v3234 = vrot.slane %v2492, 3
      %v3235 = vsel %vm3218, %v3232, %v3234
      %v3236 = vrot.slane %v2477, 3
      %v3237 = vrot.slane %v2367, 3
      %v3238 = vsel %vm3218, %v3236, %v3237
      %v3239 = vrot.slane %v2493, 3
      %v3240 = vsel %vm3218, %v3237, %v3239
      %v3241 = vrot.slane %v2478, 3
      %v3242 = vrot.slane %v2373, 3
      %v3243 = vsel %vm3218, %v3241, %v3242
      %v3244 = vrot.slane %v2494, 3
      %v3245 = vsel %vm3218, %v3242, %v3244
      %v3246 = vrot.slane %v2479, 3
      %v3247 = vrot.slane %v2379, 3
      %v3248 = vsel %vm3218, %v3246, %v3247
      %v3249 = vrot.slane %v2495, 3
      %v3250 = vsel %vm3218, %v3247, %v3249
      %v3251 = vrot.slane %v2480, 3
      %v3252 = vrot.slane %v2385, 3
      %v3253 = vsel %vm3218, %v3251, %v3252
      %v3254 = vrot.slane %v2496, 3
      %v3255 = vsel %vm3218, %v3252, %v3254
      %v3256 = vrot.slane %v2481, 3
      %v3257 = vrot.slane %v2391, 3
      %v3258 = vsel %vm3218, %v3256, %v3257
      %v3259 = vrot.slane %v2497, 3
      %v3260 = vsel %vm3218, %v3257, %v3259
      %v3261 = vrot.slane %v2482, 3
      %v3262 = vrot.slane %v2397, 3
      %v3263 = vsel %vm3218, %v3261, %v3262
      %v3264 = vrot.slane %v2498, 3
      %v3265 = vsel %vm3218, %v3262, %v3264
      %v3266 = vrot.slane %v2483, 3
      %v3267 = vrot.slane %v2403, 3
      %v3268 = vsel %vm3218, %v3266, %v3267
      %v3269 = vrot.slane %v2499, 3
      %v3270 = vsel %vm3218, %v3267, %v3269
      %v3271 = vrot.slane %v2484, 3
      %v3272 = vrot.slane %v2409, 3
      %v3273 = vsel %vm3218, %v3271, %v3272
      %v3274 = vrot.slane %v2500, 3
      %v3275 = vsel %vm3218, %v3272, %v3274
      %v3276 = vrot.slane %v2485, 3
      %v3277 = vrot.slane %v2415, 3
      %v3278 = vsel %vm3218, %v3276, %v3277
      %v3279 = vrot.slane %v2501, 3
      %v3280 = vsel %vm3218, %v3277, %v3279
      %v3281 = vrot.slane %v2486, 3
      %v3282 = vrot.slane %v2421, 3
      %v3283 = vsel %vm3218, %v3281, %v3282
      %v3284 = vrot.slane %v2502, 3
      %v3285 = vsel %vm3218, %v3282, %v3284
      %v3286 = vrot.slane %v2487, 3
      %v3287 = vrot.slane %v2427, 3
      %v3288 = vsel %vm3218, %v3286, %v3287
      %v3289 = vrot.slane %v2503, 3
      %v3290 = vsel %vm3218, %v3287, %v3289
      %s3291 = scalar_lea.vmem %s5, 24
      %v3292 = vld [vmem:[%s3291] sm:$0xff]
      %v3293 = vsel %vm717, %v3220, 0
      %v3295 = vsel %vm717, %v3223, 0
      %v3297 = vsel %vm717, %v3225, 0
      %v3299 = vsel %vm717, %v3228, 0
      %v3301 = vsel %vm717, %v3230, 0
      %v3303 = vsel %vm717, %v3233, 0
      %v3305 = vsel %vm717, %v3235, 0
      %v3307 = vsel %vm717, %v3238, 0
      %v3309 = vsel %vm717, %v3240, 0
      %v3311 = vsel %vm717, %v3243, 0
      %v3313 = vsel %vm717, %v3245, 0
      %v3315 = vsel %vm717, %v3248, 0
      %v3317 = vsel %vm717, %v3250, 0
      %v3319 = vsel %vm717, %v3253, 0
      %v3321 = vsel %vm717, %v3255, 0
      %v3323 = vsel %vm717, %v3258, 0
      %v3325 = vsel %vm717, %v3260, 0
      %v3327 = vsel %vm717, %v3263, 0
      %v3329 = vsel %vm717, %v3265, 0
      %v3331 = vsel %vm717, %v3268, 0
      %v3333 = vsel %vm717, %v3270, 0
      %v3335 = vsel %vm717, %v3273, 0
      %v3337 = vsel %vm717, %v3275, 0
      %v3339 = vsel %vm717, %v3278, 0
      %v3341 = vsel %vm717, %v3280, 0
      %v3343 = vsel %vm717, %v3283, 0
      %v3345 = vsel %vm717, %v3285, 0
      %v3347 = vsel %vm717, %v3288, 0
      %v3349 = vsel %vm717, %v3290, 0
      %3351 = vmatpush.msra.mxu0 0.0
      %3352 = vmatpush.msra.mxu0 0.0
      %3353 = vmatpush.msra.mxu0 0.0
      %3354 = vmatpush.msra.mxu0 0.0
      %3355 = vmatpush.msra.mxu0 0.0
      %3356 = vmatpush.msra.mxu0 0.0
      %3357 = vmatpush.msra.mxu0 0.0
      %3358 = vmatpush.msra.mxu0 0.0
      %3359 = vmatpush.msra.mxu0 0.0
      %3360 = vmatpush.msra.mxu0 0.0
      %3361 = vmatpush.msra.mxu0 0.0
      %3362 = vmatpush.msra.mxu0 0.0
      %3363 = vmatpush.msra.mxu0 0.0
      %3364 = vmatpush.msra.mxu0 0.0
      %3365 = vmatpush.msra.mxu0 0.0
      %3366 = vmatpush.msra.mxu0 %v3292
      %3367 = vmatmul.f32.gmra.mxu0 %v3293
      %v3368 = vpop.f32.mrf.mxu0
      %v3369 = vadd.f32 0.0, %v3368
      %3370 = vmatmul.f32.gmra.mxu0 %v3293
      %v3371 = vpop.f32.mrf.mxu0
      %v3372 = vadd.f32 0.0, %v3371
      %3373 = vmatmul.f32.gmra.mxu0 %v3293
      %v3374 = vpop.f32.mrf.mxu0
      %v3375 = vadd.f32 0.0, %v3374
      %3376 = vmatmul.f32.gmra.mxu0 %v3293
      %v3377 = vpop.f32.mrf.mxu0
      %v3378 = vadd.f32 0.0, %v3377
      %3379 = vmatmul.f32.gmra.mxu0 %v3295
      %v3380 = vpop.f32.mrf.mxu0
      %v3381 = vadd.f32 0.0, %v3380
      %3382 = vmatmul.f32.gmra.mxu0 %v3297
      %v3383 = vpop.f32.mrf.mxu0
      %v3384 = vadd.f32 0.0, %v3383
      %3385 = vmatmul.f32.gmra.mxu0 %v3299
      %v3386 = vpop.f32.mrf.mxu0
      %v3387 = vadd.f32 0.0, %v3386
      %3388 = vmatmul.f32.gmra.mxu0 %v3301
      %v3389 = vpop.f32.mrf.mxu0
      %v3390 = vadd.f32 0.0, %v3389
      %3391 = vmatmul.f32.gmra.mxu0 %v3303
      %v3392 = vpop.f32.mrf.mxu0
      %v3393 = vadd.f32 0.0, %v3392
      %3394 = vmatmul.f32.gmra.mxu0 %v3305
      %v3395 = vpop.f32.mrf.mxu0
      %v3396 = vadd.f32 0.0, %v3395
      %3397 = vmatmul.f32.gmra.mxu0 %v3307
      %v3398 = vpop.f32.mrf.mxu0
      %v3399 = vadd.f32 0.0, %v3398
      %3400 = vmatmul.f32.gmra.mxu0 %v3309
      %v3401 = vpop.f32.mrf.mxu0
      %v3402 = vadd.f32 0.0, %v3401
      %3403 = vmatmul.f32.gmra.mxu0 %v3311
      %v3404 = vpop.f32.mrf.mxu0
      %v3405 = vadd.f32 0.0, %v3404
      %3406 = vmatmul.f32.gmra.mxu0 %v3313
      %v3407 = vpop.f32.mrf.mxu0
      %v3408 = vadd.f32 0.0, %v3407
      %3409 = vmatmul.f32.gmra.mxu0 %v3315
      %v3410 = vpop.f32.mrf.mxu0
      %v3411 = vadd.f32 0.0, %v3410
      %3412 = vmatmul.f32.gmra.mxu0 %v3317
      %v3413 = vpop.f32.mrf.mxu0
      %v3414 = vadd.f32 0.0, %v3413
      %3415 = vmatmul.f32.gmra.mxu0 %v3319
      %v3416 = vpop.f32.mrf.mxu0
      %v3417 = vadd.f32 0.0, %v3416
      %3418 = vmatmul.f32.gmra.mxu0 %v3321
      %v3419 = vpop.f32.mrf.mxu0
      %v3420 = vadd.f32 0.0, %v3419
      %3421 = vmatmul.f32.gmra.mxu0 %v3323
      %v3422 = vpop.f32.mrf.mxu0
      %v3423 = vadd.f32 0.0, %v3422
      %3424 = vmatmul.f32.gmra.mxu0 %v3325
      %v3425 = vpop.f32.mrf.mxu0
      %v3426 = vadd.f32 0.0, %v3425
      %3427 = vmatmul.f32.gmra.mxu0 %v3327
      %v3428 = vpop.f32.mrf.mxu0
      %v3429 = vadd.f32 0.0, %v3428
      %3430 = vmatmul.f32.gmra.mxu0 %v3329
      %v3431 = vpop.f32.mrf.mxu0
      %v3432 = vadd.f32 0.0, %v3431
      %3433 = vmatmul.f32.gmra.mxu0 %v3331
      %v3434 = vpop.f32.mrf.mxu0
      %v3435 = vadd.f32 0.0, %v3434
      %3436 = vmatmul.f32.gmra.mxu0 %v3333
      %v3437 = vpop.f32.mrf.mxu0
      %v3438 = vadd.f32 0.0, %v3437
      %3439 = vmatmul.f32.gmra.mxu0 %v3335
      %v3440 = vpop.f32.mrf.mxu0
      %v3441 = vadd.f32 0.0, %v3440
      %3442 = vmatmul.f32.gmra.mxu0 %v3337
      %v3443 = vpop.f32.mrf.mxu0
      %v3444 = vadd.f32 0.0, %v3443
      %3445 = vmatmul.f32.gmra.mxu0 %v3339
      %v3446 = vpop.f32.mrf.mxu0
      %v3447 = vadd.f32 0.0, %v3446
      %3448 = vmatmul.f32.gmra.mxu0 %v3341
      %v3449 = vpop.f32.mrf.mxu0
      %v3450 = vadd.f32 0.0, %v3449
      %3451 = vmatmul.f32.gmra.mxu0 %v3343
      %v3452 = vpop.f32.mrf.mxu0
      %v3453 = vadd.f32 0.0, %v3452
      %3454 = vmatmul.f32.gmra.mxu0 %v3345
      %v3455 = vpop.f32.mrf.mxu0
      %v3456 = vadd.f32 0.0, %v3455
      %3457 = vmatmul.f32.gmra.mxu0 %v3347
      %v3458 = vpop.f32.mrf.mxu0
      %v3459 = vadd.f32 0.0, %v3458
      %3460 = vmatmul.f32.gmra.mxu0 %v3349
      %v3461 = vpop.f32.mrf.mxu0
      %v3462 = vadd.f32 0.0, %v3461
      %3463 = vdwg.mxu0
      %v3464 = vadd.f32 %v3186, %v3369
      %v3465 = vadd.f32 %v3187, %v3372
      %v3466 = vadd.f32 %v3188, %v3375
      %v3467 = vadd.f32 %v3189, %v3378
      %v3468 = vadd.f32 %v3190, %v3381
      %v3469 = vadd.f32 %v3191, %v3384
      %v3470 = vadd.f32 %v3192, %v3387
      %v3471 = vadd.f32 %v3193, %v3390
      %v3472 = vadd.f32 %v3194, %v3393
      %v3473 = vadd.f32 %v3195, %v3396
      %v3474 = vadd.f32 %v3196, %v3399
      %v3475 = vadd.f32 %v3197, %v3402
      %v3476 = vadd.f32 %v3198, %v3405
      %v3477 = vadd.f32 %v3199, %v3408
      %v3478 = vadd.f32 %v3200, %v3411
      %v3479 = vadd.f32 %v3201, %v3414
      %v3480 = vadd.f32 %v3202, %v3417
      %v3481 = vadd.f32 %v3203, %v3420
      %v3482 = vadd.f32 %v3204, %v3423
      %v3483 = vadd.f32 %v3205, %v3426
      %v3484 = vadd.f32 %v3206, %v3429
      %v3485 = vadd.f32 %v3207, %v3432
      %v3486 = vadd.f32 %v3208, %v3435
      %v3487 = vadd.f32 %v3209, %v3438
      %v3488 = vadd.f32 %v3210, %v3441
      %v3489 = vadd.f32 %v3211, %v3444
      %v3490 = vadd.f32 %v3212, %v3447
      %v3491 = vadd.f32 %v3213, %v3450
      %v3492 = vadd.f32 %v3214, %v3453
      %v3493 = vadd.f32 %v3215, %v3456
      %v3494 = vadd.f32 %v3216, %v3459
      %v3495 = vadd.f32 %v3217, %v3462
      %vm3496 = vcmask 1043456
      %v3497 = vrot.slane 0.0, 4
      %v3498 = vsel %vm3496, %v3497, %v3497
      %v3499 = vrot.slane %v2474, 4
      %v3500 = vrot.slane %v2349, 4
      %v3501 = vsel %vm3496, %v3499, %v3500
      %v3502 = vrot.slane %v2490, 4
      %v3503 = vsel %vm3496, %v3500, %v3502
      %v3504 = vrot.slane %v2475, 4
      %v3505 = vrot.slane %v2355, 4
      %v3506 = vsel %vm3496, %v3504, %v3505
      %v3507 = vrot.slane %v2491, 4
      %v3508 = vsel %vm3496, %v3505, %v3507
      %v3509 = vrot.slane %v2476, 4
      %v3510 = vrot.slane %v2361, 4
      %v3511 = vsel %vm3496, %v3509, %v3510
      %v3512 = vrot.slane %v2492, 4
      %v3513 = vsel %vm3496, %v3510, %v3512
      %v3514 = vrot.slane %v2477, 4
      %v3515 = vrot.slane %v2367, 4
      %v3516 = vsel %vm3496, %v3514, %v3515
      %v3517 = vrot.slane %v2493, 4
      %v3518 = vsel %vm3496, %v3515, %v3517
      %v3519 = vrot.slane %v2478, 4
      %v3520 = vrot.slane %v2373, 4
      %v3521 = vsel %vm3496, %v3519, %v3520
      %v3522 = vrot.slane %v2494, 4
      %v3523 = vsel %vm3496, %v3520, %v3522
      %v3524 = vrot.slane %v2479, 4
      %v3525 = vrot.slane %v2379, 4
      %v3526 = vsel %vm3496, %v3524, %v3525
      %v3527 = vrot.slane %v2495, 4
      %v3528 = vsel %vm3496, %v3525, %v3527
      %v3529 = vrot.slane %v2480, 4
      %v3530 = vrot.slane %v2385, 4
      %v3531 = vsel %vm3496, %v3529, %v3530
      %v3532 = vrot.slane %v2496, 4
      %v3533 = vsel %vm3496, %v3530, %v3532
      %v3534 = vrot.slane %v2481, 4
      %v3535 = vrot.slane %v2391, 4
      %v3536 = vsel %vm3496, %v3534, %v3535
      %v3537 = vrot.slane %v2497, 4
      %v3538 = vsel %vm3496, %v3535, %v3537
      %v3539 = vrot.slane %v2482, 4
      %v3540 = vrot.slane %v2397, 4
      %v3541 = vsel %vm3496, %v3539, %v3540
      %v3542 = vrot.slane %v2498, 4
      %v3543 = vsel %vm3496, %v3540, %v3542
      %v3544 = vrot.slane %v2483, 4
      %v3545 = vrot.slane %v2403, 4
      %v3546 = vsel %vm3496, %v3544, %v3545
      %v3547 = vrot.slane %v2499, 4
      %v3548 = vsel %vm3496, %v3545, %v3547
      %v3549 = vrot.slane %v2484, 4
      %v3550 = vrot.slane %v2409, 4
      %v3551 = vsel %vm3496, %v3549, %v3550
      %v3552 = vrot.slane %v2500, 4
      %v3553 = vsel %vm3496, %v3550, %v3552
      %v3554 = vrot.slane %v2485, 4
      %v3555 = vrot.slane %v2415, 4
      %v3556 = vsel %vm3496, %v3554, %v3555
      %v3557 = vrot.slane %v2501, 4
      %v3558 = vsel %vm3496, %v3555, %v3557
      %v3559 = vrot.slane %v2486, 4
      %v3560 = vrot.slane %v2421, 4
      %v3561 = vsel %vm3496, %v3559, %v3560
      %v3562 = vrot.slane %v2502, 4
      %v3563 = vsel %vm3496, %v3560, %v3562
      %v3564 = vrot.slane %v2487, 4
      %v3565 = vrot.slane %v2427, 4
      %v3566 = vsel %vm3496, %v3564, %v3565
      %v3567 = vrot.slane %v2503, 4
      %v3568 = vsel %vm3496, %v3565, %v3567
      %s3569 = scalar_lea.vmem %s5, 32
      %v3570 = vld [vmem:[%s3569] sm:$0xff]
      %v3571 = vsel %vm717, %v3498, 0
      %v3573 = vsel %vm717, %v3501, 0
      %v3575 = vsel %vm717, %v3503, 0
      %v3577 = vsel %vm717, %v3506, 0
      %v3579 = vsel %vm717, %v3508, 0
      %v3581 = vsel %vm717, %v3511, 0
      %v3583 = vsel %vm717, %v3513, 0
      %v3585 = vsel %vm717, %v3516, 0
      %v3587 = vsel %vm717, %v3518, 0
      %v3589 = vsel %vm717, %v3521, 0
      %v3591 = vsel %vm717, %v3523, 0
      %v3593 = vsel %vm717, %v3526, 0
      %v3595 = vsel %vm717, %v3528, 0
      %v3597 = vsel %vm717, %v3531, 0
      %v3599 = vsel %vm717, %v3533, 0
      %v3601 = vsel %vm717, %v3536, 0
      %v3603 = vsel %vm717, %v3538, 0
      %v3605 = vsel %vm717, %v3541, 0
      %v3607 = vsel %vm717, %v3543, 0
      %v3609 = vsel %vm717, %v3546, 0
      %v3611 = vsel %vm717, %v3548, 0
      %v3613 = vsel %vm717, %v3551, 0
      %v3615 = vsel %vm717, %v3553, 0
      %v3617 = vsel %vm717, %v3556, 0
      %v3619 = vsel %vm717, %v3558, 0
      %v3621 = vsel %vm717, %v3561, 0
      %v3623 = vsel %vm717, %v3563, 0
      %v3625 = vsel %vm717, %v3566, 0
      %v3627 = vsel %vm717, %v3568, 0
      %3629 = vmatpush.msra.mxu0 0.0
      %3630 = vmatpush.msra.mxu0 0.0
      %3631 = vmatpush.msra.mxu0 0.0
      %3632 = vmatpush.msra.mxu0 0.0
      %3633 = vmatpush.msra.mxu0 0.0
      %3634 = vmatpush.msra.mxu0 0.0
      %3635 = vmatpush.msra.mxu0 0.0
      %3636 = vmatpush.msra.mxu0 0.0
      %3637 = vmatpush.msra.mxu0 0.0
      %3638 = vmatpush.msra.mxu0 0.0
      %3639 = vmatpush.msra.mxu0 0.0
      %3640 = vmatpush.msra.mxu0 0.0
      %3641 = vmatpush.msra.mxu0 0.0
      %3642 = vmatpush.msra.mxu0 0.0
      %3643 = vmatpush.msra.mxu0 0.0
      %3644 = vmatpush.msra.mxu0 %v3570
      %3645 = vmatmul.f32.gmra.mxu0 %v3571
      %v3646 = vpop.f32.mrf.mxu0
      %v3647 = vadd.f32 0.0, %v3646
      %3648 = vmatmul.f32.gmra.mxu0 %v3571
      %v3649 = vpop.f32.mrf.mxu0
      %v3650 = vadd.f32 0.0, %v3649
      %3651 = vmatmul.f32.gmra.mxu0 %v3571
      %v3652 = vpop.f32.mrf.mxu0
      %v3653 = vadd.f32 0.0, %v3652
      %3654 = vmatmul.f32.gmra.mxu0 %v3571
      %v3655 = vpop.f32.mrf.mxu0
      %v3656 = vadd.f32 0.0, %v3655
      %3657 = vmatmul.f32.gmra.mxu0 %v3573
      %v3658 = vpop.f32.mrf.mxu0
      %v3659 = vadd.f32 0.0, %v3658
      %3660 = vmatmul.f32.gmra.mxu0 %v3575
      %v3661 = vpop.f32.mrf.mxu0
      %v3662 = vadd.f32 0.0, %v3661
      %3663 = vmatmul.f32.gmra.mxu0 %v3577
      %v3664 = vpop.f32.mrf.mxu0
      %v3665 = vadd.f32 0.0, %v3664
      %3666 = vmatmul.f32.gmra.mxu0 %v3579
      %v3667 = vpop.f32.mrf.mxu0
      %v3668 = vadd.f32 0.0, %v3667
      %3669 = vmatmul.f32.gmra.mxu0 %v3581
      %v3670 = vpop.f32.mrf.mxu0
      %v3671 = vadd.f32 0.0, %v3670
      %3672 = vmatmul.f32.gmra.mxu0 %v3583
      %v3673 = vpop.f32.mrf.mxu0
      %v3674 = vadd.f32 0.0, %v3673
      %3675 = vmatmul.f32.gmra.mxu0 %v3585
      %v3676 = vpop.f32.mrf.mxu0
      %v3677 = vadd.f32 0.0, %v3676
      %3678 = vmatmul.f32.gmra.mxu0 %v3587
      %v3679 = vpop.f32.mrf.mxu0
      %v3680 = vadd.f32 0.0, %v3679
      %3681 = vmatmul.f32.gmra.mxu0 %v3589
      %v3682 = vpop.f32.mrf.mxu0
      %v3683 = vadd.f32 0.0, %v3682
      %3684 = vmatmul.f32.gmra.mxu0 %v3591
      %v3685 = vpop.f32.mrf.mxu0
      %v3686 = vadd.f32 0.0, %v3685
      %3687 = vmatmul.f32.gmra.mxu0 %v3593
      %v3688 = vpop.f32.mrf.mxu0
      %v3689 = vadd.f32 0.0, %v3688
      %3690 = vmatmul.f32.gmra.mxu0 %v3595
      %v3691 = vpop.f32.mrf.mxu0
      %v3692 = vadd.f32 0.0, %v3691
      %3693 = vmatmul.f32.gmra.mxu0 %v3597
      %v3694 = vpop.f32.mrf.mxu0
      %v3695 = vadd.f32 0.0, %v3694
      %3696 = vmatmul.f32.gmra.mxu0 %v3599
      %v3697 = vpop.f32.mrf.mxu0
      %v3698 = vadd.f32 0.0, %v3697
      %3699 = vmatmul.f32.gmra.mxu0 %v3601
      %v3700 = vpop.f32.mrf.mxu0
      %v3701 = vadd.f32 0.0, %v3700
      %3702 = vmatmul.f32.gmra.mxu0 %v3603
      %v3703 = vpop.f32.mrf.mxu0
      %v3704 = vadd.f32 0.0, %v3703
      %3705 = vmatmul.f32.gmra.mxu0 %v3605
      %v3706 = vpop.f32.mrf.mxu0
      %v3707 = vadd.f32 0.0, %v3706
      %3708 = vmatmul.f32.gmra.mxu0 %v3607
      %v3709 = vpop.f32.mrf.mxu0
      %v3710 = vadd.f32 0.0, %v3709
      %3711 = vmatmul.f32.gmra.mxu0 %v3609
      %v3712 = vpop.f32.mrf.mxu0
      %v3713 = vadd.f32 0.0, %v3712
      %3714 = vmatmul.f32.gmra.mxu0 %v3611
      %v3715 = vpop.f32.mrf.mxu0
      %v3716 = vadd.f32 0.0, %v3715
      %3717 = vmatmul.f32.gmra.mxu0 %v3613
      %v3718 = vpop.f32.mrf.mxu0
      %v3719 = vadd.f32 0.0, %v3718
      %3720 = vmatmul.f32.gmra.mxu0 %v3615
      %v3721 = vpop.f32.mrf.mxu0
      %v3722 = vadd.f32 0.0, %v3721
      %3723 = vmatmul.f32.gmra.mxu0 %v3617
      %v3724 = vpop.f32.mrf.mxu0
      %v3725 = vadd.f32 0.0, %v3724
      %3726 = vmatmul.f32.gmra.mxu0 %v3619
      %v3727 = vpop.f32.mrf.mxu0
      %v3728 = vadd.f32 0.0, %v3727
      %3729 = vmatmul.f32.gmra.mxu0 %v3621
      %v3730 = vpop.f32.mrf.mxu0
      %v3731 = vadd.f32 0.0, %v3730
      %3732 = vmatmul.f32.gmra.mxu0 %v3623
      %v3733 = vpop.f32.mrf.mxu0
      %v3734 = vadd.f32 0.0, %v3733
      %3735 = vmatmul.f32.gmra.mxu0 %v3625
      %v3736 = vpop.f32.mrf.mxu0
      %v3737 = vadd.f32 0.0, %v3736
      %3738 = vmatmul.f32.gmra.mxu0 %v3627
      %v3739 = vpop.f32.mrf.mxu0
      %v3740 = vadd.f32 0.0, %v3739
      %3741 = vdwg.mxu0
      %v3742 = vadd.f32 %v3464, %v3647
      %v3743 = vadd.f32 %v3465, %v3650
      %v3744 = vadd.f32 %v3466, %v3653
      %v3745 = vadd.f32 %v3467, %v3656
      %v3746 = vadd.f32 %v3468, %v3659
      %v3747 = vadd.f32 %v3469, %v3662
      %v3748 = vadd.f32 %v3470, %v3665
      %v3749 = vadd.f32 %v3471, %v3668
      %v3750 = vadd.f32 %v3472, %v3671
      %v3751 = vadd.f32 %v3473, %v3674
      %v3752 = vadd.f32 %v3474, %v3677
      %v3753 = vadd.f32 %v3475, %v3680
      %v3754 = vadd.f32 %v3476, %v3683
      %v3755 = vadd.f32 %v3477, %v3686
      %v3756 = vadd.f32 %v3478, %v3689
      %v3757 = vadd.f32 %v3479, %v3692
      %v3758 = vadd.f32 %v3480, %v3695
      %v3759 = vadd.f32 %v3481, %v3698
      %v3760 = vadd.f32 %v3482, %v3701
      %v3761 = vadd.f32 %v3483, %v3704
      %v3762 = vadd.f32 %v3484, %v3707
      %v3763 = vadd.f32 %v3485, %v3710
      %v3764 = vadd.f32 %v3486, %v3713
      %v3765 = vadd.f32 %v3487, %v3716
      %v3766 = vadd.f32 %v3488, %v3719
      %v3767 = vadd.f32 %v3489, %v3722
      %v3768 = vadd.f32 %v3490, %v3725
      %v3769 = vadd.f32 %v3491, %v3728
      %v3770 = vadd.f32 %v3492, %v3731
      %v3771 = vadd.f32 %v3493, %v3734
      %v3772 = vadd.f32 %v3494, %v3737
      %v3773 = vadd.f32 %v3495, %v3740
      %s3774 = scalar_lea.vmem %s5, 40
      %v3775 = vld [vmem:[%s3774] sm:$0xff]
      %v3777 = vsel %vm717, %v2488, 0
      %v3779 = vsel %vm717, %v2433, 0
      %3781 = vmatpush.msra.mxu0 0.0
      %3782 = vmatpush.msra.mxu0 0.0
      %3783 = vmatpush.msra.mxu0 0.0
      %3784 = vmatpush.msra.mxu0 0.0
      %3785 = vmatpush.msra.mxu0 0.0
      %3786 = vmatpush.msra.mxu0 0.0
      %3787 = vmatpush.msra.mxu0 0.0
      %3788 = vmatpush.msra.mxu0 0.0
      %3789 = vmatpush.msra.mxu0 0.0
      %3790 = vmatpush.msra.mxu0 0.0
      %3791 = vmatpush.msra.mxu0 0.0
      %3792 = vmatpush.msra.mxu0 0.0
      %3793 = vmatpush.msra.mxu0 0.0
      %3794 = vmatpush.msra.mxu0 0.0
      %3795 = vmatpush.msra.mxu0 0.0
      %3796 = vmatpush.msra.mxu0 %v3775
      %3797 = vmatmul.f32.gmra.mxu0 %v893
      %v3798 = vpop.f32.mrf.mxu0
      %v3799 = vadd.f32 0.0, %v3798
      %3800 = vmatmul.f32.gmra.mxu0 %v893
      %v3801 = vpop.f32.mrf.mxu0
      %v3802 = vadd.f32 0.0, %v3801
      %3803 = vmatmul.f32.gmra.mxu0 %v2776
      %v3804 = vpop.f32.mrf.mxu0
      %v3805 = vadd.f32 0.0, %v3804
      %3806 = vmatmul.f32.gmra.mxu0 %v2778
      %v3807 = vpop.f32.mrf.mxu0
      %v3808 = vadd.f32 0.0, %v3807
      %3809 = vmatmul.f32.gmra.mxu0 %v2780
      %v3810 = vpop.f32.mrf.mxu0
      %v3811 = vadd.f32 0.0, %v3810
      %3812 = vmatmul.f32.gmra.mxu0 %v2782
      %v3813 = vpop.f32.mrf.mxu0
      %v3814 = vadd.f32 0.0, %v3813
      %3815 = vmatmul.f32.gmra.mxu0 %v2784
      %v3816 = vpop.f32.mrf.mxu0
      %v3817 = vadd.f32 0.0, %v3816
      %3818 = vmatmul.f32.gmra.mxu0 %v2786
      %v3819 = vpop.f32.mrf.mxu0
      %v3820 = vadd.f32 0.0, %v3819
      %3821 = vmatmul.f32.gmra.mxu0 %v2788
      %v3822 = vpop.f32.mrf.mxu0
      %v3823 = vadd.f32 0.0, %v3822
      %3824 = vmatmul.f32.gmra.mxu0 %v2790
      %v3825 = vpop.f32.mrf.mxu0
      %v3826 = vadd.f32 0.0, %v3825
      %3827 = vmatmul.f32.gmra.mxu0 %v2792
      %v3828 = vpop.f32.mrf.mxu0
      %v3829 = vadd.f32 0.0, %v3828
      %3830 = vmatmul.f32.gmra.mxu0 %v2794
      %v3831 = vpop.f32.mrf.mxu0
      %v3832 = vadd.f32 0.0, %v3831
      %3833 = vmatmul.f32.gmra.mxu0 %v2796
      %v3834 = vpop.f32.mrf.mxu0
      %v3835 = vadd.f32 0.0, %v3834
      %3836 = vmatmul.f32.gmra.mxu0 %v2798
      %v3837 = vpop.f32.mrf.mxu0
      %v3838 = vadd.f32 0.0, %v3837
      %3839 = vmatmul.f32.gmra.mxu0 %v2800
      %v3840 = vpop.f32.mrf.mxu0
      %v3841 = vadd.f32 0.0, %v3840
      %3842 = vmatmul.f32.gmra.mxu0 %v2802
      %v3843 = vpop.f32.mrf.mxu0
      %v3844 = vadd.f32 0.0, %v3843
      %3845 = vmatmul.f32.gmra.mxu0 %v2804
      %v3846 = vpop.f32.mrf.mxu0
      %v3847 = vadd.f32 0.0, %v3846
      %3848 = vmatmul.f32.gmra.mxu0 %v2806
      %v3849 = vpop.f32.mrf.mxu0
      %v3850 = vadd.f32 0.0, %v3849
      %3851 = vmatmul.f32.gmra.mxu0 %v2808
      %v3852 = vpop.f32.mrf.mxu0
      %v3853 = vadd.f32 0.0, %v3852
      %3854 = vmatmul.f32.gmra.mxu0 %v2810
      %v3855 = vpop.f32.mrf.mxu0
      %v3856 = vadd.f32 0.0, %v3855
      %3857 = vmatmul.f32.gmra.mxu0 %v2812
      %v3858 = vpop.f32.mrf.mxu0
      %v3859 = vadd.f32 0.0, %v3858
      %3860 = vmatmul.f32.gmra.mxu0 %v2814
      %v3861 = vpop.f32.mrf.mxu0
      %v3862 = vadd.f32 0.0, %v3861
      %3863 = vmatmul.f32.gmra.mxu0 %v2816
      %v3864 = vpop.f32.mrf.mxu0
      %v3865 = vadd.f32 0.0, %v3864
      %3866 = vmatmul.f32.gmra.mxu0 %v2818
      %v3867 = vpop.f32.mrf.mxu0
      %v3868 = vadd.f32 0.0, %v3867
      %3869 = vmatmul.f32.gmra.mxu0 %v2820
      %v3870 = vpop.f32.mrf.mxu0
      %v3871 = vadd.f32 0.0, %v3870
      %3872 = vmatmul.f32.gmra.mxu0 %v2822
      %v3873 = vpop.f32.mrf.mxu0
      %v3874 = vadd.f32 0.0, %v3873
      %3875 = vmatmul.f32.gmra.mxu0 %v2824
      %v3876 = vpop.f32.mrf.mxu0
      %v3877 = vadd.f32 0.0, %v3876
      %3878 = vmatmul.f32.gmra.mxu0 %v2826
      %v3879 = vpop.f32.mrf.mxu0
      %v3880 = vadd.f32 0.0, %v3879
      %3881 = vmatmul.f32.gmra.mxu0 %v2828
      %v3882 = vpop.f32.mrf.mxu0
      %v3883 = vadd.f32 0.0, %v3882
      %3884 = vmatmul.f32.gmra.mxu0 %v2830
      %v3885 = vpop.f32.mrf.mxu0
      %v3886 = vadd.f32 0.0, %v3885
      %3887 = vmatmul.f32.gmra.mxu0 %v3777
      %v3888 = vpop.f32.mrf.mxu0
      %v3889 = vadd.f32 0.0, %v3888
      %3890 = vmatmul.f32.gmra.mxu0 %v3779
      %v3891 = vpop.f32.mrf.mxu0
      %v3892 = vadd.f32 0.0, %v3891
      %3893 = vdwg.mxu0
      %v3894 = vadd.f32 %v3742, %v3799
      %v3895 = vadd.f32 %v3743, %v3802
      %v3896 = vadd.f32 %v3744, %v3805
      %v3897 = vadd.f32 %v3745, %v3808
      %v3898 = vadd.f32 %v3746, %v3811
      %v3899 = vadd.f32 %v3747, %v3814
      %v3900 = vadd.f32 %v3748, %v3817
      %v3901 = vadd.f32 %v3749, %v3820
      %v3902 = vadd.f32 %v3750, %v3823
      %v3903 = vadd.f32 %v3751, %v3826
      %v3904 = vadd.f32 %v3752, %v3829
      %v3905 = vadd.f32 %v3753, %v3832
      %v3906 = vadd.f32 %v3754, %v3835
      %v3907 = vadd.f32 %v3755, %v3838
      %v3908 = vadd.f32 %v3756, %v3841
      %v3909 = vadd.f32 %v3757, %v3844
      %v3910 = vadd.f32 %v3758, %v3847
      %v3911 = vadd.f32 %v3759, %v3850
      %v3912 = vadd.f32 %v3760, %v3853
      %v3913 = vadd.f32 %v3761, %v3856
      %v3914 = vadd.f32 %v3762, %v3859
      %v3915 = vadd.f32 %v3763, %v3862
      %v3916 = vadd.f32 %v3764, %v3865
      %v3917 = vadd.f32 %v3765, %v3868
      %v3918 = vadd.f32 %v3766, %v3871
      %v3919 = vadd.f32 %v3767, %v3874
      %v3920 = vadd.f32 %v3768, %v3877
      %v3921 = vadd.f32 %v3769, %v3880
      %v3922 = vadd.f32 %v3770, %v3883
      %v3923 = vadd.f32 %v3771, %v3886
      %v3924 = vadd.f32 %v3772, %v3889
      %v3925 = vadd.f32 %v3773, %v3892
      %v3927 = vrot.slane %v2488, 1
      %v3928 = vrot.slane %v2433, 1
      %v3929 = vsel %vm637, %v3927, %v3928
      %v3930 = vrot.slane %v2504, 1
      %v3931 = vsel %vm637, %v3928, %v3930
      %s3932 = scalar_lea.vmem %s5, 48
      %v3933 = vld [vmem:[%s3932] sm:$0xff]
      %v3934 = vsel %vm717, %v3929, 0
      %v3936 = vsel %vm717, %v3931, 0
      %3938 = vmatpush.msra.mxu0 0.0
      %3939 = vmatpush.msra.mxu0 0.0
      %3940 = vmatpush.msra.mxu0 0.0
      %3941 = vmatpush.msra.mxu0 0.0
      %3942 = vmatpush.msra.mxu0 0.0
      %3943 = vmatpush.msra.mxu0 0.0
      %3944 = vmatpush.msra.mxu0 0.0
      %3945 = vmatpush.msra.mxu0 0.0
      %3946 = vmatpush.msra.mxu0 0.0
      %3947 = vmatpush.msra.mxu0 0.0
      %3948 = vmatpush.msra.mxu0 0.0
      %3949 = vmatpush.msra.mxu0 0.0
      %3950 = vmatpush.msra.mxu0 0.0
      %3951 = vmatpush.msra.mxu0 0.0
      %3952 = vmatpush.msra.mxu0 0.0
      %3953 = vmatpush.msra.mxu0 %v3933
      %3954 = vmatmul.f32.gmra.mxu0 %v718
      %v3955 = vpop.f32.mrf.mxu0
      %v3956 = vadd.f32 0.0, %v3955
      %3957 = vmatmul.f32.gmra.mxu0 %v718
      %v3958 = vpop.f32.mrf.mxu0
      %v3959 = vadd.f32 0.0, %v3958
      %3960 = vmatmul.f32.gmra.mxu0 %v2607
      %v3961 = vpop.f32.mrf.mxu0
      %v3962 = vadd.f32 0.0, %v3961
      %3963 = vmatmul.f32.gmra.mxu0 %v2609
      %v3964 = vpop.f32.mrf.mxu0
      %v3965 = vadd.f32 0.0, %v3964
      %3966 = vmatmul.f32.gmra.mxu0 %v2611
      %v3967 = vpop.f32.mrf.mxu0
      %v3968 = vadd.f32 0.0, %v3967
      %3969 = vmatmul.f32.gmra.mxu0 %v2613
      %v3970 = vpop.f32.mrf.mxu0
      %v3971 = vadd.f32 0.0, %v3970
      %3972 = vmatmul.f32.gmra.mxu0 %v2615
      %v3973 = vpop.f32.mrf.mxu0
      %v3974 = vadd.f32 0.0, %v3973
      %3975 = vmatmul.f32.gmra.mxu0 %v2617
      %v3976 = vpop.f32.mrf.mxu0
      %v3977 = vadd.f32 0.0, %v3976
      %3978 = vmatmul.f32.gmra.mxu0 %v2619
      %v3979 = vpop.f32.mrf.mxu0
      %v3980 = vadd.f32 0.0, %v3979
      %3981 = vmatmul.f32.gmra.mxu0 %v2621
      %v3982 = vpop.f32.mrf.mxu0
      %v3983 = vadd.f32 0.0, %v3982
      %3984 = vmatmul.f32.gmra.mxu0 %v2623
      %v3985 = vpop.f32.mrf.mxu0
      %v3986 = vadd.f32 0.0, %v3985
      %3987 = vmatmul.f32.gmra.mxu0 %v2625
      %v3988 = vpop.f32.mrf.mxu0
      %v3989 = vadd.f32 0.0, %v3988
      %3990 = vmatmul.f32.gmra.mxu0 %v2627
      %v3991 = vpop.f32.mrf.mxu0
      %v3992 = vadd.f32 0.0, %v3991
      %3993 = vmatmul.f32.gmra.mxu0 %v2629
      %v3994 = vpop.f32.mrf.mxu0
      %v3995 = vadd.f32 0.0, %v3994
      %3996 = vmatmul.f32.gmra.mxu0 %v2631
      %v3997 = vpop.f32.mrf.mxu0
      %v3998 = vadd.f32 0.0, %v3997
      %3999 = vmatmul.f32.gmra.mxu0 %v2633
      %v4000 = vpop.f32.mrf.mxu0
      %v4001 = vadd.f32 0.0, %v4000
      %4002 = vmatmul.f32.gmra.mxu0 %v2635
      %v4003 = vpop.f32.mrf.mxu0
      %v4004 = vadd.f32 0.0, %v4003
      %4005 = vmatmul.f32.gmra.mxu0 %v2637
      %v4006 = vpop.f32.mrf.mxu0
      %v4007 = vadd.f32 0.0, %v4006
      %4008 = vmatmul.f32.gmra.mxu0 %v2639
      %v4009 = vpop.f32.mrf.mxu0
      %v4010 = vadd.f32 0.0, %v4009
      %4011 = vmatmul.f32.gmra.mxu0 %v2641
      %v4012 = vpop.f32.mrf.mxu0
      %v4013 = vadd.f32 0.0, %v4012
      %4014 = vmatmul.f32.gmra.mxu0 %v2643
      %v4015 = vpop.f32.mrf.mxu0
      %v4016 = vadd.f32 0.0, %v4015
      %4017 = vmatmul.f32.gmra.mxu0 %v2645
      %v4018 = vpop.f32.mrf.mxu0
      %v4019 = vadd.f32 0.0, %v4018
      %4020 = vmatmul.f32.gmra.mxu0 %v2647
      %v4021 = vpop.f32.mrf.mxu0
      %v4022 = vadd.f32 0.0, %v4021
      %4023 = vmatmul.f32.gmra.mxu0 %v2649
      %v4024 = vpop.f32.mrf.mxu0
      %v4025 = vadd.f32 0.0, %v4024
      %4026 = vmatmul.f32.gmra.mxu0 %v2651
      %v4027 = vpop.f32.mrf.mxu0
      %v4028 = vadd.f32 0.0, %v4027
      %4029 = vmatmul.f32.gmra.mxu0 %v2653
      %v4030 = vpop.f32.mrf.mxu0
      %v4031 = vadd.f32 0.0, %v4030
      %4032 = vmatmul.f32.gmra.mxu0 %v2655
      %v4033 = vpop.f32.mrf.mxu0
      %v4034 = vadd.f32 0.0, %v4033
      %4035 = vmatmul.f32.gmra.mxu0 %v2657
      %v4036 = vpop.f32.mrf.mxu0
      %v4037 = vadd.f32 0.0, %v4036
      %4038 = vmatmul.f32.gmra.mxu0 %v2659
      %v4039 = vpop.f32.mrf.mxu0
      %v4040 = vadd.f32 0.0, %v4039
      %4041 = vmatmul.f32.gmra.mxu0 %v2661
      %v4042 = vpop.f32.mrf.mxu0
      %v4043 = vadd.f32 0.0, %v4042
      %4044 = vmatmul.f32.gmra.mxu0 %v3934
      %v4045 = vpop.f32.mrf.mxu0
      %v4046 = vadd.f32 0.0, %v4045
      %4047 = vmatmul.f32.gmra.mxu0 %v3936
      %v4048 = vpop.f32.mrf.mxu0
      %v4049 = vadd.f32 0.0, %v4048
      %4050 = vdwg.mxu0
      %v4051 = vadd.f32 %v3894, %v3956
      %v4052 = vadd.f32 %v3895, %v3959
      %v4053 = vadd.f32 %v3896, %v3962
      %v4054 = vadd.f32 %v3897, %v3965
      %v4055 = vadd.f32 %v3898, %v3968
      %v4056 = vadd.f32 %v3899, %v3971
      %v4057 = vadd.f32 %v3900, %v3974
      %v4058 = vadd.f32 %v3901, %v3977
      %v4059 = vadd.f32 %v3902, %v3980
      %v4060 = vadd.f32 %v3903, %v3983
      %v4061 = vadd.f32 %v3904, %v3986
      %v4062 = vadd.f32 %v3905, %v3989
      %v4063 = vadd.f32 %v3906, %v3992
      %v4064 = vadd.f32 %v3907, %v3995
      %v4065 = vadd.f32 %v3908, %v3998
      %v4066 = vadd.f32 %v3909, %v4001
      %v4067 = vadd.f32 %v3910, %v4004
      %v4068 = vadd.f32 %v3911, %v4007
      %v4069 = vadd.f32 %v3912, %v4010
      %v4070 = vadd.f32 %v3913, %v4013
      %v4071 = vadd.f32 %v3914, %v4016
      %v4072 = vadd.f32 %v3915, %v4019
      %v4073 = vadd.f32 %v3916, %v4022
      %v4074 = vadd.f32 %v3917, %v4025
      %v4075 = vadd.f32 %v3918, %v4028
      %v4076 = vadd.f32 %v3919, %v4031
      %v4077 = vadd.f32 %v3920, %v4034
      %v4078 = vadd.f32 %v3921, %v4037
      %v4079 = vadd.f32 %v3922, %v4040
      %v4080 = vadd.f32 %v3923, %v4043
      %v4081 = vadd.f32 %v3924, %v4046
      %v4082 = vadd.f32 %v3925, %v4049
      %v4083 = vrot.slane %v2488, 2
      %v4084 = vrot.slane %v2433, 2
      %v4085 = vsel %vm1068, %v4083, %v4084
      %v4086 = vrot.slane %v2504, 2
      %v4087 = vsel %vm1068, %v4084, %v4086
      %s4088 = scalar_lea.vmem %s5, 56
      %v4089 = vld [vmem:[%s4088] sm:$0xff]
      %v4090 = vsel %vm717, %v4085, 0
      %v4092 = vsel %vm717, %v4087, 0
      %4094 = vmatpush.msra.mxu0 0.0
      %4095 = vmatpush.msra.mxu0 0.0
      %4096 = vmatpush.msra.mxu0 0.0
      %4097 = vmatpush.msra.mxu0 0.0
      %4098 = vmatpush.msra.mxu0 0.0
      %4099 = vmatpush.msra.mxu0 0.0
      %4100 = vmatpush.msra.mxu0 0.0
      %4101 = vmatpush.msra.mxu0 0.0
      %4102 = vmatpush.msra.mxu0 0.0
      %4103 = vmatpush.msra.mxu0 0.0
      %4104 = vmatpush.msra.mxu0 0.0
      %4105 = vmatpush.msra.mxu0 0.0
      %4106 = vmatpush.msra.mxu0 0.0
      %4107 = vmatpush.msra.mxu0 0.0
      %4108 = vmatpush.msra.mxu0 0.0
      %4109 = vmatpush.msra.mxu0 %v4089
      %4110 = vmatmul.f32.gmra.mxu0 %v1148
      %v4111 = vpop.f32.mrf.mxu0
      %v4112 = vadd.f32 0.0, %v4111
      %4113 = vmatmul.f32.gmra.mxu0 %v1148
      %v4114 = vpop.f32.mrf.mxu0
      %v4115 = vadd.f32 0.0, %v4114
      %4116 = vmatmul.f32.gmra.mxu0 %v3017
      %v4117 = vpop.f32.mrf.mxu0
      %v4118 = vadd.f32 0.0, %v4117
      %4119 = vmatmul.f32.gmra.mxu0 %v3019
      %v4120 = vpop.f32.mrf.mxu0
      %v4121 = vadd.f32 0.0, %v4120
      %4122 = vmatmul.f32.gmra.mxu0 %v3021
      %v4123 = vpop.f32.mrf.mxu0
      %v4124 = vadd.f32 0.0, %v4123
      %4125 = vmatmul.f32.gmra.mxu0 %v3023
      %v4126 = vpop.f32.mrf.mxu0
      %v4127 = vadd.f32 0.0, %v4126
      %4128 = vmatmul.f32.gmra.mxu0 %v3025
      %v4129 = vpop.f32.mrf.mxu0
      %v4130 = vadd.f32 0.0, %v4129
      %4131 = vmatmul.f32.gmra.mxu0 %v3027
      %v4132 = vpop.f32.mrf.mxu0
      %v4133 = vadd.f32 0.0, %v4132
      %4134 = vmatmul.f32.gmra.mxu0 %v3029
      %v4135 = vpop.f32.mrf.mxu0
      %v4136 = vadd.f32 0.0, %v4135
      %4137 = vmatmul.f32.gmra.mxu0 %v3031
      %v4138 = vpop.f32.mrf.mxu0
      %v4139 = vadd.f32 0.0, %v4138
      %4140 = vmatmul.f32.gmra.mxu0 %v3033
      %v4141 = vpop.f32.mrf.mxu0
      %v4142 = vadd.f32 0.0, %v4141
      %4143 = vmatmul.f32.gmra.mxu0 %v3035
      %v4144 = vpop.f32.mrf.mxu0
      %v4145 = vadd.f32 0.0, %v4144
      %4146 = vmatmul.f32.gmra.mxu0 %v3037
      %v4147 = vpop.f32.mrf.mxu0
      %v4148 = vadd.f32 0.0, %v4147
      %4149 = vmatmul.f32.gmra.mxu0 %v3039
      %v4150 = vpop.f32.mrf.mxu0
      %v4151 = vadd.f32 0.0, %v4150
      %4152 = vmatmul.f32.gmra.mxu0 %v3041
      %v4153 = vpop.f32.mrf.mxu0
      %v4154 = vadd.f32 0.0, %v4153
      %4155 = vmatmul.f32.gmra.mxu0 %v3043
      %v4156 = vpop.f32.mrf.mxu0
      %v4157 = vadd.f32 0.0, %v4156
      %4158 = vmatmul.f32.gmra.mxu0 %v3045
      %v4159 = vpop.f32.mrf.mxu0
      %v4160 = vadd.f32 0.0, %v4159
      %4161 = vmatmul.f32.gmra.mxu0 %v3047
      %v4162 = vpop.f32.mrf.mxu0
      %v4163 = vadd.f32 0.0, %v4162
      %4164 = vmatmul.f32.gmra.mxu0 %v3049
      %v4165 = vpop.f32.mrf.mxu0
      %v4166 = vadd.f32 0.0, %v4165
      %4167 = vmatmul.f32.gmra.mxu0 %v3051
      %v4168 = vpop.f32.mrf.mxu0
      %v4169 = vadd.f32 0.0, %v4168
      %4170 = vmatmul.f32.gmra.mxu0 %v3053
      %v4171 = vpop.f32.mrf.mxu0
      %v4172 = vadd.f32 0.0, %v4171
      %4173 = vmatmul.f32.gmra.mxu0 %v3055
      %v4174 = vpop.f32.mrf.mxu0
      %v4175 = vadd.f32 0.0, %v4174
      %4176 = vmatmul.f32.gmra.mxu0 %v3057
      %v4177 = vpop.f32.mrf.mxu0
      %v4178 = vadd.f32 0.0, %v4177
      %4179 = vmatmul.f32.gmra.mxu0 %v3059
      %v4180 = vpop.f32.mrf.mxu0
      %v4181 = vadd.f32 0.0, %v4180
      %4182 = vmatmul.f32.gmra.mxu0 %v3061
      %v4183 = vpop.f32.mrf.mxu0
      %v4184 = vadd.f32 0.0, %v4183
      %4185 = vmatmul.f32.gmra.mxu0 %v3063
      %v4186 = vpop.f32.mrf.mxu0
      %v4187 = vadd.f32 0.0, %v4186
      %4188 = vmatmul.f32.gmra.mxu0 %v3065
      %v4189 = vpop.f32.mrf.mxu0
      %v4190 = vadd.f32 0.0, %v4189
      %4191 = vmatmul.f32.gmra.mxu0 %v3067
      %v4192 = vpop.f32.mrf.mxu0
      %v4193 = vadd.f32 0.0, %v4192
      %4194 = vmatmul.f32.gmra.mxu0 %v3069
      %v4195 = vpop.f32.mrf.mxu0
      %v4196 = vadd.f32 0.0, %v4195
      %4197 = vmatmul.f32.gmra.mxu0 %v3071
      %v4198 = vpop.f32.mrf.mxu0
      %v4199 = vadd.f32 0.0, %v4198
      %4200 = vmatmul.f32.gmra.mxu0 %v4090
      %v4201 = vpop.f32.mrf.mxu0
      %v4202 = vadd.f32 0.0, %v4201
      %4203 = vmatmul.f32.gmra.mxu0 %v4092
      %v4204 = vpop.f32.mrf.mxu0
      %v4205 = vadd.f32 0.0, %v4204
      %4206 = vdwg.mxu0
      %v4207 = vadd.f32 %v4051, %v4112
      %v4208 = vadd.f32 %v4052, %v4115
      %v4209 = vadd.f32 %v4053, %v4118
      %v4210 = vadd.f32 %v4054, %v4121
      %v4211 = vadd.f32 %v4055, %v4124
      %v4212 = vadd.f32 %v4056, %v4127
      %v4213 = vadd.f32 %v4057, %v4130
      %v4214 = vadd.f32 %v4058, %v4133
      %v4215 = vadd.f32 %v4059, %v4136
      %v4216 = vadd.f32 %v4060, %v4139
      %v4217 = vadd.f32 %v4061, %v4142
      %v4218 = vadd.f32 %v4062, %v4145
      %v4219 = vadd.f32 %v4063, %v4148
      %v4220 = vadd.f32 %v4064, %v4151
      %v4221 = vadd.f32 %v4065, %v4154
      %v4222 = vadd.f32 %v4066, %v4157
      %v4223 = vadd.f32 %v4067, %v4160
      %v4224 = vadd.f32 %v4068, %v4163
      %v4225 = vadd.f32 %v4069, %v4166
      %v4226 = vadd.f32 %v4070, %v4169
      %v4227 = vadd.f32 %v4071, %v4172
      %v4228 = vadd.f32 %v4072, %v4175
      %v4229 = vadd.f32 %v4073, %v4178
      %v4230 = vadd.f32 %v4074, %v4181
      %v4231 = vadd.f32 %v4075, %v4184
      %v4232 = vadd.f32 %v4076, %v4187
      %v4233 = vadd.f32 %v4077, %v4190
      %v4234 = vadd.f32 %v4078, %v4193
      %v4235 = vadd.f32 %v4079, %v4196
      %v4236 = vadd.f32 %v4080, %v4199
      %v4237 = vadd.f32 %v4081, %v4202
      %v4238 = vadd.f32 %v4082, %v4205
      %v4239 = vrot.slane %v2488, 3
      %v4240 = vrot.slane %v2433, 3
      %v4241 = vsel %vm3218, %v4239, %v4240
      %v4242 = vrot.slane %v2504, 3
      %v4243 = vsel %vm3218, %v4240, %v4242
      %s4244 = scalar_lea.vmem %s5, 64
      %v4245 = vld [vmem:[%s4244] sm:$0xff]
      %v4246 = vsel %vm717, %v4241, 0
      %v4248 = vsel %vm717, %v4243, 0
      %4250 = vmatpush.msra.mxu0 0.0
      %4251 = vmatpush.msra.mxu0 0.0
      %4252 = vmatpush.msra.mxu0 0.0
      %4253 = vmatpush.msra.mxu0 0.0
      %4254 = vmatpush.msra.mxu0 0.0
      %4255 = vmatpush.msra.mxu0 0.0
      %4256 = vmatpush.msra.mxu0 0.0
      %4257 = vmatpush.msra.mxu0 0.0
      %4258 = vmatpush.msra.mxu0 0.0
      %4259 = vmatpush.msra.mxu0 0.0
      %4260 = vmatpush.msra.mxu0 0.0
      %4261 = vmatpush.msra.mxu0 0.0
      %4262 = vmatpush.msra.mxu0 0.0
      %4263 = vmatpush.msra.mxu0 0.0
      %4264 = vmatpush.msra.mxu0 0.0
      %4265 = vmatpush.msra.mxu0 %v4245
      %4266 = vmatmul.f32.gmra.mxu0 %v3293
      %v4267 = vpop.f32.mrf.mxu0
      %v4268 = vadd.f32 0.0, %v4267
      %4269 = vmatmul.f32.gmra.mxu0 %v3293
      %v4270 = vpop.f32.mrf.mxu0
      %v4271 = vadd.f32 0.0, %v4270
      %4272 = vmatmul.f32.gmra.mxu0 %v3295
      %v4273 = vpop.f32.mrf.mxu0
      %v4274 = vadd.f32 0.0, %v4273
      %4275 = vmatmul.f32.gmra.mxu0 %v3297
      %v4276 = vpop.f32.mrf.mxu0
      %v4277 = vadd.f32 0.0, %v4276
      %4278 = vmatmul.f32.gmra.mxu0 %v3299
      %v4279 = vpop.f32.mrf.mxu0
      %v4280 = vadd.f32 0.0, %v4279
      %4281 = vmatmul.f32.gmra.mxu0 %v3301
      %v4282 = vpop.f32.mrf.mxu0
      %v4283 = vadd.f32 0.0, %v4282
      %4284 = vmatmul.f32.gmra.mxu0 %v3303
      %v4285 = vpop.f32.mrf.mxu0
      %v4286 = vadd.f32 0.0, %v4285
      %4287 = vmatmul.f32.gmra.mxu0 %v3305
      %v4288 = vpop.f32.mrf.mxu0
      %v4289 = vadd.f32 0.0, %v4288
      %4290 = vmatmul.f32.gmra.mxu0 %v3307
      %v4291 = vpop.f32.mrf.mxu0
      %v4292 = vadd.f32 0.0, %v4291
      %4293 = vmatmul.f32.gmra.mxu0 %v3309
      %v4294 = vpop.f32.mrf.mxu0
      %v4295 = vadd.f32 0.0, %v4294
      %4296 = vmatmul.f32.gmra.mxu0 %v3311
      %v4297 = vpop.f32.mrf.mxu0
      %v4298 = vadd.f32 0.0, %v4297
      %4299 = vmatmul.f32.gmra.mxu0 %v3313
      %v4300 = vpop.f32.mrf.mxu0
      %v4301 = vadd.f32 0.0, %v4300
      %4302 = vmatmul.f32.gmra.mxu0 %v3315
      %v4303 = vpop.f32.mrf.mxu0
      %v4304 = vadd.f32 0.0, %v4303
      %4305 = vmatmul.f32.gmra.mxu0 %v3317
      %v4306 = vpop.f32.mrf.mxu0
      %v4307 = vadd.f32 0.0, %v4306
      %4308 = vmatmul.f32.gmra.mxu0 %v3319
      %v4309 = vpop.f32.mrf.mxu0
      %v4310 = vadd.f32 0.0, %v4309
      %4311 = vmatmul.f32.gmra.mxu0 %v3321
      %v4312 = vpop.f32.mrf.mxu0
      %v4313 = vadd.f32 0.0, %v4312
      %4314 = vmatmul.f32.gmra.mxu0 %v3323
      %v4315 = vpop.f32.mrf.mxu0
      %v4316 = vadd.f32 0.0, %v4315
      %4317 = vmatmul.f32.gmra.mxu0 %v3325
      %v4318 = vpop.f32.mrf.mxu0
      %v4319 = vadd.f32 0.0, %v4318
      %4320 = vmatmul.f32.gmra.mxu0 %v3327
      %v4321 = vpop.f32.mrf.mxu0
      %v4322 = vadd.f32 0.0, %v4321
      %4323 = vmatmul.f32.gmra.mxu0 %v3329
      %v4324 = vpop.f32.mrf.mxu0
      %v4325 = vadd.f32 0.0, %v4324
      %4326 = vmatmul.f32.gmra.mxu0 %v3331
      %v4327 = vpop.f32.mrf.mxu0
      %v4328 = vadd.f32 0.0, %v4327
      %4329 = vmatmul.f32.gmra.mxu0 %v3333
      %v4330 = vpop.f32.mrf.mxu0
      %v4331 = vadd.f32 0.0, %v4330
      %4332 = vmatmul.f32.gmra.mxu0 %v3335
      %v4333 = vpop.f32.mrf.mxu0
      %v4334 = vadd.f32 0.0, %v4333
      %4335 = vmatmul.f32.gmra.mxu0 %v3337
      %v4336 = vpop.f32.mrf.mxu0
      %v4337 = vadd.f32 0.0, %v4336
      %4338 = vmatmul.f32.gmra.mxu0 %v3339
      %v4339 = vpop.f32.mrf.mxu0
      %v4340 = vadd.f32 0.0, %v4339
      %4341 = vmatmul.f32.gmra.mxu0 %v3341
      %v4342 = vpop.f32.mrf.mxu0
      %v4343 = vadd.f32 0.0, %v4342
      %4344 = vmatmul.f32.gmra.mxu0 %v3343
      %v4345 = vpop.f32.mrf.mxu0
      %v4346 = vadd.f32 0.0, %v4345
      %4347 = vmatmul.f32.gmra.mxu0 %v3345
      %v4348 = vpop.f32.mrf.mxu0
      %v4349 = vadd.f32 0.0, %v4348
      %4350 = vmatmul.f32.gmra.mxu0 %v3347
      %v4351 = vpop.f32.mrf.mxu0
      %v4352 = vadd.f32 0.0, %v4351
      %4353 = vmatmul.f32.gmra.mxu0 %v3349
      %v4354 = vpop.f32.mrf.mxu0
      %v4355 = vadd.f32 0.0, %v4354
      %4356 = vmatmul.f32.gmra.mxu0 %v4246
      %v4357 = vpop.f32.mrf.mxu0
      %v4358 = vadd.f32 0.0, %v4357
      %4359 = vmatmul.f32.gmra.mxu0 %v4248
      %v4360 = vpop.f32.mrf.mxu0
      %v4361 = vadd.f32 0.0, %v4360
      %4362 = vdwg.mxu0
      %v4363 = vadd.f32 %v4207, %v4268
      %v4364 = vadd.f32 %v4208, %v4271
      %v4365 = vadd.f32 %v4209, %v4274
      %v4366 = vadd.f32 %v4210, %v4277
      %v4367 = vadd.f32 %v4211, %v4280
      %v4368 = vadd.f32 %v4212, %v4283
      %v4369 = vadd.f32 %v4213, %v4286
      %v4370 = vadd.f32 %v4214, %v4289
      %v4371 = vadd.f32 %v4215, %v4292
      %v4372 = vadd.f32 %v4216, %v4295
      %v4373 = vadd.f32 %v4217, %v4298
      %v4374 = vadd.f32 %v4218, %v4301
      %v4375 = vadd.f32 %v4219, %v4304
      %v4376 = vadd.f32 %v4220, %v4307
      %v4377 = vadd.f32 %v4221, %v4310
      %v4378 = vadd.f32 %v4222, %v4313
      %v4379 = vadd.f32 %v4223, %v4316
      %v4380 = vadd.f32 %v4224, %v4319
      %v4381 = vadd.f32 %v4225, %v4322
      %v4382 = vadd.f32 %v4226, %v4325
      %v4383 = vadd.f32 %v4227, %v4328
      %v4384 = vadd.f32 %v4228, %v4331
      %v4385 = vadd.f32 %v4229, %v4334
      %v4386 = vadd.f32 %v4230, %v4337
      %v4387 = vadd.f32 %v4231, %v4340
      %v4388 = vadd.f32 %v4232, %v4343
      %v4389 = vadd.f32 %v4233, %v4346
      %v4390 = vadd.f32 %v4234, %v4349
      %v4391 = vadd.f32 %v4235, %v4352
      %v4392 = vadd.f32 %v4236, %v4355
      %v4393 = vadd.f32 %v4237, %v4358
      %v4394 = vadd.f32 %v4238, %v4361
      %v4395 = vrot.slane %v2488, 4
      %v4396 = vrot.slane %v2433, 4
      %v4397 = vsel %vm3496, %v4395, %v4396
      %v4398 = vrot.slane %v2504, 4
      %v4399 = vsel %vm3496, %v4396, %v4398
      %s4400 = scalar_lea.vmem %s5, 72
      %v4401 = vld [vmem:[%s4400] sm:$0xff]
      %v4402 = vsel %vm717, %v4397, 0
      %v4404 = vsel %vm717, %v4399, 0
      %4406 = vmatpush.msra.mxu0 0.0
      %4407 = vmatpush.msra.mxu0 0.0
      %4408 = vmatpush.msra.mxu0 0.0
      %4409 = vmatpush.msra.mxu0 0.0
      %4410 = vmatpush.msra.mxu0 0.0
      %4411 = vmatpush.msra.mxu0 0.0
      %4412 = vmatpush.msra.mxu0 0.0
      %4413 = vmatpush.msra.mxu0 0.0
      %4414 = vmatpush.msra.mxu0 0.0
      %4415 = vmatpush.msra.mxu0 0.0
      %4416 = vmatpush.msra.mxu0 0.0
      %4417 = vmatpush.msra.mxu0 0.0
      %4418 = vmatpush.msra.mxu0 0.0
      %4419 = vmatpush.msra.mxu0 0.0
      %4420 = vmatpush.msra.mxu0 0.0
      %4421 = vmatpush.msra.mxu0 %v4401
      %4422 = vmatmul.f32.gmra.mxu0 %v3571
      %v4423 = vpop.f32.mrf.mxu0
      %v4424 = vadd.f32 0.0, %v4423
      %4425 = vmatmul.f32.gmra.mxu0 %v3571
      %v4426 = vpop.f32.mrf.mxu0
      %v4427 = vadd.f32 0.0, %v4426
      %4428 = vmatmul.f32.gmra.mxu0 %v3573
      %v4429 = vpop.f32.mrf.mxu0
      %v4430 = vadd.f32 0.0, %v4429
      %4431 = vmatmul.f32.gmra.mxu0 %v3575
      %v4432 = vpop.f32.mrf.mxu0
      %v4433 = vadd.f32 0.0, %v4432
      %4434 = vmatmul.f32.gmra.mxu0 %v3577
      %v4435 = vpop.f32.mrf.mxu0
      %v4436 = vadd.f32 0.0, %v4435
      %4437 = vmatmul.f32.gmra.mxu0 %v3579
      %v4438 = vpop.f32.mrf.mxu0
      %v4439 = vadd.f32 0.0, %v4438
      %4440 = vmatmul.f32.gmra.mxu0 %v3581
      %v4441 = vpop.f32.mrf.mxu0
      %v4442 = vadd.f32 0.0, %v4441
      %4443 = vmatmul.f32.gmra.mxu0 %v3583
      %v4444 = vpop.f32.mrf.mxu0
      %v4445 = vadd.f32 0.0, %v4444
      %4446 = vmatmul.f32.gmra.mxu0 %v3585
      %v4447 = vpop.f32.mrf.mxu0
      %v4448 = vadd.f32 0.0, %v4447
      %4449 = vmatmul.f32.gmra.mxu0 %v3587
      %v4450 = vpop.f32.mrf.mxu0
      %v4451 = vadd.f32 0.0, %v4450
      %4452 = vmatmul.f32.gmra.mxu0 %v3589
      %v4453 = vpop.f32.mrf.mxu0
      %v4454 = vadd.f32 0.0, %v4453
      %4455 = vmatmul.f32.gmra.mxu0 %v3591
      %v4456 = vpop.f32.mrf.mxu0
      %v4457 = vadd.f32 0.0, %v4456
      %4458 = vmatmul.f32.gmra.mxu0 %v3593
      %v4459 = vpop.f32.mrf.mxu0
      %v4460 = vadd.f32 0.0, %v4459
      %4461 = vmatmul.f32.gmra.mxu0 %v3595
      %v4462 = vpop.f32.mrf.mxu0
      %v4463 = vadd.f32 0.0, %v4462
      %4464 = vmatmul.f32.gmra.mxu0 %v3597
      %v4465 = vpop.f32.mrf.mxu0
      %v4466 = vadd.f32 0.0, %v4465
      %4467 = vmatmul.f32.gmra.mxu0 %v3599
      %v4468 = vpop.f32.mrf.mxu0
      %v4469 = vadd.f32 0.0, %v4468
      %4470 = vmatmul.f32.gmra.mxu0 %v3601
      %v4471 = vpop.f32.mrf.mxu0
      %v4472 = vadd.f32 0.0, %v4471
      %4473 = vmatmul.f32.gmra.mxu0 %v3603
      %v4474 = vpop.f32.mrf.mxu0
      %v4475 = vadd.f32 0.0, %v4474
      %4476 = vmatmul.f32.gmra.mxu0 %v3605
      %v4477 = vpop.f32.mrf.mxu0
      %v4478 = vadd.f32 0.0, %v4477
      %4479 = vmatmul.f32.gmra.mxu0 %v3607
      %v4480 = vpop.f32.mrf.mxu0
      %v4481 = vadd.f32 0.0, %v4480
      %4482 = vmatmul.f32.gmra.mxu0 %v3609
      %v4483 = vpop.f32.mrf.mxu0
      %v4484 = vadd.f32 0.0, %v4483
      %4485 = vmatmul.f32.gmra.mxu0 %v3611
      %v4486 = vpop.f32.mrf.mxu0
      %v4487 = vadd.f32 0.0, %v4486
      %4488 = vmatmul.f32.gmra.mxu0 %v3613
      %v4489 = vpop.f32.mrf.mxu0
      %v4490 = vadd.f32 0.0, %v4489
      %4491 = vmatmul.f32.gmra.mxu0 %v3615
      %v4492 = vpop.f32.mrf.mxu0
      %v4493 = vadd.f32 0.0, %v4492
      %4494 = vmatmul.f32.gmra.mxu0 %v3617
      %v4495 = vpop.f32.mrf.mxu0
      %v4496 = vadd.f32 0.0, %v4495
      %4497 = vmatmul.f32.gmra.mxu0 %v3619
      %v4498 = vpop.f32.mrf.mxu0
      %v4499 = vadd.f32 0.0, %v4498
      %4500 = vmatmul.f32.gmra.mxu0 %v3621
      %v4501 = vpop.f32.mrf.mxu0
      %v4502 = vadd.f32 0.0, %v4501
      %4503 = vmatmul.f32.gmra.mxu0 %v3623
      %v4504 = vpop.f32.mrf.mxu0
      %v4505 = vadd.f32 0.0, %v4504
      %4506 = vmatmul.f32.gmra.mxu0 %v3625
      %v4507 = vpop.f32.mrf.mxu0
      %v4508 = vadd.f32 0.0, %v4507
      %4509 = vmatmul.f32.gmra.mxu0 %v3627
      %v4510 = vpop.f32.mrf.mxu0
      %v4511 = vadd.f32 0.0, %v4510
      %4512 = vmatmul.f32.gmra.mxu0 %v4402
      %v4513 = vpop.f32.mrf.mxu0
      %v4514 = vadd.f32 0.0, %v4513
      %4515 = vmatmul.f32.gmra.mxu0 %v4404
      %v4516 = vpop.f32.mrf.mxu0
      %v4517 = vadd.f32 0.0, %v4516
      %4518 = vdwg.mxu0
      %v4519 = vadd.f32 %v4363, %v4424
      %v4520 = vadd.f32 %v4364, %v4427
      %v4521 = vadd.f32 %v4365, %v4430
      %v4522 = vadd.f32 %v4366, %v4433
      %v4523 = vadd.f32 %v4367, %v4436
      %v4524 = vadd.f32 %v4368, %v4439
      %v4525 = vadd.f32 %v4369, %v4442
      %v4526 = vadd.f32 %v4370, %v4445
      %v4527 = vadd.f32 %v4371, %v4448
      %v4528 = vadd.f32 %v4372, %v4451
      %v4529 = vadd.f32 %v4373, %v4454
      %v4530 = vadd.f32 %v4374, %v4457
      %v4531 = vadd.f32 %v4375, %v4460
      %v4532 = vadd.f32 %v4376, %v4463
      %v4533 = vadd.f32 %v4377, %v4466
      %v4534 = vadd.f32 %v4378, %v4469
      %v4535 = vadd.f32 %v4379, %v4472
      %v4536 = vadd.f32 %v4380, %v4475
      %v4537 = vadd.f32 %v4381, %v4478
      %v4538 = vadd.f32 %v4382, %v4481
      %v4539 = vadd.f32 %v4383, %v4484
      %v4540 = vadd.f32 %v4384, %v4487
      %v4541 = vadd.f32 %v4385, %v4490
      %v4542 = vadd.f32 %v4386, %v4493
      %v4543 = vadd.f32 %v4387, %v4496
      %v4544 = vadd.f32 %v4388, %v4499
      %v4545 = vadd.f32 %v4389, %v4502
      %v4546 = vadd.f32 %v4390, %v4505
      %v4547 = vadd.f32 %v4391, %v4508
      %v4548 = vadd.f32 %v4392, %v4511
      %v4549 = vadd.f32 %v4393, %v4514
      %v4550 = vadd.f32 %v4394, %v4517
      %s4551 = scalar_lea.vmem %s5, 80
      %v4552 = vld [vmem:[%s4551] sm:$0xff]
      %v4554 = vsel %vm717, %v2489, 0
      %v4556 = vsel %vm717, %v2439, 0
      %4558 = vmatpush.msra.mxu0 0.0
      %4559 = vmatpush.msra.mxu0 0.0
      %4560 = vmatpush.msra.mxu0 0.0
      %4561 = vmatpush.msra.mxu0 0.0
      %4562 = vmatpush.msra.mxu0 0.0
      %4563 = vmatpush.msra.mxu0 0.0
      %4564 = vmatpush.msra.mxu0 0.0
      %4565 = vmatpush.msra.mxu0 0.0
      %4566 = vmatpush.msra.mxu0 0.0
      %4567 = vmatpush.msra.mxu0 0.0
      %4568 = vmatpush.msra.mxu0 0.0
      %4569 = vmatpush.msra.mxu0 0.0
      %4570 = vmatpush.msra.mxu0 0.0
      %4571 = vmatpush.msra.mxu0 0.0
      %4572 = vmatpush.msra.mxu0 0.0
      %4573 = vmatpush.msra.mxu0 %v4552
      %4574 = vmatmul.f32.gmra.mxu0 %v2776
      %v4575 = vpop.f32.mrf.mxu0
      %v4576 = vadd.f32 0.0, %v4575
      %4577 = vmatmul.f32.gmra.mxu0 %v2778
      %v4578 = vpop.f32.mrf.mxu0
      %v4579 = vadd.f32 0.0, %v4578
      %4580 = vmatmul.f32.gmra.mxu0 %v2780
      %v4581 = vpop.f32.mrf.mxu0
      %v4582 = vadd.f32 0.0, %v4581
      %4583 = vmatmul.f32.gmra.mxu0 %v2782
      %v4584 = vpop.f32.mrf.mxu0
      %v4585 = vadd.f32 0.0, %v4584
      %4586 = vmatmul.f32.gmra.mxu0 %v2784
      %v4587 = vpop.f32.mrf.mxu0
      %v4588 = vadd.f32 0.0, %v4587
      %4589 = vmatmul.f32.gmra.mxu0 %v2786
      %v4590 = vpop.f32.mrf.mxu0
      %v4591 = vadd.f32 0.0, %v4590
      %4592 = vmatmul.f32.gmra.mxu0 %v2788
      %v4593 = vpop.f32.mrf.mxu0
      %v4594 = vadd.f32 0.0, %v4593
      %4595 = vmatmul.f32.gmra.mxu0 %v2790
      %v4596 = vpop.f32.mrf.mxu0
      %v4597 = vadd.f32 0.0, %v4596
      %4598 = vmatmul.f32.gmra.mxu0 %v2792
      %v4599 = vpop.f32.mrf.mxu0
      %v4600 = vadd.f32 0.0, %v4599
      %4601 = vmatmul.f32.gmra.mxu0 %v2794
      %v4602 = vpop.f32.mrf.mxu0
      %v4603 = vadd.f32 0.0, %v4602
      %4604 = vmatmul.f32.gmra.mxu0 %v2796
      %v4605 = vpop.f32.mrf.mxu0
      %v4606 = vadd.f32 0.0, %v4605
      %4607 = vmatmul.f32.gmra.mxu0 %v2798
      %v4608 = vpop.f32.mrf.mxu0
      %v4609 = vadd.f32 0.0, %v4608
      %4610 = vmatmul.f32.gmra.mxu0 %v2800
      %v4611 = vpop.f32.mrf.mxu0
      %v4612 = vadd.f32 0.0, %v4611
      %4613 = vmatmul.f32.gmra.mxu0 %v2802
      %v4614 = vpop.f32.mrf.mxu0
      %v4615 = vadd.f32 0.0, %v4614
      %4616 = vmatmul.f32.gmra.mxu0 %v2804
      %v4617 = vpop.f32.mrf.mxu0
      %v4618 = vadd.f32 0.0, %v4617
      %4619 = vmatmul.f32.gmra.mxu0 %v2806
      %v4620 = vpop.f32.mrf.mxu0
      %v4621 = vadd.f32 0.0, %v4620
      %4622 = vmatmul.f32.gmra.mxu0 %v2808
      %v4623 = vpop.f32.mrf.mxu0
      %v4624 = vadd.f32 0.0, %v4623
      %4625 = vmatmul.f32.gmra.mxu0 %v2810
      %v4626 = vpop.f32.mrf.mxu0
      %v4627 = vadd.f32 0.0, %v4626
      %4628 = vmatmul.f32.gmra.mxu0 %v2812
      %v4629 = vpop.f32.mrf.mxu0
      %v4630 = vadd.f32 0.0, %v4629
      %4631 = vmatmul.f32.gmra.mxu0 %v2814
      %v4632 = vpop.f32.mrf.mxu0
      %v4633 = vadd.f32 0.0, %v4632
      %4634 = vmatmul.f32.gmra.mxu0 %v2816
      %v4635 = vpop.f32.mrf.mxu0
      %v4636 = vadd.f32 0.0, %v4635
      %4637 = vmatmul.f32.gmra.mxu0 %v2818
      %v4638 = vpop.f32.mrf.mxu0
      %v4639 = vadd.f32 0.0, %v4638
      %4640 = vmatmul.f32.gmra.mxu0 %v2820
      %v4641 = vpop.f32.mrf.mxu0
      %v4642 = vadd.f32 0.0, %v4641
      %4643 = vmatmul.f32.gmra.mxu0 %v2822
      %v4644 = vpop.f32.mrf.mxu0
      %v4645 = vadd.f32 0.0, %v4644
      %4646 = vmatmul.f32.gmra.mxu0 %v2824
      %v4647 = vpop.f32.mrf.mxu0
      %v4648 = vadd.f32 0.0, %v4647
      %4649 = vmatmul.f32.gmra.mxu0 %v2826
      %v4650 = vpop.f32.mrf.mxu0
      %v4651 = vadd.f32 0.0, %v4650
      %4652 = vmatmul.f32.gmra.mxu0 %v2828
      %v4653 = vpop.f32.mrf.mxu0
      %v4654 = vadd.f32 0.0, %v4653
      %4655 = vmatmul.f32.gmra.mxu0 %v2830
      %v4656 = vpop.f32.mrf.mxu0
      %v4657 = vadd.f32 0.0, %v4656
      %4658 = vmatmul.f32.gmra.mxu0 %v3777
      %v4659 = vpop.f32.mrf.mxu0
      %v4660 = vadd.f32 0.0, %v4659
      %4661 = vmatmul.f32.gmra.mxu0 %v3779
      %v4662 = vpop.f32.mrf.mxu0
      %v4663 = vadd.f32 0.0, %v4662
      %4664 = vmatmul.f32.gmra.mxu0 %v4554
      %v4665 = vpop.f32.mrf.mxu0
      %v4666 = vadd.f32 0.0, %v4665
      %4667 = vmatmul.f32.gmra.mxu0 %v4556
      %v4668 = vpop.f32.mrf.mxu0
      %v4669 = vadd.f32 0.0, %v4668
      %4670 = vdwg.mxu0
      %v4671 = vadd.f32 %v4519, %v4576
      %v4672 = vadd.f32 %v4520, %v4579
      %v4673 = vadd.f32 %v4521, %v4582
      %v4674 = vadd.f32 %v4522, %v4585
      %v4675 = vadd.f32 %v4523, %v4588
      %v4676 = vadd.f32 %v4524, %v4591
      %v4677 = vadd.f32 %v4525, %v4594
      %v4678 = vadd.f32 %v4526, %v4597
      %v4679 = vadd.f32 %v4527, %v4600
      %v4680 = vadd.f32 %v4528, %v4603
      %v4681 = vadd.f32 %v4529, %v4606
      %v4682 = vadd.f32 %v4530, %v4609
      %v4683 = vadd.f32 %v4531, %v4612
      %v4684 = vadd.f32 %v4532, %v4615
      %v4685 = vadd.f32 %v4533, %v4618
      %v4686 = vadd.f32 %v4534, %v4621
      %v4687 = vadd.f32 %v4535, %v4624
      %v4688 = vadd.f32 %v4536, %v4627
      %v4689 = vadd.f32 %v4537, %v4630
      %v4690 = vadd.f32 %v4538, %v4633
      %v4691 = vadd.f32 %v4539, %v4636
      %v4692 = vadd.f32 %v4540, %v4639
      %v4693 = vadd.f32 %v4541, %v4642
      %v4694 = vadd.f32 %v4542, %v4645
      %v4695 = vadd.f32 %v4543, %v4648
      %v4696 = vadd.f32 %v4544, %v4651
      %v4697 = vadd.f32 %v4545, %v4654
      %v4698 = vadd.f32 %v4546, %v4657
      %v4699 = vadd.f32 %v4547, %v4660
      %v4700 = vadd.f32 %v4548, %v4663
      %v4701 = vadd.f32 %v4549, %v4666
      %v4702 = vadd.f32 %v4550, %v4669
      %v4704 = vrot.slane %v2489, 1
      %v4705 = vrot.slane %v2439, 1
      %v4706 = vsel %vm637, %v4704, %v4705
      %v4707 = vrot.slane %v2505, 1
      %v4708 = vsel %vm637, %v4705, %v4707
      %s4709 = scalar_lea.vmem %s5, 88
      %v4710 = vld [vmem:[%s4709] sm:$0xff]
      %v4711 = vsel %vm717, %v4706, 0
      %v4713 = vsel %vm717, %v4708, 0
      %4715 = vmatpush.msra.mxu0 0.0
      %4716 = vmatpush.msra.mxu0 0.0
      %4717 = vmatpush.msra.mxu0 0.0
      %4718 = vmatpush.msra.mxu0 0.0
      %4719 = vmatpush.msra.mxu0 0.0
      %4720 = vmatpush.msra.mxu0 0.0
      %4721 = vmatpush.msra.mxu0 0.0
      %4722 = vmatpush.msra.mxu0 0.0
      %4723 = vmatpush.msra.mxu0 0.0
      %4724 = vmatpush.msra.mxu0 0.0
      %4725 = vmatpush.msra.mxu0 0.0
      %4726 = vmatpush.msra.mxu0 0.0
      %4727 = vmatpush.msra.mxu0 0.0
      %4728 = vmatpush.msra.mxu0 0.0
      %4729 = vmatpush.msra.mxu0 0.0
      %4730 = vmatpush.msra.mxu0 %v4710
      %4731 = vmatmul.f32.gmra.mxu0 %v2607
      %v4732 = vpop.f32.mrf.mxu0
      %v4733 = vadd.f32 0.0, %v4732
      %4734 = vmatmul.f32.gmra.mxu0 %v2609
      %v4735 = vpop.f32.mrf.mxu0
      %v4736 = vadd.f32 0.0, %v4735
      %4737 = vmatmul.f32.gmra.mxu0 %v2611
      %v4738 = vpop.f32.mrf.mxu0
      %v4739 = vadd.f32 0.0, %v4738
      %4740 = vmatmul.f32.gmra.mxu0 %v2613
      %v4741 = vpop.f32.mrf.mxu0
      %v4742 = vadd.f32 0.0, %v4741
      %4743 = vmatmul.f32.gmra.mxu0 %v2615
      %v4744 = vpop.f32.mrf.mxu0
      %v4745 = vadd.f32 0.0, %v4744
      %4746 = vmatmul.f32.gmra.mxu0 %v2617
      %v4747 = vpop.f32.mrf.mxu0
      %v4748 = vadd.f32 0.0, %v4747
      %4749 = vmatmul.f32.gmra.mxu0 %v2619
      %v4750 = vpop.f32.mrf.mxu0
      %v4751 = vadd.f32 0.0, %v4750
      %4752 = vmatmul.f32.gmra.mxu0 %v2621
      %v4753 = vpop.f32.mrf.mxu0
      %v4754 = vadd.f32 0.0, %v4753
      %4755 = vmatmul.f32.gmra.mxu0 %v2623
      %v4756 = vpop.f32.mrf.mxu0
      %v4757 = vadd.f32 0.0, %v4756
      %4758 = vmatmul.f32.gmra.mxu0 %v2625
      %v4759 = vpop.f32.mrf.mxu0
      %v4760 = vadd.f32 0.0, %v4759
      %4761 = vmatmul.f32.gmra.mxu0 %v2627
      %v4762 = vpop.f32.mrf.mxu0
      %v4763 = vadd.f32 0.0, %v4762
      %4764 = vmatmul.f32.gmra.mxu0 %v2629
      %v4765 = vpop.f32.mrf.mxu0
      %v4766 = vadd.f32 0.0, %v4765
      %4767 = vmatmul.f32.gmra.mxu0 %v2631
      %v4768 = vpop.f32.mrf.mxu0
      %v4769 = vadd.f32 0.0, %v4768
      %4770 = vmatmul.f32.gmra.mxu0 %v2633
      %v4771 = vpop.f32.mrf.mxu0
      %v4772 = vadd.f32 0.0, %v4771
      %4773 = vmatmul.f32.gmra.mxu0 %v2635
      %v4774 = vpop.f32.mrf.mxu0
      %v4775 = vadd.f32 0.0, %v4774
      %4776 = vmatmul.f32.gmra.mxu0 %v2637
      %v4777 = vpop.f32.mrf.mxu0
      %v4778 = vadd.f32 0.0, %v4777
      %4779 = vmatmul.f32.gmra.mxu0 %v2639
      %v4780 = vpop.f32.mrf.mxu0
      %v4781 = vadd.f32 0.0, %v4780
      %4782 = vmatmul.f32.gmra.mxu0 %v2641
      %v4783 = vpop.f32.mrf.mxu0
      %v4784 = vadd.f32 0.0, %v4783
      %4785 = vmatmul.f32.gmra.mxu0 %v2643
      %v4786 = vpop.f32.mrf.mxu0
      %v4787 = vadd.f32 0.0, %v4786
      %4788 = vmatmul.f32.gmra.mxu0 %v2645
      %v4789 = vpop.f32.mrf.mxu0
      %v4790 = vadd.f32 0.0, %v4789
      %4791 = vmatmul.f32.gmra.mxu0 %v2647
      %v4792 = vpop.f32.mrf.mxu0
      %v4793 = vadd.f32 0.0, %v4792
      %4794 = vmatmul.f32.gmra.mxu0 %v2649
      %v4795 = vpop.f32.mrf.mxu0
      %v4796 = vadd.f32 0.0, %v4795
      %4797 = vmatmul.f32.gmra.mxu0 %v2651
      %v4798 = vpop.f32.mrf.mxu0
      %v4799 = vadd.f32 0.0, %v4798
      %4800 = vmatmul.f32.gmra.mxu0 %v2653
      %v4801 = vpop.f32.mrf.mxu0
      %v4802 = vadd.f32 0.0, %v4801
      %4803 = vmatmul.f32.gmra.mxu0 %v2655
      %v4804 = vpop.f32.mrf.mxu0
      %v4805 = vadd.f32 0.0, %v4804
      %4806 = vmatmul.f32.gmra.mxu0 %v2657
      %v4807 = vpop.f32.mrf.mxu0
      %v4808 = vadd.f32 0.0, %v4807
      %4809 = vmatmul.f32.gmra.mxu0 %v2659
      %v4810 = vpop.f32.mrf.mxu0
      %v4811 = vadd.f32 0.0, %v4810
      %4812 = vmatmul.f32.gmra.mxu0 %v2661
      %v4813 = vpop.f32.mrf.mxu0
      %v4814 = vadd.f32 0.0, %v4813
      %4815 = vmatmul.f32.gmra.mxu0 %v3934
      %v4816 = vpop.f32.mrf.mxu0
      %v4817 = vadd.f32 0.0, %v4816
      %4818 = vmatmul.f32.gmra.mxu0 %v3936
      %v4819 = vpop.f32.mrf.mxu0
      %v4820 = vadd.f32 0.0, %v4819
      %4821 = vmatmul.f32.gmra.mxu0 %v4711
      %v4822 = vpop.f32.mrf.mxu0
      %v4823 = vadd.f32 0.0, %v4822
      %4824 = vmatmul.f32.gmra.mxu0 %v4713
      %v4825 = vpop.f32.mrf.mxu0
      %v4826 = vadd.f32 0.0, %v4825
      %4827 = vdwg.mxu0
      %v4828 = vadd.f32 %v4671, %v4733
      %v4829 = vadd.f32 %v4672, %v4736
      %v4830 = vadd.f32 %v4673, %v4739
      %v4831 = vadd.f32 %v4674, %v4742
      %v4832 = vadd.f32 %v4675, %v4745
      %v4833 = vadd.f32 %v4676, %v4748
      %v4834 = vadd.f32 %v4677, %v4751
      %v4835 = vadd.f32 %v4678, %v4754
      %v4836 = vadd.f32 %v4679, %v4757
      %v4837 = vadd.f32 %v4680, %v4760
      %v4838 = vadd.f32 %v4681, %v4763
      %v4839 = vadd.f32 %v4682, %v4766
      %v4840 = vadd.f32 %v4683, %v4769
      %v4841 = vadd.f32 %v4684, %v4772
      %v4842 = vadd.f32 %v4685, %v4775
      %v4843 = vadd.f32 %v4686, %v4778
      %v4844 = vadd.f32 %v4687, %v4781
      %v4845 = vadd.f32 %v4688, %v4784
      %v4846 = vadd.f32 %v4689, %v4787
      %v4847 = vadd.f32 %v4690, %v4790
      %v4848 = vadd.f32 %v4691, %v4793
      %v4849 = vadd.f32 %v4692, %v4796
      %v4850 = vadd.f32 %v4693, %v4799
      %v4851 = vadd.f32 %v4694, %v4802
      %v4852 = vadd.f32 %v4695, %v4805
      %v4853 = vadd.f32 %v4696, %v4808
      %v4854 = vadd.f32 %v4697, %v4811
      %v4855 = vadd.f32 %v4698, %v4814
      %v4856 = vadd.f32 %v4699, %v4817
      %v4857 = vadd.f32 %v4700, %v4820
      %v4858 = vadd.f32 %v4701, %v4823
      %v4859 = vadd.f32 %v4702, %v4826
      %v4860 = vrot.slane %v2489, 2
      %v4861 = vrot.slane %v2439, 2
      %v4862 = vsel %vm1068, %v4860, %v4861
      %v4863 = vrot.slane %v2505, 2
      %v4864 = vsel %vm1068, %v4861, %v4863
      %s4865 = scalar_lea.vmem %s5, 96
      %v4866 = vld [vmem:[%s4865] sm:$0xff]
      %v4867 = vsel %vm717, %v4862, 0
      %v4869 = vsel %vm717, %v4864, 0
      %4871 = vmatpush.msra.mxu0 0.0
      %4872 = vmatpush.msra.mxu0 0.0
      %4873 = vmatpush.msra.mxu0 0.0
      %4874 = vmatpush.msra.mxu0 0.0
      %4875 = vmatpush.msra.mxu0 0.0
      %4876 = vmatpush.msra.mxu0 0.0
      %4877 = vmatpush.msra.mxu0 0.0
      %4878 = vmatpush.msra.mxu0 0.0
      %4879 = vmatpush.msra.mxu0 0.0
      %4880 = vmatpush.msra.mxu0 0.0
      %4881 = vmatpush.msra.mxu0 0.0
      %4882 = vmatpush.msra.mxu0 0.0
      %4883 = vmatpush.msra.mxu0 0.0
      %4884 = vmatpush.msra.mxu0 0.0
      %4885 = vmatpush.msra.mxu0 0.0
      %4886 = vmatpush.msra.mxu0 %v4866
      %4887 = vmatmul.f32.gmra.mxu0 %v3017
      %v4888 = vpop.f32.mrf.mxu0
      %v4889 = vadd.f32 0.0, %v4888
      %4890 = vmatmul.f32.gmra.mxu0 %v3019
      %v4891 = vpop.f32.mrf.mxu0
      %v4892 = vadd.f32 0.0, %v4891
      %4893 = vmatmul.f32.gmra.mxu0 %v3021
      %v4894 = vpop.f32.mrf.mxu0
      %v4895 = vadd.f32 0.0, %v4894
      %4896 = vmatmul.f32.gmra.mxu0 %v3023
      %v4897 = vpop.f32.mrf.mxu0
      %v4898 = vadd.f32 0.0, %v4897
      %4899 = vmatmul.f32.gmra.mxu0 %v3025
      %v4900 = vpop.f32.mrf.mxu0
      %v4901 = vadd.f32 0.0, %v4900
      %4902 = vmatmul.f32.gmra.mxu0 %v3027
      %v4903 = vpop.f32.mrf.mxu0
      %v4904 = vadd.f32 0.0, %v4903
      %4905 = vmatmul.f32.gmra.mxu0 %v3029
      %v4906 = vpop.f32.mrf.mxu0
      %v4907 = vadd.f32 0.0, %v4906
      %4908 = vmatmul.f32.gmra.mxu0 %v3031
      %v4909 = vpop.f32.mrf.mxu0
      %v4910 = vadd.f32 0.0, %v4909
      %4911 = vmatmul.f32.gmra.mxu0 %v3033
      %v4912 = vpop.f32.mrf.mxu0
      %v4913 = vadd.f32 0.0, %v4912
      %4914 = vmatmul.f32.gmra.mxu0 %v3035
      %v4915 = vpop.f32.mrf.mxu0
      %v4916 = vadd.f32 0.0, %v4915
      %4917 = vmatmul.f32.gmra.mxu0 %v3037
      %v4918 = vpop.f32.mrf.mxu0
      %v4919 = vadd.f32 0.0, %v4918
      %4920 = vmatmul.f32.gmra.mxu0 %v3039
      %v4921 = vpop.f32.mrf.mxu0
      %v4922 = vadd.f32 0.0, %v4921
      %4923 = vmatmul.f32.gmra.mxu0 %v3041
      %v4924 = vpop.f32.mrf.mxu0
      %v4925 = vadd.f32 0.0, %v4924
      %4926 = vmatmul.f32.gmra.mxu0 %v3043
      %v4927 = vpop.f32.mrf.mxu0
      %v4928 = vadd.f32 0.0, %v4927
      %4929 = vmatmul.f32.gmra.mxu0 %v3045
      %v4930 = vpop.f32.mrf.mxu0
      %v4931 = vadd.f32 0.0, %v4930
      %4932 = vmatmul.f32.gmra.mxu0 %v3047
      %v4933 = vpop.f32.mrf.mxu0
      %v4934 = vadd.f32 0.0, %v4933
      %4935 = vmatmul.f32.gmra.mxu0 %v3049
      %v4936 = vpop.f32.mrf.mxu0
      %v4937 = vadd.f32 0.0, %v4936
      %4938 = vmatmul.f32.gmra.mxu0 %v3051
      %v4939 = vpop.f32.mrf.mxu0
      %v4940 = vadd.f32 0.0, %v4939
      %4941 = vmatmul.f32.gmra.mxu0 %v3053
      %v4942 = vpop.f32.mrf.mxu0
      %v4943 = vadd.f32 0.0, %v4942
      %4944 = vmatmul.f32.gmra.mxu0 %v3055
      %v4945 = vpop.f32.mrf.mxu0
      %v4946 = vadd.f32 0.0, %v4945
      %4947 = vmatmul.f32.gmra.mxu0 %v3057
      %v4948 = vpop.f32.mrf.mxu0
      %v4949 = vadd.f32 0.0, %v4948
      %4950 = vmatmul.f32.gmra.mxu0 %v3059
      %v4951 = vpop.f32.mrf.mxu0
      %v4952 = vadd.f32 0.0, %v4951
      %4953 = vmatmul.f32.gmra.mxu0 %v3061
      %v4954 = vpop.f32.mrf.mxu0
      %v4955 = vadd.f32 0.0, %v4954
      %4956 = vmatmul.f32.gmra.mxu0 %v3063
      %v4957 = vpop.f32.mrf.mxu0
      %v4958 = vadd.f32 0.0, %v4957
      %4959 = vmatmul.f32.gmra.mxu0 %v3065
      %v4960 = vpop.f32.mrf.mxu0
      %v4961 = vadd.f32 0.0, %v4960
      %4962 = vmatmul.f32.gmra.mxu0 %v3067
      %v4963 = vpop.f32.mrf.mxu0
      %v4964 = vadd.f32 0.0, %v4963
      %4965 = vmatmul.f32.gmra.mxu0 %v3069
      %v4966 = vpop.f32.mrf.mxu0
      %v4967 = vadd.f32 0.0, %v4966
      %4968 = vmatmul.f32.gmra.mxu0 %v3071
      %v4969 = vpop.f32.mrf.mxu0
      %v4970 = vadd.f32 0.0, %v4969
      %4971 = vmatmul.f32.gmra.mxu0 %v4090
      %v4972 = vpop.f32.mrf.mxu0
      %v4973 = vadd.f32 0.0, %v4972
      %4974 = vmatmul.f32.gmra.mxu0 %v4092
      %v4975 = vpop.f32.mrf.mxu0
      %v4976 = vadd.f32 0.0, %v4975
      %4977 = vmatmul.f32.gmra.mxu0 %v4867
      %v4978 = vpop.f32.mrf.mxu0
      %v4979 = vadd.f32 0.0, %v4978
      %4980 = vmatmul.f32.gmra.mxu0 %v4869
      %v4981 = vpop.f32.mrf.mxu0
      %v4982 = vadd.f32 0.0, %v4981
      %4983 = vdwg.mxu0
      %v4984 = vadd.f32 %v4828, %v4889
      %v4985 = vadd.f32 %v4829, %v4892
      %v4986 = vadd.f32 %v4830, %v4895
      %v4987 = vadd.f32 %v4831, %v4898
      %v4988 = vadd.f32 %v4832, %v4901
      %v4989 = vadd.f32 %v4833, %v4904
      %v4990 = vadd.f32 %v4834, %v4907
      %v4991 = vadd.f32 %v4835, %v4910
      %v4992 = vadd.f32 %v4836, %v4913
      %v4993 = vadd.f32 %v4837, %v4916
      %v4994 = vadd.f32 %v4838, %v4919
      %v4995 = vadd.f32 %v4839, %v4922
      %v4996 = vadd.f32 %v4840, %v4925
      %v4997 = vadd.f32 %v4841, %v4928
      %v4998 = vadd.f32 %v4842, %v4931
      %v4999 = vadd.f32 %v4843, %v4934
      %v5000 = vadd.f32 %v4844, %v4937
      %v5001 = vadd.f32 %v4845, %v4940
      %v5002 = vadd.f32 %v4846, %v4943
      %v5003 = vadd.f32 %v4847, %v4946
      %v5004 = vadd.f32 %v4848, %v4949
      %v5005 = vadd.f32 %v4849, %v4952
      %v5006 = vadd.f32 %v4850, %v4955
      %v5007 = vadd.f32 %v4851, %v4958
      %v5008 = vadd.f32 %v4852, %v4961
      %v5009 = vadd.f32 %v4853, %v4964
      %v5010 = vadd.f32 %v4854, %v4967
      %v5011 = vadd.f32 %v4855, %v4970
      %v5012 = vadd.f32 %v4856, %v4973
      %v5013 = vadd.f32 %v4857, %v4976
      %v5014 = vadd.f32 %v4858, %v4979
      %v5015 = vadd.f32 %v4859, %v4982
      %v5016 = vrot.slane %v2489, 3
      %v5017 = vrot.slane %v2439, 3
      %v5018 = vsel %vm3218, %v5016, %v5017
      %v5019 = vrot.slane %v2505, 3
      %v5020 = vsel %vm3218, %v5017, %v5019
      %s5021 = scalar_lea.vmem %s5, 104
      %v5022 = vld [vmem:[%s5021] sm:$0xff]
      %v5023 = vsel %vm717, %v5018, 0
      %v5025 = vsel %vm717, %v5020, 0
      %5027 = vmatpush.msra.mxu0 0.0
      %5028 = vmatpush.msra.mxu0 0.0
      %5029 = vmatpush.msra.mxu0 0.0
      %5030 = vmatpush.msra.mxu0 0.0
      %5031 = vmatpush.msra.mxu0 0.0
      %5032 = vmatpush.msra.mxu0 0.0
      %5033 = vmatpush.msra.mxu0 0.0
      %5034 = vmatpush.msra.mxu0 0.0
      %5035 = vmatpush.msra.mxu0 0.0
      %5036 = vmatpush.msra.mxu0 0.0
      %5037 = vmatpush.msra.mxu0 0.0
      %5038 = vmatpush.msra.mxu0 0.0
      %5039 = vmatpush.msra.mxu0 0.0
      %5040 = vmatpush.msra.mxu0 0.0
      %5041 = vmatpush.msra.mxu0 0.0
      %5042 = vmatpush.msra.mxu0 %v5022
      %5043 = vmatmul.f32.gmra.mxu0 %v3295
      %v5044 = vpop.f32.mrf.mxu0
      %v5045 = vadd.f32 0.0, %v5044
      %5046 = vmatmul.f32.gmra.mxu0 %v3297
      %v5047 = vpop.f32.mrf.mxu0
      %v5048 = vadd.f32 0.0, %v5047
      %5049 = vmatmul.f32.gmra.mxu0 %v3299
      %v5050 = vpop.f32.mrf.mxu0
      %v5051 = vadd.f32 0.0, %v5050
      %5052 = vmatmul.f32.gmra.mxu0 %v3301
      %v5053 = vpop.f32.mrf.mxu0
      %v5054 = vadd.f32 0.0, %v5053
      %5055 = vmatmul.f32.gmra.mxu0 %v3303
      %v5056 = vpop.f32.mrf.mxu0
      %v5057 = vadd.f32 0.0, %v5056
      %5058 = vmatmul.f32.gmra.mxu0 %v3305
      %v5059 = vpop.f32.mrf.mxu0
      %v5060 = vadd.f32 0.0, %v5059
      %5061 = vmatmul.f32.gmra.mxu0 %v3307
      %v5062 = vpop.f32.mrf.mxu0
      %v5063 = vadd.f32 0.0, %v5062
      %5064 = vmatmul.f32.gmra.mxu0 %v3309
      %v5065 = vpop.f32.mrf.mxu0
      %v5066 = vadd.f32 0.0, %v5065
      %5067 = vmatmul.f32.gmra.mxu0 %v3311
      %v5068 = vpop.f32.mrf.mxu0
      %v5069 = vadd.f32 0.0, %v5068
      %5070 = vmatmul.f32.gmra.mxu0 %v3313
      %v5071 = vpop.f32.mrf.mxu0
      %v5072 = vadd.f32 0.0, %v5071
      %5073 = vmatmul.f32.gmra.mxu0 %v3315
      %v5074 = vpop.f32.mrf.mxu0
      %v5075 = vadd.f32 0.0, %v5074
      %5076 = vmatmul.f32.gmra.mxu0 %v3317
      %v5077 = vpop.f32.mrf.mxu0
      %v5078 = vadd.f32 0.0, %v5077
      %5079 = vmatmul.f32.gmra.mxu0 %v3319
      %v5080 = vpop.f32.mrf.mxu0
      %v5081 = vadd.f32 0.0, %v5080
      %5082 = vmatmul.f32.gmra.mxu0 %v3321
      %v5083 = vpop.f32.mrf.mxu0
      %v5084 = vadd.f32 0.0, %v5083
      %5085 = vmatmul.f32.gmra.mxu0 %v3323
      %v5086 = vpop.f32.mrf.mxu0
      %v5087 = vadd.f32 0.0, %v5086
      %5088 = vmatmul.f32.gmra.mxu0 %v3325
      %v5089 = vpop.f32.mrf.mxu0
      %v5090 = vadd.f32 0.0, %v5089
      %5091 = vmatmul.f32.gmra.mxu0 %v3327
      %v5092 = vpop.f32.mrf.mxu0
      %v5093 = vadd.f32 0.0, %v5092
      %5094 = vmatmul.f32.gmra.mxu0 %v3329
      %v5095 = vpop.f32.mrf.mxu0
      %v5096 = vadd.f32 0.0, %v5095
      %5097 = vmatmul.f32.gmra.mxu0 %v3331
      %v5098 = vpop.f32.mrf.mxu0
      %v5099 = vadd.f32 0.0, %v5098
      %5100 = vmatmul.f32.gmra.mxu0 %v3333
      %v5101 = vpop.f32.mrf.mxu0
      %v5102 = vadd.f32 0.0, %v5101
      %5103 = vmatmul.f32.gmra.mxu0 %v3335
      %v5104 = vpop.f32.mrf.mxu0
      %v5105 = vadd.f32 0.0, %v5104
      %5106 = vmatmul.f32.gmra.mxu0 %v3337
      %v5107 = vpop.f32.mrf.mxu0
      %v5108 = vadd.f32 0.0, %v5107
      %5109 = vmatmul.f32.gmra.mxu0 %v3339
      %v5110 = vpop.f32.mrf.mxu0
      %v5111 = vadd.f32 0.0, %v5110
      %5112 = vmatmul.f32.gmra.mxu0 %v3341
      %v5113 = vpop.f32.mrf.mxu0
      %v5114 = vadd.f32 0.0, %v5113
      %5115 = vmatmul.f32.gmra.mxu0 %v3343
      %v5116 = vpop.f32.mrf.mxu0
      %v5117 = vadd.f32 0.0, %v5116
      %5118 = vmatmul.f32.gmra.mxu0 %v3345
      %v5119 = vpop.f32.mrf.mxu0
      %v5120 = vadd.f32 0.0, %v5119
      %5121 = vmatmul.f32.gmra.mxu0 %v3347
      %v5122 = vpop.f32.mrf.mxu0
      %v5123 = vadd.f32 0.0, %v5122
      %5124 = vmatmul.f32.gmra.mxu0 %v3349
      %v5125 = vpop.f32.mrf.mxu0
      %v5126 = vadd.f32 0.0, %v5125
      %5127 = vmatmul.f32.gmra.mxu0 %v4246
      %v5128 = vpop.f32.mrf.mxu0
      %v5129 = vadd.f32 0.0, %v5128
      %5130 = vmatmul.f32.gmra.mxu0 %v4248
      %v5131 = vpop.f32.mrf.mxu0
      %v5132 = vadd.f32 0.0, %v5131
      %5133 = vmatmul.f32.gmra.mxu0 %v5023
      %v5134 = vpop.f32.mrf.mxu0
      %v5135 = vadd.f32 0.0, %v5134
      %5136 = vmatmul.f32.gmra.mxu0 %v5025
      %v5137 = vpop.f32.mrf.mxu0
      %v5138 = vadd.f32 0.0, %v5137
      %5139 = vdwg.mxu0
      %v5140 = vadd.f32 %v4984, %v5045
      %v5141 = vadd.f32 %v4985, %v5048
      %v5142 = vadd.f32 %v4986, %v5051
      %v5143 = vadd.f32 %v4987, %v5054
      %v5144 = vadd.f32 %v4988, %v5057
      %v5145 = vadd.f32 %v4989, %v5060
      %v5146 = vadd.f32 %v4990, %v5063
      %v5147 = vadd.f32 %v4991, %v5066
      %v5148 = vadd.f32 %v4992, %v5069
      %v5149 = vadd.f32 %v4993, %v5072
      %v5150 = vadd.f32 %v4994, %v5075
      %v5151 = vadd.f32 %v4995, %v5078
      %v5152 = vadd.f32 %v4996, %v5081
      %v5153 = vadd.f32 %v4997, %v5084
      %v5154 = vadd.f32 %v4998, %v5087
      %v5155 = vadd.f32 %v4999, %v5090
      %v5156 = vadd.f32 %v5000, %v5093
      %v5157 = vadd.f32 %v5001, %v5096
      %v5158 = vadd.f32 %v5002, %v5099
      %v5159 = vadd.f32 %v5003, %v5102
      %v5160 = vadd.f32 %v5004, %v5105
      %v5161 = vadd.f32 %v5005, %v5108
      %v5162 = vadd.f32 %v5006, %v5111
      %v5163 = vadd.f32 %v5007, %v5114
      %v5164 = vadd.f32 %v5008, %v5117
      %v5165 = vadd.f32 %v5009, %v5120
      %v5166 = vadd.f32 %v5010, %v5123
      %v5167 = vadd.f32 %v5011, %v5126
      %v5168 = vadd.f32 %v5012, %v5129
      %v5169 = vadd.f32 %v5013, %v5132
      %v5170 = vadd.f32 %v5014, %v5135
      %v5171 = vadd.f32 %v5015, %v5138
      %v5172 = vrot.slane %v2489, 4
      %v5173 = vrot.slane %v2439, 4
      %v5174 = vsel %vm3496, %v5172, %v5173
      %v5175 = vrot.slane %v2505, 4
      %v5176 = vsel %vm3496, %v5173, %v5175
      %s5177 = scalar_lea.vmem %s5, 112
      %v5178 = vld [vmem:[%s5177] sm:$0xff]
      %v5179 = vsel %vm717, %v5174, 0
      %v5181 = vsel %vm717, %v5176, 0
      %5183 = vmatpush.msra.mxu0 0.0
      %5184 = vmatpush.msra.mxu0 0.0
      %5185 = vmatpush.msra.mxu0 0.0
      %5186 = vmatpush.msra.mxu0 0.0
      %5187 = vmatpush.msra.mxu0 0.0
      %5188 = vmatpush.msra.mxu0 0.0
      %5189 = vmatpush.msra.mxu0 0.0
      %5190 = vmatpush.msra.mxu0 0.0
      %5191 = vmatpush.msra.mxu0 0.0
      %5192 = vmatpush.msra.mxu0 0.0
      %5193 = vmatpush.msra.mxu0 0.0
      %5194 = vmatpush.msra.mxu0 0.0
      %5195 = vmatpush.msra.mxu0 0.0
      %5196 = vmatpush.msra.mxu0 0.0
      %5197 = vmatpush.msra.mxu0 0.0
      %5198 = vmatpush.msra.mxu0 %v5178
      %5199 = vmatmul.f32.gmra.mxu0 %v3573
      %v5200 = vpop.f32.mrf.mxu0
      %v5201 = vadd.f32 0.0, %v5200
      %5202 = vmatmul.f32.gmra.mxu0 %v3575
      %v5203 = vpop.f32.mrf.mxu0
      %v5204 = vadd.f32 0.0, %v5203
      %5205 = vmatmul.f32.gmra.mxu0 %v3577
      %v5206 = vpop.f32.mrf.mxu0
      %v5207 = vadd.f32 0.0, %v5206
      %5208 = vmatmul.f32.gmra.mxu0 %v3579
      %v5209 = vpop.f32.mrf.mxu0
      %v5210 = vadd.f32 0.0, %v5209
      %5211 = vmatmul.f32.gmra.mxu0 %v3581
      %v5212 = vpop.f32.mrf.mxu0
      %v5213 = vadd.f32 0.0, %v5212
      %5214 = vmatmul.f32.gmra.mxu0 %v3583
      %v5215 = vpop.f32.mrf.mxu0
      %v5216 = vadd.f32 0.0, %v5215
      %5217 = vmatmul.f32.gmra.mxu0 %v3585
      %v5218 = vpop.f32.mrf.mxu0
      %v5219 = vadd.f32 0.0, %v5218
      %5220 = vmatmul.f32.gmra.mxu0 %v3587
      %v5221 = vpop.f32.mrf.mxu0
      %v5222 = vadd.f32 0.0, %v5221
      %5223 = vmatmul.f32.gmra.mxu0 %v3589
      %v5224 = vpop.f32.mrf.mxu0
      %v5225 = vadd.f32 0.0, %v5224
      %5226 = vmatmul.f32.gmra.mxu0 %v3591
      %v5227 = vpop.f32.mrf.mxu0
      %v5228 = vadd.f32 0.0, %v5227
      %5229 = vmatmul.f32.gmra.mxu0 %v3593
      %v5230 = vpop.f32.mrf.mxu0
      %v5231 = vadd.f32 0.0, %v5230
      %5232 = vmatmul.f32.gmra.mxu0 %v3595
      %v5233 = vpop.f32.mrf.mxu0
      %v5234 = vadd.f32 0.0, %v5233
      %5235 = vmatmul.f32.gmra.mxu0 %v3597
      %v5236 = vpop.f32.mrf.mxu0
      %v5237 = vadd.f32 0.0, %v5236
      %5238 = vmatmul.f32.gmra.mxu0 %v3599
      %v5239 = vpop.f32.mrf.mxu0
      %v5240 = vadd.f32 0.0, %v5239
      %5241 = vmatmul.f32.gmra.mxu0 %v3601
      %v5242 = vpop.f32.mrf.mxu0
      %v5243 = vadd.f32 0.0, %v5242
      %5244 = vmatmul.f32.gmra.mxu0 %v3603
      %v5245 = vpop.f32.mrf.mxu0
      %v5246 = vadd.f32 0.0, %v5245
      %5247 = vmatmul.f32.gmra.mxu0 %v3605
      %v5248 = vpop.f32.mrf.mxu0
      %v5249 = vadd.f32 0.0, %v5248
      %5250 = vmatmul.f32.gmra.mxu0 %v3607
      %v5251 = vpop.f32.mrf.mxu0
      %v5252 = vadd.f32 0.0, %v5251
      %5253 = vmatmul.f32.gmra.mxu0 %v3609
      %v5254 = vpop.f32.mrf.mxu0
      %v5255 = vadd.f32 0.0, %v5254
      %5256 = vmatmul.f32.gmra.mxu0 %v3611
      %v5257 = vpop.f32.mrf.mxu0
      %v5258 = vadd.f32 0.0, %v5257
      %5259 = vmatmul.f32.gmra.mxu0 %v3613
      %v5260 = vpop.f32.mrf.mxu0
      %v5261 = vadd.f32 0.0, %v5260
      %5262 = vmatmul.f32.gmra.mxu0 %v3615
      %v5263 = vpop.f32.mrf.mxu0
      %v5264 = vadd.f32 0.0, %v5263
      %5265 = vmatmul.f32.gmra.mxu0 %v3617
      %v5266 = vpop.f32.mrf.mxu0
      %v5267 = vadd.f32 0.0, %v5266
      %5268 = vmatmul.f32.gmra.mxu0 %v3619
      %v5269 = vpop.f32.mrf.mxu0
      %v5270 = vadd.f32 0.0, %v5269
      %5271 = vmatmul.f32.gmra.mxu0 %v3621
      %v5272 = vpop.f32.mrf.mxu0
      %v5273 = vadd.f32 0.0, %v5272
      %5274 = vmatmul.f32.gmra.mxu0 %v3623
      %v5275 = vpop.f32.mrf.mxu0
      %v5276 = vadd.f32 0.0, %v5275
      %5277 = vmatmul.f32.gmra.mxu0 %v3625
      %v5278 = vpop.f32.mrf.mxu0
      %v5279 = vadd.f32 0.0, %v5278
      %5280 = vmatmul.f32.gmra.mxu0 %v3627
      %v5281 = vpop.f32.mrf.mxu0
      %v5282 = vadd.f32 0.0, %v5281
      %5283 = vmatmul.f32.gmra.mxu0 %v4402
      %v5284 = vpop.f32.mrf.mxu0
      %v5285 = vadd.f32 0.0, %v5284
      %5286 = vmatmul.f32.gmra.mxu0 %v4404
      %v5287 = vpop.f32.mrf.mxu0
      %v5288 = vadd.f32 0.0, %v5287
      %5289 = vmatmul.f32.gmra.mxu0 %v5179
      %v5290 = vpop.f32.mrf.mxu0
      %v5291 = vadd.f32 0.0, %v5290
      %5292 = vmatmul.f32.gmra.mxu0 %v5181
      %v5293 = vpop.f32.mrf.mxu0
      %v5294 = vadd.f32 0.0, %v5293
      %5295 = vdwg.mxu0
      %v5296 = vadd.f32 %v5140, %v5201
      %v5297 = vadd.f32 %v5141, %v5204
      %v5298 = vadd.f32 %v5142, %v5207
      %v5299 = vadd.f32 %v5143, %v5210
      %v5300 = vadd.f32 %v5144, %v5213
      %v5301 = vadd.f32 %v5145, %v5216
      %v5302 = vadd.f32 %v5146, %v5219
      %v5303 = vadd.f32 %v5147, %v5222
      %v5304 = vadd.f32 %v5148, %v5225
      %v5305 = vadd.f32 %v5149, %v5228
      %v5306 = vadd.f32 %v5150, %v5231
      %v5307 = vadd.f32 %v5151, %v5234
      %v5308 = vadd.f32 %v5152, %v5237
      %v5309 = vadd.f32 %v5153, %v5240
      %v5310 = vadd.f32 %v5154, %v5243
      %v5311 = vadd.f32 %v5155, %v5246
      %v5312 = vadd.f32 %v5156, %v5249
      %v5313 = vadd.f32 %v5157, %v5252
      %v5314 = vadd.f32 %v5158, %v5255
      %v5315 = vadd.f32 %v5159, %v5258
      %v5316 = vadd.f32 %v5160, %v5261
      %v5317 = vadd.f32 %v5161, %v5264
      %v5318 = vadd.f32 %v5162, %v5267
      %v5319 = vadd.f32 %v5163, %v5270
      %v5320 = vadd.f32 %v5164, %v5273
      %v5321 = vadd.f32 %v5165, %v5276
      %v5322 = vadd.f32 %v5166, %v5279
      %v5323 = vadd.f32 %v5167, %v5282
      %v5324 = vadd.f32 %v5168, %v5285
      %v5325 = vadd.f32 %v5169, %v5288
      %v5326 = vadd.f32 %v5170, %v5291
      %v5327 = vadd.f32 %v5171, %v5294
      %s5328 = scalar_lea.vmem %s5, 120
      %v5329 = vld [vmem:[%s5328] sm:$0xff]
      %5330 = vmatpush.msra.mxu0 0.0
      %5331 = vmatpush.msra.mxu0 0.0
      %5332 = vmatpush.msra.mxu0 0.0
      %5333 = vmatpush.msra.mxu0 0.0
      %5334 = vmatpush.msra.mxu0 0.0
      %5335 = vmatpush.msra.mxu0 0.0
      %5336 = vmatpush.msra.mxu0 0.0
      %5337 = vmatpush.msra.mxu0 0.0
      %5338 = vmatpush.msra.mxu0 0.0
      %5339 = vmatpush.msra.mxu0 0.0
      %5340 = vmatpush.msra.mxu0 0.0
      %5341 = vmatpush.msra.mxu0 0.0
      %5342 = vmatpush.msra.mxu0 0.0
      %5343 = vmatpush.msra.mxu0 0.0
      %5344 = vmatpush.msra.mxu0 0.0
      %5345 = vmatpush.msra.mxu0 %v5329
      %5346 = vmatmul.f32.gmra.mxu0 %v2780
      %v5347 = vpop.f32.mrf.mxu0
      %v5348 = vadd.f32 0.0, %v5347
      %5349 = vmatmul.f32.gmra.mxu0 %v2782
      %v5350 = vpop.f32.mrf.mxu0
      %v5351 = vadd.f32 0.0, %v5350
      %5352 = vmatmul.f32.gmra.mxu0 %v2784
      %v5353 = vpop.f32.mrf.mxu0
      %v5354 = vadd.f32 0.0, %v5353
      %5355 = vmatmul.f32.gmra.mxu0 %v2786
      %v5356 = vpop.f32.mrf.mxu0
      %v5357 = vadd.f32 0.0, %v5356
      %5358 = vmatmul.f32.gmra.mxu0 %v2788
      %v5359 = vpop.f32.mrf.mxu0
      %v5360 = vadd.f32 0.0, %v5359
      %5361 = vmatmul.f32.gmra.mxu0 %v2790
      %v5362 = vpop.f32.mrf.mxu0
      %v5363 = vadd.f32 0.0, %v5362
      %5364 = vmatmul.f32.gmra.mxu0 %v2792
      %v5365 = vpop.f32.mrf.mxu0
      %v5366 = vadd.f32 0.0, %v5365
      %5367 = vmatmul.f32.gmra.mxu0 %v2794
      %v5368 = vpop.f32.mrf.mxu0
      %v5369 = vadd.f32 0.0, %v5368
      %5370 = vmatmul.f32.gmra.mxu0 %v2796
      %v5371 = vpop.f32.mrf.mxu0
      %v5372 = vadd.f32 0.0, %v5371
      %5373 = vmatmul.f32.gmra.mxu0 %v2798
      %v5374 = vpop.f32.mrf.mxu0
      %v5375 = vadd.f32 0.0, %v5374
      %5376 = vmatmul.f32.gmra.mxu0 %v2800
      %v5377 = vpop.f32.mrf.mxu0
      %v5378 = vadd.f32 0.0, %v5377
      %5379 = vmatmul.f32.gmra.mxu0 %v2802
      %v5380 = vpop.f32.mrf.mxu0
      %v5381 = vadd.f32 0.0, %v5380
      %5382 = vmatmul.f32.gmra.mxu0 %v2804
      %v5383 = vpop.f32.mrf.mxu0
      %v5384 = vadd.f32 0.0, %v5383
      %5385 = vmatmul.f32.gmra.mxu0 %v2806
      %v5386 = vpop.f32.mrf.mxu0
      %v5387 = vadd.f32 0.0, %v5386
      %5388 = vmatmul.f32.gmra.mxu0 %v2808
      %v5389 = vpop.f32.mrf.mxu0
      %v5390 = vadd.f32 0.0, %v5389
      %5391 = vmatmul.f32.gmra.mxu0 %v2810
      %v5392 = vpop.f32.mrf.mxu0
      %v5393 = vadd.f32 0.0, %v5392
      %5394 = vmatmul.f32.gmra.mxu0 %v2812
      %v5395 = vpop.f32.mrf.mxu0
      %v5396 = vadd.f32 0.0, %v5395
      %5397 = vmatmul.f32.gmra.mxu0 %v2814
      %v5398 = vpop.f32.mrf.mxu0
      %v5399 = vadd.f32 0.0, %v5398
      %5400 = vmatmul.f32.gmra.mxu0 %v2816
      %v5401 = vpop.f32.mrf.mxu0
      %v5402 = vadd.f32 0.0, %v5401
      %5403 = vmatmul.f32.gmra.mxu0 %v2818
      %v5404 = vpop.f32.mrf.mxu0
      %v5405 = vadd.f32 0.0, %v5404
      %5406 = vmatmul.f32.gmra.mxu0 %v2820
      %v5407 = vpop.f32.mrf.mxu0
      %v5408 = vadd.f32 0.0, %v5407
      %5409 = vmatmul.f32.gmra.mxu0 %v2822
      %v5410 = vpop.f32.mrf.mxu0
      %v5411 = vadd.f32 0.0, %v5410
      %5412 = vmatmul.f32.gmra.mxu0 %v2824
      %v5413 = vpop.f32.mrf.mxu0
      %v5414 = vadd.f32 0.0, %v5413
      %5415 = vmatmul.f32.gmra.mxu0 %v2826
      %v5416 = vpop.f32.mrf.mxu0
      %v5417 = vadd.f32 0.0, %v5416
      %5418 = vmatmul.f32.gmra.mxu0 %v2828
      %v5419 = vpop.f32.mrf.mxu0
      %v5420 = vadd.f32 0.0, %v5419
      %5421 = vmatmul.f32.gmra.mxu0 %v2830
      %v5422 = vpop.f32.mrf.mxu0
      %v5423 = vadd.f32 0.0, %v5422
      %5424 = vmatmul.f32.gmra.mxu0 %v3777
      %v5425 = vpop.f32.mrf.mxu0
      %v5426 = vadd.f32 0.0, %v5425
      %5427 = vmatmul.f32.gmra.mxu0 %v3779
      %v5428 = vpop.f32.mrf.mxu0
      %v5429 = vadd.f32 0.0, %v5428
      %5430 = vmatmul.f32.gmra.mxu0 %v4554
      %v5431 = vpop.f32.mrf.mxu0
      %v5432 = vadd.f32 0.0, %v5431
      %5433 = vmatmul.f32.gmra.mxu0 %v4556
      %v5434 = vpop.f32.mrf.mxu0
      %v5435 = vadd.f32 0.0, %v5434
      %5436 = vmatmul.f32.gmra.mxu0 %v893
      %v5437 = vpop.f32.mrf.mxu0
      %v5438 = vadd.f32 0.0, %v5437
      %5439 = vmatmul.f32.gmra.mxu0 %v893
      %v5440 = vpop.f32.mrf.mxu0
      %v5441 = vadd.f32 0.0, %v5440
      %5442 = vdwg.mxu0
      %v5443 = vadd.f32 %v5296, %v5348
      %v5444 = vadd.f32 %v5297, %v5351
      %v5445 = vadd.f32 %v5298, %v5354
      %v5446 = vadd.f32 %v5299, %v5357
      %v5447 = vadd.f32 %v5300, %v5360
      %v5448 = vadd.f32 %v5301, %v5363
      %v5449 = vadd.f32 %v5302, %v5366
      %v5450 = vadd.f32 %v5303, %v5369
      %v5451 = vadd.f32 %v5304, %v5372
      %v5452 = vadd.f32 %v5305, %v5375
      %v5453 = vadd.f32 %v5306, %v5378
      %v5454 = vadd.f32 %v5307, %v5381
      %v5455 = vadd.f32 %v5308, %v5384
      %v5456 = vadd.f32 %v5309, %v5387
      %v5457 = vadd.f32 %v5310, %v5390
      %v5458 = vadd.f32 %v5311, %v5393
      %v5459 = vadd.f32 %v5312, %v5396
      %v5460 = vadd.f32 %v5313, %v5399
      %v5461 = vadd.f32 %v5314, %v5402
      %v5462 = vadd.f32 %v5315, %v5405
      %v5463 = vadd.f32 %v5316, %v5408
      %v5464 = vadd.f32 %v5317, %v5411
      %v5465 = vadd.f32 %v5318, %v5414
      %v5466 = vadd.f32 %v5319, %v5417
      %v5467 = vadd.f32 %v5320, %v5420
      %v5468 = vadd.f32 %v5321, %v5423
      %v5469 = vadd.f32 %v5322, %v5426
      %v5470 = vadd.f32 %v5323, %v5429
      %v5471 = vadd.f32 %v5324, %v5432
      %v5472 = vadd.f32 %v5325, %v5435
      %v5473 = vadd.f32 %v5326, %v5438
      %v5474 = vadd.f32 %v5327, %v5441
      %s5475 = scalar_lea.vmem %s5, 128
      %v5476 = vld [vmem:[%s5475] sm:$0xff]
      %5477 = vmatpush.msra.mxu0 0.0
      %5478 = vmatpush.msra.mxu0 0.0
      %5479 = vmatpush.msra.mxu0 0.0
      %5480 = vmatpush.msra.mxu0 0.0
      %5481 = vmatpush.msra.mxu0 0.0
      %5482 = vmatpush.msra.mxu0 0.0
      %5483 = vmatpush.msra.mxu0 0.0
      %5484 = vmatpush.msra.mxu0 0.0
      %5485 = vmatpush.msra.mxu0 0.0
      %5486 = vmatpush.msra.mxu0 0.0
      %5487 = vmatpush.msra.mxu0 0.0
      %5488 = vmatpush.msra.mxu0 0.0
      %5489 = vmatpush.msra.mxu0 0.0
      %5490 = vmatpush.msra.mxu0 0.0
      %5491 = vmatpush.msra.mxu0 0.0
      %5492 = vmatpush.msra.mxu0 %v5476
      %5493 = vmatmul.f32.gmra.mxu0 %v2611
      %v5494 = vpop.f32.mrf.mxu0
      %v5495 = vadd.f32 0.0, %v5494
      %5496 = vmatmul.f32.gmra.mxu0 %v2613
      %v5497 = vpop.f32.mrf.mxu0
      %v5498 = vadd.f32 0.0, %v5497
      %5499 = vmatmul.f32.gmra.mxu0 %v2615
      %v5500 = vpop.f32.mrf.mxu0
      %v5501 = vadd.f32 0.0, %v5500
      %5502 = vmatmul.f32.gmra.mxu0 %v2617
      %v5503 = vpop.f32.mrf.mxu0
      %v5504 = vadd.f32 0.0, %v5503
      %5505 = vmatmul.f32.gmra.mxu0 %v2619
      %v5506 = vpop.f32.mrf.mxu0
      %v5507 = vadd.f32 0.0, %v5506
      %5508 = vmatmul.f32.gmra.mxu0 %v2621
      %v5509 = vpop.f32.mrf.mxu0
      %v5510 = vadd.f32 0.0, %v5509
      %5511 = vmatmul.f32.gmra.mxu0 %v2623
      %v5512 = vpop.f32.mrf.mxu0
      %v5513 = vadd.f32 0.0, %v5512
      %5514 = vmatmul.f32.gmra.mxu0 %v2625
      %v5515 = vpop.f32.mrf.mxu0
      %v5516 = vadd.f32 0.0, %v5515
      %5517 = vmatmul.f32.gmra.mxu0 %v2627
      %v5518 = vpop.f32.mrf.mxu0
      %v5519 = vadd.f32 0.0, %v5518
      %5520 = vmatmul.f32.gmra.mxu0 %v2629
      %v5521 = vpop.f32.mrf.mxu0
      %v5522 = vadd.f32 0.0, %v5521
      %5523 = vmatmul.f32.gmra.mxu0 %v2631
      %v5524 = vpop.f32.mrf.mxu0
      %v5525 = vadd.f32 0.0, %v5524
      %5526 = vmatmul.f32.gmra.mxu0 %v2633
      %v5527 = vpop.f32.mrf.mxu0
      %v5528 = vadd.f32 0.0, %v5527
      %5529 = vmatmul.f32.gmra.mxu0 %v2635
      %v5530 = vpop.f32.mrf.mxu0
      %v5531 = vadd.f32 0.0, %v5530
      %5532 = vmatmul.f32.gmra.mxu0 %v2637
      %v5533 = vpop.f32.mrf.mxu0
      %v5534 = vadd.f32 0.0, %v5533
      %5535 = vmatmul.f32.gmra.mxu0 %v2639
      %v5536 = vpop.f32.mrf.mxu0
      %v5537 = vadd.f32 0.0, %v5536
      %5538 = vmatmul.f32.gmra.mxu0 %v2641
      %v5539 = vpop.f32.mrf.mxu0
      %v5540 = vadd.f32 0.0, %v5539
      %5541 = vmatmul.f32.gmra.mxu0 %v2643
      %v5542 = vpop.f32.mrf.mxu0
      %v5543 = vadd.f32 0.0, %v5542
      %5544 = vmatmul.f32.gmra.mxu0 %v2645
      %v5545 = vpop.f32.mrf.mxu0
      %v5546 = vadd.f32 0.0, %v5545
      %5547 = vmatmul.f32.gmra.mxu0 %v2647
      %v5548 = vpop.f32.mrf.mxu0
      %v5549 = vadd.f32 0.0, %v5548
      %5550 = vmatmul.f32.gmra.mxu0 %v2649
      %v5551 = vpop.f32.mrf.mxu0
      %v5552 = vadd.f32 0.0, %v5551
      %5553 = vmatmul.f32.gmra.mxu0 %v2651
      %v5554 = vpop.f32.mrf.mxu0
      %v5555 = vadd.f32 0.0, %v5554
      %5556 = vmatmul.f32.gmra.mxu0 %v2653
      %v5557 = vpop.f32.mrf.mxu0
      %v5558 = vadd.f32 0.0, %v5557
      %5559 = vmatmul.f32.gmra.mxu0 %v2655
      %v5560 = vpop.f32.mrf.mxu0
      %v5561 = vadd.f32 0.0, %v5560
      %5562 = vmatmul.f32.gmra.mxu0 %v2657
      %v5563 = vpop.f32.mrf.mxu0
      %v5564 = vadd.f32 0.0, %v5563
      %5565 = vmatmul.f32.gmra.mxu0 %v2659
      %v5566 = vpop.f32.mrf.mxu0
      %v5567 = vadd.f32 0.0, %v5566
      %5568 = vmatmul.f32.gmra.mxu0 %v2661
      %v5569 = vpop.f32.mrf.mxu0
      %v5570 = vadd.f32 0.0, %v5569
      %5571 = vmatmul.f32.gmra.mxu0 %v3934
      %v5572 = vpop.f32.mrf.mxu0
      %v5573 = vadd.f32 0.0, %v5572
      %5574 = vmatmul.f32.gmra.mxu0 %v3936
      %v5575 = vpop.f32.mrf.mxu0
      %v5576 = vadd.f32 0.0, %v5575
      %5577 = vmatmul.f32.gmra.mxu0 %v4711
      %v5578 = vpop.f32.mrf.mxu0
      %v5579 = vadd.f32 0.0, %v5578
      %5580 = vmatmul.f32.gmra.mxu0 %v4713
      %v5581 = vpop.f32.mrf.mxu0
      %v5582 = vadd.f32 0.0, %v5581
      %5583 = vmatmul.f32.gmra.mxu0 %v718
      %v5584 = vpop.f32.mrf.mxu0
      %v5585 = vadd.f32 0.0, %v5584
      %5586 = vmatmul.f32.gmra.mxu0 %v718
      %v5587 = vpop.f32.mrf.mxu0
      %v5588 = vadd.f32 0.0, %v5587
      %5589 = vdwg.mxu0
      %v5590 = vadd.f32 %v5443, %v5495
      %v5591 = vadd.f32 %v5444, %v5498
      %v5592 = vadd.f32 %v5445, %v5501
      %v5593 = vadd.f32 %v5446, %v5504
      %v5594 = vadd.f32 %v5447, %v5507
      %v5595 = vadd.f32 %v5448, %v5510
      %v5596 = vadd.f32 %v5449, %v5513
      %v5597 = vadd.f32 %v5450, %v5516
      %v5598 = vadd.f32 %v5451, %v5519
      %v5599 = vadd.f32 %v5452, %v5522
      %v5600 = vadd.f32 %v5453, %v5525
      %v5601 = vadd.f32 %v5454, %v5528
      %v5602 = vadd.f32 %v5455, %v5531
      %v5603 = vadd.f32 %v5456, %v5534
      %v5604 = vadd.f32 %v5457, %v5537
      %v5605 = vadd.f32 %v5458, %v5540
      %v5606 = vadd.f32 %v5459, %v5543
      %v5607 = vadd.f32 %v5460, %v5546
      %v5608 = vadd.f32 %v5461, %v5549
      %v5609 = vadd.f32 %v5462, %v5552
      %v5610 = vadd.f32 %v5463, %v5555
      %v5611 = vadd.f32 %v5464, %v5558
      %v5612 = vadd.f32 %v5465, %v5561
      %v5613 = vadd.f32 %v5466, %v5564
      %v5614 = vadd.f32 %v5467, %v5567
      %v5615 = vadd.f32 %v5468, %v5570
      %v5616 = vadd.f32 %v5469, %v5573
      %v5617 = vadd.f32 %v5470, %v5576
      %v5618 = vadd.f32 %v5471, %v5579
      %v5619 = vadd.f32 %v5472, %v5582
      %v5620 = vadd.f32 %v5473, %v5585
      %v5621 = vadd.f32 %v5474, %v5588
      %s5622 = scalar_lea.vmem %s5, 136
      %v5623 = vld [vmem:[%s5622] sm:$0xff]
      %5624 = vmatpush.msra.mxu0 0.0
      %5625 = vmatpush.msra.mxu0 0.0
      %5626 = vmatpush.msra.mxu0 0.0
      %5627 = vmatpush.msra.mxu0 0.0
      %5628 = vmatpush.msra.mxu0 0.0
      %5629 = vmatpush.msra.mxu0 0.0
      %5630 = vmatpush.msra.mxu0 0.0
      %5631 = vmatpush.msra.mxu0 0.0
      %5632 = vmatpush.msra.mxu0 0.0
      %5633 = vmatpush.msra.mxu0 0.0
      %5634 = vmatpush.msra.mxu0 0.0
      %5635 = vmatpush.msra.mxu0 0.0
      %5636 = vmatpush.msra.mxu0 0.0
      %5637 = vmatpush.msra.mxu0 0.0
      %5638 = vmatpush.msra.mxu0 0.0
      %5639 = vmatpush.msra.mxu0 %v5623
      %5640 = vmatmul.f32.gmra.mxu0 %v3021
      %v5641 = vpop.f32.mrf.mxu0
      %v5642 = vadd.f32 0.0, %v5641
      %5643 = vmatmul.f32.gmra.mxu0 %v3023
      %v5644 = vpop.f32.mrf.mxu0
      %v5645 = vadd.f32 0.0, %v5644
      %5646 = vmatmul.f32.gmra.mxu0 %v3025
      %v5647 = vpop.f32.mrf.mxu0
      %v5648 = vadd.f32 0.0, %v5647
      %5649 = vmatmul.f32.gmra.mxu0 %v3027
      %v5650 = vpop.f32.mrf.mxu0
      %v5651 = vadd.f32 0.0, %v5650
      %5652 = vmatmul.f32.gmra.mxu0 %v3029
      %v5653 = vpop.f32.mrf.mxu0
      %v5654 = vadd.f32 0.0, %v5653
      %5655 = vmatmul.f32.gmra.mxu0 %v3031
      %v5656 = vpop.f32.mrf.mxu0
      %v5657 = vadd.f32 0.0, %v5656
      %5658 = vmatmul.f32.gmra.mxu0 %v3033
      %v5659 = vpop.f32.mrf.mxu0
      %v5660 = vadd.f32 0.0, %v5659
      %5661 = vmatmul.f32.gmra.mxu0 %v3035
      %v5662 = vpop.f32.mrf.mxu0
      %v5663 = vadd.f32 0.0, %v5662
      %5664 = vmatmul.f32.gmra.mxu0 %v3037
      %v5665 = vpop.f32.mrf.mxu0
      %v5666 = vadd.f32 0.0, %v5665
      %5667 = vmatmul.f32.gmra.mxu0 %v3039
      %v5668 = vpop.f32.mrf.mxu0
      %v5669 = vadd.f32 0.0, %v5668
      %5670 = vmatmul.f32.gmra.mxu0 %v3041
      %v5671 = vpop.f32.mrf.mxu0
      %v5672 = vadd.f32 0.0, %v5671
      %5673 = vmatmul.f32.gmra.mxu0 %v3043
      %v5674 = vpop.f32.mrf.mxu0
      %v5675 = vadd.f32 0.0, %v5674
      %5676 = vmatmul.f32.gmra.mxu0 %v3045
      %v5677 = vpop.f32.mrf.mxu0
      %v5678 = vadd.f32 0.0, %v5677
      %5679 = vmatmul.f32.gmra.mxu0 %v3047
      %v5680 = vpop.f32.mrf.mxu0
      %v5681 = vadd.f32 0.0, %v5680
      %5682 = vmatmul.f32.gmra.mxu0 %v3049
      %v5683 = vpop.f32.mrf.mxu0
      %v5684 = vadd.f32 0.0, %v5683
      %5685 = vmatmul.f32.gmra.mxu0 %v3051
      %v5686 = vpop.f32.mrf.mxu0
      %v5687 = vadd.f32 0.0, %v5686
      %5688 = vmatmul.f32.gmra.mxu0 %v3053
      %v5689 = vpop.f32.mrf.mxu0
      %v5690 = vadd.f32 0.0, %v5689
      %5691 = vmatmul.f32.gmra.mxu0 %v3055
      %v5692 = vpop.f32.mrf.mxu0
      %v5693 = vadd.f32 0.0, %v5692
      %5694 = vmatmul.f32.gmra.mxu0 %v3057
      %v5695 = vpop.f32.mrf.mxu0
      %v5696 = vadd.f32 0.0, %v5695
      %5697 = vmatmul.f32.gmra.mxu0 %v3059
      %v5698 = vpop.f32.mrf.mxu0
      %v5699 = vadd.f32 0.0, %v5698
      %5700 = vmatmul.f32.gmra.mxu0 %v3061
      %v5701 = vpop.f32.mrf.mxu0
      %v5702 = vadd.f32 0.0, %v5701
      %5703 = vmatmul.f32.gmra.mxu0 %v3063
      %v5704 = vpop.f32.mrf.mxu0
      %v5705 = vadd.f32 0.0, %v5704
      %5706 = vmatmul.f32.gmra.mxu0 %v3065
      %v5707 = vpop.f32.mrf.mxu0
      %v5708 = vadd.f32 0.0, %v5707
      %5709 = vmatmul.f32.gmra.mxu0 %v3067
      %v5710 = vpop.f32.mrf.mxu0
      %v5711 = vadd.f32 0.0, %v5710
      %5712 = vmatmul.f32.gmra.mxu0 %v3069
      %v5713 = vpop.f32.mrf.mxu0
      %v5714 = vadd.f32 0.0, %v5713
      %5715 = vmatmul.f32.gmra.mxu0 %v3071
      %v5716 = vpop.f32.mrf.mxu0
      %v5717 = vadd.f32 0.0, %v5716
      %5718 = vmatmul.f32.gmra.mxu0 %v4090
      %v5719 = vpop.f32.mrf.mxu0
      %v5720 = vadd.f32 0.0, %v5719
      %5721 = vmatmul.f32.gmra.mxu0 %v4092
      %v5722 = vpop.f32.mrf.mxu0
      %v5723 = vadd.f32 0.0, %v5722
      %5724 = vmatmul.f32.gmra.mxu0 %v4867
      %v5725 = vpop.f32.mrf.mxu0
      %v5726 = vadd.f32 0.0, %v5725
      %5727 = vmatmul.f32.gmra.mxu0 %v4869
      %v5728 = vpop.f32.mrf.mxu0
      %v5729 = vadd.f32 0.0, %v5728
      %5730 = vmatmul.f32.gmra.mxu0 %v1148
      %v5731 = vpop.f32.mrf.mxu0
      %v5732 = vadd.f32 0.0, %v5731
      %5733 = vmatmul.f32.gmra.mxu0 %v1148
      %v5734 = vpop.f32.mrf.mxu0
      %v5735 = vadd.f32 0.0, %v5734
      %5736 = vdwg.mxu0
      %v5737 = vadd.f32 %v5590, %v5642
      %v5738 = vadd.f32 %v5591, %v5645
      %v5739 = vadd.f32 %v5592, %v5648
      %v5740 = vadd.f32 %v5593, %v5651
      %v5741 = vadd.f32 %v5594, %v5654
      %v5742 = vadd.f32 %v5595, %v5657
      %v5743 = vadd.f32 %v5596, %v5660
      %v5744 = vadd.f32 %v5597, %v5663
      %v5745 = vadd.f32 %v5598, %v5666
      %v5746 = vadd.f32 %v5599, %v5669
      %v5747 = vadd.f32 %v5600, %v5672
      %v5748 = vadd.f32 %v5601, %v5675
      %v5749 = vadd.f32 %v5602, %v5678
      %v5750 = vadd.f32 %v5603, %v5681
      %v5751 = vadd.f32 %v5604, %v5684
      %v5752 = vadd.f32 %v5605, %v5687
      %v5753 = vadd.f32 %v5606, %v5690
      %v5754 = vadd.f32 %v5607, %v5693
      %v5755 = vadd.f32 %v5608, %v5696
      %v5756 = vadd.f32 %v5609, %v5699
      %v5757 = vadd.f32 %v5610, %v5702
      %v5758 = vadd.f32 %v5611, %v5705
      %v5759 = vadd.f32 %v5612, %v5708
      %v5760 = vadd.f32 %v5613, %v5711
      %v5761 = vadd.f32 %v5614, %v5714
      %v5762 = vadd.f32 %v5615, %v5717
      %v5763 = vadd.f32 %v5616, %v5720
      %v5764 = vadd.f32 %v5617, %v5723
      %v5765 = vadd.f32 %v5618, %v5726
      %v5766 = vadd.f32 %v5619, %v5729
      %v5767 = vadd.f32 %v5620, %v5732
      %v5768 = vadd.f32 %v5621, %v5735
      %s5769 = scalar_lea.vmem %s5, 144
      %v5770 = vld [vmem:[%s5769] sm:$0xff]
      %5771 = vmatpush.msra.mxu0 0.0
      %5772 = vmatpush.msra.mxu0 0.0
      %5773 = vmatpush.msra.mxu0 0.0
      %5774 = vmatpush.msra.mxu0 0.0
      %5775 = vmatpush.msra.mxu0 0.0
      %5776 = vmatpush.msra.mxu0 0.0
      %5777 = vmatpush.msra.mxu0 0.0
      %5778 = vmatpush.msra.mxu0 0.0
      %5779 = vmatpush.msra.mxu0 0.0
      %5780 = vmatpush.msra.mxu0 0.0
      %5781 = vmatpush.msra.mxu0 0.0
      %5782 = vmatpush.msra.mxu0 0.0
      %5783 = vmatpush.msra.mxu0 0.0
      %5784 = vmatpush.msra.mxu0 0.0
      %5785 = vmatpush.msra.mxu0 0.0
      %5786 = vmatpush.msra.mxu0 %v5770
      %5787 = vmatmul.f32.gmra.mxu0 %v3299
      %v5788 = vpop.f32.mrf.mxu0
      %v5789 = vadd.f32 0.0, %v5788
      %5790 = vmatmul.f32.gmra.mxu0 %v3301
      %v5791 = vpop.f32.mrf.mxu0
      %v5792 = vadd.f32 0.0, %v5791
      %5793 = vmatmul.f32.gmra.mxu0 %v3303
      %v5794 = vpop.f32.mrf.mxu0
      %v5795 = vadd.f32 0.0, %v5794
      %5796 = vmatmul.f32.gmra.mxu0 %v3305
      %v5797 = vpop.f32.mrf.mxu0
      %v5798 = vadd.f32 0.0, %v5797
      %5799 = vmatmul.f32.gmra.mxu0 %v3307
      %v5800 = vpop.f32.mrf.mxu0
      %v5801 = vadd.f32 0.0, %v5800
      %5802 = vmatmul.f32.gmra.mxu0 %v3309
      %v5803 = vpop.f32.mrf.mxu0
      %v5804 = vadd.f32 0.0, %v5803
      %5805 = vmatmul.f32.gmra.mxu0 %v3311
      %v5806 = vpop.f32.mrf.mxu0
      %v5807 = vadd.f32 0.0, %v5806
      %5808 = vmatmul.f32.gmra.mxu0 %v3313
      %v5809 = vpop.f32.mrf.mxu0
      %v5810 = vadd.f32 0.0, %v5809
      %5811 = vmatmul.f32.gmra.mxu0 %v3315
      %v5812 = vpop.f32.mrf.mxu0
      %v5813 = vadd.f32 0.0, %v5812
      %5814 = vmatmul.f32.gmra.mxu0 %v3317
      %v5815 = vpop.f32.mrf.mxu0
      %v5816 = vadd.f32 0.0, %v5815
      %5817 = vmatmul.f32.gmra.mxu0 %v3319
      %v5818 = vpop.f32.mrf.mxu0
      %v5819 = vadd.f32 0.0, %v5818
      %5820 = vmatmul.f32.gmra.mxu0 %v3321
      %v5821 = vpop.f32.mrf.mxu0
      %v5822 = vadd.f32 0.0, %v5821
      %5823 = vmatmul.f32.gmra.mxu0 %v3323
      %v5824 = vpop.f32.mrf.mxu0
      %v5825 = vadd.f32 0.0, %v5824
      %5826 = vmatmul.f32.gmra.mxu0 %v3325
      %v5827 = vpop.f32.mrf.mxu0
      %v5828 = vadd.f32 0.0, %v5827
      %5829 = vmatmul.f32.gmra.mxu0 %v3327
      %v5830 = vpop.f32.mrf.mxu0
      %v5831 = vadd.f32 0.0, %v5830
      %5832 = vmatmul.f32.gmra.mxu0 %v3329
      %v5833 = vpop.f32.mrf.mxu0
      %v5834 = vadd.f32 0.0, %v5833
      %5835 = vmatmul.f32.gmra.mxu0 %v3331
      %v5836 = vpop.f32.mrf.mxu0
      %v5837 = vadd.f32 0.0, %v5836
      %5838 = vmatmul.f32.gmra.mxu0 %v3333
      %v5839 = vpop.f32.mrf.mxu0
      %v5840 = vadd.f32 0.0, %v5839
      %5841 = vmatmul.f32.gmra.mxu0 %v3335
      %v5842 = vpop.f32.mrf.mxu0
      %v5843 = vadd.f32 0.0, %v5842
      %5844 = vmatmul.f32.gmra.mxu0 %v3337
      %v5845 = vpop.f32.mrf.mxu0
      %v5846 = vadd.f32 0.0, %v5845
      %5847 = vmatmul.f32.gmra.mxu0 %v3339
      %v5848 = vpop.f32.mrf.mxu0
      %v5849 = vadd.f32 0.0, %v5848
      %5850 = vmatmul.f32.gmra.mxu0 %v3341
      %v5851 = vpop.f32.mrf.mxu0
      %v5852 = vadd.f32 0.0, %v5851
      %5853 = vmatmul.f32.gmra.mxu0 %v3343
      %v5854 = vpop.f32.mrf.mxu0
      %v5855 = vadd.f32 0.0, %v5854
      %5856 = vmatmul.f32.gmra.mxu0 %v3345
      %v5857 = vpop.f32.mrf.mxu0
      %v5858 = vadd.f32 0.0, %v5857
      %5859 = vmatmul.f32.gmra.mxu0 %v3347
      %v5860 = vpop.f32.mrf.mxu0
      %v5861 = vadd.f32 0.0, %v5860
      %5862 = vmatmul.f32.gmra.mxu0 %v3349
      %v5863 = vpop.f32.mrf.mxu0
      %v5864 = vadd.f32 0.0, %v5863
      %5865 = vmatmul.f32.gmra.mxu0 %v4246
      %v5866 = vpop.f32.mrf.mxu0
      %v5867 = vadd.f32 0.0, %v5866
      %5868 = vmatmul.f32.gmra.mxu0 %v4248
      %v5869 = vpop.f32.mrf.mxu0
      %v5870 = vadd.f32 0.0, %v5869
      %5871 = vmatmul.f32.gmra.mxu0 %v5023
      %v5872 = vpop.f32.mrf.mxu0
      %v5873 = vadd.f32 0.0, %v5872
      %5874 = vmatmul.f32.gmra.mxu0 %v5025
      %v5875 = vpop.f32.mrf.mxu0
      %v5876 = vadd.f32 0.0, %v5875
      %5877 = vmatmul.f32.gmra.mxu0 %v3293
      %v5878 = vpop.f32.mrf.mxu0
      %v5879 = vadd.f32 0.0, %v5878
      %5880 = vmatmul.f32.gmra.mxu0 %v3293
      %v5881 = vpop.f32.mrf.mxu0
      %v5882 = vadd.f32 0.0, %v5881
      %5883 = vdwg.mxu0
      %v5884 = vadd.f32 %v5737, %v5789
      %v5885 = vadd.f32 %v5738, %v5792
      %v5886 = vadd.f32 %v5739, %v5795
      %v5887 = vadd.f32 %v5740, %v5798
      %v5888 = vadd.f32 %v5741, %v5801
      %v5889 = vadd.f32 %v5742, %v5804
      %v5890 = vadd.f32 %v5743, %v5807
      %v5891 = vadd.f32 %v5744, %v5810
      %v5892 = vadd.f32 %v5745, %v5813
      %v5893 = vadd.f32 %v5746, %v5816
      %v5894 = vadd.f32 %v5747, %v5819
      %v5895 = vadd.f32 %v5748, %v5822
      %v5896 = vadd.f32 %v5749, %v5825
      %v5897 = vadd.f32 %v5750, %v5828
      %v5898 = vadd.f32 %v5751, %v5831
      %v5899 = vadd.f32 %v5752, %v5834
      %v5900 = vadd.f32 %v5753, %v5837
      %v5901 = vadd.f32 %v5754, %v5840
      %v5902 = vadd.f32 %v5755, %v5843
      %v5903 = vadd.f32 %v5756, %v5846
      %v5904 = vadd.f32 %v5757, %v5849
      %v5905 = vadd.f32 %v5758, %v5852
      %v5906 = vadd.f32 %v5759, %v5855
      %v5907 = vadd.f32 %v5760, %v5858
      %v5908 = vadd.f32 %v5761, %v5861
      %v5909 = vadd.f32 %v5762, %v5864
      %v5910 = vadd.f32 %v5763, %v5867
      %v5911 = vadd.f32 %v5764, %v5870
      %v5912 = vadd.f32 %v5765, %v5873
      %v5913 = vadd.f32 %v5766, %v5876
      %v5914 = vadd.f32 %v5767, %v5879
      %v5915 = vadd.f32 %v5768, %v5882
      %s5916 = scalar_lea.vmem %s5, 152
      %v5917 = vld [vmem:[%s5916] sm:$0xff]
      %5918 = vmatpush.msra.mxu0 0.0
      %5919 = vmatpush.msra.mxu0 0.0
      %5920 = vmatpush.msra.mxu0 0.0
      %5921 = vmatpush.msra.mxu0 0.0
      %5922 = vmatpush.msra.mxu0 0.0
      %5923 = vmatpush.msra.mxu0 0.0
      %5924 = vmatpush.msra.mxu0 0.0
      %5925 = vmatpush.msra.mxu0 0.0
      %5926 = vmatpush.msra.mxu0 0.0
      %5927 = vmatpush.msra.mxu0 0.0
      %5928 = vmatpush.msra.mxu0 0.0
      %5929 = vmatpush.msra.mxu0 0.0
      %5930 = vmatpush.msra.mxu0 0.0
      %5931 = vmatpush.msra.mxu0 0.0
      %5932 = vmatpush.msra.mxu0 0.0
      %5933 = vmatpush.msra.mxu0 %v5917
      %5934 = vmatmul.f32.gmra.mxu0 %v3577
      %v5935 = vpop.f32.mrf.mxu0
      %v5936 = vadd.f32 0.0, %v5935
      %5937 = vmatmul.f32.gmra.mxu0 %v3579
      %v5938 = vpop.f32.mrf.mxu0
      %v5939 = vadd.f32 0.0, %v5938
      %5940 = vmatmul.f32.gmra.mxu0 %v3581
      %v5941 = vpop.f32.mrf.mxu0
      %v5942 = vadd.f32 0.0, %v5941
      %5943 = vmatmul.f32.gmra.mxu0 %v3583
      %v5944 = vpop.f32.mrf.mxu0
      %v5945 = vadd.f32 0.0, %v5944
      %5946 = vmatmul.f32.gmra.mxu0 %v3585
      %v5947 = vpop.f32.mrf.mxu0
      %v5948 = vadd.f32 0.0, %v5947
      %5949 = vmatmul.f32.gmra.mxu0 %v3587
      %v5950 = vpop.f32.mrf.mxu0
      %v5951 = vadd.f32 0.0, %v5950
      %5952 = vmatmul.f32.gmra.mxu0 %v3589
      %v5953 = vpop.f32.mrf.mxu0
      %v5954 = vadd.f32 0.0, %v5953
      %5955 = vmatmul.f32.gmra.mxu0 %v3591
      %v5956 = vpop.f32.mrf.mxu0
      %v5957 = vadd.f32 0.0, %v5956
      %5958 = vmatmul.f32.gmra.mxu0 %v3593
      %v5959 = vpop.f32.mrf.mxu0
      %v5960 = vadd.f32 0.0, %v5959
      %5961 = vmatmul.f32.gmra.mxu0 %v3595
      %v5962 = vpop.f32.mrf.mxu0
      %v5963 = vadd.f32 0.0, %v5962
      %5964 = vmatmul.f32.gmra.mxu0 %v3597
      %v5965 = vpop.f32.mrf.mxu0
      %v5966 = vadd.f32 0.0, %v5965
      %5967 = vmatmul.f32.gmra.mxu0 %v3599
      %v5968 = vpop.f32.mrf.mxu0
      %v5969 = vadd.f32 0.0, %v5968
      %5970 = vmatmul.f32.gmra.mxu0 %v3601
      %v5971 = vpop.f32.mrf.mxu0
      %v5972 = vadd.f32 0.0, %v5971
      %5973 = vmatmul.f32.gmra.mxu0 %v3603
      %v5974 = vpop.f32.mrf.mxu0
      %v5975 = vadd.f32 0.0, %v5974
      %5976 = vmatmul.f32.gmra.mxu0 %v3605
      %v5977 = vpop.f32.mrf.mxu0
      %v5978 = vadd.f32 0.0, %v5977
      %5979 = vmatmul.f32.gmra.mxu0 %v3607
      %v5980 = vpop.f32.mrf.mxu0
      %v5981 = vadd.f32 0.0, %v5980
      %5982 = vmatmul.f32.gmra.mxu0 %v3609
      %v5983 = vpop.f32.mrf.mxu0
      %v5984 = vadd.f32 0.0, %v5983
      %5985 = vmatmul.f32.gmra.mxu0 %v3611
      %v5986 = vpop.f32.mrf.mxu0
      %v5987 = vadd.f32 0.0, %v5986
      %5988 = vmatmul.f32.gmra.mxu0 %v3613
      %v5989 = vpop.f32.mrf.mxu0
      %v5990 = vadd.f32 0.0, %v5989
      %5991 = vmatmul.f32.gmra.mxu0 %v3615
      %v5992 = vpop.f32.mrf.mxu0
      %v5993 = vadd.f32 0.0, %v5992
      %5994 = vmatmul.f32.gmra.mxu0 %v3617
      %v5995 = vpop.f32.mrf.mxu0
      %v5996 = vadd.f32 0.0, %v5995
      %5997 = vmatmul.f32.gmra.mxu0 %v3619
      %v5998 = vpop.f32.mrf.mxu0
      %v5999 = vadd.f32 0.0, %v5998
      %6000 = vmatmul.f32.gmra.mxu0 %v3621
      %v6001 = vpop.f32.mrf.mxu0
      %v6002 = vadd.f32 0.0, %v6001
      %6003 = vmatmul.f32.gmra.mxu0 %v3623
      %v6004 = vpop.f32.mrf.mxu0
      %v6005 = vadd.f32 0.0, %v6004
      %6006 = vmatmul.f32.gmra.mxu0 %v3625
      %v6007 = vpop.f32.mrf.mxu0
      %v6008 = vadd.f32 0.0, %v6007
      %6009 = vmatmul.f32.gmra.mxu0 %v3627
      %v6010 = vpop.f32.mrf.mxu0
      %v6011 = vadd.f32 0.0, %v6010
      %6012 = vmatmul.f32.gmra.mxu0 %v4402
      %v6013 = vpop.f32.mrf.mxu0
      %v6014 = vadd.f32 0.0, %v6013
      %6015 = vmatmul.f32.gmra.mxu0 %v4404
      %v6016 = vpop.f32.mrf.mxu0
      %v6017 = vadd.f32 0.0, %v6016
      %6018 = vmatmul.f32.gmra.mxu0 %v5179
      %v6019 = vpop.f32.mrf.mxu0
      %v6020 = vadd.f32 0.0, %v6019
      %6021 = vmatmul.f32.gmra.mxu0 %v5181
      %v6022 = vpop.f32.mrf.mxu0
      %v6023 = vadd.f32 0.0, %v6022
      %6024 = vmatmul.f32.gmra.mxu0 %v3571
      %v6025 = vpop.f32.mrf.mxu0
      %v6026 = vadd.f32 0.0, %v6025
      %6027 = vmatmul.f32.gmra.mxu0 %v3571
      %v6028 = vpop.f32.mrf.mxu0
      %v6029 = vadd.f32 0.0, %v6028
      %6030 = vdwg.mxu0
      %v6031 = vadd.f32 %v5884, %v5936
      %v6032 = vadd.f32 %v5885, %v5939
      %v6033 = vadd.f32 %v5886, %v5942
      %v6034 = vadd.f32 %v5887, %v5945
      %v6035 = vadd.f32 %v5888, %v5948
      %v6036 = vadd.f32 %v5889, %v5951
      %v6037 = vadd.f32 %v5890, %v5954
      %v6038 = vadd.f32 %v5891, %v5957
      %v6039 = vadd.f32 %v5892, %v5960
      %v6040 = vadd.f32 %v5893, %v5963
      %v6041 = vadd.f32 %v5894, %v5966
      %v6042 = vadd.f32 %v5895, %v5969
      %v6043 = vadd.f32 %v5896, %v5972
      %v6044 = vadd.f32 %v5897, %v5975
      %v6045 = vadd.f32 %v5898, %v5978
      %v6046 = vadd.f32 %v5899, %v5981
      %v6047 = vadd.f32 %v5900, %v5984
      %v6048 = vadd.f32 %v5901, %v5987
      %v6049 = vadd.f32 %v5902, %v5990
      %v6050 = vadd.f32 %v5903, %v5993
      %v6051 = vadd.f32 %v5904, %v5996
      %v6052 = vadd.f32 %v5905, %v5999
      %v6053 = vadd.f32 %v5906, %v6002
      %v6054 = vadd.f32 %v5907, %v6005
      %v6055 = vadd.f32 %v5908, %v6008
      %v6056 = vadd.f32 %v5909, %v6011
      %v6057 = vadd.f32 %v5910, %v6014
      %v6058 = vadd.f32 %v5911, %v6017
      %v6059 = vadd.f32 %v5912, %v6020
      %v6060 = vadd.f32 %v5913, %v6023
      %v6061 = vadd.f32 %v5914, %v6026
      %v6062 = vadd.f32 %v5915, %v6029
      %s6063 = scalar_lea.vmem %s5, 160
      %v6064 = vld [vmem:[%s6063] sm:$0xff]
      %6065 = vmatpush.msra.mxu0 0.0
      %6066 = vmatpush.msra.mxu0 0.0
      %6067 = vmatpush.msra.mxu0 0.0
      %6068 = vmatpush.msra.mxu0 0.0
      %6069 = vmatpush.msra.mxu0 0.0
      %6070 = vmatpush.msra.mxu0 0.0
      %6071 = vmatpush.msra.mxu0 0.0
      %6072 = vmatpush.msra.mxu0 0.0
      %6073 = vmatpush.msra.mxu0 0.0
      %6074 = vmatpush.msra.mxu0 0.0
      %6075 = vmatpush.msra.mxu0 0.0
      %6076 = vmatpush.msra.mxu0 0.0
      %6077 = vmatpush.msra.mxu0 0.0
      %6078 = vmatpush.msra.mxu0 0.0
      %6079 = vmatpush.msra.mxu0 0.0
      %6080 = vmatpush.msra.mxu0 %v6064
      %6081 = vmatmul.f32.gmra.mxu0 %v2784
      %v6082 = vpop.f32.mrf.mxu0
      %v6083 = vadd.f32 0.0, %v6082
      %6084 = vmatmul.f32.gmra.mxu0 %v2786
      %v6085 = vpop.f32.mrf.mxu0
      %v6086 = vadd.f32 0.0, %v6085
      %6087 = vmatmul.f32.gmra.mxu0 %v2788
      %v6088 = vpop.f32.mrf.mxu0
      %v6089 = vadd.f32 0.0, %v6088
      %6090 = vmatmul.f32.gmra.mxu0 %v2790
      %v6091 = vpop.f32.mrf.mxu0
      %v6092 = vadd.f32 0.0, %v6091
      %6093 = vmatmul.f32.gmra.mxu0 %v2792
      %v6094 = vpop.f32.mrf.mxu0
      %v6095 = vadd.f32 0.0, %v6094
      %6096 = vmatmul.f32.gmra.mxu0 %v2794
      %v6097 = vpop.f32.mrf.mxu0
      %v6098 = vadd.f32 0.0, %v6097
      %6099 = vmatmul.f32.gmra.mxu0 %v2796
      %v6100 = vpop.f32.mrf.mxu0
      %v6101 = vadd.f32 0.0, %v6100
      %6102 = vmatmul.f32.gmra.mxu0 %v2798
      %v6103 = vpop.f32.mrf.mxu0
      %v6104 = vadd.f32 0.0, %v6103
      %6105 = vmatmul.f32.gmra.mxu0 %v2800
      %v6106 = vpop.f32.mrf.mxu0
      %v6107 = vadd.f32 0.0, %v6106
      %6108 = vmatmul.f32.gmra.mxu0 %v2802
      %v6109 = vpop.f32.mrf.mxu0
      %v6110 = vadd.f32 0.0, %v6109
      %6111 = vmatmul.f32.gmra.mxu0 %v2804
      %v6112 = vpop.f32.mrf.mxu0
      %v6113 = vadd.f32 0.0, %v6112
      %6114 = vmatmul.f32.gmra.mxu0 %v2806
      %v6115 = vpop.f32.mrf.mxu0
      %v6116 = vadd.f32 0.0, %v6115
      %6117 = vmatmul.f32.gmra.mxu0 %v2808
      %v6118 = vpop.f32.mrf.mxu0
      %v6119 = vadd.f32 0.0, %v6118
      %6120 = vmatmul.f32.gmra.mxu0 %v2810
      %v6121 = vpop.f32.mrf.mxu0
      %v6122 = vadd.f32 0.0, %v6121
      %6123 = vmatmul.f32.gmra.mxu0 %v2812
      %v6124 = vpop.f32.mrf.mxu0
      %v6125 = vadd.f32 0.0, %v6124
      %6126 = vmatmul.f32.gmra.mxu0 %v2814
      %v6127 = vpop.f32.mrf.mxu0
      %v6128 = vadd.f32 0.0, %v6127
      %6129 = vmatmul.f32.gmra.mxu0 %v2816
      %v6130 = vpop.f32.mrf.mxu0
      %v6131 = vadd.f32 0.0, %v6130
      %6132 = vmatmul.f32.gmra.mxu0 %v2818
      %v6133 = vpop.f32.mrf.mxu0
      %v6134 = vadd.f32 0.0, %v6133
      %6135 = vmatmul.f32.gmra.mxu0 %v2820
      %v6136 = vpop.f32.mrf.mxu0
      %v6137 = vadd.f32 0.0, %v6136
      %6138 = vmatmul.f32.gmra.mxu0 %v2822
      %v6139 = vpop.f32.mrf.mxu0
      %v6140 = vadd.f32 0.0, %v6139
      %6141 = vmatmul.f32.gmra.mxu0 %v2824
      %v6142 = vpop.f32.mrf.mxu0
      %v6143 = vadd.f32 0.0, %v6142
      %6144 = vmatmul.f32.gmra.mxu0 %v2826
      %v6145 = vpop.f32.mrf.mxu0
      %v6146 = vadd.f32 0.0, %v6145
      %6147 = vmatmul.f32.gmra.mxu0 %v2828
      %v6148 = vpop.f32.mrf.mxu0
      %v6149 = vadd.f32 0.0, %v6148
      %6150 = vmatmul.f32.gmra.mxu0 %v2830
      %v6151 = vpop.f32.mrf.mxu0
      %v6152 = vadd.f32 0.0, %v6151
      %6153 = vmatmul.f32.gmra.mxu0 %v3777
      %v6154 = vpop.f32.mrf.mxu0
      %v6155 = vadd.f32 0.0, %v6154
      %6156 = vmatmul.f32.gmra.mxu0 %v3779
      %v6157 = vpop.f32.mrf.mxu0
      %v6158 = vadd.f32 0.0, %v6157
      %6159 = vmatmul.f32.gmra.mxu0 %v4554
      %v6160 = vpop.f32.mrf.mxu0
      %v6161 = vadd.f32 0.0, %v6160
      %6162 = vmatmul.f32.gmra.mxu0 %v4556
      %v6163 = vpop.f32.mrf.mxu0
      %v6164 = vadd.f32 0.0, %v6163
      %6165 = vmatmul.f32.gmra.mxu0 %v893
      %v6166 = vpop.f32.mrf.mxu0
      %v6167 = vadd.f32 0.0, %v6166
      %6168 = vmatmul.f32.gmra.mxu0 %v893
      %v6169 = vpop.f32.mrf.mxu0
      %v6170 = vadd.f32 0.0, %v6169
      %6171 = vmatmul.f32.gmra.mxu0 %v893
      %v6172 = vpop.f32.mrf.mxu0
      %v6173 = vadd.f32 0.0, %v6172
      %6174 = vmatmul.f32.gmra.mxu0 %v893
      %v6175 = vpop.f32.mrf.mxu0
      %v6176 = vadd.f32 0.0, %v6175
      %6177 = vdwg.mxu0
      %v6178 = vadd.f32 %v6031, %v6083
      %v6179 = vadd.f32 %v6032, %v6086
      %v6180 = vadd.f32 %v6033, %v6089
      %v6181 = vadd.f32 %v6034, %v6092
      %v6182 = vadd.f32 %v6035, %v6095
      %v6183 = vadd.f32 %v6036, %v6098
      %v6184 = vadd.f32 %v6037, %v6101
      %v6185 = vadd.f32 %v6038, %v6104
      %v6186 = vadd.f32 %v6039, %v6107
      %v6187 = vadd.f32 %v6040, %v6110
      %v6188 = vadd.f32 %v6041, %v6113
      %v6189 = vadd.f32 %v6042, %v6116
      %v6190 = vadd.f32 %v6043, %v6119
      %v6191 = vadd.f32 %v6044, %v6122
      %v6192 = vadd.f32 %v6045, %v6125
      %v6193 = vadd.f32 %v6046, %v6128
      %v6194 = vadd.f32 %v6047, %v6131
      %v6195 = vadd.f32 %v6048, %v6134
      %v6196 = vadd.f32 %v6049, %v6137
      %v6197 = vadd.f32 %v6050, %v6140
      %v6198 = vadd.f32 %v6051, %v6143
      %v6199 = vadd.f32 %v6052, %v6146
      %v6200 = vadd.f32 %v6053, %v6149
      %v6201 = vadd.f32 %v6054, %v6152
      %v6202 = vadd.f32 %v6055, %v6155
      %v6203 = vadd.f32 %v6056, %v6158
      %v6204 = vadd.f32 %v6057, %v6161
      %v6205 = vadd.f32 %v6058, %v6164
      %v6206 = vadd.f32 %v6059, %v6167
      %v6207 = vadd.f32 %v6060, %v6170
      %v6208 = vadd.f32 %v6061, %v6173
      %v6209 = vadd.f32 %v6062, %v6176
      %s6210 = scalar_lea.vmem %s5, 168
      %v6211 = vld [vmem:[%s6210] sm:$0xff]
      %6212 = vmatpush.msra.mxu0 0.0
      %6213 = vmatpush.msra.mxu0 0.0
      %6214 = vmatpush.msra.mxu0 0.0
      %6215 = vmatpush.msra.mxu0 0.0
      %6216 = vmatpush.msra.mxu0 0.0
      %6217 = vmatpush.msra.mxu0 0.0
      %6218 = vmatpush.msra.mxu0 0.0
      %6219 = vmatpush.msra.mxu0 0.0
      %6220 = vmatpush.msra.mxu0 0.0
      %6221 = vmatpush.msra.mxu0 0.0
      %6222 = vmatpush.msra.mxu0 0.0
      %6223 = vmatpush.msra.mxu0 0.0
      %6224 = vmatpush.msra.mxu0 0.0
      %6225 = vmatpush.msra.mxu0 0.0
      %6226 = vmatpush.msra.mxu0 0.0
      %6227 = vmatpush.msra.mxu0 %v6211
      %6228 = vmatmul.f32.gmra.mxu0 %v2615
      %v6229 = vpop.f32.mrf.mxu0
      %v6230 = vadd.f32 0.0, %v6229
      %6231 = vmatmul.f32.gmra.mxu0 %v2617
      %v6232 = vpop.f32.mrf.mxu0
      %v6233 = vadd.f32 0.0, %v6232
      %6234 = vmatmul.f32.gmra.mxu0 %v2619
      %v6235 = vpop.f32.mrf.mxu0
      %v6236 = vadd.f32 0.0, %v6235
      %6237 = vmatmul.f32.gmra.mxu0 %v2621
      %v6238 = vpop.f32.mrf.mxu0
      %v6239 = vadd.f32 0.0, %v6238
      %6240 = vmatmul.f32.gmra.mxu0 %v2623
      %v6241 = vpop.f32.mrf.mxu0
      %v6242 = vadd.f32 0.0, %v6241
      %6243 = vmatmul.f32.gmra.mxu0 %v2625
      %v6244 = vpop.f32.mrf.mxu0
      %v6245 = vadd.f32 0.0, %v6244
      %6246 = vmatmul.f32.gmra.mxu0 %v2627
      %v6247 = vpop.f32.mrf.mxu0
      %v6248 = vadd.f32 0.0, %v6247
      %6249 = vmatmul.f32.gmra.mxu0 %v2629
      %v6250 = vpop.f32.mrf.mxu0
      %v6251 = vadd.f32 0.0, %v6250
      %6252 = vmatmul.f32.gmra.mxu0 %v2631
      %v6253 = vpop.f32.mrf.mxu0
      %v6254 = vadd.f32 0.0, %v6253
      %6255 = vmatmul.f32.gmra.mxu0 %v2633
      %v6256 = vpop.f32.mrf.mxu0
      %v6257 = vadd.f32 0.0, %v6256
      %6258 = vmatmul.f32.gmra.mxu0 %v2635
      %v6259 = vpop.f32.mrf.mxu0
      %v6260 = vadd.f32 0.0, %v6259
      %6261 = vmatmul.f32.gmra.mxu0 %v2637
      %v6262 = vpop.f32.mrf.mxu0
      %v6263 = vadd.f32 0.0, %v6262
      %6264 = vmatmul.f32.gmra.mxu0 %v2639
      %v6265 = vpop.f32.mrf.mxu0
      %v6266 = vadd.f32 0.0, %v6265
      %6267 = vmatmul.f32.gmra.mxu0 %v2641
      %v6268 = vpop.f32.mrf.mxu0
      %v6269 = vadd.f32 0.0, %v6268
      %6270 = vmatmul.f32.gmra.mxu0 %v2643
      %v6271 = vpop.f32.mrf.mxu0
      %v6272 = vadd.f32 0.0, %v6271
      %6273 = vmatmul.f32.gmra.mxu0 %v2645
      %v6274 = vpop.f32.mrf.mxu0
      %v6275 = vadd.f32 0.0, %v6274
      %6276 = vmatmul.f32.gmra.mxu0 %v2647
      %v6277 = vpop.f32.mrf.mxu0
      %v6278 = vadd.f32 0.0, %v6277
      %6279 = vmatmul.f32.gmra.mxu0 %v2649
      %v6280 = vpop.f32.mrf.mxu0
      %v6281 = vadd.f32 0.0, %v6280
      %6282 = vmatmul.f32.gmra.mxu0 %v2651
      %v6283 = vpop.f32.mrf.mxu0
      %v6284 = vadd.f32 0.0, %v6283
      %6285 = vmatmul.f32.gmra.mxu0 %v2653
      %v6286 = vpop.f32.mrf.mxu0
      %v6287 = vadd.f32 0.0, %v6286
      %6288 = vmatmul.f32.gmra.mxu0 %v2655
      %v6289 = vpop.f32.mrf.mxu0
      %v6290 = vadd.f32 0.0, %v6289
      %6291 = vmatmul.f32.gmra.mxu0 %v2657
      %v6292 = vpop.f32.mrf.mxu0
      %v6293 = vadd.f32 0.0, %v6292
      %6294 = vmatmul.f32.gmra.mxu0 %v2659
      %v6295 = vpop.f32.mrf.mxu0
      %v6296 = vadd.f32 0.0, %v6295
      %6297 = vmatmul.f32.gmra.mxu0 %v2661
      %v6298 = vpop.f32.mrf.mxu0
      %v6299 = vadd.f32 0.0, %v6298
      %6300 = vmatmul.f32.gmra.mxu0 %v3934
      %v6301 = vpop.f32.mrf.mxu0
      %v6302 = vadd.f32 0.0, %v6301
      %6303 = vmatmul.f32.gmra.mxu0 %v3936
      %v6304 = vpop.f32.mrf.mxu0
      %v6305 = vadd.f32 0.0, %v6304
      %6306 = vmatmul.f32.gmra.mxu0 %v4711
      %v6307 = vpop.f32.mrf.mxu0
      %v6308 = vadd.f32 0.0, %v6307
      %6309 = vmatmul.f32.gmra.mxu0 %v4713
      %v6310 = vpop.f32.mrf.mxu0
      %v6311 = vadd.f32 0.0, %v6310
      %6312 = vmatmul.f32.gmra.mxu0 %v718
      %v6313 = vpop.f32.mrf.mxu0
      %v6314 = vadd.f32 0.0, %v6313
      %6315 = vmatmul.f32.gmra.mxu0 %v718
      %v6316 = vpop.f32.mrf.mxu0
      %v6317 = vadd.f32 0.0, %v6316
      %6318 = vmatmul.f32.gmra.mxu0 %v718
      %v6319 = vpop.f32.mrf.mxu0
      %v6320 = vadd.f32 0.0, %v6319
      %6321 = vmatmul.f32.gmra.mxu0 %v718
      %v6322 = vpop.f32.mrf.mxu0
      %v6323 = vadd.f32 0.0, %v6322
      %6324 = vdwg.mxu0
      %v6325 = vadd.f32 %v6178, %v6230
      %v6326 = vadd.f32 %v6179, %v6233
      %v6327 = vadd.f32 %v6180, %v6236
      %v6328 = vadd.f32 %v6181, %v6239
      %v6329 = vadd.f32 %v6182, %v6242
      %v6330 = vadd.f32 %v6183, %v6245
      %v6331 = vadd.f32 %v6184, %v6248
      %v6332 = vadd.f32 %v6185, %v6251
      %v6333 = vadd.f32 %v6186, %v6254
      %v6334 = vadd.f32 %v6187, %v6257
      %v6335 = vadd.f32 %v6188, %v6260
      %v6336 = vadd.f32 %v6189, %v6263
      %v6337 = vadd.f32 %v6190, %v6266
      %v6338 = vadd.f32 %v6191, %v6269
      %v6339 = vadd.f32 %v6192, %v6272
      %v6340 = vadd.f32 %v6193, %v6275
      %v6341 = vadd.f32 %v6194, %v6278
      %v6342 = vadd.f32 %v6195, %v6281
      %v6343 = vadd.f32 %v6196, %v6284
      %v6344 = vadd.f32 %v6197, %v6287
      %v6345 = vadd.f32 %v6198, %v6290
      %v6346 = vadd.f32 %v6199, %v6293
      %v6347 = vadd.f32 %v6200, %v6296
      %v6348 = vadd.f32 %v6201, %v6299
      %v6349 = vadd.f32 %v6202, %v6302
      %v6350 = vadd.f32 %v6203, %v6305
      %v6351 = vadd.f32 %v6204, %v6308
      %v6352 = vadd.f32 %v6205, %v6311
      %v6353 = vadd.f32 %v6206, %v6314
      %v6354 = vadd.f32 %v6207, %v6317
      %v6355 = vadd.f32 %v6208, %v6320
      %v6356 = vadd.f32 %v6209, %v6323
      %s6357 = scalar_lea.vmem %s5, 176
      %v6358 = vld [vmem:[%s6357] sm:$0xff]
      %6359 = vmatpush.msra.mxu0 0.0
      %6360 = vmatpush.msra.mxu0 0.0
      %6361 = vmatpush.msra.mxu0 0.0
      %6362 = vmatpush.msra.mxu0 0.0
      %6363 = vmatpush.msra.mxu0 0.0
      %6364 = vmatpush.msra.mxu0 0.0
      %6365 = vmatpush.msra.mxu0 0.0
      %6366 = vmatpush.msra.mxu0 0.0
      %6367 = vmatpush.msra.mxu0 0.0
      %6368 = vmatpush.msra.mxu0 0.0
      %6369 = vmatpush.msra.mxu0 0.0
      %6370 = vmatpush.msra.mxu0 0.0
      %6371 = vmatpush.msra.mxu0 0.0
      %6372 = vmatpush.msra.mxu0 0.0
      %6373 = vmatpush.msra.mxu0 0.0
      %6374 = vmatpush.msra.mxu0 %v6358
      %6375 = vmatmul.f32.gmra.mxu0 %v3025
      %v6376 = vpop.f32.mrf.mxu0
      %v6377 = vadd.f32 0.0, %v6376
      %6378 = vmatmul.f32.gmra.mxu0 %v3027
      %v6379 = vpop.f32.mrf.mxu0
      %v6380 = vadd.f32 0.0, %v6379
      %6381 = vmatmul.f32.gmra.mxu0 %v3029
      %v6382 = vpop.f32.mrf.mxu0
      %v6383 = vadd.f32 0.0, %v6382
      %6384 = vmatmul.f32.gmra.mxu0 %v3031
      %v6385 = vpop.f32.mrf.mxu0
      %v6386 = vadd.f32 0.0, %v6385
      %6387 = vmatmul.f32.gmra.mxu0 %v3033
      %v6388 = vpop.f32.mrf.mxu0
      %v6389 = vadd.f32 0.0, %v6388
      %6390 = vmatmul.f32.gmra.mxu0 %v3035
      %v6391 = vpop.f32.mrf.mxu0
      %v6392 = vadd.f32 0.0, %v6391
      %6393 = vmatmul.f32.gmra.mxu0 %v3037
      %v6394 = vpop.f32.mrf.mxu0
      %v6395 = vadd.f32 0.0, %v6394
      %6396 = vmatmul.f32.gmra.mxu0 %v3039
      %v6397 = vpop.f32.mrf.mxu0
      %v6398 = vadd.f32 0.0, %v6397
      %6399 = vmatmul.f32.gmra.mxu0 %v3041
      %v6400 = vpop.f32.mrf.mxu0
      %v6401 = vadd.f32 0.0, %v6400
      %6402 = vmatmul.f32.gmra.mxu0 %v3043
      %v6403 = vpop.f32.mrf.mxu0
      %v6404 = vadd.f32 0.0, %v6403
      %6405 = vmatmul.f32.gmra.mxu0 %v3045
      %v6406 = vpop.f32.mrf.mxu0
      %v6407 = vadd.f32 0.0, %v6406
      %6408 = vmatmul.f32.gmra.mxu0 %v3047
      %v6409 = vpop.f32.mrf.mxu0
      %v6410 = vadd.f32 0.0, %v6409
      %6411 = vmatmul.f32.gmra.mxu0 %v3049
      %v6412 = vpop.f32.mrf.mxu0
      %v6413 = vadd.f32 0.0, %v6412
      %6414 = vmatmul.f32.gmra.mxu0 %v3051
      %v6415 = vpop.f32.mrf.mxu0
      %v6416 = vadd.f32 0.0, %v6415
      %6417 = vmatmul.f32.gmra.mxu0 %v3053
      %v6418 = vpop.f32.mrf.mxu0
      %v6419 = vadd.f32 0.0, %v6418
      %6420 = vmatmul.f32.gmra.mxu0 %v3055
      %v6421 = vpop.f32.mrf.mxu0
      %v6422 = vadd.f32 0.0, %v6421
      %6423 = vmatmul.f32.gmra.mxu0 %v3057
      %v6424 = vpop.f32.mrf.mxu0
      %v6425 = vadd.f32 0.0, %v6424
      %6426 = vmatmul.f32.gmra.mxu0 %v3059
      %v6427 = vpop.f32.mrf.mxu0
      %v6428 = vadd.f32 0.0, %v6427
      %6429 = vmatmul.f32.gmra.mxu0 %v3061
      %v6430 = vpop.f32.mrf.mxu0
      %v6431 = vadd.f32 0.0, %v6430
      %6432 = vmatmul.f32.gmra.mxu0 %v3063
      %v6433 = vpop.f32.mrf.mxu0
      %v6434 = vadd.f32 0.0, %v6433
      %6435 = vmatmul.f32.gmra.mxu0 %v3065
      %v6436 = vpop.f32.mrf.mxu0
      %v6437 = vadd.f32 0.0, %v6436
      %6438 = vmatmul.f32.gmra.mxu0 %v3067
      %v6439 = vpop.f32.mrf.mxu0
      %v6440 = vadd.f32 0.0, %v6439
      %6441 = vmatmul.f32.gmra.mxu0 %v3069
      %v6442 = vpop.f32.mrf.mxu0
      %v6443 = vadd.f32 0.0, %v6442
      %6444 = vmatmul.f32.gmra.mxu0 %v3071
      %v6445 = vpop.f32.mrf.mxu0
      %v6446 = vadd.f32 0.0, %v6445
      %6447 = vmatmul.f32.gmra.mxu0 %v4090
      %v6448 = vpop.f32.mrf.mxu0
      %v6449 = vadd.f32 0.0, %v6448
      %6450 = vmatmul.f32.gmra.mxu0 %v4092
      %v6451 = vpop.f32.mrf.mxu0
      %v6452 = vadd.f32 0.0, %v6451
      %6453 = vmatmul.f32.gmra.mxu0 %v4867
      %v6454 = vpop.f32.mrf.mxu0
      %v6455 = vadd.f32 0.0, %v6454
      %6456 = vmatmul.f32.gmra.mxu0 %v4869
      %v6457 = vpop.f32.mrf.mxu0
      %v6458 = vadd.f32 0.0, %v6457
      %6459 = vmatmul.f32.gmra.mxu0 %v1148
      %v6460 = vpop.f32.mrf.mxu0
      %v6461 = vadd.f32 0.0, %v6460
      %6462 = vmatmul.f32.gmra.mxu0 %v1148
      %v6463 = vpop.f32.mrf.mxu0
      %v6464 = vadd.f32 0.0, %v6463
      %6465 = vmatmul.f32.gmra.mxu0 %v1148
      %v6466 = vpop.f32.mrf.mxu0
      %v6467 = vadd.f32 0.0, %v6466
      %6468 = vmatmul.f32.gmra.mxu0 %v1148
      %v6469 = vpop.f32.mrf.mxu0
      %v6470 = vadd.f32 0.0, %v6469
      %6471 = vdwg.mxu0
      %v6472 = vadd.f32 %v6325, %v6377
      %v6473 = vadd.f32 %v6326, %v6380
      %v6474 = vadd.f32 %v6327, %v6383
      %v6475 = vadd.f32 %v6328, %v6386
      %v6476 = vadd.f32 %v6329, %v6389
      %v6477 = vadd.f32 %v6330, %v6392
      %v6478 = vadd.f32 %v6331, %v6395
      %v6479 = vadd.f32 %v6332, %v6398
      %v6480 = vadd.f32 %v6333, %v6401
      %v6481 = vadd.f32 %v6334, %v6404
      %v6482 = vadd.f32 %v6335, %v6407
      %v6483 = vadd.f32 %v6336, %v6410
      %v6484 = vadd.f32 %v6337, %v6413
      %v6485 = vadd.f32 %v6338, %v6416
      %v6486 = vadd.f32 %v6339, %v6419
      %v6487 = vadd.f32 %v6340, %v6422
      %v6488 = vadd.f32 %v6341, %v6425
      %v6489 = vadd.f32 %v6342, %v6428
      %v6490 = vadd.f32 %v6343, %v6431
      %v6491 = vadd.f32 %v6344, %v6434
      %v6492 = vadd.f32 %v6345, %v6437
      %v6493 = vadd.f32 %v6346, %v6440
      %v6494 = vadd.f32 %v6347, %v6443
      %v6495 = vadd.f32 %v6348, %v6446
      %v6496 = vadd.f32 %v6349, %v6449
      %v6497 = vadd.f32 %v6350, %v6452
      %v6498 = vadd.f32 %v6351, %v6455
      %v6499 = vadd.f32 %v6352, %v6458
      %v6500 = vadd.f32 %v6353, %v6461
      %v6501 = vadd.f32 %v6354, %v6464
      %v6502 = vadd.f32 %v6355, %v6467
      %v6503 = vadd.f32 %v6356, %v6470
      %s6504 = scalar_lea.vmem %s5, 184
      %v6505 = vld [vmem:[%s6504] sm:$0xff]
      %6506 = vmatpush.msra.mxu0 0.0
      %6507 = vmatpush.msra.mxu0 0.0
      %6508 = vmatpush.msra.mxu0 0.0
      %6509 = vmatpush.msra.mxu0 0.0
      %6510 = vmatpush.msra.mxu0 0.0
      %6511 = vmatpush.msra.mxu0 0.0
      %6512 = vmatpush.msra.mxu0 0.0
      %6513 = vmatpush.msra.mxu0 0.0
      %6514 = vmatpush.msra.mxu0 0.0
      %6515 = vmatpush.msra.mxu0 0.0
      %6516 = vmatpush.msra.mxu0 0.0
      %6517 = vmatpush.msra.mxu0 0.0
      %6518 = vmatpush.msra.mxu0 0.0
      %6519 = vmatpush.msra.mxu0 0.0
      %6520 = vmatpush.msra.mxu0 0.0
      %6521 = vmatpush.msra.mxu0 %v6505
      %6522 = vmatmul.f32.gmra.mxu0 %v3303
      %v6523 = vpop.f32.mrf.mxu0
      %v6524 = vadd.f32 0.0, %v6523
      %6525 = vmatmul.f32.gmra.mxu0 %v3305
      %v6526 = vpop.f32.mrf.mxu0
      %v6527 = vadd.f32 0.0, %v6526
      %6528 = vmatmul.f32.gmra.mxu0 %v3307
      %v6529 = vpop.f32.mrf.mxu0
      %v6530 = vadd.f32 0.0, %v6529
      %6531 = vmatmul.f32.gmra.mxu0 %v3309
      %v6532 = vpop.f32.mrf.mxu0
      %v6533 = vadd.f32 0.0, %v6532
      %6534 = vmatmul.f32.gmra.mxu0 %v3311
      %v6535 = vpop.f32.mrf.mxu0
      %v6536 = vadd.f32 0.0, %v6535
      %6537 = vmatmul.f32.gmra.mxu0 %v3313
      %v6538 = vpop.f32.mrf.mxu0
      %v6539 = vadd.f32 0.0, %v6538
      %6540 = vmatmul.f32.gmra.mxu0 %v3315
      %v6541 = vpop.f32.mrf.mxu0
      %v6542 = vadd.f32 0.0, %v6541
      %6543 = vmatmul.f32.gmra.mxu0 %v3317
      %v6544 = vpop.f32.mrf.mxu0
      %v6545 = vadd.f32 0.0, %v6544
      %6546 = vmatmul.f32.gmra.mxu0 %v3319
      %v6547 = vpop.f32.mrf.mxu0
      %v6548 = vadd.f32 0.0, %v6547
      %6549 = vmatmul.f32.gmra.mxu0 %v3321
      %v6550 = vpop.f32.mrf.mxu0
      %v6551 = vadd.f32 0.0, %v6550
      %6552 = vmatmul.f32.gmra.mxu0 %v3323
      %v6553 = vpop.f32.mrf.mxu0
      %v6554 = vadd.f32 0.0, %v6553
      %6555 = vmatmul.f32.gmra.mxu0 %v3325
      %v6556 = vpop.f32.mrf.mxu0
      %v6557 = vadd.f32 0.0, %v6556
      %6558 = vmatmul.f32.gmra.mxu0 %v3327
      %v6559 = vpop.f32.mrf.mxu0
      %v6560 = vadd.f32 0.0, %v6559
      %6561 = vmatmul.f32.gmra.mxu0 %v3329
      %v6562 = vpop.f32.mrf.mxu0
      %v6563 = vadd.f32 0.0, %v6562
      %6564 = vmatmul.f32.gmra.mxu0 %v3331
      %v6565 = vpop.f32.mrf.mxu0
      %v6566 = vadd.f32 0.0, %v6565
      %6567 = vmatmul.f32.gmra.mxu0 %v3333
      %v6568 = vpop.f32.mrf.mxu0
      %v6569 = vadd.f32 0.0, %v6568
      %6570 = vmatmul.f32.gmra.mxu0 %v3335
      %v6571 = vpop.f32.mrf.mxu0
      %v6572 = vadd.f32 0.0, %v6571
      %6573 = vmatmul.f32.gmra.mxu0 %v3337
      %v6574 = vpop.f32.mrf.mxu0
      %v6575 = vadd.f32 0.0, %v6574
      %6576 = vmatmul.f32.gmra.mxu0 %v3339
      %v6577 = vpop.f32.mrf.mxu0
      %v6578 = vadd.f32 0.0, %v6577
      %6579 = vmatmul.f32.gmra.mxu0 %v3341
      %v6580 = vpop.f32.mrf.mxu0
      %v6581 = vadd.f32 0.0, %v6580
      %6582 = vmatmul.f32.gmra.mxu0 %v3343
      %v6583 = vpop.f32.mrf.mxu0
      %v6584 = vadd.f32 0.0, %v6583
      %6585 = vmatmul.f32.gmra.mxu0 %v3345
      %v6586 = vpop.f32.mrf.mxu0
      %v6587 = vadd.f32 0.0, %v6586
      %6588 = vmatmul.f32.gmra.mxu0 %v3347
      %v6589 = vpop.f32.mrf.mxu0
      %v6590 = vadd.f32 0.0, %v6589
      %6591 = vmatmul.f32.gmra.mxu0 %v3349
      %v6592 = vpop.f32.mrf.mxu0
      %v6593 = vadd.f32 0.0, %v6592
      %6594 = vmatmul.f32.gmra.mxu0 %v4246
      %v6595 = vpop.f32.mrf.mxu0
      %v6596 = vadd.f32 0.0, %v6595
      %6597 = vmatmul.f32.gmra.mxu0 %v4248
      %v6598 = vpop.f32.mrf.mxu0
      %v6599 = vadd.f32 0.0, %v6598
      %6600 = vmatmul.f32.gmra.mxu0 %v5023
      %v6601 = vpop.f32.mrf.mxu0
      %v6602 = vadd.f32 0.0, %v6601
      %6603 = vmatmul.f32.gmra.mxu0 %v5025
      %v6604 = vpop.f32.mrf.mxu0
      %v6605 = vadd.f32 0.0, %v6604
      %6606 = vmatmul.f32.gmra.mxu0 %v3293
      %v6607 = vpop.f32.mrf.mxu0
      %v6608 = vadd.f32 0.0, %v6607
      %6609 = vmatmul.f32.gmra.mxu0 %v3293
      %v6610 = vpop.f32.mrf.mxu0
      %v6611 = vadd.f32 0.0, %v6610
      %6612 = vmatmul.f32.gmra.mxu0 %v3293
      %v6613 = vpop.f32.mrf.mxu0
      %v6614 = vadd.f32 0.0, %v6613
      %6615 = vmatmul.f32.gmra.mxu0 %v3293
      %v6616 = vpop.f32.mrf.mxu0
      %v6617 = vadd.f32 0.0, %v6616
      %6618 = vdwg.mxu0
      %v6619 = vadd.f32 %v6472, %v6524
      %v6620 = vadd.f32 %v6473, %v6527
      %v6621 = vadd.f32 %v6474, %v6530
      %v6622 = vadd.f32 %v6475, %v6533
      %v6623 = vadd.f32 %v6476, %v6536
      %v6624 = vadd.f32 %v6477, %v6539
      %v6625 = vadd.f32 %v6478, %v6542
      %v6626 = vadd.f32 %v6479, %v6545
      %v6627 = vadd.f32 %v6480, %v6548
      %v6628 = vadd.f32 %v6481, %v6551
      %v6629 = vadd.f32 %v6482, %v6554
      %v6630 = vadd.f32 %v6483, %v6557
      %v6631 = vadd.f32 %v6484, %v6560
      %v6632 = vadd.f32 %v6485, %v6563
      %v6633 = vadd.f32 %v6486, %v6566
      %v6634 = vadd.f32 %v6487, %v6569
      %v6635 = vadd.f32 %v6488, %v6572
      %v6636 = vadd.f32 %v6489, %v6575
      %v6637 = vadd.f32 %v6490, %v6578
      %v6638 = vadd.f32 %v6491, %v6581
      %v6639 = vadd.f32 %v6492, %v6584
      %v6640 = vadd.f32 %v6493, %v6587
      %v6641 = vadd.f32 %v6494, %v6590
      %v6642 = vadd.f32 %v6495, %v6593
      %v6643 = vadd.f32 %v6496, %v6596
      %v6644 = vadd.f32 %v6497, %v6599
      %v6645 = vadd.f32 %v6498, %v6602
      %v6646 = vadd.f32 %v6499, %v6605
      %v6647 = vadd.f32 %v6500, %v6608
      %v6648 = vadd.f32 %v6501, %v6611
      %v6649 = vadd.f32 %v6502, %v6614
      %v6650 = vadd.f32 %v6503, %v6617
      %s6651 = scalar_lea.vmem %s5, 192
      %v6652 = vld [vmem:[%s6651] sm:$0xff]
      %6653 = vmatpush.msra.mxu0 0.0
      %6654 = vmatpush.msra.mxu0 0.0
      %6655 = vmatpush.msra.mxu0 0.0
      %6656 = vmatpush.msra.mxu0 0.0
      %6657 = vmatpush.msra.mxu0 0.0
      %6658 = vmatpush.msra.mxu0 0.0
      %6659 = vmatpush.msra.mxu0 0.0
      %6660 = vmatpush.msra.mxu0 0.0
      %6661 = vmatpush.msra.mxu0 0.0
      %6662 = vmatpush.msra.mxu0 0.0
      %6663 = vmatpush.msra.mxu0 0.0
      %6664 = vmatpush.msra.mxu0 0.0
      %6665 = vmatpush.msra.mxu0 0.0
      %6666 = vmatpush.msra.mxu0 0.0
      %6667 = vmatpush.msra.mxu0 0.0
      %6668 = vmatpush.msra.mxu0 %v6652
      %6669 = vmatmul.f32.gmra.mxu0 %v3581
      %v6670 = vpop.f32.mrf.mxu0
      %v6671 = vadd.f32 0.0, %v6670
      %6672 = vmatmul.f32.gmra.mxu0 %v3583
      %v6673 = vpop.f32.mrf.mxu0
      %v6674 = vadd.f32 0.0, %v6673
      %6675 = vmatmul.f32.gmra.mxu0 %v3585
      %v6676 = vpop.f32.mrf.mxu0
      %v6677 = vadd.f32 0.0, %v6676
      %6678 = vmatmul.f32.gmra.mxu0 %v3587
      %v6679 = vpop.f32.mrf.mxu0
      %v6680 = vadd.f32 0.0, %v6679
      %6681 = vmatmul.f32.gmra.mxu0 %v3589
      %v6682 = vpop.f32.mrf.mxu0
      %v6683 = vadd.f32 0.0, %v6682
      %6684 = vmatmul.f32.gmra.mxu0 %v3591
      %v6685 = vpop.f32.mrf.mxu0
      %v6686 = vadd.f32 0.0, %v6685
      %6687 = vmatmul.f32.gmra.mxu0 %v3593
      %v6688 = vpop.f32.mrf.mxu0
      %v6689 = vadd.f32 0.0, %v6688
      %6690 = vmatmul.f32.gmra.mxu0 %v3595
      %v6691 = vpop.f32.mrf.mxu0
      %v6692 = vadd.f32 0.0, %v6691
      %6693 = vmatmul.f32.gmra.mxu0 %v3597
      %v6694 = vpop.f32.mrf.mxu0
      %v6695 = vadd.f32 0.0, %v6694
      %6696 = vmatmul.f32.gmra.mxu0 %v3599
      %v6697 = vpop.f32.mrf.mxu0
      %v6698 = vadd.f32 0.0, %v6697
      %6699 = vmatmul.f32.gmra.mxu0 %v3601
      %v6700 = vpop.f32.mrf.mxu0
      %v6701 = vadd.f32 0.0, %v6700
      %6702 = vmatmul.f32.gmra.mxu0 %v3603
      %v6703 = vpop.f32.mrf.mxu0
      %v6704 = vadd.f32 0.0, %v6703
      %6705 = vmatmul.f32.gmra.mxu0 %v3605
      %v6706 = vpop.f32.mrf.mxu0
      %v6707 = vadd.f32 0.0, %v6706
      %6708 = vmatmul.f32.gmra.mxu0 %v3607
      %v6709 = vpop.f32.mrf.mxu0
      %v6710 = vadd.f32 0.0, %v6709
      %6711 = vmatmul.f32.gmra.mxu0 %v3609
      %v6712 = vpop.f32.mrf.mxu0
      %v6713 = vadd.f32 0.0, %v6712
      %6714 = vmatmul.f32.gmra.mxu0 %v3611
      %v6715 = vpop.f32.mrf.mxu0
      %v6716 = vadd.f32 0.0, %v6715
      %6717 = vmatmul.f32.gmra.mxu0 %v3613
      %v6718 = vpop.f32.mrf.mxu0
      %v6719 = vadd.f32 0.0, %v6718
      %6720 = vmatmul.f32.gmra.mxu0 %v3615
      %v6721 = vpop.f32.mrf.mxu0
      %v6722 = vadd.f32 0.0, %v6721
      %6723 = vmatmul.f32.gmra.mxu0 %v3617
      %v6724 = vpop.f32.mrf.mxu0
      %v6725 = vadd.f32 0.0, %v6724
      %6726 = vmatmul.f32.gmra.mxu0 %v3619
      %v6727 = vpop.f32.mrf.mxu0
      %v6728 = vadd.f32 0.0, %v6727
      %6729 = vmatmul.f32.gmra.mxu0 %v3621
      %v6730 = vpop.f32.mrf.mxu0
      %v6731 = vadd.f32 0.0, %v6730
      %6732 = vmatmul.f32.gmra.mxu0 %v3623
      %v6733 = vpop.f32.mrf.mxu0
      %v6734 = vadd.f32 0.0, %v6733
      %6735 = vmatmul.f32.gmra.mxu0 %v3625
      %v6736 = vpop.f32.mrf.mxu0
      %v6737 = vadd.f32 0.0, %v6736
      %6738 = vmatmul.f32.gmra.mxu0 %v3627
      %v6739 = vpop.f32.mrf.mxu0
      %v6740 = vadd.f32 0.0, %v6739
      %6741 = vmatmul.f32.gmra.mxu0 %v4402
      %v6742 = vpop.f32.mrf.mxu0
      %v6743 = vadd.f32 0.0, %v6742
      %6744 = vmatmul.f32.gmra.mxu0 %v4404
      %v6745 = vpop.f32.mrf.mxu0
      %v6746 = vadd.f32 0.0, %v6745
      %6747 = vmatmul.f32.gmra.mxu0 %v5179
      %v6748 = vpop.f32.mrf.mxu0
      %v6749 = vadd.f32 0.0, %v6748
      %6750 = vmatmul.f32.gmra.mxu0 %v5181
      %v6751 = vpop.f32.mrf.mxu0
      %v6752 = vadd.f32 0.0, %v6751
      %6753 = vmatmul.f32.gmra.mxu0 %v3571
      %v6754 = vpop.f32.mrf.mxu0
      %v6755 = vadd.f32 0.0, %v6754
      %6756 = vmatmul.f32.gmra.mxu0 %v3571
      %v6757 = vpop.f32.mrf.mxu0
      %v6758 = vadd.f32 0.0, %v6757
      %6759 = vmatmul.f32.gmra.mxu0 %v3571
      %v6760 = vpop.f32.mrf.mxu0
      %v6761 = vadd.f32 0.0, %v6760
      %6762 = vmatmul.f32.gmra.mxu0 %v3571
      %v6763 = vpop.f32.mrf.mxu0
      %v6764 = vadd.f32 0.0, %v6763
      %6765 = vdwg.mxu0
      %v6766 = vadd.f32 %v6619, %v6671
      %v6767 = vadd.f32 %v6620, %v6674
      %v6768 = vadd.f32 %v6621, %v6677
      %v6769 = vadd.f32 %v6622, %v6680
      %v6770 = vadd.f32 %v6623, %v6683
      %v6771 = vadd.f32 %v6624, %v6686
      %v6772 = vadd.f32 %v6625, %v6689
      %v6773 = vadd.f32 %v6626, %v6692
      %v6774 = vadd.f32 %v6627, %v6695
      %v6775 = vadd.f32 %v6628, %v6698
      %v6776 = vadd.f32 %v6629, %v6701
      %v6777 = vadd.f32 %v6630, %v6704
      %v6778 = vadd.f32 %v6631, %v6707
      %v6779 = vadd.f32 %v6632, %v6710
      %v6780 = vadd.f32 %v6633, %v6713
      %v6781 = vadd.f32 %v6634, %v6716
      %v6782 = vadd.f32 %v6635, %v6719
      %v6783 = vadd.f32 %v6636, %v6722
      %v6784 = vadd.f32 %v6637, %v6725
      %v6785 = vadd.f32 %v6638, %v6728
      %v6786 = vadd.f32 %v6639, %v6731
      %v6787 = vadd.f32 %v6640, %v6734
      %v6788 = vadd.f32 %v6641, %v6737
      %v6789 = vadd.f32 %v6642, %v6740
      %v6790 = vadd.f32 %v6643, %v6743
      %v6791 = vadd.f32 %v6644, %v6746
      %v6792 = vadd.f32 %v6645, %v6749
      %v6793 = vadd.f32 %v6646, %v6752
      %v6794 = vadd.f32 %v6647, %v6755
      %v6795 = vadd.f32 %v6648, %v6758
      %v6796 = vadd.f32 %v6649, %v6761
      %v6797 = vadd.f32 %v6650, %v6764
      %v6798 = vld [vmem:[%s6] sm:$0x1]
      %v6800 = vperm.slane %v6798, 0
      %v6802 = vadd.f32 %v6766, %v6800
      %v6803 = vadd.f32 %v6767, %v6800
      %v6804 = vadd.f32 %v6768, %v6800
      %v6805 = vadd.f32 %v6769, %v6800
      %v6806 = vadd.f32 %v6770, %v6800
      %v6807 = vadd.f32 %v6771, %v6800
      %v6808 = vadd.f32 %v6772, %v6800
      %v6809 = vadd.f32 %v6773, %v6800
      %v6810 = vadd.f32 %v6774, %v6800
      %v6811 = vadd.f32 %v6775, %v6800
      %v6812 = vadd.f32 %v6776, %v6800
      %v6813 = vadd.f32 %v6777, %v6800
      %v6814 = vadd.f32 %v6778, %v6800
      %v6815 = vadd.f32 %v6779, %v6800
      %v6816 = vadd.f32 %v6780, %v6800
      %v6817 = vadd.f32 %v6781, %v6800
      %v6818 = vadd.f32 %v6782, %v6800
      %v6819 = vadd.f32 %v6783, %v6800
      %v6820 = vadd.f32 %v6784, %v6800
      %v6821 = vadd.f32 %v6785, %v6800
      %v6822 = vadd.f32 %v6786, %v6800
      %v6823 = vadd.f32 %v6787, %v6800
      %v6824 = vadd.f32 %v6788, %v6800
      %v6825 = vadd.f32 %v6789, %v6800
      %v6826 = vadd.f32 %v6790, %v6800
      %v6827 = vadd.f32 %v6791, %v6800
      %v6828 = vadd.f32 %v6792, %v6800
      %v6829 = vadd.f32 %v6793, %v6800
      %v6830 = vadd.f32 %v6794, %v6800
      %v6831 = vadd.f32 %v6795, %v6800
      %v6832 = vadd.f32 %v6796, %v6800
      %v6833 = vadd.f32 %v6797, %v6800
      %6834 = vst.msk [vmem:[%s346] sm:$0xff] %vm717, %v2265
      %6835 = vst.msk [vmem:[%s346 + $0x8] sm:$0xff] %vm717, %v2266
      %6836 = vst.msk [vmem:[%s346 + $0x10] sm:$0xff] %vm717, %v2267
      %6837 = vst.msk [vmem:[%s346 + $0x18] sm:$0xff] %vm717, %v2268
      %6838 = vst.msk [vmem:[%s346 + $0x20] sm:$0xff] %vm717, %v2269
      %6839 = vst.msk [vmem:[%s346 + $0x28] sm:$0xff] %vm717, %v2270
      %6840 = vst.msk [vmem:[%s346 + $0x30] sm:$0xff] %vm717, %v2271
      %6841 = vst.msk [vmem:[%s346 + $0x38] sm:$0xff] %vm717, %v2272
      %6842 = vst.msk [vmem:[%s346 + $0x40] sm:$0xff] %vm717, %v2273
      %6843 = vst.msk [vmem:[%s346 + $0x48] sm:$0xff] %vm717, %v2274
      %6844 = vst.msk [vmem:[%s346 + $0x50] sm:$0xff] %vm717, %v2275
      %6845 = vst.msk [vmem:[%s346 + $0x58] sm:$0xff] %vm717, %v2276
      %6846 = vst.msk [vmem:[%s346 + $0x60] sm:$0xff] %vm717, %v2277
      %6847 = vst.msk [vmem:[%s346 + $0x68] sm:$0xff] %vm717, %v2278
      %6848 = vst.msk [vmem:[%s346 + $0x70] sm:$0xff] %vm717, %v2279
      %6849 = vst.msk [vmem:[%s346 + $0x78] sm:$0xff] %vm717, %v2280
      %6850 = vst.msk [vmem:[%s346 + $0x80] sm:$0xff] %vm717, %v2281
      %6851 = vst.msk [vmem:[%s346 + $0x88] sm:$0xff] %vm717, %v2282
      %6852 = vst.msk [vmem:[%s346 + $0x90] sm:$0xff] %vm717, %v2283
      %6853 = vst.msk [vmem:[%s346 + $0x98] sm:$0xff] %vm717, %v2284
      %6854 = vst.msk [vmem:[%s346 + $0xa0] sm:$0xff] %vm717, %v2285
      %6855 = vst.msk [vmem:[%s346 + $0xa8] sm:$0xff] %vm717, %v2286
      %6856 = vst.msk [vmem:[%s346 + $0xb0] sm:$0xff] %vm717, %v2287
      %6857 = vst.msk [vmem:[%s346 + $0xb8] sm:$0xff] %vm717, %v2288
      %6858 = vst.msk [vmem:[%s346 + $0xc0] sm:$0xff] %vm717, %v2289
      %6859 = vst.msk [vmem:[%s346 + $0xc8] sm:$0xff] %vm717, %v2290
      %6860 = vst.msk [vmem:[%s346 + $0xd0] sm:$0xff] %vm717, %v2291
      %6861 = vst.msk [vmem:[%s346 + $0xd8] sm:$0xff] %vm717, %v2292
      %6862 = vst.msk [vmem:[%s346 + $0xe0] sm:$0xff] %vm717, %v2293
      %6863 = vst.msk [vmem:[%s346 + $0xe8] sm:$0xff] %vm717, %v2294
      %6864 = vst.msk [vmem:[%s346 + $0xf0] sm:$0xff] %vm717, %v2295
      %6865 = vst.msk [vmem:[%s346 + $0xf8] sm:$0xff] %vm717, %v2296
      %6866 = vst.msk [vmem:[%s351] sm:$0xff] %vm717, %v6802
      %6867 = vst.msk [vmem:[%s351 + $0x8] sm:$0xff] %vm717, %v6803
      %6868 = vst.msk [vmem:[%s351 + $0x10] sm:$0xff] %vm717, %v6804
      %6869 = vst.msk [vmem:[%s351 + $0x18] sm:$0xff] %vm717, %v6805
      %6870 = vst.msk [vmem:[%s351 + $0x20] sm:$0xff] %vm717, %v6806
      %6871 = vst.msk [vmem:[%s351 + $0x28] sm:$0xff] %vm717, %v6807
      %6872 = vst.msk [vmem:[%s351 + $0x30] sm:$0xff] %vm717, %v6808
      %6873 = vst.msk [vmem:[%s351 + $0x38] sm:$0xff] %vm717, %v6809
      %6874 = vst.msk [vmem:[%s351 + $0x40] sm:$0xff] %vm717, %v6810
      %6875 = vst.msk [vmem:[%s351 + $0x48] sm:$0xff] %vm717, %v6811
      %6876 = vst.msk [vmem:[%s351 + $0x50] sm:$0xff] %vm717, %v6812
      %6877 = vst.msk [vmem:[%s351 + $0x58] sm:$0xff] %vm717, %v6813
      %6878 = vst.msk [vmem:[%s351 + $0x60] sm:$0xff] %vm717, %v6814
      %6879 = vst.msk [vmem:[%s351 + $0x68] sm:$0xff] %vm717, %v6815
      %6880 = vst.msk [vmem:[%s351 + $0x70] sm:$0xff] %vm717, %v6816
      %6881 = vst.msk [vmem:[%s351 + $0x78] sm:$0xff] %vm717, %v6817
      %6882 = vst.msk [vmem:[%s351 + $0x80] sm:$0xff] %vm717, %v6818
      %6883 = vst.msk [vmem:[%s351 + $0x88] sm:$0xff] %vm717, %v6819
      %6884 = vst.msk [vmem:[%s351 + $0x90] sm:$0xff] %vm717, %v6820
      %6885 = vst.msk [vmem:[%s351 + $0x98] sm:$0xff] %vm717, %v6821
      %6886 = vst.msk [vmem:[%s351 + $0xa0] sm:$0xff] %vm717, %v6822
      %6887 = vst.msk [vmem:[%s351 + $0xa8] sm:$0xff] %vm717, %v6823
      %6888 = vst.msk [vmem:[%s351 + $0xb0] sm:$0xff] %vm717, %v6824
      %6889 = vst.msk [vmem:[%s351 + $0xb8] sm:$0xff] %vm717, %v6825
      %6890 = vst.msk [vmem:[%s351 + $0xc0] sm:$0xff] %vm717, %v6826
      %6891 = vst.msk [vmem:[%s351 + $0xc8] sm:$0xff] %vm717, %v6827
      %6892 = vst.msk [vmem:[%s351 + $0xd0] sm:$0xff] %vm717, %v6828
      %6893 = vst.msk [vmem:[%s351 + $0xd8] sm:$0xff] %vm717, %v6829
      %6894 = vst.msk [vmem:[%s351 + $0xe0] sm:$0xff] %vm717, %v6830
      %6895 = vst.msk [vmem:[%s351 + $0xe8] sm:$0xff] %vm717, %v6831
      %6896 = vst.msk [vmem:[%s351 + $0xf0] sm:$0xff] %vm717, %v6832
      %6897 = vst.msk [vmem:[%s351 + $0xf8] sm:$0xff] %vm717, %v6833
      %v6898 = vsel %vm717, %v2265, 0.0
      %v6899 = vsel %vm717, %v2266, 0.0
      %v6900 = vadd.f32 %v6898, %v6899
      %v6901 = vsel %vm717, %v2267, 0.0
      %v6902 = vadd.f32 %v6900, %v6901
      %v6903 = vsel %vm717, %v2268, 0.0
      %v6904 = vadd.f32 %v6902, %v6903
      %v6905 = vsel %vm717, %v2269, 0.0
      %v6906 = vadd.f32 %v6904, %v6905
      %v6907 = vsel %vm717, %v2270, 0.0
      %v6908 = vadd.f32 %v6906, %v6907
      %v6909 = vsel %vm717, %v2271, 0.0
      %v6910 = vadd.f32 %v6908, %v6909
      %v6911 = vsel %vm717, %v2272, 0.0
      %v6912 = vadd.f32 %v6910, %v6911
      %v6913 = vsel %vm717, %v2273, 0.0
      %v6914 = vadd.f32 %v6912, %v6913
      %v6915 = vsel %vm717, %v2274, 0.0
      %v6916 = vadd.f32 %v6914, %v6915
      %v6917 = vsel %vm717, %v2275, 0.0
      %v6918 = vadd.f32 %v6916, %v6917
      %v6919 = vsel %vm717, %v2276, 0.0
      %v6920 = vadd.f32 %v6918, %v6919
      %v6921 = vsel %vm717, %v2277, 0.0
      %v6922 = vadd.f32 %v6920, %v6921
      %v6923 = vsel %vm717, %v2278, 0.0
      %v6924 = vadd.f32 %v6922, %v6923
      %v6925 = vsel %vm717, %v2279, 0.0
      %v6926 = vadd.f32 %v6924, %v6925
      %v6927 = vsel %vm717, %v2280, 0.0
      %v6928 = vadd.f32 %v6926, %v6927
      %v6929 = vsel %vm717, %v2281, 0.0
      %v6930 = vadd.f32 %v6928, %v6929
      %v6931 = vsel %vm717, %v2282, 0.0
      %v6932 = vadd.f32 %v6930, %v6931
      %v6933 = vsel %vm717, %v2283, 0.0
      %v6934 = vadd.f32 %v6932, %v6933
      %v6935 = vsel %vm717, %v2284, 0.0
      %v6936 = vadd.f32 %v6934, %v6935
      %v6937 = vsel %vm717, %v2285, 0.0
      %v6938 = vadd.f32 %v6936, %v6937
      %v6939 = vsel %vm717, %v2286, 0.0
      %v6940 = vadd.f32 %v6938, %v6939
      %v6941 = vsel %vm717, %v2287, 0.0
      %v6942 = vadd.f32 %v6940, %v6941
      %v6943 = vsel %vm717, %v2288, 0.0
      %v6944 = vadd.f32 %v6942, %v6943
      %v6945 = vsel %vm717, %v2289, 0.0
      %v6946 = vadd.f32 %v6944, %v6945
      %v6947 = vsel %vm717, %v2290, 0.0
      %v6948 = vadd.f32 %v6946, %v6947
      %v6949 = vsel %vm717, %v2291, 0.0
      %v6950 = vadd.f32 %v6948, %v6949
      %v6951 = vsel %vm717, %v2292, 0.0
      %v6952 = vadd.f32 %v6950, %v6951
      %v6953 = vsel %vm717, %v2293, 0.0
      %v6954 = vadd.f32 %v6952, %v6953
      %v6955 = vsel %vm717, %v2294, 0.0
      %v6956 = vadd.f32 %v6954, %v6955
      %v6957 = vsel %vm717, %v2295, 0.0
      %v6958 = vadd.f32 %v6956, %v6957
      %v6959 = vsel %vm717, %v2296, 0.0
      %v6960 = vadd.f32 %v6958, %v6959
      %v6961 = vrot.slane %v6960, 4
      %v6962 = vadd.f32 %v6960, %v6961
      %v6963 = vrot.slane %v6962, 2
      %v6964 = vadd.f32 %v6962, %v6963
      %v6965 = vrot.slane %v6964, 1
      %v6966 = vadd.f32 %v6964, %v6965
      %v6967 = vsel %vm717, %v6802, 0.0
      %v6968 = vsel %vm717, %v6803, 0.0
      %v6969 = vadd.f32 %v6967, %v6968
      %v6970 = vsel %vm717, %v6804, 0.0
      %v6971 = vadd.f32 %v6969, %v6970
      %v6972 = vsel %vm717, %v6805, 0.0
      %v6973 = vadd.f32 %v6971, %v6972
      %v6974 = vsel %vm717, %v6806, 0.0
      %v6975 = vadd.f32 %v6973, %v6974
      %v6976 = vsel %vm717, %v6807, 0.0
      %v6977 = vadd.f32 %v6975, %v6976
      %v6978 = vsel %vm717, %v6808, 0.0
      %v6979 = vadd.f32 %v6977, %v6978
      %v6980 = vsel %vm717, %v6809, 0.0
      %v6981 = vadd.f32 %v6979, %v6980
      %v6982 = vsel %vm717, %v6810, 0.0
      %v6983 = vadd.f32 %v6981, %v6982
      %v6984 = vsel %vm717, %v6811, 0.0
      %v6985 = vadd.f32 %v6983, %v6984
      %v6986 = vsel %vm717, %v6812, 0.0
      %v6987 = vadd.f32 %v6985, %v6986
      %v6988 = vsel %vm717, %v6813, 0.0
      %v6989 = vadd.f32 %v6987, %v6988
      %v6990 = vsel %vm717, %v6814, 0.0
      %v6991 = vadd.f32 %v6989, %v6990
      %v6992 = vsel %vm717, %v6815, 0.0
      %v6993 = vadd.f32 %v6991, %v6992
      %v6994 = vsel %vm717, %v6816, 0.0
      %v6995 = vadd.f32 %v6993, %v6994
      %v6996 = vsel %vm717, %v6817, 0.0
      %v6997 = vadd.f32 %v6995, %v6996
      %v6998 = vsel %vm717, %v6818, 0.0
      %v6999 = vadd.f32 %v6997, %v6998
      %v7000 = vsel %vm717, %v6819, 0.0
      %v7001 = vadd.f32 %v6999, %v7000
      %v7002 = vsel %vm717, %v6820, 0.0
      %v7003 = vadd.f32 %v7001, %v7002
      %v7004 = vsel %vm717, %v6821, 0.0
      %v7005 = vadd.f32 %v7003, %v7004
      %v7006 = vsel %vm717, %v6822, 0.0
      %v7007 = vadd.f32 %v7005, %v7006
      %v7008 = vsel %vm717, %v6823, 0.0
      %v7009 = vadd.f32 %v7007, %v7008
      %v7010 = vsel %vm717, %v6824, 0.0
      %v7011 = vadd.f32 %v7009, %v7010
      %v7012 = vsel %vm717, %v6825, 0.0
      %v7013 = vadd.f32 %v7011, %v7012
      %v7014 = vsel %vm717, %v6826, 0.0
      %v7015 = vadd.f32 %v7013, %v7014
      %v7016 = vsel %vm717, %v6827, 0.0
      %v7017 = vadd.f32 %v7015, %v7016
      %v7018 = vsel %vm717, %v6828, 0.0
      %v7019 = vadd.f32 %v7017, %v7018
      %v7020 = vsel %vm717, %v6829, 0.0
      %v7021 = vadd.f32 %v7019, %v7020
      %v7022 = vsel %vm717, %v6830, 0.0
      %v7023 = vadd.f32 %v7021, %v7022
      %v7024 = vsel %vm717, %v6831, 0.0
      %v7025 = vadd.f32 %v7023, %v7024
      %v7026 = vsel %vm717, %v6832, 0.0
      %v7027 = vadd.f32 %v7025, %v7026
      %v7028 = vsel %vm717, %v6833, 0.0
      %v7029 = vadd.f32 %v7027, %v7028
      %v7030 = vrot.slane %v7029, 4
      %v7031 = vadd.f32 %v7029, %v7030
      %v7032 = vrot.slane %v7031, 2
      %v7033 = vadd.f32 %v7031, %v7032
      %v7034 = vrot.slane %v7033, 1
      %v7035 = vadd.f32 %v7033, %v7034
      %7037 = vrot.lane.b32.xlu0 %v7035, 8
      %v7038 = vpop.permute.xlu0 %7037
      %v7040 = vsel %vm717, %v6966, %v7038
      %v7041 = vmul.f32 %v2265, %v2265
      %v7042 = vmul.f32 %v2266, %v2266
      %v7043 = vmul.f32 %v2267, %v2267
      %v7044 = vmul.f32 %v2268, %v2268
      %v7045 = vmul.f32 %v2269, %v2269
      %v7046 = vmul.f32 %v2270, %v2270
      %v7047 = vmul.f32 %v2271, %v2271
      %v7048 = vmul.f32 %v2272, %v2272
      %v7049 = vmul.f32 %v2273, %v2273
      %v7050 = vmul.f32 %v2274, %v2274
      %v7051 = vmul.f32 %v2275, %v2275
      %v7052 = vmul.f32 %v2276, %v2276
      %v7053 = vmul.f32 %v2277, %v2277
      %v7054 = vmul.f32 %v2278, %v2278
      %v7055 = vmul.f32 %v2279, %v2279
      %v7056 = vmul.f32 %v2280, %v2280
      %v7057 = vmul.f32 %v2281, %v2281
      %v7058 = vmul.f32 %v2282, %v2282
      %v7059 = vmul.f32 %v2283, %v2283
      %v7060 = vmul.f32 %v2284, %v2284
      %v7061 = vmul.f32 %v2285, %v2285
      %v7062 = vmul.f32 %v2286, %v2286
      %v7063 = vmul.f32 %v2287, %v2287
      %v7064 = vmul.f32 %v2288, %v2288
      %v7065 = vmul.f32 %v2289, %v2289
      %v7066 = vmul.f32 %v2290, %v2290
      %v7067 = vmul.f32 %v2291, %v2291
      %v7068 = vmul.f32 %v2292, %v2292
      %v7069 = vmul.f32 %v2293, %v2293
      %v7070 = vmul.f32 %v2294, %v2294
      %v7071 = vmul.f32 %v2295, %v2295
      %v7072 = vmul.f32 %v2296, %v2296
      %v7073 = vsel %vm717, %v7041, 0.0
      %v7074 = vsel %vm717, %v7042, 0.0
      %v7075 = vadd.f32 %v7073, %v7074
      %v7076 = vsel %vm717, %v7043, 0.0
      %v7077 = vadd.f32 %v7075, %v7076
      %v7078 = vsel %vm717, %v7044, 0.0
      %v7079 = vadd.f32 %v7077, %v7078
      %v7080 = vsel %vm717, %v7045, 0.0
      %v7081 = vadd.f32 %v7079, %v7080
      %v7082 = vsel %vm717, %v7046, 0.0
      %v7083 = vadd.f32 %v7081, %v7082
      %v7084 = vsel %vm717, %v7047, 0.0
      %v7085 = vadd.f32 %v7083, %v7084
      %v7086 = vsel %vm717, %v7048, 0.0
      %v7087 = vadd.f32 %v7085, %v7086
      %v7088 = vsel %vm717, %v7049, 0.0
      %v7089 = vadd.f32 %v7087, %v7088
      %v7090 = vsel %vm717, %v7050, 0.0
      %v7091 = vadd.f32 %v7089, %v7090
      %v7092 = vsel %vm717, %v7051, 0.0
      %v7093 = vadd.f32 %v7091, %v7092
      %v7094 = vsel %vm717, %v7052, 0.0
      %v7095 = vadd.f32 %v7093, %v7094
      %v7096 = vsel %vm717, %v7053, 0.0
      %v7097 = vadd.f32 %v7095, %v7096
      %v7098 = vsel %vm717, %v7054, 0.0
      %v7099 = vadd.f32 %v7097, %v7098
      %v7100 = vsel %vm717, %v7055, 0.0
      %v7101 = vadd.f32 %v7099, %v7100
      %v7102 = vsel %vm717, %v7056, 0.0
      %v7103 = vadd.f32 %v7101, %v7102
      %v7104 = vsel %vm717, %v7057, 0.0
      %v7105 = vadd.f32 %v7103, %v7104
      %v7106 = vsel %vm717, %v7058, 0.0
      %v7107 = vadd.f32 %v7105, %v7106
      %v7108 = vsel %vm717, %v7059, 0.0
      %v7109 = vadd.f32 %v7107, %v7108
      %v7110 = vsel %vm717, %v7060, 0.0
      %v7111 = vadd.f32 %v7109, %v7110
      %v7112 = vsel %vm717, %v7061, 0.0
      %v7113 = vadd.f32 %v7111, %v7112
      %v7114 = vsel %vm717, %v7062, 0.0
      %v7115 = vadd.f32 %v7113, %v7114
      %v7116 = vsel %vm717, %v7063, 0.0
      %v7117 = vadd.f32 %v7115, %v7116
      %v7118 = vsel %vm717, %v7064, 0.0
      %v7119 = vadd.f32 %v7117, %v7118
      %v7120 = vsel %vm717, %v7065, 0.0
      %v7121 = vadd.f32 %v7119, %v7120
      %v7122 = vsel %vm717, %v7066, 0.0
      %v7123 = vadd.f32 %v7121, %v7122
      %v7124 = vsel %vm717, %v7067, 0.0
      %v7125 = vadd.f32 %v7123, %v7124
      %v7126 = vsel %vm717, %v7068, 0.0
      %v7127 = vadd.f32 %v7125, %v7126
      %v7128 = vsel %vm717, %v7069, 0.0
      %v7129 = vadd.f32 %v7127, %v7128
      %v7130 = vsel %vm717, %v7070, 0.0
      %v7131 = vadd.f32 %v7129, %v7130
      %v7132 = vsel %vm717, %v7071, 0.0
      %v7133 = vadd.f32 %v7131, %v7132
      %v7134 = vsel %vm717, %v7072, 0.0
      %v7135 = vadd.f32 %v7133, %v7134
      %v7136 = vrot.slane %v7135, 4
      %v7137 = vadd.f32 %v7135, %v7136
      %v7138 = vrot.slane %v7137, 2
      %v7139 = vadd.f32 %v7137, %v7138
      %v7140 = vrot.slane %v7139, 1
      %v7141 = vadd.f32 %v7139, %v7140
      %v7142 = vmul.f32 %v6802, %v6802
      %v7143 = vmul.f32 %v6803, %v6803
      %v7144 = vmul.f32 %v6804, %v6804
      %v7145 = vmul.f32 %v6805, %v6805
      %v7146 = vmul.f32 %v6806, %v6806
      %v7147 = vmul.f32 %v6807, %v6807
      %v7148 = vmul.f32 %v6808, %v6808
      %v7149 = vmul.f32 %v6809, %v6809
      %v7150 = vmul.f32 %v6810, %v6810
      %v7151 = vmul.f32 %v6811, %v6811
      %v7152 = vmul.f32 %v6812, %v6812
      %v7153 = vmul.f32 %v6813, %v6813
      %v7154 = vmul.f32 %v6814, %v6814
      %v7155 = vmul.f32 %v6815, %v6815
      %v7156 = vmul.f32 %v6816, %v6816
      %v7157 = vmul.f32 %v6817, %v6817
      %v7158 = vmul.f32 %v6818, %v6818
      %v7159 = vmul.f32 %v6819, %v6819
      %v7160 = vmul.f32 %v6820, %v6820
      %v7161 = vmul.f32 %v6821, %v6821
      %v7162 = vmul.f32 %v6822, %v6822
      %v7163 = vmul.f32 %v6823, %v6823
      %v7164 = vmul.f32 %v6824, %v6824
      %v7165 = vmul.f32 %v6825, %v6825
      %v7166 = vmul.f32 %v6826, %v6826
      %v7167 = vmul.f32 %v6827, %v6827
      %v7168 = vmul.f32 %v6828, %v6828
      %v7169 = vmul.f32 %v6829, %v6829
      %v7170 = vmul.f32 %v6830, %v6830
      %v7171 = vmul.f32 %v6831, %v6831
      %v7172 = vmul.f32 %v6832, %v6832
      %v7173 = vmul.f32 %v6833, %v6833
      %v7174 = vsel %vm717, %v7142, 0.0
      %v7175 = vsel %vm717, %v7143, 0.0
      %v7176 = vadd.f32 %v7174, %v7175
      %v7177 = vsel %vm717, %v7144, 0.0
      %v7178 = vadd.f32 %v7176, %v7177
      %v7179 = vsel %vm717, %v7145, 0.0
      %v7180 = vadd.f32 %v7178, %v7179
      %v7181 = vsel %vm717, %v7146, 0.0
      %v7182 = vadd.f32 %v7180, %v7181
      %v7183 = vsel %vm717, %v7147, 0.0
      %v7184 = vadd.f32 %v7182, %v7183
      %v7185 = vsel %vm717, %v7148, 0.0
      %v7186 = vadd.f32 %v7184, %v7185
      %v7187 = vsel %vm717, %v7149, 0.0
      %v7188 = vadd.f32 %v7186, %v7187
      %v7189 = vsel %vm717, %v7150, 0.0
      %v7190 = vadd.f32 %v7188, %v7189
      %v7191 = vsel %vm717, %v7151, 0.0
      %v7192 = vadd.f32 %v7190, %v7191
      %v7193 = vsel %vm717, %v7152, 0.0
      %v7194 = vadd.f32 %v7192, %v7193
      %v7195 = vsel %vm717, %v7153, 0.0
      %v7196 = vadd.f32 %v7194, %v7195
      %v7197 = vsel %vm717, %v7154, 0.0
      %v7198 = vadd.f32 %v7196, %v7197
      %v7199 = vsel %vm717, %v7155, 0.0
      %v7200 = vadd.f32 %v7198, %v7199
      %v7201 = vsel %vm717, %v7156, 0.0
      %v7202 = vadd.f32 %v7200, %v7201
      %v7203 = vsel %vm717, %v7157, 0.0
      %v7204 = vadd.f32 %v7202, %v7203
      %v7205 = vsel %vm717, %v7158, 0.0
      %v7206 = vadd.f32 %v7204, %v7205
      %v7207 = vsel %vm717, %v7159, 0.0
      %v7208 = vadd.f32 %v7206, %v7207
      %v7209 = vsel %vm717, %v7160, 0.0
      %v7210 = vadd.f32 %v7208, %v7209
      %v7211 = vsel %vm717, %v7161, 0.0
      %v7212 = vadd.f32 %v7210, %v7211
      %v7213 = vsel %vm717, %v7162, 0.0
      %v7214 = vadd.f32 %v7212, %v7213
      %v7215 = vsel %vm717, %v7163, 0.0
      %v7216 = vadd.f32 %v7214, %v7215
      %v7217 = vsel %vm717, %v7164, 0.0
      %v7218 = vadd.f32 %v7216, %v7217
      %v7219 = vsel %vm717, %v7165, 0.0
      %v7220 = vadd.f32 %v7218, %v7219
      %v7221 = vsel %vm717, %v7166, 0.0
      %v7222 = vadd.f32 %v7220, %v7221
      %v7223 = vsel %vm717, %v7167, 0.0
      %v7224 = vadd.f32 %v7222, %v7223
      %v7225 = vsel %vm717, %v7168, 0.0
      %v7226 = vadd.f32 %v7224, %v7225
      %v7227 = vsel %vm717, %v7169, 0.0
      %v7228 = vadd.f32 %v7226, %v7227
      %v7229 = vsel %vm717, %v7170, 0.0
      %v7230 = vadd.f32 %v7228, %v7229
      %v7231 = vsel %vm717, %v7171, 0.0
      %v7232 = vadd.f32 %v7230, %v7231
      %v7233 = vsel %vm717, %v7172, 0.0
      %v7234 = vadd.f32 %v7232, %v7233
      %v7235 = vsel %vm717, %v7173, 0.0
      %v7236 = vadd.f32 %v7234, %v7235
      %v7237 = vrot.slane %v7236, 4
      %v7238 = vadd.f32 %v7236, %v7237
      %v7239 = vrot.slane %v7238, 2
      %v7240 = vadd.f32 %v7238, %v7239
      %v7241 = vrot.slane %v7240, 1
      %v7242 = vadd.f32 %v7240, %v7241
      %7244 = vrot.lane.b32.xlu0 %v7242, 8
      %v7245 = vpop.permute.xlu0 %7244
      %v7247 = vsel %vm717, %v7141, %v7245
      %v7249 = vrot.slane %v7247, 7
      %v7251 = vsel %vm492, %v7040, %v7249
      %vm7252 = vcmask 123904
      %7253 = vst.msk [vmem:[%s355] sm:$0x3] %vm7252, %v7251
      %p7254 = scmp.lt.s32.totalorder %s21, 1
      %s7255 = scalar_select %p7254, %s21, 1
      %s7256 = smul.addr %s7255, 32
      %s7257 = smul.addr %s7256, 8
      %s7258 = scalar_lea.vmem %s7, %s7257
      %p7259 = scmp.lt.s32.totalorder %s21, 1
      %s7260 = scalar_select %p7259, %s21, 1
      %s7261 = smul.addr %s7260, 32
      %s7262 = smul.addr %s7261, 8
      %s7263 = scalar_lea.vmem %s8, %s7262
      %p7264 = scmp.lt.s32.totalorder %s21, 1
      %s7265 = scalar_select %p7264, %s21, 1
      %s7266 = smul.addr %s7265, 2
      %s7267 = scalar_lea.vmem %s9, %s7266
      // Predicated region
      $region49: #{inception_v1_forward.4} parent=47 // pred_check
        %p7268 = pneg %p191
      $region50: #{inception_v1_forward.4} parent=47 // pred_check_branch
        %7270 = sbr.rel (%p7268) target = $region52
      $region51: #{inception_v1_forward.4} parent=47 // pred_region
        _
      $region52: #{inception_v1_forward.4} parent=47 // pred_fallthru
        _
      // Predicated region
      $region53: #{inception_v1_forward.4} parent=47 // pred_check
        %p7271 = pneg %p217
      $region54: #{inception_v1_forward.4} parent=47 // pred_check_branch
        %7273 = sbr.rel (%p7271) target = $region56
      $region55: #{inception_v1_forward.4} parent=47 // pred_region
        _
      $region56: #{inception_v1_forward.4} parent=47 // pred_fallthru
        _
      // Predicated region
      $region57: #{inception_v1_forward.4} parent=47 // pred_check
        %p7274 = pneg %p243
      $region58: #{inception_v1_forward.4} parent=47 // pred_check_branch
        %7276 = sbr.rel (%p7274) target = $region60
      $region59: #{inception_v1_forward.4} parent=47 // pred_region
        _
      $region60: #{inception_v1_forward.4} parent=47 // pred_fallthru
        _
    $region48: #{inception_v1_forward.4} parent=5 // pred_fallthru
      _
    %p7277 = scmp.le.s32.totalorder 2, %s16
    // Predicated region
    $region61: #{inception_v1_forward.4} parent=5 // pred_check
      %p7278 = pneg %p7277
    $region62: #{inception_v1_forward.4} parent=5 // pred_check_branch
      %7280 = sbr.rel (%p7278) target = $region64
    $region63: #{inception_v1_forward.4} parent=5 // pred_region
      %s7281 = ssub.s32 %s16, 2
      // Predicated region
      $region65: #{inception_v1_forward.4} parent=63 // pred_check
        %p7282 = pneg %p197
      $region66: #{inception_v1_forward.4} parent=63 // pred_check_branch
        %7284 = sbr.rel (%p7282) target = $region68
      $region67: #{inception_v1_forward.4} parent=63 // pred_region
        %p7285 = scmp.lt.s32.totalorder %s22, 1
        %s7286 = scalar_select %p7285, %s22, 1
        %s7287 = smul.addr %s7286, 32
        %s7288 = smul.addr %s7287, 8
        %s7289 = scalar_lea.vmem %s7, %s7288
      $region68: #{inception_v1_forward.4} parent=63 // pred_fallthru
        _
      // Predicated region
      $region69: #{inception_v1_forward.4} parent=63 // pred_check
        %p7290 = pneg %p223
      $region70: #{inception_v1_forward.4} parent=63 // pred_check_branch
        %7292 = sbr.rel (%p7290) target = $region72
      $region71: #{inception_v1_forward.4} parent=63 // pred_region
        %p7293 = scmp.lt.s32.totalorder %s22, 1
        %s7294 = scalar_select %p7293, %s22, 1
        %s7295 = smul.addr %s7294, 32
        %s7296 = smul.addr %s7295, 8
        %s7297 = scalar_lea.vmem %s8, %s7296
      $region72: #{inception_v1_forward.4} parent=63 // pred_fallthru
        _
      // Predicated region
      $region73: #{inception_v1_forward.4} parent=63 // pred_check
        %p7298 = pneg %p249
      $region74: #{inception_v1_forward.4} parent=63 // pred_check_branch
        %7300 = sbr.rel (%p7298) target = $region76
      $region75: #{inception_v1_forward.4} parent=63 // pred_region
        %p7301 = scmp.lt.s32.totalorder %s22, 1
        %s7302 = scalar_select %p7301, %s22, 1
        %s7303 = smul.addr %s7302, 2
        %s7304 = scalar_lea.vmem %s9, %s7303
      $region76: #{inception_v1_forward.4} parent=63 // pred_fallthru
        _
    $region64: #{inception_v1_forward.4} parent=5 // pred_fallthru
      _
  $region6: #{inception_v1_forward.4} parent=0 // loop_footer
    %s20 = sadd.s32 1, %s16
  $region7: #{inception_v1_forward.4} parent=0 // loop_footer_branch
    %15 = sbr.rel target = $region3
  $region8: #{inception_v1_forward.4} parent=0 // loop_exit
    _

</llo_original>
